<compile_context>
chip_gen: v7x
topology: tpu7x:2x2x1
jax: 0.10.0
libtpu: 0.0.40
codegen_flags: <defaults>
</compile_context>

<pallas_src>
import functools

import jax
import jax.numpy as jnp
import numpy as np
from jax.experimental import pallas as pl
from jax.experimental.pallas import tpu as pltpu

PAD_IDX = 0
HP = 128          # padded hidden size: one full 128-lane vreg per gate
LANE = 128        # vocab padded to a multiple of this for lane-dense stores


# ----------------------------------------------------------------------------
# Fused kernel: encoder LSTM -> decoder LSTM -> vocab projection.
# ----------------------------------------------------------------------------
def _lstm_cell(xw, h_prev, c_prev, whh, Hp):
    # xw already contains x @ W_ih + (b_ih + b_hh); only h @ W_hh is on the
    # serial critical path.
    gates = xw + jnp.dot(h_prev, whh, preferred_element_type=jnp.float32)
    i_g = jax.nn.sigmoid(gates[:, 0 * Hp:1 * Hp])   # lane-aligned 128-wide slices
    f_g = jax.nn.sigmoid(gates[:, 1 * Hp:2 * Hp])
    g_g = jnp.tanh(gates[:, 2 * Hp:3 * Hp])
    o_g = jax.nn.sigmoid(gates[:, 3 * Hp:4 * Hp])
    c_new = f_g * c_prev + i_g * g_g
    h_new = o_g * jnp.tanh(c_new)
    return h_new, c_new


def _s2s_fused_kernel(src_ref, tgt_ref,
                      enc_wih_ref, enc_whh_ref, enc_b_ref,
                      dec_wih_ref, dec_whh_ref, dec_b_ref,
                      mlp_w_ref, mlp_b_ref,
                      logits_ref,
                      xw_enc_sc, xw_dec_sc, dech_sc):
    Ts, B, _ = src_ref.shape
    Tt = tgt_ref.shape[0]
    Hp = enc_whh_ref.shape[0]
    Vp = mlp_w_ref.shape[1]

    # ---- Phase 1: input projections, hoisted out of the serial recurrence ----
    enc_bb = jnp.broadcast_to(enc_b_ref[...], (B, 4 * Hp))   # hoisted broadcasts
    dec_bb = jnp.broadcast_to(dec_b_ref[...], (B, 4 * Hp))
    enc_wih = enc_wih_ref[...]
    dec_wih = dec_wih_ref[...]
    for t in range(Ts):
        xw_enc_sc[t] = (jnp.dot(src_ref[t], enc_wih,
                                preferred_element_type=jnp.float32) + enc_bb)
    for t in range(Tt):
        xw_dec_sc[t] = (jnp.dot(tgt_ref[t], dec_wih,
                                preferred_element_type=jnp.float32) + dec_bb)

    # ---- Phase 2: encoder recurrence (h0 = c0 = 0) ----
    enc_whh = enc_whh_ref[...]
    h = jnp.zeros((B, Hp), jnp.float32)
    c = jnp.zeros((B, Hp), jnp.float32)
    for t in range(Ts):
        h, c = _lstm_cell(xw_enc_sc[t], h, c, enc_whh, Hp)

    # ---- Phase 3: decoder recurrence seeded by encoder final (h, c) ----
    dec_whh = dec_whh_ref[...]
    for t in range(Tt):
        h, c = _lstm_cell(xw_dec_sc[t], h, c, dec_whh, Hp)
        dech_sc[t] = h

    # ---- Phase 4: vocab projection, lane-dense 128-wide output stores ----
    mlp_bb = jnp.broadcast_to(mlp_b_ref[...], (B, Vp))
    mlp_w = mlp_w_ref[...]
    for t in range(Tt):
        logits_ref[t] = (jnp.dot(dech_sc[t], mlp_w,
                                 preferred_element_type=jnp.float32) + mlp_bb)


def s2s_fused_pallas(src_e, tgt_e, p):
    """src_e: (Ts,B,E) embedded (already flipped) source; tgt_e: (Tt,B,E).
    p holds padded weights: *_wih (E,4Hp), *_whh (Hp,4Hp), *_b (1,4Hp),
    mlp_w (Hp,Vp), mlp_b (1,Vp). Returns padded logits (Tt,B,Vp) f32."""
    Ts, B, E = src_e.shape
    Tt = tgt_e.shape[0]
    Hp = p["enc_whh"].shape[0]
    Vp = p["mlp_w"].shape[1]

    flops = 2 * B * ((Ts + Tt) * E * 4 * Hp      # input projections
                     + (Ts + Tt) * Hp * 4 * Hp   # recurrences
                     + Tt * Hp * Vp)             # vocab projection
    transcendentals = 5 * (Ts + Tt) * B * Hp     # 3 sigmoid + 2 tanh per unit/step
    bytes_accessed = 4 * (src_e.size + tgt_e.size
                          + p["enc_wih"].size + p["enc_whh"].size + p["enc_b"].size
                          + p["dec_wih"].size + p["dec_whh"].size + p["dec_b"].size
                          + p["mlp_w"].size + p["mlp_b"].size
                          + Tt * B * Vp)

    return pl.pallas_call(
        _s2s_fused_kernel,
        out_shape=jax.ShapeDtypeStruct((Tt, B, Vp), jnp.float32),
        scratch_shapes=[
            pltpu.VMEM((Ts, B, 4 * Hp), jnp.float32),   # precomputed enc x@W_ih + b
            pltpu.VMEM((Tt, B, 4 * Hp), jnp.float32),   # precomputed dec x@W_ih + b
            pltpu.VMEM((Tt, B, Hp), jnp.float32),       # decoder hidden states
        ],
        cost_estimate=pl.CostEstimate(flops=flops,
                                      transcendentals=transcendentals,
                                      bytes_accessed=bytes_accessed),
    )(src_e, tgt_e,
      p["enc_wih"], p["enc_whh"], p["enc_b"],
      p["dec_wih"], p["dec_whh"], p["dec_b"],
      p["mlp_w"], p["mlp_b"])


# ----------------------------------------------------------------------------
# Forward wrapper (matches S2STrans.forward for lstm / num_layers=1 / uni enc).
# ----------------------------------------------------------------------------
@functools.partial(jax.jit, static_argnames=("tgt_vocab",))
def s2s_forward(padded_params, X, y_teacher, *, tgt_vocab):
    # torch.flip(X, [0]) applied to the tiny int32 id tensor before the gather
    # -> the embedded source is produced already reversed (no big HBM copy).
    Xr = jnp.flip(X, axis=0)
    src_e = jnp.take(padded_params["src_emb"], Xr, axis=0)          # (Ts,B,E)
    tgt_e = jnp.take(padded_params["tgt_emb"], y_teacher, axis=0)   # (Tt,B,E)
    logits_pad = s2s_fused_pallas(src_e, tgt_e, padded_params)      # (Tt,B,Vp)
    return logits_pad[..., :tgt_vocab]


# ----------------------------------------------------------------------------
# Parameter init (logical shapes, matching the PyTorch module) + padding.
# ----------------------------------------------------------------------------
def init_params(key, src_vocab, tgt_vocab, E, H):
    ks = jax.random.split(key, 10)
    s = 0.1

    def nrm(k, shape):
        return (s * jax.random.normal(k, shape)).astype(jnp.float32)

    src_emb = nrm(ks[0], (src_vocab, E)).at[PAD_IDX].set(0.0)   # padding_idx row = 0
    tgt_emb = nrm(ks[1], (tgt_vocab, E)).at[PAD_IDX].set(0.0)

    return dict(
        src_emb=src_emb,
        tgt_emb=tgt_emb,
        # stored pre-transposed: (in, 4H) so kernels compute x @ W
        enc_wih=nrm(ks[2], (E, 4 * H)),
        enc_whh=nrm(ks[3], (H, 4 * H)),
        enc_b=nrm(ks[4], (1, 4 * H)),       # b_ih + b_hh folded
        dec_wih=nrm(ks[5], (E, 4 * H)),
        dec_whh=nrm(ks[6], (H, 4 * H)),
        dec_b=nrm(ks[7], (1, 4 * H)),
        mlp_w=nrm(ks[8], (H, tgt_vocab)),
        mlp_b=nrm(ks[9], (1, tgt_vocab)),
    )


def _pad_gate_cols(w, H, Hp):
    """(..., 4H) -> (..., 4Hp): each gate's H real columns at the start of its Hp block."""
    parts = []
    for g in range(4):
        blk = w[..., g * H:(g + 1) * H]
        parts.append(jnp.pad(blk, [(0, 0)] * (w.ndim - 1) + [(0, Hp - H)]))
    return jnp.concatenate(parts, axis=-1)


def pad_params(p, H, V, Hp=HP):
    """Zero-pad H->Hp and V->multiple of 128. Padded hidden units stay exactly 0
    through the recurrence (zero weights/bias -> c=0, h=0), so results match."""
    Vp = ((V + LANE - 1) // LANE) * LANE
    out = dict(src_emb=p["src_emb"], tgt_emb=p["tgt_emb"])
    for side in ("enc", "dec"):
        out[f"{side}_wih"] = _pad_gate_cols(p[f"{side}_wih"], H, Hp)            # (E, 4Hp)
        whh = _pad_gate_cols(p[f"{side}_whh"], H, Hp)                            # (H, 4Hp)
        out[f"{side}_whh"] = jnp.pad(whh, ((0, Hp - H), (0, 0)))                 # (Hp, 4Hp)
        out[f"{side}_b"] = _pad_gate_cols(p[f"{side}_b"], H, Hp)                 # (1, 4Hp)
    out["mlp_w"] = jnp.pad(p["mlp_w"], ((0, Hp - H), (0, Vp - V)))               # (Hp, Vp)
    out["mlp_b"] = jnp.pad(p["mlp_b"], ((0, 0), (0, Vp - V)))                    # (1, Vp)
    return out


# ----------------------------------------------------------------------------
# Pure-JAX reference (unpadded) for a correctness check.
# ----------------------------------------------------------------------------
def _lstm_ref(x_seq, h0, c0, w_ih, w_hh, bias):
    def step(carry, x):
        h, c = carry
        g = x @ w_ih + h @ w_hh + bias[0]
        H = h.shape[1]
        i = jax.nn.sigmoid(g[:, :H])
        f = jax.nn.sigmoid(g[:, H:2 * H])
        gg = jnp.tanh(g[:, 2 * H:3 * H])
        o = jax.nn.sigmoid(g[:, 3 * H:])
        c = f * c + i * gg
        h = o * jnp.tanh(c)
        return (h, c), h
    (h, c), hs = jax.lax.scan(step, (h0, c0), x_seq)
    return hs, h, c


def s2s_forward_ref(params, X, y_teacher):
    B = X.shape[1]
    H = params["enc_whh"].shape[0]
    Xr = jnp.flip(X, axis=0)
    src_e = jnp.take(params["src_emb"], Xr, axis=0)
    tgt_e = jnp.take(params["tgt_emb"], y_teacher, axis=0)
    zeros = jnp.zeros((B, H), jnp.float32)
    _, enc_h, enc_c = _lstm_ref(src_e, zeros, zeros,
                                params["enc_wih"], params["enc_whh"], params["enc_b"])
    dec_hseq, _, _ = _lstm_ref(tgt_e, enc_h, enc_c,
                               params["dec_wih"], params["dec_whh"], params["dec_b"])
    return dec_hseq @ params["mlp_w"] + params["mlp_b"][0]


if __name__ == "__main__":
    SRC_VOCAB, TGT_VOCAB = 24, 40
    E, H = 32, 32
    T_SRC, T_TGT, B = 8, 8, 2

    key = jax.random.PRNGKey(0)
    k_p, k_x, k_y = jax.random.split(key, 3)
    params = init_params(k_p, SRC_VOCAB, TGT_VOCAB, E, H)
    padded = pad_params(params, H, TGT_VOCAB)

    X = jax.random.randint(k_x, (T_SRC, B), 0, SRC_VOCAB, dtype=jnp.int32)
    y_teacher = jax.random.randint(k_y, (T_TGT, B), 0, TGT_VOCAB, dtype=jnp.int32)

    out = jax.block_until_ready(s2s_forward(padded, X, y_teacher, tgt_vocab=TGT_VOCAB))
    ref = jax.block_until_ready(s2s_forward_ref(params, X, y_teacher))

    np.testing.assert_allclose(np.asarray(out), np.asarray(ref), rtol=1e-4, atol=1e-4)
    assert out.shape == (T_TGT, B, TGT_VOCAB)
    # TODO(synk): beam-search `infer` (dynamic Python-side control flow) is not
    # translated; only the training-time forward() is implemented.
    print("KERNEL_OK")
</pallas_src>

<mosaic_0001>
module attributes {stable_mosaic.version = 11 : i64} {
  func.func @_s2s_fused_kernel(%arg0: memref<8x2x32xf32, #tpu.memory_space<vmem>>, %arg1: memref<8x2x32xf32, #tpu.memory_space<vmem>>, %arg2: memref<32x512xf32, #tpu.memory_space<vmem>>, %arg3: memref<128x512xf32, #tpu.memory_space<vmem>>, %arg4: memref<1x512xf32, #tpu.memory_space<vmem>>, %arg5: memref<32x512xf32, #tpu.memory_space<vmem>>, %arg6: memref<128x512xf32, #tpu.memory_space<vmem>>, %arg7: memref<1x512xf32, #tpu.memory_space<vmem>>, %arg8: memref<128x128xf32, #tpu.memory_space<vmem>>, %arg9: memref<1x128xf32, #tpu.memory_space<vmem>>, %arg10: memref<8x2x128xf32, #tpu.memory_space<vmem>>, %arg11: memref<8x2x512xf32, #tpu.memory_space<vmem>>, %arg12: memref<8x2x512xf32, #tpu.memory_space<vmem>>, %arg13: memref<8x2x128xf32, #tpu.memory_space<vmem>>) attributes {dimension_semantics = [], scalar_prefetch = 0 : i64, scratch_operands = 3 : i64, tpu.core_type = #tpu.core_type<tc>} {
    %c0 = arith.constant 0 : index
    %c0_0 = arith.constant 0 : index
    %0 = vector.load %arg4[%c0, %c0_0] : memref<1x512xf32, #tpu.memory_space<vmem>>, vector<1x512xf32>
    %1 = vector.shape_cast %0 : vector<1x512xf32> to vector<1x512xf32>
    %2 = vector.broadcast %1 : vector<1x512xf32> to vector<2x512xf32>
    %c0_1 = arith.constant 0 : index
    %c0_2 = arith.constant 0 : index
    %3 = vector.load %arg7[%c0_1, %c0_2] : memref<1x512xf32, #tpu.memory_space<vmem>>, vector<1x512xf32>
    %4 = vector.shape_cast %3 : vector<1x512xf32> to vector<1x512xf32>
    %5 = vector.broadcast %4 : vector<1x512xf32> to vector<2x512xf32>
    %c0_3 = arith.constant 0 : index
    %c0_4 = arith.constant 0 : index
    %6 = vector.load %arg2[%c0_3, %c0_4] : memref<32x512xf32, #tpu.memory_space<vmem>>, vector<32x512xf32>
    %c0_5 = arith.constant 0 : index
    %c0_6 = arith.constant 0 : index
    %7 = vector.load %arg5[%c0_5, %c0_6] : memref<32x512xf32, #tpu.memory_space<vmem>>, vector<32x512xf32>
    %c0_7 = arith.constant 0 : index
    %c0_8 = arith.constant 0 : index
    %c0_9 = arith.constant 0 : index
    %8 = vector.load %arg0[%c0_7, %c0_8, %c0_9] : memref<8x2x32xf32, #tpu.memory_space<vmem>>, vector<1x2x32xf32>
    %9 = vector.shape_cast %8 : vector<1x2x32xf32> to vector<2x32xf32>
    %cst = arith.constant dense<0.000000e+00> : vector<2x512xf32>
    %10 = tpu.matmul %9, %6, %cst {dimension_numbers = #tpu.dot_dimension_numbers<[1], [0], [0], [1], [0, 0, 1, 1], [], []>} : vector<2x32xf32>, vector<32x512xf32>, vector<2x512xf32> -> vector<2x512xf32>
    %11 = arith.addf %10, %2 : vector<2x512xf32>
    %c0_10 = arith.constant 0 : index
    %c0_11 = arith.constant 0 : index
    %c0_12 = arith.constant 0 : index
    %12 = vector.load %arg11[%c0_10, %c0_11, %c0_12] : memref<8x2x512xf32, #tpu.memory_space<vmem>>, vector<1x2x512xf32>
    %13 = vector.shape_cast %12 : vector<1x2x512xf32> to vector<2x512xf32>
    %14 = vector.shape_cast %11 : vector<2x512xf32> to vector<1x2x512xf32>
    tpu.vector_store %arg11[%c0_10, %c0_11, %c0_12], %14 {strides = array<i32>} : memref<8x2x512xf32, #tpu.memory_space<vmem>>, vector<1x2x512xf32>,
    %c1 = arith.constant 1 : index
    %c0_13 = arith.constant 0 : index
    %c0_14 = arith.constant 0 : index
    %15 = vector.load %arg0[%c1, %c0_13, %c0_14] : memref<8x2x32xf32, #tpu.memory_space<vmem>>, vector<1x2x32xf32>
    %16 = vector.shape_cast %15 : vector<1x2x32xf32> to vector<2x32xf32>
    %cst_15 = arith.constant dense<0.000000e+00> : vector<2x512xf32>
    %17 = tpu.matmul %16, %6, %cst_15 {dimension_numbers = #tpu.dot_dimension_numbers<[1], [0], [0], [1], [0, 0, 1, 1], [], []>} : vector<2x32xf32>, vector<32x512xf32>, vector<2x512xf32> -> vector<2x512xf32>
    %18 = arith.addf %17, %2 : vector<2x512xf32>
    %c1_16 = arith.constant 1 : index
    %c0_17 = arith.constant 0 : index
    %c0_18 = arith.constant 0 : index
    %19 = vector.load %arg11[%c1_16, %c0_17, %c0_18] : memref<8x2x512xf32, #tpu.memory_space<vmem>>, vector<1x2x512xf32>
    %20 = vector.shape_cast %19 : vector<1x2x512xf32> to vector<2x512xf32>
    %21 = vector.shape_cast %18 : vector<2x512xf32> to vector<1x2x512xf32>
    tpu.vector_store %arg11[%c1_16, %c0_17, %c0_18], %21 {strides = array<i32>} : memref<8x2x512xf32, #tpu.memory_space<vmem>>, vector<1x2x512xf32>,
    %c2 = arith.constant 2 : index
    %c0_19 = arith.constant 0 : index
    %c0_20 = arith.constant 0 : index
    %22 = vector.load %arg0[%c2, %c0_19, %c0_20] : memref<8x2x32xf32, #tpu.memory_space<vmem>>, vector<1x2x32xf32>
    %23 = vector.shape_cast %22 : vector<1x2x32xf32> to vector<2x32xf32>
    %cst_21 = arith.constant dense<0.000000e+00> : vector<2x512xf32>
    %24 = tpu.matmul %23, %6, %cst_21 {dimension_numbers = #tpu.dot_dimension_numbers<[1], [0], [0], [1], [0, 0, 1, 1], [], []>} : vector<2x32xf32>, vector<32x512xf32>, vector<2x512xf32> -> vector<2x512xf32>
    %25 = arith.addf %24, %2 : vector<2x512xf32>
    %c2_22 = arith.constant 2 : index
    %c0_23 = arith.constant 0 : index
    %c0_24 = arith.constant 0 : index
    %26 = vector.load %arg11[%c2_22, %c0_23, %c0_24] : memref<8x2x512xf32, #tpu.memory_space<vmem>>, vector<1x2x512xf32>
    %27 = vector.shape_cast %26 : vector<1x2x512xf32> to vector<2x512xf32>
    %28 = vector.shape_cast %25 : vector<2x512xf32> to vector<1x2x512xf32>
    tpu.vector_store %arg11[%c2_22, %c0_23, %c0_24], %28 {strides = array<i32>} : memref<8x2x512xf32, #tpu.memory_space<vmem>>, vector<1x2x512xf32>,
    %c3 = arith.constant 3 : index
    %c0_25 = arith.constant 0 : index
    %c0_26 = arith.constant 0 : index
    %29 = vector.load %arg0[%c3, %c0_25, %c0_26] : memref<8x2x32xf32, #tpu.memory_space<vmem>>, vector<1x2x32xf32>
    %30 = vector.shape_cast %29 : vector<1x2x32xf32> to vector<2x32xf32>
    %cst_27 = arith.constant dense<0.000000e+00> : vector<2x512xf32>
    %31 = tpu.matmul %30, %6, %cst_27 {dimension_numbers = #tpu.dot_dimension_numbers<[1], [0], [0], [1], [0, 0, 1, 1], [], []>} : vector<2x32xf32>, vector<32x512xf32>, vector<2x512xf32> -> vector<2x512xf32>
    %32 = arith.addf %31, %2 : vector<2x512xf32>
    %c3_28 = arith.constant 3 : index
    %c0_29 = arith.constant 0 : index
    %c0_30 = arith.constant 0 : index
    %33 = vector.load %arg11[%c3_28, %c0_29, %c0_30] : memref<8x2x512xf32, #tpu.memory_space<vmem>>, vector<1x2x512xf32>
    %34 = vector.shape_cast %33 : vector<1x2x512xf32> to vector<2x512xf32>
    %35 = vector.shape_cast %32 : vector<2x512xf32> to vector<1x2x512xf32>
    tpu.vector_store %arg11[%c3_28, %c0_29, %c0_30], %35 {strides = array<i32>} : memref<8x2x512xf32, #tpu.memory_space<vmem>>, vector<1x2x512xf32>,
    %c4 = arith.constant 4 : index
    %c0_31 = arith.constant 0 : index
    %c0_32 = arith.constant 0 : index
    %36 = vector.load %arg0[%c4, %c0_31, %c0_32] : memref<8x2x32xf32, #tpu.memory_space<vmem>>, vector<1x2x32xf32>
    %37 = vector.shape_cast %36 : vector<1x2x32xf32> to vector<2x32xf32>
    %cst_33 = arith.constant dense<0.000000e+00> : vector<2x512xf32>
    %38 = tpu.matmul %37, %6, %cst_33 {dimension_numbers = #tpu.dot_dimension_numbers<[1], [0], [0], [1], [0, 0, 1, 1], [], []>} : vector<2x32xf32>, vector<32x512xf32>, vector<2x512xf32> -> vector<2x512xf32>
    %39 = arith.addf %38, %2 : vector<2x512xf32>
    %c4_34 = arith.constant 4 : index
    %c0_35 = arith.constant 0 : index
    %c0_36 = arith.constant 0 : index
    %40 = vector.load %arg11[%c4_34, %c0_35, %c0_36] : memref<8x2x512xf32, #tpu.memory_space<vmem>>, vector<1x2x512xf32>
    %41 = vector.shape_cast %40 : vector<1x2x512xf32> to vector<2x512xf32>
    %42 = vector.shape_cast %39 : vector<2x512xf32> to vector<1x2x512xf32>
    tpu.vector_store %arg11[%c4_34, %c0_35, %c0_36], %42 {strides = array<i32>} : memref<8x2x512xf32, #tpu.memory_space<vmem>>, vector<1x2x512xf32>,
    %c5 = arith.constant 5 : index
    %c0_37 = arith.constant 0 : index
    %c0_38 = arith.constant 0 : index
    %43 = vector.load %arg0[%c5, %c0_37, %c0_38] : memref<8x2x32xf32, #tpu.memory_space<vmem>>, vector<1x2x32xf32>
    %44 = vector.shape_cast %43 : vector<1x2x32xf32> to vector<2x32xf32>
    %cst_39 = arith.constant dense<0.000000e+00> : vector<2x512xf32>
    %45 = tpu.matmul %44, %6, %cst_39 {dimension_numbers = #tpu.dot_dimension_numbers<[1], [0], [0], [1], [0, 0, 1, 1], [], []>} : vector<2x32xf32>, vector<32x512xf32>, vector<2x512xf32> -> vector<2x512xf32>
    %46 = arith.addf %45, %2 : vector<2x512xf32>
    %c5_40 = arith.constant 5 : index
    %c0_41 = arith.constant 0 : index
    %c0_42 = arith.constant 0 : index
    %47 = vector.load %arg11[%c5_40, %c0_41, %c0_42] : memref<8x2x512xf32, #tpu.memory_space<vmem>>, vector<1x2x512xf32>
    %48 = vector.shape_cast %47 : vector<1x2x512xf32> to vector<2x512xf32>
    %49 = vector.shape_cast %46 : vector<2x512xf32> to vector<1x2x512xf32>
    tpu.vector_store %arg11[%c5_40, %c0_41, %c0_42], %49 {strides = array<i32>} : memref<8x2x512xf32, #tpu.memory_space<vmem>>, vector<1x2x512xf32>,
    %c6 = arith.constant 6 : index
    %c0_43 = arith.constant 0 : index
    %c0_44 = arith.constant 0 : index
    %50 = vector.load %arg0[%c6, %c0_43, %c0_44] : memref<8x2x32xf32, #tpu.memory_space<vmem>>, vector<1x2x32xf32>
    %51 = vector.shape_cast %50 : vector<1x2x32xf32> to vector<2x32xf32>
    %cst_45 = arith.constant dense<0.000000e+00> : vector<2x512xf32>
    %52 = tpu.matmul %51, %6, %cst_45 {dimension_numbers = #tpu.dot_dimension_numbers<[1], [0], [0], [1], [0, 0, 1, 1], [], []>} : vector<2x32xf32>, vector<32x512xf32>, vector<2x512xf32> -> vector<2x512xf32>
    %53 = arith.addf %52, %2 : vector<2x512xf32>
    %c6_46 = arith.constant 6 : index
    %c0_47 = arith.constant 0 : index
    %c0_48 = arith.constant 0 : index
    %54 = vector.load %arg11[%c6_46, %c0_47, %c0_48] : memref<8x2x512xf32, #tpu.memory_space<vmem>>, vector<1x2x512xf32>
    %55 = vector.shape_cast %54 : vector<1x2x512xf32> to vector<2x512xf32>
    %56 = vector.shape_cast %53 : vector<2x512xf32> to vector<1x2x512xf32>
    tpu.vector_store %arg11[%c6_46, %c0_47, %c0_48], %56 {strides = array<i32>} : memref<8x2x512xf32, #tpu.memory_space<vmem>>, vector<1x2x512xf32>,
    %c7 = arith.constant 7 : index
    %c0_49 = arith.constant 0 : index
    %c0_50 = arith.constant 0 : index
    %57 = vector.load %arg0[%c7, %c0_49, %c0_50] : memref<8x2x32xf32, #tpu.memory_space<vmem>>, vector<1x2x32xf32>
    %58 = vector.shape_cast %57 : vector<1x2x32xf32> to vector<2x32xf32>
    %cst_51 = arith.constant dense<0.000000e+00> : vector<2x512xf32>
    %59 = tpu.matmul %58, %6, %cst_51 {dimension_numbers = #tpu.dot_dimension_numbers<[1], [0], [0], [1], [0, 0, 1, 1], [], []>} : vector<2x32xf32>, vector<32x512xf32>, vector<2x512xf32> -> vector<2x512xf32>
    %60 = arith.addf %59, %2 : vector<2x512xf32>
    %c7_52 = arith.constant 7 : index
    %c0_53 = arith.constant 0 : index
    %c0_54 = arith.constant 0 : index
    %61 = vector.load %arg11[%c7_52, %c0_53, %c0_54] : memref<8x2x512xf32, #tpu.memory_space<vmem>>, vector<1x2x512xf32>
    %62 = vector.shape_cast %61 : vector<1x2x512xf32> to vector<2x512xf32>
    %63 = vector.shape_cast %60 : vector<2x512xf32> to vector<1x2x512xf32>
    tpu.vector_store %arg11[%c7_52, %c0_53, %c0_54], %63 {strides = array<i32>} : memref<8x2x512xf32, #tpu.memory_space<vmem>>, vector<1x2x512xf32>,
    %c0_55 = arith.constant 0 : index
    %c0_56 = arith.constant 0 : index
    %c0_57 = arith.constant 0 : index
    %64 = vector.load %arg1[%c0_55, %c0_56, %c0_57] : memref<8x2x32xf32, #tpu.memory_space<vmem>>, vector<1x2x32xf32>
    %65 = vector.shape_cast %64 : vector<1x2x32xf32> to vector<2x32xf32>
    %cst_58 = arith.constant dense<0.000000e+00> : vector<2x512xf32>
    %66 = tpu.matmul %65, %7, %cst_58 {dimension_numbers = #tpu.dot_dimension_numbers<[1], [0], [0], [1], [0, 0, 1, 1], [], []>} : vector<2x32xf32>, vector<32x512xf32>, vector<2x512xf32> -> vector<2x512xf32>
    %67 = arith.addf %66, %5 : vector<2x512xf32>
    %c0_59 = arith.constant 0 : index
    %c0_60 = arith.constant 0 : index
    %c0_61 = arith.constant 0 : index
    %68 = vector.load %arg12[%c0_59, %c0_60, %c0_61] : memref<8x2x512xf32, #tpu.memory_space<vmem>>, vector<1x2x512xf32>
    %69 = vector.shape_cast %68 : vector<1x2x512xf32> to vector<2x512xf32>
    %70 = vector.shape_cast %67 : vector<2x512xf32> to vector<1x2x512xf32>
    tpu.vector_store %arg12[%c0_59, %c0_60, %c0_61], %70 {strides = array<i32>} : memref<8x2x512xf32, #tpu.memory_space<vmem>>, vector<1x2x512xf32>,
    %c1_62 = arith.constant 1 : index
    %c0_63 = arith.constant 0 : index
    %c0_64 = arith.constant 0 : index
    %71 = vector.load %arg1[%c1_62, %c0_63, %c0_64] : memref<8x2x32xf32, #tpu.memory_space<vmem>>, vector<1x2x32xf32>
    %72 = vector.shape_cast %71 : vector<1x2x32xf32> to vector<2x32xf32>
    %cst_65 = arith.constant dense<0.000000e+00> : vector<2x512xf32>
    %73 = tpu.matmul %72, %7, %cst_65 {dimension_numbers = #tpu.dot_dimension_numbers<[1], [0], [0], [1], [0, 0, 1, 1], [], []>} : vector<2x32xf32>, vector<32x512xf32>, vector<2x512xf32> -> vector<2x512xf32>
    %74 = arith.addf %73, %5 : vector<2x512xf32>
    %c1_66 = arith.constant 1 : index
    %c0_67 = arith.constant 0 : index
    %c0_68 = arith.constant 0 : index
    %75 = vector.load %arg12[%c1_66, %c0_67, %c0_68] : memref<8x2x512xf32, #tpu.memory_space<vmem>>, vector<1x2x512xf32>
    %76 = vector.shape_cast %75 : vector<1x2x512xf32> to vector<2x512xf32>
    %77 = vector.shape_cast %74 : vector<2x512xf32> to vector<1x2x512xf32>
    tpu.vector_store %arg12[%c1_66, %c0_67, %c0_68], %77 {strides = array<i32>} : memref<8x2x512xf32, #tpu.memory_space<vmem>>, vector<1x2x512xf32>,
    %c2_69 = arith.constant 2 : index
    %c0_70 = arith.constant 0 : index
    %c0_71 = arith.constant 0 : index
    %78 = vector.load %arg1[%c2_69, %c0_70, %c0_71] : memref<8x2x32xf32, #tpu.memory_space<vmem>>, vector<1x2x32xf32>
    %79 = vector.shape_cast %78 : vector<1x2x32xf32> to vector<2x32xf32>
    %cst_72 = arith.constant dense<0.000000e+00> : vector<2x512xf32>
    %80 = tpu.matmul %79, %7, %cst_72 {dimension_numbers = #tpu.dot_dimension_numbers<[1], [0], [0], [1], [0, 0, 1, 1], [], []>} : vector<2x32xf32>, vector<32x512xf32>, vector<2x512xf32> -> vector<2x512xf32>
    %81 = arith.addf %80, %5 : vector<2x512xf32>
    %c2_73 = arith.constant 2 : index
    %c0_74 = arith.constant 0 : index
    %c0_75 = arith.constant 0 : index
    %82 = vector.load %arg12[%c2_73, %c0_74, %c0_75] : memref<8x2x512xf32, #tpu.memory_space<vmem>>, vector<1x2x512xf32>
    %83 = vector.shape_cast %82 : vector<1x2x512xf32> to vector<2x512xf32>
    %84 = vector.shape_cast %81 : vector<2x512xf32> to vector<1x2x512xf32>
    tpu.vector_store %arg12[%c2_73, %c0_74, %c0_75], %84 {strides = array<i32>} : memref<8x2x512xf32, #tpu.memory_space<vmem>>, vector<1x2x512xf32>,
    %c3_76 = arith.constant 3 : index
    %c0_77 = arith.constant 0 : index
    %c0_78 = arith.constant 0 : index
    %85 = vector.load %arg1[%c3_76, %c0_77, %c0_78] : memref<8x2x32xf32, #tpu.memory_space<vmem>>, vector<1x2x32xf32>
    %86 = vector.shape_cast %85 : vector<1x2x32xf32> to vector<2x32xf32>
    %cst_79 = arith.constant dense<0.000000e+00> : vector<2x512xf32>
    %87 = tpu.matmul %86, %7, %cst_79 {dimension_numbers = #tpu.dot_dimension_numbers<[1], [0], [0], [1], [0, 0, 1, 1], [], []>} : vector<2x32xf32>, vector<32x512xf32>, vector<2x512xf32> -> vector<2x512xf32>
    %88 = arith.addf %87, %5 : vector<2x512xf32>
    %c3_80 = arith.constant 3 : index
    %c0_81 = arith.constant 0 : index
    %c0_82 = arith.constant 0 : index
    %89 = vector.load %arg12[%c3_80, %c0_81, %c0_82] : memref<8x2x512xf32, #tpu.memory_space<vmem>>, vector<1x2x512xf32>
    %90 = vector.shape_cast %89 : vector<1x2x512xf32> to vector<2x512xf32>
    %91 = vector.shape_cast %88 : vector<2x512xf32> to vector<1x2x512xf32>
    tpu.vector_store %arg12[%c3_80, %c0_81, %c0_82], %91 {strides = array<i32>} : memref<8x2x512xf32, #tpu.memory_space<vmem>>, vector<1x2x512xf32>,
    %c4_83 = arith.constant 4 : index
    %c0_84 = arith.constant 0 : index
    %c0_85 = arith.constant 0 : index
    %92 = vector.load %arg1[%c4_83, %c0_84, %c0_85] : memref<8x2x32xf32, #tpu.memory_space<vmem>>, vector<1x2x32xf32>
    %93 = vector.shape_cast %92 : vector<1x2x32xf32> to vector<2x32xf32>
    %cst_86 = arith.constant dense<0.000000e+00> : vector<2x512xf32>
    %94 = tpu.matmul %93, %7, %cst_86 {dimension_numbers = #tpu.dot_dimension_numbers<[1], [0], [0], [1], [0, 0, 1, 1], [], []>} : vector<2x32xf32>, vector<32x512xf32>, vector<2x512xf32> -> vector<2x512xf32>
    %95 = arith.addf %94, %5 : vector<2x512xf32>
    %c4_87 = arith.constant 4 : index
    %c0_88 = arith.constant 0 : index
    %c0_89 = arith.constant 0 : index
    %96 = vector.load %arg12[%c4_87, %c0_88, %c0_89] : memref<8x2x512xf32, #tpu.memory_space<vmem>>, vector<1x2x512xf32>
    %97 = vector.shape_cast %96 : vector<1x2x512xf32> to vector<2x512xf32>
    %98 = vector.shape_cast %95 : vector<2x512xf32> to vector<1x2x512xf32>
    tpu.vector_store %arg12[%c4_87, %c0_88, %c0_89], %98 {strides = array<i32>} : memref<8x2x512xf32, #tpu.memory_space<vmem>>, vector<1x2x512xf32>,
    %c5_90 = arith.constant 5 : index
    %c0_91 = arith.constant 0 : index
    %c0_92 = arith.constant 0 : index
    %99 = vector.load %arg1[%c5_90, %c0_91, %c0_92] : memref<8x2x32xf32, #tpu.memory_space<vmem>>, vector<1x2x32xf32>
    %100 = vector.shape_cast %99 : vector<1x2x32xf32> to vector<2x32xf32>
    %cst_93 = arith.constant dense<0.000000e+00> : vector<2x512xf32>
    %101 = tpu.matmul %100, %7, %cst_93 {dimension_numbers = #tpu.dot_dimension_numbers<[1], [0], [0], [1], [0, 0, 1, 1], [], []>} : vector<2x32xf32>, vector<32x512xf32>, vector<2x512xf32> -> vector<2x512xf32>
    %102 = arith.addf %101, %5 : vector<2x512xf32>
    %c5_94 = arith.constant 5 : index
    %c0_95 = arith.constant 0 : index
    %c0_96 = arith.constant 0 : index
    %103 = vector.load %arg12[%c5_94, %c0_95, %c0_96] : memref<8x2x512xf32, #tpu.memory_space<vmem>>, vector<1x2x512xf32>
    %104 = vector.shape_cast %103 : vector<1x2x512xf32> to vector<2x512xf32>
    %105 = vector.shape_cast %102 : vector<2x512xf32> to vector<1x2x512xf32>
    tpu.vector_store %arg12[%c5_94, %c0_95, %c0_96], %105 {strides = array<i32>} : memref<8x2x512xf32, #tpu.memory_space<vmem>>, vector<1x2x512xf32>,
    %c6_97 = arith.constant 6 : index
    %c0_98 = arith.constant 0 : index
    %c0_99 = arith.constant 0 : index
    %106 = vector.load %arg1[%c6_97, %c0_98, %c0_99] : memref<8x2x32xf32, #tpu.memory_space<vmem>>, vector<1x2x32xf32>
    %107 = vector.shape_cast %106 : vector<1x2x32xf32> to vector<2x32xf32>
    %cst_100 = arith.constant dense<0.000000e+00> : vector<2x512xf32>
    %108 = tpu.matmul %107, %7, %cst_100 {dimension_numbers = #tpu.dot_dimension_numbers<[1], [0], [0], [1], [0, 0, 1, 1], [], []>} : vector<2x32xf32>, vector<32x512xf32>, vector<2x512xf32> -> vector<2x512xf32>
    %109 = arith.addf %108, %5 : vector<2x512xf32>
    %c6_101 = arith.constant 6 : index
    %c0_102 = arith.constant 0 : index
    %c0_103 = arith.constant 0 : index
    %110 = vector.load %arg12[%c6_101, %c0_102, %c0_103] : memref<8x2x512xf32, #tpu.memory_space<vmem>>, vector<1x2x512xf32>
    %111 = vector.shape_cast %110 : vector<1x2x512xf32> to vector<2x512xf32>
    %112 = vector.shape_cast %109 : vector<2x512xf32> to vector<1x2x512xf32>
    tpu.vector_store %arg12[%c6_101, %c0_102, %c0_103], %112 {strides = array<i32>} : memref<8x2x512xf32, #tpu.memory_space<vmem>>, vector<1x2x512xf32>,
    %c7_104 = arith.constant 7 : index
    %c0_105 = arith.constant 0 : index
    %c0_106 = arith.constant 0 : index
    %113 = vector.load %arg1[%c7_104, %c0_105, %c0_106] : memref<8x2x32xf32, #tpu.memory_space<vmem>>, vector<1x2x32xf32>
    %114 = vector.shape_cast %113 : vector<1x2x32xf32> to vector<2x32xf32>
    %cst_107 = arith.constant dense<0.000000e+00> : vector<2x512xf32>
    %115 = tpu.matmul %114, %7, %cst_107 {dimension_numbers = #tpu.dot_dimension_numbers<[1], [0], [0], [1], [0, 0, 1, 1], [], []>} : vector<2x32xf32>, vector<32x512xf32>, vector<2x512xf32> -> vector<2x512xf32>
    %116 = arith.addf %115, %5 : vector<2x512xf32>
    %c7_108 = arith.constant 7 : index
    %c0_109 = arith.constant 0 : index
    %c0_110 = arith.constant 0 : index
    %117 = vector.load %arg12[%c7_108, %c0_109, %c0_110] : memref<8x2x512xf32, #tpu.memory_space<vmem>>, vector<1x2x512xf32>
    %118 = vector.shape_cast %117 : vector<1x2x512xf32> to vector<2x512xf32>
    %119 = vector.shape_cast %116 : vector<2x512xf32> to vector<1x2x512xf32>
    tpu.vector_store %arg12[%c7_108, %c0_109, %c0_110], %119 {strides = array<i32>} : memref<8x2x512xf32, #tpu.memory_space<vmem>>, vector<1x2x512xf32>,
    %c0_111 = arith.constant 0 : index
    %c0_112 = arith.constant 0 : index
    %120 = vector.load %arg3[%c0_111, %c0_112] : memref<128x512xf32, #tpu.memory_space<vmem>>, vector<128x512xf32>
    %cst_113 = arith.constant 0.000000e+00 : f32
    %121 = vector.broadcast %cst_113 : f32 to vector<2x128xf32>
    %cst_114 = arith.constant 0.000000e+00 : f32
    %122 = vector.broadcast %cst_114 : f32 to vector<2x128xf32>
    %c0_115 = arith.constant 0 : index
    %c0_116 = arith.constant 0 : index
    %c0_117 = arith.constant 0 : index
    %123 = vector.load %arg11[%c0_115, %c0_116, %c0_117] : memref<8x2x512xf32, #tpu.memory_space<vmem>>, vector<1x2x512xf32>
    %124 = vector.shape_cast %123 : vector<1x2x512xf32> to vector<2x512xf32>
    %cst_118 = arith.constant dense<0.000000e+00> : vector<2x512xf32>
    %125 = tpu.matmul %121, %120, %cst_118 {dimension_numbers = #tpu.dot_dimension_numbers<[1], [0], [0], [1], [0, 0, 1, 1], [], []>} : vector<2x128xf32>, vector<128x512xf32>, vector<2x512xf32> -> vector<2x512xf32>
    %126 = arith.addf %124, %125 : vector<2x512xf32>
    %127 = vector.extract_strided_slice %126 {offsets = [0, 0], sizes = [2, 128], strides = [1, 1]} : vector<2x512xf32> to vector<2x128xf32>
    %128 = arith.negf %127 : vector<2x128xf32>
    %129 = math.exp %128 : vector<2x128xf32>
    %cst_119 = arith.constant 1.000000e+00 : f32
    %130 = vector.broadcast %cst_119 : f32 to vector<2x128xf32>
    %131 = arith.addf %130, %129 : vector<2x128xf32>
    %132 = arith.divf %130, %131 : vector<2x128xf32>
    %133 = vector.extract_strided_slice %126 {offsets = [0, 128], sizes = [2, 128], strides = [1, 1]} : vector<2x512xf32> to vector<2x128xf32>
    %134 = arith.negf %133 : vector<2x128xf32>
    %135 = math.exp %134 : vector<2x128xf32>
    %cst_120 = arith.constant 1.000000e+00 : f32
    %136 = vector.broadcast %cst_120 : f32 to vector<2x128xf32>
    %137 = arith.addf %136, %135 : vector<2x128xf32>
    %138 = arith.divf %136, %137 : vector<2x128xf32>
    %139 = vector.extract_strided_slice %126 {offsets = [0, 256], sizes = [2, 128], strides = [1, 1]} : vector<2x512xf32> to vector<2x128xf32>
    %140 = math.tanh %139 : vector<2x128xf32>
    %141 = vector.extract_strided_slice %126 {offsets = [0, 384], sizes = [2, 128], strides = [1, 1]} : vector<2x512xf32> to vector<2x128xf32>
    %142 = arith.negf %141 : vector<2x128xf32>
    %143 = math.exp %142 : vector<2x128xf32>
    %cst_121 = arith.constant 1.000000e+00 : f32
    %144 = vector.broadcast %cst_121 : f32 to vector<2x128xf32>
    %145 = arith.addf %144, %143 : vector<2x128xf32>
    %146 = arith.divf %144, %145 : vector<2x128xf32>
    %147 = arith.mulf %138, %122 : vector<2x128xf32>
    %148 = arith.mulf %132, %140 : vector<2x128xf32>
    %149 = arith.addf %147, %148 : vector<2x128xf32>
    %150 = math.tanh %149 : vector<2x128xf32>
    %151 = arith.mulf %146, %150 : vector<2x128xf32>
    %c1_122 = arith.constant 1 : index
    %c0_123 = arith.constant 0 : index
    %c0_124 = arith.constant 0 : index
    %152 = vector.load %arg11[%c1_122, %c0_123, %c0_124] : memref<8x2x512xf32, #tpu.memory_space<vmem>>, vector<1x2x512xf32>
    %153 = vector.shape_cast %152 : vector<1x2x512xf32> to vector<2x512xf32>
    %cst_125 = arith.constant dense<0.000000e+00> : vector<2x512xf32>
    %154 = tpu.matmul %151, %120, %cst_125 {dimension_numbers = #tpu.dot_dimension_numbers<[1], [0], [0], [1], [0, 0, 1, 1], [], []>} : vector<2x128xf32>, vector<128x512xf32>, vector<2x512xf32> -> vector<2x512xf32>
    %155 = arith.addf %153, %154 : vector<2x512xf32>
    %156 = vector.extract_strided_slice %155 {offsets = [0, 0], sizes = [2, 128], strides = [1, 1]} : vector<2x512xf32> to vector<2x128xf32>
    %157 = arith.negf %156 : vector<2x128xf32>
    %158 = math.exp %157 : vector<2x128xf32>
    %cst_126 = arith.constant 1.000000e+00 : f32
    %159 = vector.broadcast %cst_126 : f32 to vector<2x128xf32>
    %160 = arith.addf %159, %158 : vector<2x128xf32>
    %161 = arith.divf %159, %160 : vector<2x128xf32>
    %162 = vector.extract_strided_slice %155 {offsets = [0, 128], sizes = [2, 128], strides = [1, 1]} : vector<2x512xf32> to vector<2x128xf32>
    %163 = arith.negf %162 : vector<2x128xf32>
    %164 = math.exp %163 : vector<2x128xf32>
    %cst_127 = arith.constant 1.000000e+00 : f32
    %165 = vector.broadcast %cst_127 : f32 to vector<2x128xf32>
    %166 = arith.addf %165, %164 : vector<2x128xf32>
    %167 = arith.divf %165, %166 : vector<2x128xf32>
    %168 = vector.extract_strided_slice %155 {offsets = [0, 256], sizes = [2, 128], strides = [1, 1]} : vector<2x512xf32> to vector<2x128xf32>
    %169 = math.tanh %168 : vector<2x128xf32>
    %170 = vector.extract_strided_slice %155 {offsets = [0, 384], sizes = [2, 128], strides = [1, 1]} : vector<2x512xf32> to vector<2x128xf32>
    %171 = arith.negf %170 : vector<2x128xf32>
    %172 = math.exp %171 : vector<2x128xf32>
    %cst_128 = arith.constant 1.000000e+00 : f32
    %173 = vector.broadcast %cst_128 : f32 to vector<2x128xf32>
    %174 = arith.addf %173, %172 : vector<2x128xf32>
    %175 = arith.divf %173, %174 : vector<2x128xf32>
    %176 = arith.mulf %167, %149 : vector<2x128xf32>
    %177 = arith.mulf %161, %169 : vector<2x128xf32>
    %178 = arith.addf %176, %177 : vector<2x128xf32>
    %179 = math.tanh %178 : vector<2x128xf32>
    %180 = arith.mulf %175, %179 : vector<2x128xf32>
    %c2_129 = arith.constant 2 : index
    %c0_130 = arith.constant 0 : index
    %c0_131 = arith.constant 0 : index
    %181 = vector.load %arg11[%c2_129, %c0_130, %c0_131] : memref<8x2x512xf32, #tpu.memory_space<vmem>>, vector<1x2x512xf32>
    %182 = vector.shape_cast %181 : vector<1x2x512xf32> to vector<2x512xf32>
    %cst_132 = arith.constant dense<0.000000e+00> : vector<2x512xf32>
    %183 = tpu.matmul %180, %120, %cst_132 {dimension_numbers = #tpu.dot_dimension_numbers<[1], [0], [0], [1], [0, 0, 1, 1], [], []>} : vector<2x128xf32>, vector<128x512xf32>, vector<2x512xf32> -> vector<2x512xf32>
    %184 = arith.addf %182, %183 : vector<2x512xf32>
    %185 = vector.extract_strided_slice %184 {offsets = [0, 0], sizes = [2, 128], strides = [1, 1]} : vector<2x512xf32> to vector<2x128xf32>
    %186 = arith.negf %185 : vector<2x128xf32>
    %187 = math.exp %186 : vector<2x128xf32>
    %cst_133 = arith.constant 1.000000e+00 : f32
    %188 = vector.broadcast %cst_133 : f32 to vector<2x128xf32>
    %189 = arith.addf %188, %187 : vector<2x128xf32>
    %190 = arith.divf %188, %189 : vector<2x128xf32>
    %191 = vector.extract_strided_slice %184 {offsets = [0, 128], sizes = [2, 128], strides = [1, 1]} : vector<2x512xf32> to vector<2x128xf32>
    %192 = arith.negf %191 : vector<2x128xf32>
    %193 = math.exp %192 : vector<2x128xf32>
    %cst_134 = arith.constant 1.000000e+00 : f32
    %194 = vector.broadcast %cst_134 : f32 to vector<2x128xf32>
    %195 = arith.addf %194, %193 : vector<2x128xf32>
    %196 = arith.divf %194, %195 : vector<2x128xf32>
    %197 = vector.extract_strided_slice %184 {offsets = [0, 256], sizes = [2, 128], strides = [1, 1]} : vector<2x512xf32> to vector<2x128xf32>
    %198 = math.tanh %197 : vector<2x128xf32>
    %199 = vector.extract_strided_slice %184 {offsets = [0, 384], sizes = [2, 128], strides = [1, 1]} : vector<2x512xf32> to vector<2x128xf32>
    %200 = arith.negf %199 : vector<2x128xf32>
    %201 = math.exp %200 : vector<2x128xf32>
    %cst_135 = arith.constant 1.000000e+00 : f32
    %202 = vector.broadcast %cst_135 : f32 to vector<2x128xf32>
    %203 = arith.addf %202, %201 : vector<2x128xf32>
    %204 = arith.divf %202, %203 : vector<2x128xf32>
    %205 = arith.mulf %196, %178 : vector<2x128xf32>
    %206 = arith.mulf %190, %198 : vector<2x128xf32>
    %207 = arith.addf %205, %206 : vector<2x128xf32>
    %208 = math.tanh %207 : vector<2x128xf32>
    %209 = arith.mulf %204, %208 : vector<2x128xf32>
    %c3_136 = arith.constant 3 : index
    %c0_137 = arith.constant 0 : index
    %c0_138 = arith.constant 0 : index
    %210 = vector.load %arg11[%c3_136, %c0_137, %c0_138] : memref<8x2x512xf32, #tpu.memory_space<vmem>>, vector<1x2x512xf32>
    %211 = vector.shape_cast %210 : vector<1x2x512xf32> to vector<2x512xf32>
    %cst_139 = arith.constant dense<0.000000e+00> : vector<2x512xf32>
    %212 = tpu.matmul %209, %120, %cst_139 {dimension_numbers = #tpu.dot_dimension_numbers<[1], [0], [0], [1], [0, 0, 1, 1], [], []>} : vector<2x128xf32>, vector<128x512xf32>, vector<2x512xf32> -> vector<2x512xf32>
    %213 = arith.addf %211, %212 : vector<2x512xf32>
    %214 = vector.extract_strided_slice %213 {offsets = [0, 0], sizes = [2, 128], strides = [1, 1]} : vector<2x512xf32> to vector<2x128xf32>
    %215 = arith.negf %214 : vector<2x128xf32>
    %216 = math.exp %215 : vector<2x128xf32>
    %cst_140 = arith.constant 1.000000e+00 : f32
    %217 = vector.broadcast %cst_140 : f32 to vector<2x128xf32>
    %218 = arith.addf %217, %216 : vector<2x128xf32>
    %219 = arith.divf %217, %218 : vector<2x128xf32>
    %220 = vector.extract_strided_slice %213 {offsets = [0, 128], sizes = [2, 128], strides = [1, 1]} : vector<2x512xf32> to vector<2x128xf32>
    %221 = arith.negf %220 : vector<2x128xf32>
    %222 = math.exp %221 : vector<2x128xf32>
    %cst_141 = arith.constant 1.000000e+00 : f32
    %223 = vector.broadcast %cst_141 : f32 to vector<2x128xf32>
    %224 = arith.addf %223, %222 : vector<2x128xf32>
    %225 = arith.divf %223, %224 : vector<2x128xf32>
    %226 = vector.extract_strided_slice %213 {offsets = [0, 256], sizes = [2, 128], strides = [1, 1]} : vector<2x512xf32> to vector<2x128xf32>
    %227 = math.tanh %226 : vector<2x128xf32>
    %228 = vector.extract_strided_slice %213 {offsets = [0, 384], sizes = [2, 128], strides = [1, 1]} : vector<2x512xf32> to vector<2x128xf32>
    %229 = arith.negf %228 : vector<2x128xf32>
    %230 = math.exp %229 : vector<2x128xf32>
    %cst_142 = arith.constant 1.000000e+00 : f32
    %231 = vector.broadcast %cst_142 : f32 to vector<2x128xf32>
    %232 = arith.addf %231, %230 : vector<2x128xf32>
    %233 = arith.divf %231, %232 : vector<2x128xf32>
    %234 = arith.mulf %225, %207 : vector<2x128xf32>
    %235 = arith.mulf %219, %227 : vector<2x128xf32>
    %236 = arith.addf %234, %235 : vector<2x128xf32>
    %237 = math.tanh %236 : vector<2x128xf32>
    %238 = arith.mulf %233, %237 : vector<2x128xf32>
    %c4_143 = arith.constant 4 : index
    %c0_144 = arith.constant 0 : index
    %c0_145 = arith.constant 0 : index
    %239 = vector.load %arg11[%c4_143, %c0_144, %c0_145] : memref<8x2x512xf32, #tpu.memory_space<vmem>>, vector<1x2x512xf32>
    %240 = vector.shape_cast %239 : vector<1x2x512xf32> to vector<2x512xf32>
    %cst_146 = arith.constant dense<0.000000e+00> : vector<2x512xf32>
    %241 = tpu.matmul %238, %120, %cst_146 {dimension_numbers = #tpu.dot_dimension_numbers<[1], [0], [0], [1], [0, 0, 1, 1], [], []>} : vector<2x128xf32>, vector<128x512xf32>, vector<2x512xf32> -> vector<2x512xf32>
    %242 = arith.addf %240, %241 : vector<2x512xf32>
    %243 = vector.extract_strided_slice %242 {offsets = [0, 0], sizes = [2, 128], strides = [1, 1]} : vector<2x512xf32> to vector<2x128xf32>
    %244 = arith.negf %243 : vector<2x128xf32>
    %245 = math.exp %244 : vector<2x128xf32>
    %cst_147 = arith.constant 1.000000e+00 : f32
    %246 = vector.broadcast %cst_147 : f32 to vector<2x128xf32>
    %247 = arith.addf %246, %245 : vector<2x128xf32>
    %248 = arith.divf %246, %247 : vector<2x128xf32>
    %249 = vector.extract_strided_slice %242 {offsets = [0, 128], sizes = [2, 128], strides = [1, 1]} : vector<2x512xf32> to vector<2x128xf32>
    %250 = arith.negf %249 : vector<2x128xf32>
    %251 = math.exp %250 : vector<2x128xf32>
    %cst_148 = arith.constant 1.000000e+00 : f32
    %252 = vector.broadcast %cst_148 : f32 to vector<2x128xf32>
    %253 = arith.addf %252, %251 : vector<2x128xf32>
    %254 = arith.divf %252, %253 : vector<2x128xf32>
    %255 = vector.extract_strided_slice %242 {offsets = [0, 256], sizes = [2, 128], strides = [1, 1]} : vector<2x512xf32> to vector<2x128xf32>
    %256 = math.tanh %255 : vector<2x128xf32>
    %257 = vector.extract_strided_slice %242 {offsets = [0, 384], sizes = [2, 128], strides = [1, 1]} : vector<2x512xf32> to vector<2x128xf32>
    %258 = arith.negf %257 : vector<2x128xf32>
    %259 = math.exp %258 : vector<2x128xf32>
    %cst_149 = arith.constant 1.000000e+00 : f32
    %260 = vector.broadcast %cst_149 : f32 to vector<2x128xf32>
    %261 = arith.addf %260, %259 : vector<2x128xf32>
    %262 = arith.divf %260, %261 : vector<2x128xf32>
    %263 = arith.mulf %254, %236 : vector<2x128xf32>
    %264 = arith.mulf %248, %256 : vector<2x128xf32>
    %265 = arith.addf %263, %264 : vector<2x128xf32>
    %266 = math.tanh %265 : vector<2x128xf32>
    %267 = arith.mulf %262, %266 : vector<2x128xf32>
    %c5_150 = arith.constant 5 : index
    %c0_151 = arith.constant 0 : index
    %c0_152 = arith.constant 0 : index
    %268 = vector.load %arg11[%c5_150, %c0_151, %c0_152] : memref<8x2x512xf32, #tpu.memory_space<vmem>>, vector<1x2x512xf32>
    %269 = vector.shape_cast %268 : vector<1x2x512xf32> to vector<2x512xf32>
    %cst_153 = arith.constant dense<0.000000e+00> : vector<2x512xf32>
    %270 = tpu.matmul %267, %120, %cst_153 {dimension_numbers = #tpu.dot_dimension_numbers<[1], [0], [0], [1], [0, 0, 1, 1], [], []>} : vector<2x128xf32>, vector<128x512xf32>, vector<2x512xf32> -> vector<2x512xf32>
    %271 = arith.addf %269, %270 : vector<2x512xf32>
    %272 = vector.extract_strided_slice %271 {offsets = [0, 0], sizes = [2, 128], strides = [1, 1]} : vector<2x512xf32> to vector<2x128xf32>
    %273 = arith.negf %272 : vector<2x128xf32>
    %274 = math.exp %273 : vector<2x128xf32>
    %cst_154 = arith.constant 1.000000e+00 : f32
    %275 = vector.broadcast %cst_154 : f32 to vector<2x128xf32>
    %276 = arith.addf %275, %274 : vector<2x128xf32>
    %277 = arith.divf %275, %276 : vector<2x128xf32>
    %278 = vector.extract_strided_slice %271 {offsets = [0, 128], sizes = [2, 128], strides = [1, 1]} : vector<2x512xf32> to vector<2x128xf32>
    %279 = arith.negf %278 : vector<2x128xf32>
    %280 = math.exp %279 : vector<2x128xf32>
    %cst_155 = arith.constant 1.000000e+00 : f32
    %281 = vector.broadcast %cst_155 : f32 to vector<2x128xf32>
    %282 = arith.addf %281, %280 : vector<2x128xf32>
    %283 = arith.divf %281, %282 : vector<2x128xf32>
    %284 = vector.extract_strided_slice %271 {offsets = [0, 256], sizes = [2, 128], strides = [1, 1]} : vector<2x512xf32> to vector<2x128xf32>
    %285 = math.tanh %284 : vector<2x128xf32>
    %286 = vector.extract_strided_slice %271 {offsets = [0, 384], sizes = [2, 128], strides = [1, 1]} : vector<2x512xf32> to vector<2x128xf32>
    %287 = arith.negf %286 : vector<2x128xf32>
    %288 = math.exp %287 : vector<2x128xf32>
    %cst_156 = arith.constant 1.000000e+00 : f32
    %289 = vector.broadcast %cst_156 : f32 to vector<2x128xf32>
    %290 = arith.addf %289, %288 : vector<2x128xf32>
    %291 = arith.divf %289, %290 : vector<2x128xf32>
    %292 = arith.mulf %283, %265 : vector<2x128xf32>
    %293 = arith.mulf %277, %285 : vector<2x128xf32>
    %294 = arith.addf %292, %293 : vector<2x128xf32>
    %295 = math.tanh %294 : vector<2x128xf32>
    %296 = arith.mulf %291, %295 : vector<2x128xf32>
    %c6_157 = arith.constant 6 : index
    %c0_158 = arith.constant 0 : index
    %c0_159 = arith.constant 0 : index
    %297 = vector.load %arg11[%c6_157, %c0_158, %c0_159] : memref<8x2x512xf32, #tpu.memory_space<vmem>>, vector<1x2x512xf32>
    %298 = vector.shape_cast %297 : vector<1x2x512xf32> to vector<2x512xf32>
    %cst_160 = arith.constant dense<0.000000e+00> : vector<2x512xf32>
    %299 = tpu.matmul %296, %120, %cst_160 {dimension_numbers = #tpu.dot_dimension_numbers<[1], [0], [0], [1], [0, 0, 1, 1], [], []>} : vector<2x128xf32>, vector<128x512xf32>, vector<2x512xf32> -> vector<2x512xf32>
    %300 = arith.addf %298, %299 : vector<2x512xf32>
    %301 = vector.extract_strided_slice %300 {offsets = [0, 0], sizes = [2, 128], strides = [1, 1]} : vector<2x512xf32> to vector<2x128xf32>
    %302 = arith.negf %301 : vector<2x128xf32>
    %303 = math.exp %302 : vector<2x128xf32>
    %cst_161 = arith.constant 1.000000e+00 : f32
    %304 = vector.broadcast %cst_161 : f32 to vector<2x128xf32>
    %305 = arith.addf %304, %303 : vector<2x128xf32>
    %306 = arith.divf %304, %305 : vector<2x128xf32>
    %307 = vector.extract_strided_slice %300 {offsets = [0, 128], sizes = [2, 128], strides = [1, 1]} : vector<2x512xf32> to vector<2x128xf32>
    %308 = arith.negf %307 : vector<2x128xf32>
    %309 = math.exp %308 : vector<2x128xf32>
    %cst_162 = arith.constant 1.000000e+00 : f32
    %310 = vector.broadcast %cst_162 : f32 to vector<2x128xf32>
    %311 = arith.addf %310, %309 : vector<2x128xf32>
    %312 = arith.divf %310, %311 : vector<2x128xf32>
    %313 = vector.extract_strided_slice %300 {offsets = [0, 256], sizes = [2, 128], strides = [1, 1]} : vector<2x512xf32> to vector<2x128xf32>
    %314 = math.tanh %313 : vector<2x128xf32>
    %315 = vector.extract_strided_slice %300 {offsets = [0, 384], sizes = [2, 128], strides = [1, 1]} : vector<2x512xf32> to vector<2x128xf32>
    %316 = arith.negf %315 : vector<2x128xf32>
    %317 = math.exp %316 : vector<2x128xf32>
    %cst_163 = arith.constant 1.000000e+00 : f32
    %318 = vector.broadcast %cst_163 : f32 to vector<2x128xf32>
    %319 = arith.addf %318, %317 : vector<2x128xf32>
    %320 = arith.divf %318, %319 : vector<2x128xf32>
    %321 = arith.mulf %312, %294 : vector<2x128xf32>
    %322 = arith.mulf %306, %314 : vector<2x128xf32>
    %323 = arith.addf %321, %322 : vector<2x128xf32>
    %324 = math.tanh %323 : vector<2x128xf32>
    %325 = arith.mulf %320, %324 : vector<2x128xf32>
    %c7_164 = arith.constant 7 : index
    %c0_165 = arith.constant 0 : index
    %c0_166 = arith.constant 0 : index
    %326 = vector.load %arg11[%c7_164, %c0_165, %c0_166] : memref<8x2x512xf32, #tpu.memory_space<vmem>>, vector<1x2x512xf32>
    %327 = vector.shape_cast %326 : vector<1x2x512xf32> to vector<2x512xf32>
    %cst_167 = arith.constant dense<0.000000e+00> : vector<2x512xf32>
    %328 = tpu.matmul %325, %120, %cst_167 {dimension_numbers = #tpu.dot_dimension_numbers<[1], [0], [0], [1], [0, 0, 1, 1], [], []>} : vector<2x128xf32>, vector<128x512xf32>, vector<2x512xf32> -> vector<2x512xf32>
    %329 = arith.addf %327, %328 : vector<2x512xf32>
    %330 = vector.extract_strided_slice %329 {offsets = [0, 0], sizes = [2, 128], strides = [1, 1]} : vector<2x512xf32> to vector<2x128xf32>
    %331 = arith.negf %330 : vector<2x128xf32>
    %332 = math.exp %331 : vector<2x128xf32>
    %cst_168 = arith.constant 1.000000e+00 : f32
    %333 = vector.broadcast %cst_168 : f32 to vector<2x128xf32>
    %334 = arith.addf %333, %332 : vector<2x128xf32>
    %335 = arith.divf %333, %334 : vector<2x128xf32>
    %336 = vector.extract_strided_slice %329 {offsets = [0, 128], sizes = [2, 128], strides = [1, 1]} : vector<2x512xf32> to vector<2x128xf32>
    %337 = arith.negf %336 : vector<2x128xf32>
    %338 = math.exp %337 : vector<2x128xf32>
    %cst_169 = arith.constant 1.000000e+00 : f32
    %339 = vector.broadcast %cst_169 : f32 to vector<2x128xf32>
    %340 = arith.addf %339, %338 : vector<2x128xf32>
    %341 = arith.divf %339, %340 : vector<2x128xf32>
    %342 = vector.extract_strided_slice %329 {offsets = [0, 256], sizes = [2, 128], strides = [1, 1]} : vector<2x512xf32> to vector<2x128xf32>
    %343 = math.tanh %342 : vector<2x128xf32>
    %344 = vector.extract_strided_slice %329 {offsets = [0, 384], sizes = [2, 128], strides = [1, 1]} : vector<2x512xf32> to vector<2x128xf32>
    %345 = arith.negf %344 : vector<2x128xf32>
    %346 = math.exp %345 : vector<2x128xf32>
    %cst_170 = arith.constant 1.000000e+00 : f32
    %347 = vector.broadcast %cst_170 : f32 to vector<2x128xf32>
    %348 = arith.addf %347, %346 : vector<2x128xf32>
    %349 = arith.divf %347, %348 : vector<2x128xf32>
    %350 = arith.mulf %341, %323 : vector<2x128xf32>
    %351 = arith.mulf %335, %343 : vector<2x128xf32>
    %352 = arith.addf %350, %351 : vector<2x128xf32>
    %353 = math.tanh %352 : vector<2x128xf32>
    %354 = arith.mulf %349, %353 : vector<2x128xf32>
    %c0_171 = arith.constant 0 : index
    %c0_172 = arith.constant 0 : index
    %355 = vector.load %arg6[%c0_171, %c0_172] : memref<128x512xf32, #tpu.memory_space<vmem>>, vector<128x512xf32>
    %c0_173 = arith.constant 0 : index
    %c0_174 = arith.constant 0 : index
    %c0_175 = arith.constant 0 : index
    %356 = vector.load %arg12[%c0_173, %c0_174, %c0_175] : memref<8x2x512xf32, #tpu.memory_space<vmem>>, vector<1x2x512xf32>
    %357 = vector.shape_cast %356 : vector<1x2x512xf32> to vector<2x512xf32>
    %cst_176 = arith.constant dense<0.000000e+00> : vector<2x512xf32>
    %358 = tpu.matmul %354, %355, %cst_176 {dimension_numbers = #tpu.dot_dimension_numbers<[1], [0], [0], [1], [0, 0, 1, 1], [], []>} : vector<2x128xf32>, vector<128x512xf32>, vector<2x512xf32> -> vector<2x512xf32>
    %359 = arith.addf %357, %358 : vector<2x512xf32>
    %360 = vector.extract_strided_slice %359 {offsets = [0, 0], sizes = [2, 128], strides = [1, 1]} : vector<2x512xf32> to vector<2x128xf32>
    %361 = arith.negf %360 : vector<2x128xf32>
    %362 = math.exp %361 : vector<2x128xf32>
    %cst_177 = arith.constant 1.000000e+00 : f32
    %363 = vector.broadcast %cst_177 : f32 to vector<2x128xf32>
    %364 = arith.addf %363, %362 : vector<2x128xf32>
    %365 = arith.divf %363, %364 : vector<2x128xf32>
    %366 = vector.extract_strided_slice %359 {offsets = [0, 128], sizes = [2, 128], strides = [1, 1]} : vector<2x512xf32> to vector<2x128xf32>
    %367 = arith.negf %366 : vector<2x128xf32>
    %368 = math.exp %367 : vector<2x128xf32>
    %cst_178 = arith.constant 1.000000e+00 : f32
    %369 = vector.broadcast %cst_178 : f32 to vector<2x128xf32>
    %370 = arith.addf %369, %368 : vector<2x128xf32>
    %371 = arith.divf %369, %370 : vector<2x128xf32>
    %372 = vector.extract_strided_slice %359 {offsets = [0, 256], sizes = [2, 128], strides = [1, 1]} : vector<2x512xf32> to vector<2x128xf32>
    %373 = math.tanh %372 : vector<2x128xf32>
    %374 = vector.extract_strided_slice %359 {offsets = [0, 384], sizes = [2, 128], strides = [1, 1]} : vector<2x512xf32> to vector<2x128xf32>
    %375 = arith.negf %374 : vector<2x128xf32>
    %376 = math.exp %375 : vector<2x128xf32>
    %cst_179 = arith.constant 1.000000e+00 : f32
    %377 = vector.broadcast %cst_179 : f32 to vector<2x128xf32>
    %378 = arith.addf %377, %376 : vector<2x128xf32>
    %379 = arith.divf %377, %378 : vector<2x128xf32>
    %380 = arith.mulf %371, %352 : vector<2x128xf32>
    %381 = arith.mulf %365, %373 : vector<2x128xf32>
    %382 = arith.addf %380, %381 : vector<2x128xf32>
    %383 = math.tanh %382 : vector<2x128xf32>
    %384 = arith.mulf %379, %383 : vector<2x128xf32>
    %c0_180 = arith.constant 0 : index
    %c0_181 = arith.constant 0 : index
    %c0_182 = arith.constant 0 : index
    %385 = vector.load %arg13[%c0_180, %c0_181, %c0_182] : memref<8x2x128xf32, #tpu.memory_space<vmem>>, vector<1x2x128xf32>
    %386 = vector.shape_cast %385 : vector<1x2x128xf32> to vector<2x128xf32>
    %387 = vector.shape_cast %384 : vector<2x128xf32> to vector<1x2x128xf32>
    tpu.vector_store %arg13[%c0_180, %c0_181, %c0_182], %387 {strides = array<i32>} : memref<8x2x128xf32, #tpu.memory_space<vmem>>, vector<1x2x128xf32>,
    %c1_183 = arith.constant 1 : index
    %c0_184 = arith.constant 0 : index
    %c0_185 = arith.constant 0 : index
    %388 = vector.load %arg12[%c1_183, %c0_184, %c0_185] : memref<8x2x512xf32, #tpu.memory_space<vmem>>, vector<1x2x512xf32>
    %389 = vector.shape_cast %388 : vector<1x2x512xf32> to vector<2x512xf32>
    %cst_186 = arith.constant dense<0.000000e+00> : vector<2x512xf32>
    %390 = tpu.matmul %384, %355, %cst_186 {dimension_numbers = #tpu.dot_dimension_numbers<[1], [0], [0], [1], [0, 0, 1, 1], [], []>} : vector<2x128xf32>, vector<128x512xf32>, vector<2x512xf32> -> vector<2x512xf32>
    %391 = arith.addf %389, %390 : vector<2x512xf32>
    %392 = vector.extract_strided_slice %391 {offsets = [0, 0], sizes = [2, 128], strides = [1, 1]} : vector<2x512xf32> to vector<2x128xf32>
    %393 = arith.negf %392 : vector<2x128xf32>
    %394 = math.exp %393 : vector<2x128xf32>
    %cst_187 = arith.constant 1.000000e+00 : f32
    %395 = vector.broadcast %cst_187 : f32 to vector<2x128xf32>
    %396 = arith.addf %395, %394 : vector<2x128xf32>
    %397 = arith.divf %395, %396 : vector<2x128xf32>
    %398 = vector.extract_strided_slice %391 {offsets = [0, 128], sizes = [2, 128], strides = [1, 1]} : vector<2x512xf32> to vector<2x128xf32>
    %399 = arith.negf %398 : vector<2x128xf32>
    %400 = math.exp %399 : vector<2x128xf32>
    %cst_188 = arith.constant 1.000000e+00 : f32
    %401 = vector.broadcast %cst_188 : f32 to vector<2x128xf32>
    %402 = arith.addf %401, %400 : vector<2x128xf32>
    %403 = arith.divf %401, %402 : vector<2x128xf32>
    %404 = vector.extract_strided_slice %391 {offsets = [0, 256], sizes = [2, 128], strides = [1, 1]} : vector<2x512xf32> to vector<2x128xf32>
    %405 = math.tanh %404 : vector<2x128xf32>
    %406 = vector.extract_strided_slice %391 {offsets = [0, 384], sizes = [2, 128], strides = [1, 1]} : vector<2x512xf32> to vector<2x128xf32>
    %407 = arith.negf %406 : vector<2x128xf32>
    %408 = math.exp %407 : vector<2x128xf32>
    %cst_189 = arith.constant 1.000000e+00 : f32
    %409 = vector.broadcast %cst_189 : f32 to vector<2x128xf32>
    %410 = arith.addf %409, %408 : vector<2x128xf32>
    %411 = arith.divf %409, %410 : vector<2x128xf32>
    %412 = arith.mulf %403, %382 : vector<2x128xf32>
    %413 = arith.mulf %397, %405 : vector<2x128xf32>
    %414 = arith.addf %412, %413 : vector<2x128xf32>
    %415 = math.tanh %414 : vector<2x128xf32>
    %416 = arith.mulf %411, %415 : vector<2x128xf32>
    %c1_190 = arith.constant 1 : index
    %c0_191 = arith.constant 0 : index
    %c0_192 = arith.constant 0 : index
    %417 = vector.load %arg13[%c1_190, %c0_191, %c0_192] : memref<8x2x128xf32, #tpu.memory_space<vmem>>, vector<1x2x128xf32>
    %418 = vector.shape_cast %417 : vector<1x2x128xf32> to vector<2x128xf32>
    %419 = vector.shape_cast %416 : vector<2x128xf32> to vector<1x2x128xf32>
    tpu.vector_store %arg13[%c1_190, %c0_191, %c0_192], %419 {strides = array<i32>} : memref<8x2x128xf32, #tpu.memory_space<vmem>>, vector<1x2x128xf32>,
    %c2_193 = arith.constant 2 : index
    %c0_194 = arith.constant 0 : index
    %c0_195 = arith.constant 0 : index
    %420 = vector.load %arg12[%c2_193, %c0_194, %c0_195] : memref<8x2x512xf32, #tpu.memory_space<vmem>>, vector<1x2x512xf32>
    %421 = vector.shape_cast %420 : vector<1x2x512xf32> to vector<2x512xf32>
    %cst_196 = arith.constant dense<0.000000e+00> : vector<2x512xf32>
    %422 = tpu.matmul %416, %355, %cst_196 {dimension_numbers = #tpu.dot_dimension_numbers<[1], [0], [0], [1], [0, 0, 1, 1], [], []>} : vector<2x128xf32>, vector<128x512xf32>, vector<2x512xf32> -> vector<2x512xf32>
    %423 = arith.addf %421, %422 : vector<2x512xf32>
    %424 = vector.extract_strided_slice %423 {offsets = [0, 0], sizes = [2, 128], strides = [1, 1]} : vector<2x512xf32> to vector<2x128xf32>
    %425 = arith.negf %424 : vector<2x128xf32>
    %426 = math.exp %425 : vector<2x128xf32>
    %cst_197 = arith.constant 1.000000e+00 : f32
    %427 = vector.broadcast %cst_197 : f32 to vector<2x128xf32>
    %428 = arith.addf %427, %426 : vector<2x128xf32>
    %429 = arith.divf %427, %428 : vector<2x128xf32>
    %430 = vector.extract_strided_slice %423 {offsets = [0, 128], sizes = [2, 128], strides = [1, 1]} : vector<2x512xf32> to vector<2x128xf32>
    %431 = arith.negf %430 : vector<2x128xf32>
    %432 = math.exp %431 : vector<2x128xf32>
    %cst_198 = arith.constant 1.000000e+00 : f32
    %433 = vector.broadcast %cst_198 : f32 to vector<2x128xf32>
    %434 = arith.addf %433, %432 : vector<2x128xf32>
    %435 = arith.divf %433, %434 : vector<2x128xf32>
    %436 = vector.extract_strided_slice %423 {offsets = [0, 256], sizes = [2, 128], strides = [1, 1]} : vector<2x512xf32> to vector<2x128xf32>
    %437 = math.tanh %436 : vector<2x128xf32>
    %438 = vector.extract_strided_slice %423 {offsets = [0, 384], sizes = [2, 128], strides = [1, 1]} : vector<2x512xf32> to vector<2x128xf32>
    %439 = arith.negf %438 : vector<2x128xf32>
    %440 = math.exp %439 : vector<2x128xf32>
    %cst_199 = arith.constant 1.000000e+00 : f32
    %441 = vector.broadcast %cst_199 : f32 to vector<2x128xf32>
    %442 = arith.addf %441, %440 : vector<2x128xf32>
    %443 = arith.divf %441, %442 : vector<2x128xf32>
    %444 = arith.mulf %435, %414 : vector<2x128xf32>
    %445 = arith.mulf %429, %437 : vector<2x128xf32>
    %446 = arith.addf %444, %445 : vector<2x128xf32>
    %447 = math.tanh %446 : vector<2x128xf32>
    %448 = arith.mulf %443, %447 : vector<2x128xf32>
    %c2_200 = arith.constant 2 : index
    %c0_201 = arith.constant 0 : index
    %c0_202 = arith.constant 0 : index
    %449 = vector.load %arg13[%c2_200, %c0_201, %c0_202] : memref<8x2x128xf32, #tpu.memory_space<vmem>>, vector<1x2x128xf32>
    %450 = vector.shape_cast %449 : vector<1x2x128xf32> to vector<2x128xf32>
    %451 = vector.shape_cast %448 : vector<2x128xf32> to vector<1x2x128xf32>
    tpu.vector_store %arg13[%c2_200, %c0_201, %c0_202], %451 {strides = array<i32>} : memref<8x2x128xf32, #tpu.memory_space<vmem>>, vector<1x2x128xf32>,
    %c3_203 = arith.constant 3 : index
    %c0_204 = arith.constant 0 : index
    %c0_205 = arith.constant 0 : index
    %452 = vector.load %arg12[%c3_203, %c0_204, %c0_205] : memref<8x2x512xf32, #tpu.memory_space<vmem>>, vector<1x2x512xf32>
    %453 = vector.shape_cast %452 : vector<1x2x512xf32> to vector<2x512xf32>
    %cst_206 = arith.constant dense<0.000000e+00> : vector<2x512xf32>
    %454 = tpu.matmul %448, %355, %cst_206 {dimension_numbers = #tpu.dot_dimension_numbers<[1], [0], [0], [1], [0, 0, 1, 1], [], []>} : vector<2x128xf32>, vector<128x512xf32>, vector<2x512xf32> -> vector<2x512xf32>
    %455 = arith.addf %453, %454 : vector<2x512xf32>
    %456 = vector.extract_strided_slice %455 {offsets = [0, 0], sizes = [2, 128], strides = [1, 1]} : vector<2x512xf32> to vector<2x128xf32>
    %457 = arith.negf %456 : vector<2x128xf32>
    %458 = math.exp %457 : vector<2x128xf32>
    %cst_207 = arith.constant 1.000000e+00 : f32
    %459 = vector.broadcast %cst_207 : f32 to vector<2x128xf32>
    %460 = arith.addf %459, %458 : vector<2x128xf32>
    %461 = arith.divf %459, %460 : vector<2x128xf32>
    %462 = vector.extract_strided_slice %455 {offsets = [0, 128], sizes = [2, 128], strides = [1, 1]} : vector<2x512xf32> to vector<2x128xf32>
    %463 = arith.negf %462 : vector<2x128xf32>
    %464 = math.exp %463 : vector<2x128xf32>
    %cst_208 = arith.constant 1.000000e+00 : f32
    %465 = vector.broadcast %cst_208 : f32 to vector<2x128xf32>
    %466 = arith.addf %465, %464 : vector<2x128xf32>
    %467 = arith.divf %465, %466 : vector<2x128xf32>
    %468 = vector.extract_strided_slice %455 {offsets = [0, 256], sizes = [2, 128], strides = [1, 1]} : vector<2x512xf32> to vector<2x128xf32>
    %469 = math.tanh %468 : vector<2x128xf32>
    %470 = vector.extract_strided_slice %455 {offsets = [0, 384], sizes = [2, 128], strides = [1, 1]} : vector<2x512xf32> to vector<2x128xf32>
    %471 = arith.negf %470 : vector<2x128xf32>
    %472 = math.exp %471 : vector<2x128xf32>
    %cst_209 = arith.constant 1.000000e+00 : f32
    %473 = vector.broadcast %cst_209 : f32 to vector<2x128xf32>
    %474 = arith.addf %473, %472 : vector<2x128xf32>
    %475 = arith.divf %473, %474 : vector<2x128xf32>
    %476 = arith.mulf %467, %446 : vector<2x128xf32>
    %477 = arith.mulf %461, %469 : vector<2x128xf32>
    %478 = arith.addf %476, %477 : vector<2x128xf32>
    %479 = math.tanh %478 : vector<2x128xf32>
    %480 = arith.mulf %475, %479 : vector<2x128xf32>
    %c3_210 = arith.constant 3 : index
    %c0_211 = arith.constant 0 : index
    %c0_212 = arith.constant 0 : index
    %481 = vector.load %arg13[%c3_210, %c0_211, %c0_212] : memref<8x2x128xf32, #tpu.memory_space<vmem>>, vector<1x2x128xf32>
    %482 = vector.shape_cast %481 : vector<1x2x128xf32> to vector<2x128xf32>
    %483 = vector.shape_cast %480 : vector<2x128xf32> to vector<1x2x128xf32>
    tpu.vector_store %arg13[%c3_210, %c0_211, %c0_212], %483 {strides = array<i32>} : memref<8x2x128xf32, #tpu.memory_space<vmem>>, vector<1x2x128xf32>,
    %c4_213 = arith.constant 4 : index
    %c0_214 = arith.constant 0 : index
    %c0_215 = arith.constant 0 : index
    %484 = vector.load %arg12[%c4_213, %c0_214, %c0_215] : memref<8x2x512xf32, #tpu.memory_space<vmem>>, vector<1x2x512xf32>
    %485 = vector.shape_cast %484 : vector<1x2x512xf32> to vector<2x512xf32>
    %cst_216 = arith.constant dense<0.000000e+00> : vector<2x512xf32>
    %486 = tpu.matmul %480, %355, %cst_216 {dimension_numbers = #tpu.dot_dimension_numbers<[1], [0], [0], [1], [0, 0, 1, 1], [], []>} : vector<2x128xf32>, vector<128x512xf32>, vector<2x512xf32> -> vector<2x512xf32>
    %487 = arith.addf %485, %486 : vector<2x512xf32>
    %488 = vector.extract_strided_slice %487 {offsets = [0, 0], sizes = [2, 128], strides = [1, 1]} : vector<2x512xf32> to vector<2x128xf32>
    %489 = arith.negf %488 : vector<2x128xf32>
    %490 = math.exp %489 : vector<2x128xf32>
    %cst_217 = arith.constant 1.000000e+00 : f32
    %491 = vector.broadcast %cst_217 : f32 to vector<2x128xf32>
    %492 = arith.addf %491, %490 : vector<2x128xf32>
    %493 = arith.divf %491, %492 : vector<2x128xf32>
    %494 = vector.extract_strided_slice %487 {offsets = [0, 128], sizes = [2, 128], strides = [1, 1]} : vector<2x512xf32> to vector<2x128xf32>
    %495 = arith.negf %494 : vector<2x128xf32>
    %496 = math.exp %495 : vector<2x128xf32>
    %cst_218 = arith.constant 1.000000e+00 : f32
    %497 = vector.broadcast %cst_218 : f32 to vector<2x128xf32>
    %498 = arith.addf %497, %496 : vector<2x128xf32>
    %499 = arith.divf %497, %498 : vector<2x128xf32>
    %500 = vector.extract_strided_slice %487 {offsets = [0, 256], sizes = [2, 128], strides = [1, 1]} : vector<2x512xf32> to vector<2x128xf32>
    %501 = math.tanh %500 : vector<2x128xf32>
    %502 = vector.extract_strided_slice %487 {offsets = [0, 384], sizes = [2, 128], strides = [1, 1]} : vector<2x512xf32> to vector<2x128xf32>
    %503 = arith.negf %502 : vector<2x128xf32>
    %504 = math.exp %503 : vector<2x128xf32>
    %cst_219 = arith.constant 1.000000e+00 : f32
    %505 = vector.broadcast %cst_219 : f32 to vector<2x128xf32>
    %506 = arith.addf %505, %504 : vector<2x128xf32>
    %507 = arith.divf %505, %506 : vector<2x128xf32>
    %508 = arith.mulf %499, %478 : vector<2x128xf32>
    %509 = arith.mulf %493, %501 : vector<2x128xf32>
    %510 = arith.addf %508, %509 : vector<2x128xf32>
    %511 = math.tanh %510 : vector<2x128xf32>
    %512 = arith.mulf %507, %511 : vector<2x128xf32>
    %c4_220 = arith.constant 4 : index
    %c0_221 = arith.constant 0 : index
    %c0_222 = arith.constant 0 : index
    %513 = vector.load %arg13[%c4_220, %c0_221, %c0_222] : memref<8x2x128xf32, #tpu.memory_space<vmem>>, vector<1x2x128xf32>
    %514 = vector.shape_cast %513 : vector<1x2x128xf32> to vector<2x128xf32>
    %515 = vector.shape_cast %512 : vector<2x128xf32> to vector<1x2x128xf32>
    tpu.vector_store %arg13[%c4_220, %c0_221, %c0_222], %515 {strides = array<i32>} : memref<8x2x128xf32, #tpu.memory_space<vmem>>, vector<1x2x128xf32>,
    %c5_223 = arith.constant 5 : index
    %c0_224 = arith.constant 0 : index
    %c0_225 = arith.constant 0 : index
    %516 = vector.load %arg12[%c5_223, %c0_224, %c0_225] : memref<8x2x512xf32, #tpu.memory_space<vmem>>, vector<1x2x512xf32>
    %517 = vector.shape_cast %516 : vector<1x2x512xf32> to vector<2x512xf32>
    %cst_226 = arith.constant dense<0.000000e+00> : vector<2x512xf32>
    %518 = tpu.matmul %512, %355, %cst_226 {dimension_numbers = #tpu.dot_dimension_numbers<[1], [0], [0], [1], [0, 0, 1, 1], [], []>} : vector<2x128xf32>, vector<128x512xf32>, vector<2x512xf32> -> vector<2x512xf32>
    %519 = arith.addf %517, %518 : vector<2x512xf32>
    %520 = vector.extract_strided_slice %519 {offsets = [0, 0], sizes = [2, 128], strides = [1, 1]} : vector<2x512xf32> to vector<2x128xf32>
    %521 = arith.negf %520 : vector<2x128xf32>
    %522 = math.exp %521 : vector<2x128xf32>
    %cst_227 = arith.constant 1.000000e+00 : f32
    %523 = vector.broadcast %cst_227 : f32 to vector<2x128xf32>
    %524 = arith.addf %523, %522 : vector<2x128xf32>
    %525 = arith.divf %523, %524 : vector<2x128xf32>
    %526 = vector.extract_strided_slice %519 {offsets = [0, 128], sizes = [2, 128], strides = [1, 1]} : vector<2x512xf32> to vector<2x128xf32>
    %527 = arith.negf %526 : vector<2x128xf32>
    %528 = math.exp %527 : vector<2x128xf32>
    %cst_228 = arith.constant 1.000000e+00 : f32
    %529 = vector.broadcast %cst_228 : f32 to vector<2x128xf32>
    %530 = arith.addf %529, %528 : vector<2x128xf32>
    %531 = arith.divf %529, %530 : vector<2x128xf32>
    %532 = vector.extract_strided_slice %519 {offsets = [0, 256], sizes = [2, 128], strides = [1, 1]} : vector<2x512xf32> to vector<2x128xf32>
    %533 = math.tanh %532 : vector<2x128xf32>
    %534 = vector.extract_strided_slice %519 {offsets = [0, 384], sizes = [2, 128], strides = [1, 1]} : vector<2x512xf32> to vector<2x128xf32>
    %535 = arith.negf %534 : vector<2x128xf32>
    %536 = math.exp %535 : vector<2x128xf32>
    %cst_229 = arith.constant 1.000000e+00 : f32
    %537 = vector.broadcast %cst_229 : f32 to vector<2x128xf32>
    %538 = arith.addf %537, %536 : vector<2x128xf32>
    %539 = arith.divf %537, %538 : vector<2x128xf32>
    %540 = arith.mulf %531, %510 : vector<2x128xf32>
    %541 = arith.mulf %525, %533 : vector<2x128xf32>
    %542 = arith.addf %540, %541 : vector<2x128xf32>
    %543 = math.tanh %542 : vector<2x128xf32>
    %544 = arith.mulf %539, %543 : vector<2x128xf32>
    %c5_230 = arith.constant 5 : index
    %c0_231 = arith.constant 0 : index
    %c0_232 = arith.constant 0 : index
    %545 = vector.load %arg13[%c5_230, %c0_231, %c0_232] : memref<8x2x128xf32, #tpu.memory_space<vmem>>, vector<1x2x128xf32>
    %546 = vector.shape_cast %545 : vector<1x2x128xf32> to vector<2x128xf32>
    %547 = vector.shape_cast %544 : vector<2x128xf32> to vector<1x2x128xf32>
    tpu.vector_store %arg13[%c5_230, %c0_231, %c0_232], %547 {strides = array<i32>} : memref<8x2x128xf32, #tpu.memory_space<vmem>>, vector<1x2x128xf32>,
    %c6_233 = arith.constant 6 : index
    %c0_234 = arith.constant 0 : index
    %c0_235 = arith.constant 0 : index
    %548 = vector.load %arg12[%c6_233, %c0_234, %c0_235] : memref<8x2x512xf32, #tpu.memory_space<vmem>>, vector<1x2x512xf32>
    %549 = vector.shape_cast %548 : vector<1x2x512xf32> to vector<2x512xf32>
    %cst_236 = arith.constant dense<0.000000e+00> : vector<2x512xf32>
    %550 = tpu.matmul %544, %355, %cst_236 {dimension_numbers = #tpu.dot_dimension_numbers<[1], [0], [0], [1], [0, 0, 1, 1], [], []>} : vector<2x128xf32>, vector<128x512xf32>, vector<2x512xf32> -> vector<2x512xf32>
    %551 = arith.addf %549, %550 : vector<2x512xf32>
    %552 = vector.extract_strided_slice %551 {offsets = [0, 0], sizes = [2, 128], strides = [1, 1]} : vector<2x512xf32> to vector<2x128xf32>
    %553 = arith.negf %552 : vector<2x128xf32>
    %554 = math.exp %553 : vector<2x128xf32>
    %cst_237 = arith.constant 1.000000e+00 : f32
    %555 = vector.broadcast %cst_237 : f32 to vector<2x128xf32>
    %556 = arith.addf %555, %554 : vector<2x128xf32>
    %557 = arith.divf %555, %556 : vector<2x128xf32>
    %558 = vector.extract_strided_slice %551 {offsets = [0, 128], sizes = [2, 128], strides = [1, 1]} : vector<2x512xf32> to vector<2x128xf32>
    %559 = arith.negf %558 : vector<2x128xf32>
    %560 = math.exp %559 : vector<2x128xf32>
    %cst_238 = arith.constant 1.000000e+00 : f32
    %561 = vector.broadcast %cst_238 : f32 to vector<2x128xf32>
    %562 = arith.addf %561, %560 : vector<2x128xf32>
    %563 = arith.divf %561, %562 : vector<2x128xf32>
    %564 = vector.extract_strided_slice %551 {offsets = [0, 256], sizes = [2, 128], strides = [1, 1]} : vector<2x512xf32> to vector<2x128xf32>
    %565 = math.tanh %564 : vector<2x128xf32>
    %566 = vector.extract_strided_slice %551 {offsets = [0, 384], sizes = [2, 128], strides = [1, 1]} : vector<2x512xf32> to vector<2x128xf32>
    %567 = arith.negf %566 : vector<2x128xf32>
    %568 = math.exp %567 : vector<2x128xf32>
    %cst_239 = arith.constant 1.000000e+00 : f32
    %569 = vector.broadcast %cst_239 : f32 to vector<2x128xf32>
    %570 = arith.addf %569, %568 : vector<2x128xf32>
    %571 = arith.divf %569, %570 : vector<2x128xf32>
    %572 = arith.mulf %563, %542 : vector<2x128xf32>
    %573 = arith.mulf %557, %565 : vector<2x128xf32>
    %574 = arith.addf %572, %573 : vector<2x128xf32>
    %575 = math.tanh %574 : vector<2x128xf32>
    %576 = arith.mulf %571, %575 : vector<2x128xf32>
    %c6_240 = arith.constant 6 : index
    %c0_241 = arith.constant 0 : index
    %c0_242 = arith.constant 0 : index
    %577 = vector.load %arg13[%c6_240, %c0_241, %c0_242] : memref<8x2x128xf32, #tpu.memory_space<vmem>>, vector<1x2x128xf32>
    %578 = vector.shape_cast %577 : vector<1x2x128xf32> to vector<2x128xf32>
    %579 = vector.shape_cast %576 : vector<2x128xf32> to vector<1x2x128xf32>
    tpu.vector_store %arg13[%c6_240, %c0_241, %c0_242], %579 {strides = array<i32>} : memref<8x2x128xf32, #tpu.memory_space<vmem>>, vector<1x2x128xf32>,
    %c7_243 = arith.constant 7 : index
    %c0_244 = arith.constant 0 : index
    %c0_245 = arith.constant 0 : index
    %580 = vector.load %arg12[%c7_243, %c0_244, %c0_245] : memref<8x2x512xf32, #tpu.memory_space<vmem>>, vector<1x2x512xf32>
    %581 = vector.shape_cast %580 : vector<1x2x512xf32> to vector<2x512xf32>
    %cst_246 = arith.constant dense<0.000000e+00> : vector<2x512xf32>
    %582 = tpu.matmul %576, %355, %cst_246 {dimension_numbers = #tpu.dot_dimension_numbers<[1], [0], [0], [1], [0, 0, 1, 1], [], []>} : vector<2x128xf32>, vector<128x512xf32>, vector<2x512xf32> -> vector<2x512xf32>
    %583 = arith.addf %581, %582 : vector<2x512xf32>
    %584 = vector.extract_strided_slice %583 {offsets = [0, 0], sizes = [2, 128], strides = [1, 1]} : vector<2x512xf32> to vector<2x128xf32>
    %585 = arith.negf %584 : vector<2x128xf32>
    %586 = math.exp %585 : vector<2x128xf32>
    %cst_247 = arith.constant 1.000000e+00 : f32
    %587 = vector.broadcast %cst_247 : f32 to vector<2x128xf32>
    %588 = arith.addf %587, %586 : vector<2x128xf32>
    %589 = arith.divf %587, %588 : vector<2x128xf32>
    %590 = vector.extract_strided_slice %583 {offsets = [0, 128], sizes = [2, 128], strides = [1, 1]} : vector<2x512xf32> to vector<2x128xf32>
    %591 = arith.negf %590 : vector<2x128xf32>
    %592 = math.exp %591 : vector<2x128xf32>
    %cst_248 = arith.constant 1.000000e+00 : f32
    %593 = vector.broadcast %cst_248 : f32 to vector<2x128xf32>
    %594 = arith.addf %593, %592 : vector<2x128xf32>
    %595 = arith.divf %593, %594 : vector<2x128xf32>
    %596 = vector.extract_strided_slice %583 {offsets = [0, 256], sizes = [2, 128], strides = [1, 1]} : vector<2x512xf32> to vector<2x128xf32>
    %597 = math.tanh %596 : vector<2x128xf32>
    %598 = vector.extract_strided_slice %583 {offsets = [0, 384], sizes = [2, 128], strides = [1, 1]} : vector<2x512xf32> to vector<2x128xf32>
    %599 = arith.negf %598 : vector<2x128xf32>
    %600 = math.exp %599 : vector<2x128xf32>
    %cst_249 = arith.constant 1.000000e+00 : f32
    %601 = vector.broadcast %cst_249 : f32 to vector<2x128xf32>
    %602 = arith.addf %601, %600 : vector<2x128xf32>
    %603 = arith.divf %601, %602 : vector<2x128xf32>
    %604 = arith.mulf %595, %574 : vector<2x128xf32>
    %605 = arith.mulf %589, %597 : vector<2x128xf32>
    %606 = arith.addf %604, %605 : vector<2x128xf32>
    %607 = math.tanh %606 : vector<2x128xf32>
    %608 = arith.mulf %603, %607 : vector<2x128xf32>
    %c7_250 = arith.constant 7 : index
    %c0_251 = arith.constant 0 : index
    %c0_252 = arith.constant 0 : index
    %609 = vector.load %arg13[%c7_250, %c0_251, %c0_252] : memref<8x2x128xf32, #tpu.memory_space<vmem>>, vector<1x2x128xf32>
    %610 = vector.shape_cast %609 : vector<1x2x128xf32> to vector<2x128xf32>
    %611 = vector.shape_cast %608 : vector<2x128xf32> to vector<1x2x128xf32>
    tpu.vector_store %arg13[%c7_250, %c0_251, %c0_252], %611 {strides = array<i32>} : memref<8x2x128xf32, #tpu.memory_space<vmem>>, vector<1x2x128xf32>,
    %c0_253 = arith.constant 0 : index
    %c0_254 = arith.constant 0 : index
    %612 = vector.load %arg9[%c0_253, %c0_254] : memref<1x128xf32, #tpu.memory_space<vmem>>, vector<1x128xf32>
    %613 = vector.shape_cast %612 : vector<1x128xf32> to vector<1x128xf32>
    %614 = vector.broadcast %613 : vector<1x128xf32> to vector<2x128xf32>
    %c0_255 = arith.constant 0 : index
    %c0_256 = arith.constant 0 : index
    %615 = vector.load %arg8[%c0_255, %c0_256] : memref<128x128xf32, #tpu.memory_space<vmem>>, vector<128x128xf32>
    %c0_257 = arith.constant 0 : index
    %c0_258 = arith.constant 0 : index
    %c0_259 = arith.constant 0 : index
    %616 = vector.load %arg13[%c0_257, %c0_258, %c0_259] : memref<8x2x128xf32, #tpu.memory_space<vmem>>, vector<1x2x128xf32>
    %617 = vector.shape_cast %616 : vector<1x2x128xf32> to vector<2x128xf32>
    %cst_260 = arith.constant dense<0.000000e+00> : vector<2x128xf32>
    %618 = tpu.matmul %617, %615, %cst_260 {dimension_numbers = #tpu.dot_dimension_numbers<[1], [0], [0], [1], [0, 0, 1, 1], [], []>} : vector<2x128xf32>, vector<128x128xf32>, vector<2x128xf32> -> vector<2x128xf32>
    %619 = arith.addf %618, %614 : vector<2x128xf32>
    %c0_261 = arith.constant 0 : index
    %c0_262 = arith.constant 0 : index
    %c0_263 = arith.constant 0 : index
    %620 = vector.load %arg10[%c0_261, %c0_262, %c0_263] : memref<8x2x128xf32, #tpu.memory_space<vmem>>, vector<1x2x128xf32>
    %621 = vector.shape_cast %620 : vector<1x2x128xf32> to vector<2x128xf32>
    %622 = vector.shape_cast %619 : vector<2x128xf32> to vector<1x2x128xf32>
    tpu.vector_store %arg10[%c0_261, %c0_262, %c0_263], %622 {strides = array<i32>} : memref<8x2x128xf32, #tpu.memory_space<vmem>>, vector<1x2x128xf32>,
    %c1_264 = arith.constant 1 : index
    %c0_265 = arith.constant 0 : index
    %c0_266 = arith.constant 0 : index
    %623 = vector.load %arg13[%c1_264, %c0_265, %c0_266] : memref<8x2x128xf32, #tpu.memory_space<vmem>>, vector<1x2x128xf32>
    %624 = vector.shape_cast %623 : vector<1x2x128xf32> to vector<2x128xf32>
    %cst_267 = arith.constant dense<0.000000e+00> : vector<2x128xf32>
    %625 = tpu.matmul %624, %615, %cst_267 {dimension_numbers = #tpu.dot_dimension_numbers<[1], [0], [0], [1], [0, 0, 1, 1], [], []>} : vector<2x128xf32>, vector<128x128xf32>, vector<2x128xf32> -> vector<2x128xf32>
    %626 = arith.addf %625, %614 : vector<2x128xf32>
    %c1_268 = arith.constant 1 : index
    %c0_269 = arith.constant 0 : index
    %c0_270 = arith.constant 0 : index
    %627 = vector.load %arg10[%c1_268, %c0_269, %c0_270] : memref<8x2x128xf32, #tpu.memory_space<vmem>>, vector<1x2x128xf32>
    %628 = vector.shape_cast %627 : vector<1x2x128xf32> to vector<2x128xf32>
    %629 = vector.shape_cast %626 : vector<2x128xf32> to vector<1x2x128xf32>
    tpu.vector_store %arg10[%c1_268, %c0_269, %c0_270], %629 {strides = array<i32>} : memref<8x2x128xf32, #tpu.memory_space<vmem>>, vector<1x2x128xf32>,
    %c2_271 = arith.constant 2 : index
    %c0_272 = arith.constant 0 : index
    %c0_273 = arith.constant 0 : index
    %630 = vector.load %arg13[%c2_271, %c0_272, %c0_273] : memref<8x2x128xf32, #tpu.memory_space<vmem>>, vector<1x2x128xf32>
    %631 = vector.shape_cast %630 : vector<1x2x128xf32> to vector<2x128xf32>
    %cst_274 = arith.constant dense<0.000000e+00> : vector<2x128xf32>
    %632 = tpu.matmul %631, %615, %cst_274 {dimension_numbers = #tpu.dot_dimension_numbers<[1], [0], [0], [1], [0, 0, 1, 1], [], []>} : vector<2x128xf32>, vector<128x128xf32>, vector<2x128xf32> -> vector<2x128xf32>
    %633 = arith.addf %632, %614 : vector<2x128xf32>
    %c2_275 = arith.constant 2 : index
    %c0_276 = arith.constant 0 : index
    %c0_277 = arith.constant 0 : index
    %634 = vector.load %arg10[%c2_275, %c0_276, %c0_277] : memref<8x2x128xf32, #tpu.memory_space<vmem>>, vector<1x2x128xf32>
    %635 = vector.shape_cast %634 : vector<1x2x128xf32> to vector<2x128xf32>
    %636 = vector.shape_cast %633 : vector<2x128xf32> to vector<1x2x128xf32>
    tpu.vector_store %arg10[%c2_275, %c0_276, %c0_277], %636 {strides = array<i32>} : memref<8x2x128xf32, #tpu.memory_space<vmem>>, vector<1x2x128xf32>,
    %c3_278 = arith.constant 3 : index
    %c0_279 = arith.constant 0 : index
    %c0_280 = arith.constant 0 : index
    %637 = vector.load %arg13[%c3_278, %c0_279, %c0_280] : memref<8x2x128xf32, #tpu.memory_space<vmem>>, vector<1x2x128xf32>
    %638 = vector.shape_cast %637 : vector<1x2x128xf32> to vector<2x128xf32>
    %cst_281 = arith.constant dense<0.000000e+00> : vector<2x128xf32>
    %639 = tpu.matmul %638, %615, %cst_281 {dimension_numbers = #tpu.dot_dimension_numbers<[1], [0], [0], [1], [0, 0, 1, 1], [], []>} : vector<2x128xf32>, vector<128x128xf32>, vector<2x128xf32> -> vector<2x128xf32>
    %640 = arith.addf %639, %614 : vector<2x128xf32>
    %c3_282 = arith.constant 3 : index
    %c0_283 = arith.constant 0 : index
    %c0_284 = arith.constant 0 : index
    %641 = vector.load %arg10[%c3_282, %c0_283, %c0_284] : memref<8x2x128xf32, #tpu.memory_space<vmem>>, vector<1x2x128xf32>
    %642 = vector.shape_cast %641 : vector<1x2x128xf32> to vector<2x128xf32>
    %643 = vector.shape_cast %640 : vector<2x128xf32> to vector<1x2x128xf32>
    tpu.vector_store %arg10[%c3_282, %c0_283, %c0_284], %643 {strides = array<i32>} : memref<8x2x128xf32, #tpu.memory_space<vmem>>, vector<1x2x128xf32>,
    %c4_285 = arith.constant 4 : index
    %c0_286 = arith.constant 0 : index
    %c0_287 = arith.constant 0 : index
    %644 = vector.load %arg13[%c4_285, %c0_286, %c0_287] : memref<8x2x128xf32, #tpu.memory_space<vmem>>, vector<1x2x128xf32>
    %645 = vector.shape_cast %644 : vector<1x2x128xf32> to vector<2x128xf32>
    %cst_288 = arith.constant dense<0.000000e+00> : vector<2x128xf32>
    %646 = tpu.matmul %645, %615, %cst_288 {dimension_numbers = #tpu.dot_dimension_numbers<[1], [0], [0], [1], [0, 0, 1, 1], [], []>} : vector<2x128xf32>, vector<128x128xf32>, vector<2x128xf32> -> vector<2x128xf32>
    %647 = arith.addf %646, %614 : vector<2x128xf32>
    %c4_289 = arith.constant 4 : index
    %c0_290 = arith.constant 0 : index
    %c0_291 = arith.constant 0 : index
    %648 = vector.load %arg10[%c4_289, %c0_290, %c0_291] : memref<8x2x128xf32, #tpu.memory_space<vmem>>, vector<1x2x128xf32>
    %649 = vector.shape_cast %648 : vector<1x2x128xf32> to vector<2x128xf32>
    %650 = vector.shape_cast %647 : vector<2x128xf32> to vector<1x2x128xf32>
    tpu.vector_store %arg10[%c4_289, %c0_290, %c0_291], %650 {strides = array<i32>} : memref<8x2x128xf32, #tpu.memory_space<vmem>>, vector<1x2x128xf32>,
    %c5_292 = arith.constant 5 : index
    %c0_293 = arith.constant 0 : index
    %c0_294 = arith.constant 0 : index
    %651 = vector.load %arg13[%c5_292, %c0_293, %c0_294] : memref<8x2x128xf32, #tpu.memory_space<vmem>>, vector<1x2x128xf32>
    %652 = vector.shape_cast %651 : vector<1x2x128xf32> to vector<2x128xf32>
    %cst_295 = arith.constant dense<0.000000e+00> : vector<2x128xf32>
    %653 = tpu.matmul %652, %615, %cst_295 {dimension_numbers = #tpu.dot_dimension_numbers<[1], [0], [0], [1], [0, 0, 1, 1], [], []>} : vector<2x128xf32>, vector<128x128xf32>, vector<2x128xf32> -> vector<2x128xf32>
    %654 = arith.addf %653, %614 : vector<2x128xf32>
    %c5_296 = arith.constant 5 : index
    %c0_297 = arith.constant 0 : index
    %c0_298 = arith.constant 0 : index
    %655 = vector.load %arg10[%c5_296, %c0_297, %c0_298] : memref<8x2x128xf32, #tpu.memory_space<vmem>>, vector<1x2x128xf32>
    %656 = vector.shape_cast %655 : vector<1x2x128xf32> to vector<2x128xf32>
    %657 = vector.shape_cast %654 : vector<2x128xf32> to vector<1x2x128xf32>
    tpu.vector_store %arg10[%c5_296, %c0_297, %c0_298], %657 {strides = array<i32>} : memref<8x2x128xf32, #tpu.memory_space<vmem>>, vector<1x2x128xf32>,
    %c6_299 = arith.constant 6 : index
    %c0_300 = arith.constant 0 : index
    %c0_301 = arith.constant 0 : index
    %658 = vector.load %arg13[%c6_299, %c0_300, %c0_301] : memref<8x2x128xf32, #tpu.memory_space<vmem>>, vector<1x2x128xf32>
    %659 = vector.shape_cast %658 : vector<1x2x128xf32> to vector<2x128xf32>
    %cst_302 = arith.constant dense<0.000000e+00> : vector<2x128xf32>
    %660 = tpu.matmul %659, %615, %cst_302 {dimension_numbers = #tpu.dot_dimension_numbers<[1], [0], [0], [1], [0, 0, 1, 1], [], []>} : vector<2x128xf32>, vector<128x128xf32>, vector<2x128xf32> -> vector<2x128xf32>
    %661 = arith.addf %660, %614 : vector<2x128xf32>
    %c6_303 = arith.constant 6 : index
    %c0_304 = arith.constant 0 : index
    %c0_305 = arith.constant 0 : index
    %662 = vector.load %arg10[%c6_303, %c0_304, %c0_305] : memref<8x2x128xf32, #tpu.memory_space<vmem>>, vector<1x2x128xf32>
    %663 = vector.shape_cast %662 : vector<1x2x128xf32> to vector<2x128xf32>
    %664 = vector.shape_cast %661 : vector<2x128xf32> to vector<1x2x128xf32>
    tpu.vector_store %arg10[%c6_303, %c0_304, %c0_305], %664 {strides = array<i32>} : memref<8x2x128xf32, #tpu.memory_space<vmem>>, vector<1x2x128xf32>,
    %c7_306 = arith.constant 7 : index
    %c0_307 = arith.constant 0 : index
    %c0_308 = arith.constant 0 : index
    %665 = vector.load %arg13[%c7_306, %c0_307, %c0_308] : memref<8x2x128xf32, #tpu.memory_space<vmem>>, vector<1x2x128xf32>
    %666 = vector.shape_cast %665 : vector<1x2x128xf32> to vector<2x128xf32>
    %cst_309 = arith.constant dense<0.000000e+00> : vector<2x128xf32>
    %667 = tpu.matmul %666, %615, %cst_309 {dimension_numbers = #tpu.dot_dimension_numbers<[1], [0], [0], [1], [0, 0, 1, 1], [], []>} : vector<2x128xf32>, vector<128x128xf32>, vector<2x128xf32> -> vector<2x128xf32>
    %668 = arith.addf %667, %614 : vector<2x128xf32>
    %c7_310 = arith.constant 7 : index
    %c0_311 = arith.constant 0 : index
    %c0_312 = arith.constant 0 : index
    %669 = vector.load %arg10[%c7_310, %c0_311, %c0_312] : memref<8x2x128xf32, #tpu.memory_space<vmem>>, vector<1x2x128xf32>
    %670 = vector.shape_cast %669 : vector<1x2x128xf32> to vector<2x128xf32>
    %671 = vector.shape_cast %668 : vector<2x128xf32> to vector<1x2x128xf32>
    tpu.vector_store %arg10[%c7_310, %c0_311, %c0_312], %671 {strides = array<i32>} : memref<8x2x128xf32, #tpu.memory_space<vmem>>, vector<1x2x128xf32>,
    return
  }
}

</mosaic_0001>

<llo_original>
// kernel: s2s_forward.1
$region0: #{s2s_forward.1}
  #allocation0 [shape = 'u32[]', space=smem, size = 0x4, offset = 0x4, fixed_abs, tag = 'smem constant byte address 0x4 - core index']
  #allocation1 [shape = 'u32[144,128]{1,0:T(1,128)}', space=vmem, size = 0x12000, scoped, tag = 'internal scratch']
  #allocation2 [shape = 'f32[8,2,512]{2,1,0:T(2,128)}', space=vmem, size = 0x8000, scoped, tag = 'scratch operand']
  #allocation3 [shape = 'f32[8,2,512]{2,1,0:T(2,128)}', space=vmem, size = 0x8000, scoped, tag = 'scratch operand']
  #allocation4 [shape = 'f32[8,2,128]{2,1,0:T(2,128)}', space=vmem, size = 0x2000, scoped, tag = 'scratch operand']
  %s0 = inlined_call_operand.vmem [shape: f32[8,2,32], index: 0, kind: input, shape index: {}]
  %s1 = inlined_call_operand.vmem [shape: f32[8,2,32], index: 1, kind: input, shape index: {}]
  %s2 = inlined_call_operand.hbm [shape: f32[32,512], index: 2, kind: input, shape index: {}]
  %s3 = inlined_call_operand.vmem [shape: f32[128,512], index: 3, kind: input, shape index: {}]
  %s4 = inlined_call_operand.vmem [shape: f32[1,512], index: 4, kind: input, shape index: {}]
  %s5 = inlined_call_operand.hbm [shape: f32[32,512], index: 5, kind: input, shape index: {}]
  %s6 = inlined_call_operand.hbm [shape: f32[128,512], index: 6, kind: input, shape index: {}]
  %s7 = inlined_call_operand.vmem [shape: f32[1,512], index: 7, kind: input, shape index: {}]
  %s8 = inlined_call_operand.hbm [shape: f32[128,128], index: 8, kind: input, shape index: {}]
  %s9 = inlined_call_operand.vmem [shape: f32[1,128], index: 9, kind: input, shape index: {}]
  %s10 = inlined_call_operand.hbm [shape: f32[8,2,128], index: 10, kind: output, shape index: {}]
  %s11 = sld [smem:[#allocation0]]
  $region66: #{s2s_forward.1} parent=0
    _
  %s13 = ssub.s32 1, %s11
  %s14 = scalar_select 0, %s13, %s11
  $region1: #{s2s_forward.1} parent=0
    #allocation5 [shape = 'u8[65536]{0}', space=vmem, size = 0x10000, scoped, tag = 'input window, operand 2, single buffered']
    #allocation6 [shape = 's32[1]{0}', space=sflag, size = 0x4, scoped, tag = 'scoped memory for s2s_forward.1']
    #allocation7 [shape = 's32[1]{0}', space=sflag, size = 0x4, scoped, tag = 'scoped memory for s2s_forward.1']
    #allocation8 [shape = 'u8[65536]{0}', space=vmem, size = 0x10000, scoped, tag = 'input window, operand 5, single buffered']
    #allocation9 [shape = 's32[1]{0}', space=sflag, size = 0x4, scoped, tag = 'scoped memory for s2s_forward.1']
    #allocation10 [shape = 'u8[262144]{0}', space=vmem, size = 0x40000, scoped, tag = 'input window, operand 6, single buffered']
    #allocation11 [shape = 'u8[65536]{0}', space=vmem, size = 0x10000, scoped, tag = 'input window, operand 8, single buffered']
    #allocation12 [shape = 's32[1]{0}', space=sflag, size = 0x4, scoped, tag = 'scoped memory for s2s_forward.1']
    #allocation13 [shape = 'u8[8192]{0}', space=vmem, size = 0x2000, scoped, tag = 'output window, operand 0, single buffered']
    %15 = vsyncpa [#allocation6], 0
    %16 = vsyncpa [#allocation9], 0
    %17 = vsyncpa [#allocation12], 0
    %18 = vsyncpa [#allocation7], 0
    // Predicated region
    $region2: #{s2s_forward.1} parent=1 // pred_check
      _
    $region3: #{s2s_forward.1} parent=1 // pred_check_branch
      %20 = sbr.rel (0) target = $region5
    $region4: #{s2s_forward.1} parent=1 // pred_region
      _
    $region5: #{s2s_forward.1} parent=1 // pred_fallthru
      _
    // Predicated region
    $region6: #{s2s_forward.1} parent=1 // pred_check
      _
    $region7: #{s2s_forward.1} parent=1 // pred_check_branch
      %22 = sbr.rel (0) target = $region9
    $region8: #{s2s_forward.1} parent=1 // pred_region
      _
    $region9: #{s2s_forward.1} parent=1 // pred_fallthru
      _
    // Predicated region
    $region10: #{s2s_forward.1} parent=1 // pred_check
      _
    $region11: #{s2s_forward.1} parent=1 // pred_check_branch
      %24 = sbr.rel (0) target = $region13
    $region12: #{s2s_forward.1} parent=1 // pred_region
      %s26 = ssub.s32 2048, 2048
      %27 = vsyncadd [#allocation6], %s26
      %s28 = sshll.u32 [#allocation5], 4
      %s29 = int_to_ptr.vmem [resolvable:$true] %s28
      %34 = dma.hbm_to_vmem [thread:$0]  %s2, 2048, %s29, [#allocation6], 512, 512, 32
    $region13: #{s2s_forward.1} parent=1 // pred_fallthru
      _
    // Predicated region
    $region14: #{s2s_forward.1} parent=1 // pred_check
      _
    $region15: #{s2s_forward.1} parent=1 // pred_check_branch
      %36 = sbr.rel (0) target = $region17
    $region16: #{s2s_forward.1} parent=1 // pred_region
      _
    $region17: #{s2s_forward.1} parent=1 // pred_fallthru
      _
    // Predicated region
    $region18: #{s2s_forward.1} parent=1 // pred_check
      _
    $region19: #{s2s_forward.1} parent=1 // pred_check_branch
      %38 = sbr.rel (0) target = $region21
    $region20: #{s2s_forward.1} parent=1 // pred_region
      _
    $region21: #{s2s_forward.1} parent=1 // pred_fallthru
      _
    // Predicated region
    $region22: #{s2s_forward.1} parent=1 // pred_check
      _
    $region23: #{s2s_forward.1} parent=1 // pred_check_branch
      %40 = sbr.rel (0) target = $region25
    $region24: #{s2s_forward.1} parent=1 // pred_region
      %s42 = ssub.s32 2048, 2048
      %43 = vsyncadd [#allocation9], %s42
      %s44 = sshll.u32 [#allocation8], 4
      %s45 = int_to_ptr.vmem [resolvable:$true] %s44
      %50 = dma.hbm_to_vmem [thread:$0]  %s5, 2048, %s45, [#allocation9], 512, 512, 32
    $region25: #{s2s_forward.1} parent=1 // pred_fallthru
      _
    // Predicated region
    $region26: #{s2s_forward.1} parent=1 // pred_check
      _
    $region27: #{s2s_forward.1} parent=1 // pred_check_branch
      %52 = sbr.rel (0) target = $region29
    $region28: #{s2s_forward.1} parent=1 // pred_region
      %s54 = ssub.s32 8192, 8192
      %55 = vsyncadd [#allocation9], %s54
      %s56 = sshll.u32 [#allocation10], 4
      %s57 = int_to_ptr.vmem [resolvable:$true] %s56
      %62 = dma.hbm_to_vmem [thread:$0]  %s6, 8192, %s57, [#allocation9], 512, 512, 32
    $region29: #{s2s_forward.1} parent=1 // pred_fallthru
      _
    // Predicated region
    $region30: #{s2s_forward.1} parent=1 // pred_check
      _
    $region31: #{s2s_forward.1} parent=1 // pred_check_branch
      %64 = sbr.rel (0) target = $region33
    $region32: #{s2s_forward.1} parent=1 // pred_region
      _
    $region33: #{s2s_forward.1} parent=1 // pred_fallthru
      _
    // Predicated region
    $region34: #{s2s_forward.1} parent=1 // pred_check
      _
    $region35: #{s2s_forward.1} parent=1 // pred_check_branch
      %66 = sbr.rel (0) target = $region37
    $region36: #{s2s_forward.1} parent=1 // pred_region
      %s68 = ssub.s32 2048, 2048
      %69 = vsyncadd [#allocation12], %s68
      %s70 = sshll.u32 [#allocation11], 4
      %s71 = int_to_ptr.vmem [resolvable:$true] %s70
      %76 = dma.hbm_to_vmem [thread:$0]  %s8, 2048, %s71, [#allocation12], 128, 128, 8
    $region37: #{s2s_forward.1} parent=1 // pred_fallthru
      _
    // Predicated region
    $region38: #{s2s_forward.1} parent=1 // pred_check
      _
    $region39: #{s2s_forward.1} parent=1 // pred_check_branch
      %78 = sbr.rel (0) target = $region41
    $region40: #{s2s_forward.1} parent=1 // pred_region
      _
    $region41: #{s2s_forward.1} parent=1 // pred_fallthru
      _
    // Predicated region
    $region42: #{s2s_forward.1} parent=1 // pred_check
      _
    $region43: #{s2s_forward.1} parent=1 // pred_check_branch
      %80 = sbr.rel (0) target = $region45
    $region44: #{s2s_forward.1} parent=1 // pred_region
      %81 = dma.done [#allocation6], 2048
    $region45: #{s2s_forward.1} parent=1 // pred_fallthru
      _
    // Predicated region
    $region46: #{s2s_forward.1} parent=1 // pred_check
      _
    $region47: #{s2s_forward.1} parent=1 // pred_check_branch
      %83 = sbr.rel (0) target = $region49
    $region48: #{s2s_forward.1} parent=1 // pred_region
      %84 = dma.done [#allocation9], 2048
    $region49: #{s2s_forward.1} parent=1 // pred_fallthru
      _
    // Predicated region
    $region50: #{s2s_forward.1} parent=1 // pred_check
      _
    $region51: #{s2s_forward.1} parent=1 // pred_check_branch
      %86 = sbr.rel (0) target = $region53
    $region52: #{s2s_forward.1} parent=1 // pred_region
      %87 = dma.done [#allocation9], 8192
    $region53: #{s2s_forward.1} parent=1 // pred_fallthru
      _
    // Predicated region
    $region54: #{s2s_forward.1} parent=1 // pred_check
      _
    $region55: #{s2s_forward.1} parent=1 // pred_check_branch
      %89 = sbr.rel (0) target = $region57
    $region56: #{s2s_forward.1} parent=1 // pred_region
      %90 = dma.done [#allocation12], 2048
    $region57: #{s2s_forward.1} parent=1 // pred_fallthru
      _
    %v91 = vld [vmem:[%s4] sm:$0xf]
    %v93 = vlaneseq
    %v94 = vshrl.u32 %v93, 7
    %v95 = vsub.s32 0, %v94
    %v96 = vrot.slane %v91, %v95
    %v97 = vlaneseq
    %v98 = vshrl.u32 %v97, 7
    %v99 = vsub.s32 1, %v98
    %v100 = vrot.slane %v91, %v99
    %v101 = vlaneseq
    %v102 = vshrl.u32 %v101, 7
    %v103 = vsub.s32 2, %v102
    %v104 = vrot.slane %v91, %v103
    %v105 = vlaneseq
    %v106 = vshrl.u32 %v105, 7
    %v107 = vsub.s32 3, %v106
    %v108 = vrot.slane %v91, %v107
    %v113 = vld [vmem:[%s7] sm:$0xf]
    %v115 = vlaneseq
    %v116 = vshrl.u32 %v115, 7
    %v117 = vsub.s32 0, %v116
    %v118 = vrot.slane %v113, %v117
    %v119 = vlaneseq
    %v120 = vshrl.u32 %v119, 7
    %v121 = vsub.s32 1, %v120
    %v122 = vrot.slane %v113, %v121
    %v123 = vlaneseq
    %v124 = vshrl.u32 %v123, 7
    %v125 = vsub.s32 2, %v124
    %v126 = vrot.slane %v113, %v125
    %v127 = vlaneseq
    %v128 = vshrl.u32 %v127, 7
    %v129 = vsub.s32 3, %v128
    %v130 = vrot.slane %v113, %v129
    %v135 = vld [vmem:[#allocation5] sm:$0xff]
    %v136 = vld [vmem:[#allocation5 + $0x8] sm:$0xff]
    %v137 = vld [vmem:[#allocation5 + $0x10] sm:$0xff]
    %v138 = vld [vmem:[#allocation5 + $0x18] sm:$0xff]
    %v139 = vld [vmem:[#allocation5 + $0x20] sm:$0xff]
    %v140 = vld [vmem:[#allocation5 + $0x28] sm:$0xff]
    %v141 = vld [vmem:[#allocation5 + $0x30] sm:$0xff]
    %v142 = vld [vmem:[#allocation5 + $0x38] sm:$0xff]
    %v143 = vld [vmem:[#allocation5 + $0x40] sm:$0xff]
    %v144 = vld [vmem:[#allocation5 + $0x48] sm:$0xff]
    %v145 = vld [vmem:[#allocation5 + $0x50] sm:$0xff]
    %v146 = vld [vmem:[#allocation5 + $0x58] sm:$0xff]
    %v147 = vld [vmem:[#allocation5 + $0x60] sm:$0xff]
    %v148 = vld [vmem:[#allocation5 + $0x68] sm:$0xff]
    %v149 = vld [vmem:[#allocation5 + $0x70] sm:$0xff]
    %v150 = vld [vmem:[#allocation5 + $0x78] sm:$0xff]
    %v151 = vld [vmem:[#allocation8] sm:$0xff]
    %v152 = vld [vmem:[#allocation8 + $0x8] sm:$0xff]
    %v153 = vld [vmem:[#allocation8 + $0x10] sm:$0xff]
    %v154 = vld [vmem:[#allocation8 + $0x18] sm:$0xff]
    %v155 = vld [vmem:[#allocation8 + $0x20] sm:$0xff]
    %v156 = vld [vmem:[#allocation8 + $0x28] sm:$0xff]
    %v157 = vld [vmem:[#allocation8 + $0x30] sm:$0xff]
    %v158 = vld [vmem:[#allocation8 + $0x38] sm:$0xff]
    %v159 = vld [vmem:[#allocation8 + $0x40] sm:$0xff]
    %v160 = vld [vmem:[#allocation8 + $0x48] sm:$0xff]
    %v161 = vld [vmem:[#allocation8 + $0x50] sm:$0xff]
    %v162 = vld [vmem:[#allocation8 + $0x58] sm:$0xff]
    %v163 = vld [vmem:[#allocation8 + $0x60] sm:$0xff]
    %v164 = vld [vmem:[#allocation8 + $0x68] sm:$0xff]
    %v165 = vld [vmem:[#allocation8 + $0x70] sm:$0xff]
    %v166 = vld [vmem:[#allocation8 + $0x78] sm:$0xff]
    %v167 = vld [vmem:[%s0] sm:$0x3]
    %vm168 = vcmask 261120
    %v170 = vsel %vm168, %v167, 0
    %172 = vmatprep.subr.mxu0 %v136
    %173 = vmatpush1.msra.mxu0 %v135
    %174 = vmatprep.subr.mxu0 %v140
    %175 = vmatpush1.msra.mxu0 %v139
    %176 = vmatprep.subr.mxu0 %v144
    %177 = vmatpush1.msra.mxu0 %v143
    %178 = vmatprep.subr.mxu0 %v148
    %179 = vmatpush1.msra.mxu0 %v147
    %180 = vmatprep.subr.mxu0 0.0
    %181 = vmatpush1.msra.mxu0 0.0
    %182 = vmatprep.subr.mxu0 0.0
    %183 = vmatpush1.msra.mxu0 0.0
    %184 = vmatprep.subr.mxu0 0.0
    %185 = vmatpush1.msra.mxu0 0.0
    %186 = vmatprep.subr.mxu0 0.0
    %187 = vmatpush1.msra.mxu0 0.0
    %188 = vmatprep.subr.mxu0 0.0
    %189 = vmatpush1.msra.mxu0 0.0
    %190 = vmatprep.subr.mxu0 0.0
    %191 = vmatpush1.msra.mxu0 0.0
    %192 = vmatprep.subr.mxu0 0.0
    %193 = vmatpush1.msra.mxu0 0.0
    %194 = vmatprep.subr.mxu0 0.0
    %195 = vmatpush1.msra.mxu0 0.0
    %196 = vmatprep.subr.mxu0 0.0
    %197 = vmatpush1.msra.mxu0 0.0
    %198 = vmatprep.subr.mxu0 0.0
    %199 = vmatpush1.msra.mxu0 0.0
    %200 = vmatprep.subr.mxu0 0.0
    %201 = vmatpush1.msra.mxu0 0.0
    %202 = vmatprep.subr.mxu0 0.0
    %203 = vmatpush1.msra.mxu0 0.0
    %204 = vmatprep.subr.mxu0 0.0
    %205 = vmatpush1.msra.mxu0 0.0
    %206 = vmatprep.subr.mxu0 0.0
    %207 = vmatpush1.msra.mxu0 0.0
    %208 = vmatprep.subr.mxu0 0.0
    %209 = vmatpush1.msra.mxu0 0.0
    %210 = vmatprep.subr.mxu0 0.0
    %211 = vmatpush1.msra.mxu0 0.0
    %212 = vmatprep.subr.mxu0 0.0
    %213 = vmatpush1.msra.mxu0 0.0
    %214 = vmatprep.subr.mxu0 0.0
    %215 = vmatpush1.msra.mxu0 0.0
    %216 = vmatprep.subr.mxu0 0.0
    %217 = vmatpush1.msra.mxu0 0.0
    %218 = vmatprep.subr.mxu0 0.0
    %219 = vmatpush1.msra.mxu0 0.0
    %220 = vmatprep.subr.mxu0 0.0
    %221 = vmatpush1.msra.mxu0 0.0
    %222 = vmatprep.subr.mxu0 0.0
    %223 = vmatpush1.msra.mxu0 0.0
    %224 = vmatprep.subr.mxu0 0.0
    %225 = vmatpush1.msra.mxu0 0.0
    %226 = vmatprep.subr.mxu0 0.0
    %227 = vmatpush1.msra.mxu0 0.0
    %228 = vmatprep.subr.mxu0 0.0
    %229 = vmatpush1.msra.mxu0 0.0
    %230 = vmatprep.subr.mxu0 0.0
    %231 = vmatpush1.msra.mxu0 0.0
    %232 = vmatprep.subr.mxu0 0.0
    %233 = vmatpush1.msra.mxu0 0.0
    %234 = vmatprep.subr.mxu0 0.0
    %235 = vmatpush1.msra.mxu0 0.0
    %236 = vmatprep.mubr.f32.mxu0 0.0
    %237 = vmatmul.mubr.f32.gmra.mrb[0].mxu0 %v170
    %v238 = vpop.f32.mrb[0].mxu0
    %v239 = vadd.f32 %v96, %v238
    %v240 = vpop.f32.mrb[0].mxu0
    %v241 = vadd.f32 %v100, %v240
    %242 = vdwg.mxu0
    %243 = vmatprep.subr.mxu0 %v138
    %244 = vmatpush1.msra.mxu0 %v137
    %245 = vmatprep.subr.mxu0 %v142
    %246 = vmatpush1.msra.mxu0 %v141
    %247 = vmatprep.subr.mxu0 %v146
    %248 = vmatpush1.msra.mxu0 %v145
    %249 = vmatprep.subr.mxu0 %v150
    %250 = vmatpush1.msra.mxu0 %v149
    %251 = vmatprep.subr.mxu0 0.0
    %252 = vmatpush1.msra.mxu0 0.0
    %253 = vmatprep.subr.mxu0 0.0
    %254 = vmatpush1.msra.mxu0 0.0
    %255 = vmatprep.subr.mxu0 0.0
    %256 = vmatpush1.msra.mxu0 0.0
    %257 = vmatprep.subr.mxu0 0.0
    %258 = vmatpush1.msra.mxu0 0.0
    %259 = vmatprep.subr.mxu0 0.0
    %260 = vmatpush1.msra.mxu0 0.0
    %261 = vmatprep.subr.mxu0 0.0
    %262 = vmatpush1.msra.mxu0 0.0
    %263 = vmatprep.subr.mxu0 0.0
    %264 = vmatpush1.msra.mxu0 0.0
    %265 = vmatprep.subr.mxu0 0.0
    %266 = vmatpush1.msra.mxu0 0.0
    %267 = vmatprep.subr.mxu0 0.0
    %268 = vmatpush1.msra.mxu0 0.0
    %269 = vmatprep.subr.mxu0 0.0
    %270 = vmatpush1.msra.mxu0 0.0
    %271 = vmatprep.subr.mxu0 0.0
    %272 = vmatpush1.msra.mxu0 0.0
    %273 = vmatprep.subr.mxu0 0.0
    %274 = vmatpush1.msra.mxu0 0.0
    %275 = vmatprep.subr.mxu0 0.0
    %276 = vmatpush1.msra.mxu0 0.0
    %277 = vmatprep.subr.mxu0 0.0
    %278 = vmatpush1.msra.mxu0 0.0
    %279 = vmatprep.subr.mxu0 0.0
    %280 = vmatpush1.msra.mxu0 0.0
    %281 = vmatprep.subr.mxu0 0.0
    %282 = vmatpush1.msra.mxu0 0.0
    %283 = vmatprep.subr.mxu0 0.0
    %284 = vmatpush1.msra.mxu0 0.0
    %285 = vmatprep.subr.mxu0 0.0
    %286 = vmatpush1.msra.mxu0 0.0
    %287 = vmatprep.subr.mxu0 0.0
    %288 = vmatpush1.msra.mxu0 0.0
    %289 = vmatprep.subr.mxu0 0.0
    %290 = vmatpush1.msra.mxu0 0.0
    %291 = vmatprep.subr.mxu0 0.0
    %292 = vmatpush1.msra.mxu0 0.0
    %293 = vmatprep.subr.mxu0 0.0
    %294 = vmatpush1.msra.mxu0 0.0
    %295 = vmatprep.subr.mxu0 0.0
    %296 = vmatpush1.msra.mxu0 0.0
    %297 = vmatprep.subr.mxu0 0.0
    %298 = vmatpush1.msra.mxu0 0.0
    %299 = vmatprep.subr.mxu0 0.0
    %300 = vmatpush1.msra.mxu0 0.0
    %301 = vmatprep.subr.mxu0 0.0
    %302 = vmatpush1.msra.mxu0 0.0
    %303 = vmatprep.subr.mxu0 0.0
    %304 = vmatpush1.msra.mxu0 0.0
    %305 = vmatprep.subr.mxu0 0.0
    %306 = vmatpush1.msra.mxu0 0.0
    %307 = vmatprep.mubr.f32.mxu0 0.0
    %308 = vmatmul.mubr.f32.gmra.mrb[0].mxu0 %v170
    %v309 = vpop.f32.mrb[0].mxu0
    %v310 = vadd.f32 %v104, %v309
    %v311 = vpop.f32.mrb[0].mxu0
    %v312 = vadd.f32 %v108, %v311
    %313 = vdwg.mxu0
    %v318 = vcombine.low %v239, %v241
    %v319 = vcombine.low %v310, %v312
    %v321 = vunpack.c.l.s4 1983009808
    %v322 = vunpack.c.0.s8 %v321
    %v323 = vlaneseq
    %v324 = vshrl.u32 %v323, 7
    %v325 = vsub.s32 %v322, %v324
    %v326 = vrot.slane %v318, %v325
    %v328 = vunpack.c.l.s4 1983009808
    %v329 = vunpack.c.0.s8 %v328
    %v330 = vlaneseq
    %v331 = vshrl.u32 %v330, 7
    %v332 = vsub.s32 %v329, %v331
    %v333 = vrot.slane %v319, %v332
    %v334 = vcombine.low %v326, %v333
    %336 = vst [vmem:[#allocation2] sm:$0xff] %v334
    %s337 = scalar_lea.vmem %s0, 2
    %v338 = vld [vmem:[%s337] sm:$0x3]
    %v340 = vsel %vm168, %v338, 0
    %342 = vmatprep.subr.mxu0 %v136
    %343 = vmatpush1.msra.mxu0 %v135
    %344 = vmatprep.subr.mxu0 %v140
    %345 = vmatpush1.msra.mxu0 %v139
    %346 = vmatprep.subr.mxu0 %v144
    %347 = vmatpush1.msra.mxu0 %v143
    %348 = vmatprep.subr.mxu0 %v148
    %349 = vmatpush1.msra.mxu0 %v147
    %350 = vmatprep.subr.mxu0 0.0
    %351 = vmatpush1.msra.mxu0 0.0
    %352 = vmatprep.subr.mxu0 0.0
    %353 = vmatpush1.msra.mxu0 0.0
    %354 = vmatprep.subr.mxu0 0.0
    %355 = vmatpush1.msra.mxu0 0.0
    %356 = vmatprep.subr.mxu0 0.0
    %357 = vmatpush1.msra.mxu0 0.0
    %358 = vmatprep.subr.mxu0 0.0
    %359 = vmatpush1.msra.mxu0 0.0
    %360 = vmatprep.subr.mxu0 0.0
    %361 = vmatpush1.msra.mxu0 0.0
    %362 = vmatprep.subr.mxu0 0.0
    %363 = vmatpush1.msra.mxu0 0.0
    %364 = vmatprep.subr.mxu0 0.0
    %365 = vmatpush1.msra.mxu0 0.0
    %366 = vmatprep.subr.mxu0 0.0
    %367 = vmatpush1.msra.mxu0 0.0
    %368 = vmatprep.subr.mxu0 0.0
    %369 = vmatpush1.msra.mxu0 0.0
    %370 = vmatprep.subr.mxu0 0.0
    %371 = vmatpush1.msra.mxu0 0.0
    %372 = vmatprep.subr.mxu0 0.0
    %373 = vmatpush1.msra.mxu0 0.0
    %374 = vmatprep.subr.mxu0 0.0
    %375 = vmatpush1.msra.mxu0 0.0
    %376 = vmatprep.subr.mxu0 0.0
    %377 = vmatpush1.msra.mxu0 0.0
    %378 = vmatprep.subr.mxu0 0.0
    %379 = vmatpush1.msra.mxu0 0.0
    %380 = vmatprep.subr.mxu0 0.0
    %381 = vmatpush1.msra.mxu0 0.0
    %382 = vmatprep.subr.mxu0 0.0
    %383 = vmatpush1.msra.mxu0 0.0
    %384 = vmatprep.subr.mxu0 0.0
    %385 = vmatpush1.msra.mxu0 0.0
    %386 = vmatprep.subr.mxu0 0.0
    %387 = vmatpush1.msra.mxu0 0.0
    %388 = vmatprep.subr.mxu0 0.0
    %389 = vmatpush1.msra.mxu0 0.0
    %390 = vmatprep.subr.mxu0 0.0
    %391 = vmatpush1.msra.mxu0 0.0
    %392 = vmatprep.subr.mxu0 0.0
    %393 = vmatpush1.msra.mxu0 0.0
    %394 = vmatprep.subr.mxu0 0.0
    %395 = vmatpush1.msra.mxu0 0.0
    %396 = vmatprep.subr.mxu0 0.0
    %397 = vmatpush1.msra.mxu0 0.0
    %398 = vmatprep.subr.mxu0 0.0
    %399 = vmatpush1.msra.mxu0 0.0
    %400 = vmatprep.subr.mxu0 0.0
    %401 = vmatpush1.msra.mxu0 0.0
    %402 = vmatprep.subr.mxu0 0.0
    %403 = vmatpush1.msra.mxu0 0.0
    %404 = vmatprep.subr.mxu0 0.0
    %405 = vmatpush1.msra.mxu0 0.0
    %406 = vmatprep.mubr.f32.mxu0 0.0
    %407 = vmatmul.mubr.f32.gmra.mrb[0].mxu0 %v340
    %v408 = vpop.f32.mrb[0].mxu0
    %v409 = vadd.f32 %v96, %v408
    %v410 = vpop.f32.mrb[0].mxu0
    %v411 = vadd.f32 %v100, %v410
    %412 = vdwg.mxu0
    %413 = vmatprep.subr.mxu0 %v138
    %414 = vmatpush1.msra.mxu0 %v137
    %415 = vmatprep.subr.mxu0 %v142
    %416 = vmatpush1.msra.mxu0 %v141
    %417 = vmatprep.subr.mxu0 %v146
    %418 = vmatpush1.msra.mxu0 %v145
    %419 = vmatprep.subr.mxu0 %v150
    %420 = vmatpush1.msra.mxu0 %v149
    %421 = vmatprep.subr.mxu0 0.0
    %422 = vmatpush1.msra.mxu0 0.0
    %423 = vmatprep.subr.mxu0 0.0
    %424 = vmatpush1.msra.mxu0 0.0
    %425 = vmatprep.subr.mxu0 0.0
    %426 = vmatpush1.msra.mxu0 0.0
    %427 = vmatprep.subr.mxu0 0.0
    %428 = vmatpush1.msra.mxu0 0.0
    %429 = vmatprep.subr.mxu0 0.0
    %430 = vmatpush1.msra.mxu0 0.0
    %431 = vmatprep.subr.mxu0 0.0
    %432 = vmatpush1.msra.mxu0 0.0
    %433 = vmatprep.subr.mxu0 0.0
    %434 = vmatpush1.msra.mxu0 0.0
    %435 = vmatprep.subr.mxu0 0.0
    %436 = vmatpush1.msra.mxu0 0.0
    %437 = vmatprep.subr.mxu0 0.0
    %438 = vmatpush1.msra.mxu0 0.0
    %439 = vmatprep.subr.mxu0 0.0
    %440 = vmatpush1.msra.mxu0 0.0
    %441 = vmatprep.subr.mxu0 0.0
    %442 = vmatpush1.msra.mxu0 0.0
    %443 = vmatprep.subr.mxu0 0.0
    %444 = vmatpush1.msra.mxu0 0.0
    %445 = vmatprep.subr.mxu0 0.0
    %446 = vmatpush1.msra.mxu0 0.0
    %447 = vmatprep.subr.mxu0 0.0
    %448 = vmatpush1.msra.mxu0 0.0
    %449 = vmatprep.subr.mxu0 0.0
    %450 = vmatpush1.msra.mxu0 0.0
    %451 = vmatprep.subr.mxu0 0.0
    %452 = vmatpush1.msra.mxu0 0.0
    %453 = vmatprep.subr.mxu0 0.0
    %454 = vmatpush1.msra.mxu0 0.0
    %455 = vmatprep.subr.mxu0 0.0
    %456 = vmatpush1.msra.mxu0 0.0
    %457 = vmatprep.subr.mxu0 0.0
    %458 = vmatpush1.msra.mxu0 0.0
    %459 = vmatprep.subr.mxu0 0.0
    %460 = vmatpush1.msra.mxu0 0.0
    %461 = vmatprep.subr.mxu0 0.0
    %462 = vmatpush1.msra.mxu0 0.0
    %463 = vmatprep.subr.mxu0 0.0
    %464 = vmatpush1.msra.mxu0 0.0
    %465 = vmatprep.subr.mxu0 0.0
    %466 = vmatpush1.msra.mxu0 0.0
    %467 = vmatprep.subr.mxu0 0.0
    %468 = vmatpush1.msra.mxu0 0.0
    %469 = vmatprep.subr.mxu0 0.0
    %470 = vmatpush1.msra.mxu0 0.0
    %471 = vmatprep.subr.mxu0 0.0
    %472 = vmatpush1.msra.mxu0 0.0
    %473 = vmatprep.subr.mxu0 0.0
    %474 = vmatpush1.msra.mxu0 0.0
    %475 = vmatprep.subr.mxu0 0.0
    %476 = vmatpush1.msra.mxu0 0.0
    %477 = vmatprep.mubr.f32.mxu0 0.0
    %478 = vmatmul.mubr.f32.gmra.mrb[0].mxu0 %v340
    %v479 = vpop.f32.mrb[0].mxu0
    %v480 = vadd.f32 %v104, %v479
    %v481 = vpop.f32.mrb[0].mxu0
    %v482 = vadd.f32 %v108, %v481
    %483 = vdwg.mxu0
    %v488 = vcombine.low %v409, %v411
    %v489 = vcombine.low %v480, %v482
    %v491 = vunpack.c.l.s4 1983009808
    %v492 = vunpack.c.0.s8 %v491
    %v493 = vlaneseq
    %v494 = vshrl.u32 %v493, 7
    %v495 = vsub.s32 %v492, %v494
    %v496 = vrot.slane %v488, %v495
    %v498 = vunpack.c.l.s4 1983009808
    %v499 = vunpack.c.0.s8 %v498
    %v500 = vlaneseq
    %v501 = vshrl.u32 %v500, 7
    %v502 = vsub.s32 %v499, %v501
    %v503 = vrot.slane %v489, %v502
    %v504 = vcombine.low %v496, %v503
    %s506 = scalar_lea.vmem [#allocation2], 8
    %507 = vst [vmem:[%s506] sm:$0xff] %v504
    %s508 = scalar_lea.vmem %s0, 4
    %v509 = vld [vmem:[%s508] sm:$0x3]
    %v511 = vsel %vm168, %v509, 0
    %513 = vmatprep.subr.mxu0 %v136
    %514 = vmatpush1.msra.mxu0 %v135
    %515 = vmatprep.subr.mxu0 %v140
    %516 = vmatpush1.msra.mxu0 %v139
    %517 = vmatprep.subr.mxu0 %v144
    %518 = vmatpush1.msra.mxu0 %v143
    %519 = vmatprep.subr.mxu0 %v148
    %520 = vmatpush1.msra.mxu0 %v147
    %521 = vmatprep.subr.mxu0 0.0
    %522 = vmatpush1.msra.mxu0 0.0
    %523 = vmatprep.subr.mxu0 0.0
    %524 = vmatpush1.msra.mxu0 0.0
    %525 = vmatprep.subr.mxu0 0.0
    %526 = vmatpush1.msra.mxu0 0.0
    %527 = vmatprep.subr.mxu0 0.0
    %528 = vmatpush1.msra.mxu0 0.0
    %529 = vmatprep.subr.mxu0 0.0
    %530 = vmatpush1.msra.mxu0 0.0
    %531 = vmatprep.subr.mxu0 0.0
    %532 = vmatpush1.msra.mxu0 0.0
    %533 = vmatprep.subr.mxu0 0.0
    %534 = vmatpush1.msra.mxu0 0.0
    %535 = vmatprep.subr.mxu0 0.0
    %536 = vmatpush1.msra.mxu0 0.0
    %537 = vmatprep.subr.mxu0 0.0
    %538 = vmatpush1.msra.mxu0 0.0
    %539 = vmatprep.subr.mxu0 0.0
    %540 = vmatpush1.msra.mxu0 0.0
    %541 = vmatprep.subr.mxu0 0.0
    %542 = vmatpush1.msra.mxu0 0.0
    %543 = vmatprep.subr.mxu0 0.0
    %544 = vmatpush1.msra.mxu0 0.0
    %545 = vmatprep.subr.mxu0 0.0
    %546 = vmatpush1.msra.mxu0 0.0
    %547 = vmatprep.subr.mxu0 0.0
    %548 = vmatpush1.msra.mxu0 0.0
    %549 = vmatprep.subr.mxu0 0.0
    %550 = vmatpush1.msra.mxu0 0.0
    %551 = vmatprep.subr.mxu0 0.0
    %552 = vmatpush1.msra.mxu0 0.0
    %553 = vmatprep.subr.mxu0 0.0
    %554 = vmatpush1.msra.mxu0 0.0
    %555 = vmatprep.subr.mxu0 0.0
    %556 = vmatpush1.msra.mxu0 0.0
    %557 = vmatprep.subr.mxu0 0.0
    %558 = vmatpush1.msra.mxu0 0.0
    %559 = vmatprep.subr.mxu0 0.0
    %560 = vmatpush1.msra.mxu0 0.0
    %561 = vmatprep.subr.mxu0 0.0
    %562 = vmatpush1.msra.mxu0 0.0
    %563 = vmatprep.subr.mxu0 0.0
    %564 = vmatpush1.msra.mxu0 0.0
    %565 = vmatprep.subr.mxu0 0.0
    %566 = vmatpush1.msra.mxu0 0.0
    %567 = vmatprep.subr.mxu0 0.0
    %568 = vmatpush1.msra.mxu0 0.0
    %569 = vmatprep.subr.mxu0 0.0
    %570 = vmatpush1.msra.mxu0 0.0
    %571 = vmatprep.subr.mxu0 0.0
    %572 = vmatpush1.msra.mxu0 0.0
    %573 = vmatprep.subr.mxu0 0.0
    %574 = vmatpush1.msra.mxu0 0.0
    %575 = vmatprep.subr.mxu0 0.0
    %576 = vmatpush1.msra.mxu0 0.0
    %577 = vmatprep.mubr.f32.mxu0 0.0
    %578 = vmatmul.mubr.f32.gmra.mrb[0].mxu0 %v511
    %v579 = vpop.f32.mrb[0].mxu0
    %v580 = vadd.f32 %v96, %v579
    %v581 = vpop.f32.mrb[0].mxu0
    %v582 = vadd.f32 %v100, %v581
    %583 = vdwg.mxu0
    %584 = vmatprep.subr.mxu0 %v138
    %585 = vmatpush1.msra.mxu0 %v137
    %586 = vmatprep.subr.mxu0 %v142
    %587 = vmatpush1.msra.mxu0 %v141
    %588 = vmatprep.subr.mxu0 %v146
    %589 = vmatpush1.msra.mxu0 %v145
    %590 = vmatprep.subr.mxu0 %v150
    %591 = vmatpush1.msra.mxu0 %v149
    %592 = vmatprep.subr.mxu0 0.0
    %593 = vmatpush1.msra.mxu0 0.0
    %594 = vmatprep.subr.mxu0 0.0
    %595 = vmatpush1.msra.mxu0 0.0
    %596 = vmatprep.subr.mxu0 0.0
    %597 = vmatpush1.msra.mxu0 0.0
    %598 = vmatprep.subr.mxu0 0.0
    %599 = vmatpush1.msra.mxu0 0.0
    %600 = vmatprep.subr.mxu0 0.0
    %601 = vmatpush1.msra.mxu0 0.0
    %602 = vmatprep.subr.mxu0 0.0
    %603 = vmatpush1.msra.mxu0 0.0
    %604 = vmatprep.subr.mxu0 0.0
    %605 = vmatpush1.msra.mxu0 0.0
    %606 = vmatprep.subr.mxu0 0.0
    %607 = vmatpush1.msra.mxu0 0.0
    %608 = vmatprep.subr.mxu0 0.0
    %609 = vmatpush1.msra.mxu0 0.0
    %610 = vmatprep.subr.mxu0 0.0
    %611 = vmatpush1.msra.mxu0 0.0
    %612 = vmatprep.subr.mxu0 0.0
    %613 = vmatpush1.msra.mxu0 0.0
    %614 = vmatprep.subr.mxu0 0.0
    %615 = vmatpush1.msra.mxu0 0.0
    %616 = vmatprep.subr.mxu0 0.0
    %617 = vmatpush1.msra.mxu0 0.0
    %618 = vmatprep.subr.mxu0 0.0
    %619 = vmatpush1.msra.mxu0 0.0
    %620 = vmatprep.subr.mxu0 0.0
    %621 = vmatpush1.msra.mxu0 0.0
    %622 = vmatprep.subr.mxu0 0.0
    %623 = vmatpush1.msra.mxu0 0.0
    %624 = vmatprep.subr.mxu0 0.0
    %625 = vmatpush1.msra.mxu0 0.0
    %626 = vmatprep.subr.mxu0 0.0
    %627 = vmatpush1.msra.mxu0 0.0
    %628 = vmatprep.subr.mxu0 0.0
    %629 = vmatpush1.msra.mxu0 0.0
    %630 = vmatprep.subr.mxu0 0.0
    %631 = vmatpush1.msra.mxu0 0.0
    %632 = vmatprep.subr.mxu0 0.0
    %633 = vmatpush1.msra.mxu0 0.0
    %634 = vmatprep.subr.mxu0 0.0
    %635 = vmatpush1.msra.mxu0 0.0
    %636 = vmatprep.subr.mxu0 0.0
    %637 = vmatpush1.msra.mxu0 0.0
    %638 = vmatprep.subr.mxu0 0.0
    %639 = vmatpush1.msra.mxu0 0.0
    %640 = vmatprep.subr.mxu0 0.0
    %641 = vmatpush1.msra.mxu0 0.0
    %642 = vmatprep.subr.mxu0 0.0
    %643 = vmatpush1.msra.mxu0 0.0
    %644 = vmatprep.subr.mxu0 0.0
    %645 = vmatpush1.msra.mxu0 0.0
    %646 = vmatprep.subr.mxu0 0.0
    %647 = vmatpush1.msra.mxu0 0.0
    %648 = vmatprep.mubr.f32.mxu0 0.0
    %649 = vmatmul.mubr.f32.gmra.mrb[0].mxu0 %v511
    %v650 = vpop.f32.mrb[0].mxu0
    %v651 = vadd.f32 %v104, %v650
    %v652 = vpop.f32.mrb[0].mxu0
    %v653 = vadd.f32 %v108, %v652
    %654 = vdwg.mxu0
    %v659 = vcombine.low %v580, %v582
    %v660 = vcombine.low %v651, %v653
    %v662 = vunpack.c.l.s4 1983009808
    %v663 = vunpack.c.0.s8 %v662
    %v664 = vlaneseq
    %v665 = vshrl.u32 %v664, 7
    %v666 = vsub.s32 %v663, %v665
    %v667 = vrot.slane %v659, %v666
    %v669 = vunpack.c.l.s4 1983009808
    %v670 = vunpack.c.0.s8 %v669
    %v671 = vlaneseq
    %v672 = vshrl.u32 %v671, 7
    %v673 = vsub.s32 %v670, %v672
    %v674 = vrot.slane %v660, %v673
    %v675 = vcombine.low %v667, %v674
    %s677 = scalar_lea.vmem [#allocation2], 16
    %678 = vst [vmem:[%s677] sm:$0xff] %v675
    %s679 = scalar_lea.vmem %s0, 6
    %v680 = vld [vmem:[%s679] sm:$0x3]
    %v682 = vsel %vm168, %v680, 0
    %684 = vmatprep.subr.mxu0 %v136
    %685 = vmatpush1.msra.mxu0 %v135
    %686 = vmatprep.subr.mxu0 %v140
    %687 = vmatpush1.msra.mxu0 %v139
    %688 = vmatprep.subr.mxu0 %v144
    %689 = vmatpush1.msra.mxu0 %v143
    %690 = vmatprep.subr.mxu0 %v148
    %691 = vmatpush1.msra.mxu0 %v147
    %692 = vmatprep.subr.mxu0 0.0
    %693 = vmatpush1.msra.mxu0 0.0
    %694 = vmatprep.subr.mxu0 0.0
    %695 = vmatpush1.msra.mxu0 0.0
    %696 = vmatprep.subr.mxu0 0.0
    %697 = vmatpush1.msra.mxu0 0.0
    %698 = vmatprep.subr.mxu0 0.0
    %699 = vmatpush1.msra.mxu0 0.0
    %700 = vmatprep.subr.mxu0 0.0
    %701 = vmatpush1.msra.mxu0 0.0
    %702 = vmatprep.subr.mxu0 0.0
    %703 = vmatpush1.msra.mxu0 0.0
    %704 = vmatprep.subr.mxu0 0.0
    %705 = vmatpush1.msra.mxu0 0.0
    %706 = vmatprep.subr.mxu0 0.0
    %707 = vmatpush1.msra.mxu0 0.0
    %708 = vmatprep.subr.mxu0 0.0
    %709 = vmatpush1.msra.mxu0 0.0
    %710 = vmatprep.subr.mxu0 0.0
    %711 = vmatpush1.msra.mxu0 0.0
    %712 = vmatprep.subr.mxu0 0.0
    %713 = vmatpush1.msra.mxu0 0.0
    %714 = vmatprep.subr.mxu0 0.0
    %715 = vmatpush1.msra.mxu0 0.0
    %716 = vmatprep.subr.mxu0 0.0
    %717 = vmatpush1.msra.mxu0 0.0
    %718 = vmatprep.subr.mxu0 0.0
    %719 = vmatpush1.msra.mxu0 0.0
    %720 = vmatprep.subr.mxu0 0.0
    %721 = vmatpush1.msra.mxu0 0.0
    %722 = vmatprep.subr.mxu0 0.0
    %723 = vmatpush1.msra.mxu0 0.0
    %724 = vmatprep.subr.mxu0 0.0
    %725 = vmatpush1.msra.mxu0 0.0
    %726 = vmatprep.subr.mxu0 0.0
    %727 = vmatpush1.msra.mxu0 0.0
    %728 = vmatprep.subr.mxu0 0.0
    %729 = vmatpush1.msra.mxu0 0.0
    %730 = vmatprep.subr.mxu0 0.0
    %731 = vmatpush1.msra.mxu0 0.0
    %732 = vmatprep.subr.mxu0 0.0
    %733 = vmatpush1.msra.mxu0 0.0
    %734 = vmatprep.subr.mxu0 0.0
    %735 = vmatpush1.msra.mxu0 0.0
    %736 = vmatprep.subr.mxu0 0.0
    %737 = vmatpush1.msra.mxu0 0.0
    %738 = vmatprep.subr.mxu0 0.0
    %739 = vmatpush1.msra.mxu0 0.0
    %740 = vmatprep.subr.mxu0 0.0
    %741 = vmatpush1.msra.mxu0 0.0
    %742 = vmatprep.subr.mxu0 0.0
    %743 = vmatpush1.msra.mxu0 0.0
    %744 = vmatprep.subr.mxu0 0.0
    %745 = vmatpush1.msra.mxu0 0.0
    %746 = vmatprep.subr.mxu0 0.0
    %747 = vmatpush1.msra.mxu0 0.0
    %748 = vmatprep.mubr.f32.mxu0 0.0
    %749 = vmatmul.mubr.f32.gmra.mrb[0].mxu0 %v682
    %v750 = vpop.f32.mrb[0].mxu0
    %v751 = vadd.f32 %v96, %v750
    %v752 = vpop.f32.mrb[0].mxu0
    %v753 = vadd.f32 %v100, %v752
    %754 = vdwg.mxu0
    %755 = vmatprep.subr.mxu0 %v138
    %756 = vmatpush1.msra.mxu0 %v137
    %757 = vmatprep.subr.mxu0 %v142
    %758 = vmatpush1.msra.mxu0 %v141
    %759 = vmatprep.subr.mxu0 %v146
    %760 = vmatpush1.msra.mxu0 %v145
    %761 = vmatprep.subr.mxu0 %v150
    %762 = vmatpush1.msra.mxu0 %v149
    %763 = vmatprep.subr.mxu0 0.0
    %764 = vmatpush1.msra.mxu0 0.0
    %765 = vmatprep.subr.mxu0 0.0
    %766 = vmatpush1.msra.mxu0 0.0
    %767 = vmatprep.subr.mxu0 0.0
    %768 = vmatpush1.msra.mxu0 0.0
    %769 = vmatprep.subr.mxu0 0.0
    %770 = vmatpush1.msra.mxu0 0.0
    %771 = vmatprep.subr.mxu0 0.0
    %772 = vmatpush1.msra.mxu0 0.0
    %773 = vmatprep.subr.mxu0 0.0
    %774 = vmatpush1.msra.mxu0 0.0
    %775 = vmatprep.subr.mxu0 0.0
    %776 = vmatpush1.msra.mxu0 0.0
    %777 = vmatprep.subr.mxu0 0.0
    %778 = vmatpush1.msra.mxu0 0.0
    %779 = vmatprep.subr.mxu0 0.0
    %780 = vmatpush1.msra.mxu0 0.0
    %781 = vmatprep.subr.mxu0 0.0
    %782 = vmatpush1.msra.mxu0 0.0
    %783 = vmatprep.subr.mxu0 0.0
    %784 = vmatpush1.msra.mxu0 0.0
    %785 = vmatprep.subr.mxu0 0.0
    %786 = vmatpush1.msra.mxu0 0.0
    %787 = vmatprep.subr.mxu0 0.0
    %788 = vmatpush1.msra.mxu0 0.0
    %789 = vmatprep.subr.mxu0 0.0
    %790 = vmatpush1.msra.mxu0 0.0
    %791 = vmatprep.subr.mxu0 0.0
    %792 = vmatpush1.msra.mxu0 0.0
    %793 = vmatprep.subr.mxu0 0.0
    %794 = vmatpush1.msra.mxu0 0.0
    %795 = vmatprep.subr.mxu0 0.0
    %796 = vmatpush1.msra.mxu0 0.0
    %797 = vmatprep.subr.mxu0 0.0
    %798 = vmatpush1.msra.mxu0 0.0
    %799 = vmatprep.subr.mxu0 0.0
    %800 = vmatpush1.msra.mxu0 0.0
    %801 = vmatprep.subr.mxu0 0.0
    %802 = vmatpush1.msra.mxu0 0.0
    %803 = vmatprep.subr.mxu0 0.0
    %804 = vmatpush1.msra.mxu0 0.0
    %805 = vmatprep.subr.mxu0 0.0
    %806 = vmatpush1.msra.mxu0 0.0
    %807 = vmatprep.subr.mxu0 0.0
    %808 = vmatpush1.msra.mxu0 0.0
    %809 = vmatprep.subr.mxu0 0.0
    %810 = vmatpush1.msra.mxu0 0.0
    %811 = vmatprep.subr.mxu0 0.0
    %812 = vmatpush1.msra.mxu0 0.0
    %813 = vmatprep.subr.mxu0 0.0
    %814 = vmatpush1.msra.mxu0 0.0
    %815 = vmatprep.subr.mxu0 0.0
    %816 = vmatpush1.msra.mxu0 0.0
    %817 = vmatprep.subr.mxu0 0.0
    %818 = vmatpush1.msra.mxu0 0.0
    %819 = vmatprep.mubr.f32.mxu0 0.0
    %820 = vmatmul.mubr.f32.gmra.mrb[0].mxu0 %v682
    %v821 = vpop.f32.mrb[0].mxu0
    %v822 = vadd.f32 %v104, %v821
    %v823 = vpop.f32.mrb[0].mxu0
    %v824 = vadd.f32 %v108, %v823
    %825 = vdwg.mxu0
    %v830 = vcombine.low %v751, %v753
    %v831 = vcombine.low %v822, %v824
    %v833 = vunpack.c.l.s4 1983009808
    %v834 = vunpack.c.0.s8 %v833
    %v835 = vlaneseq
    %v836 = vshrl.u32 %v835, 7
    %v837 = vsub.s32 %v834, %v836
    %v838 = vrot.slane %v830, %v837
    %v840 = vunpack.c.l.s4 1983009808
    %v841 = vunpack.c.0.s8 %v840
    %v842 = vlaneseq
    %v843 = vshrl.u32 %v842, 7
    %v844 = vsub.s32 %v841, %v843
    %v845 = vrot.slane %v831, %v844
    %v846 = vcombine.low %v838, %v845
    %s848 = scalar_lea.vmem [#allocation2], 24
    %849 = vst [vmem:[%s848] sm:$0xff] %v846
    %s850 = scalar_lea.vmem %s0, 8
    %v851 = vld [vmem:[%s850] sm:$0x3]
    %v853 = vsel %vm168, %v851, 0
    %855 = vmatprep.subr.mxu0 %v136
    %856 = vmatpush1.msra.mxu0 %v135
    %857 = vmatprep.subr.mxu0 %v140
    %858 = vmatpush1.msra.mxu0 %v139
    %859 = vmatprep.subr.mxu0 %v144
    %860 = vmatpush1.msra.mxu0 %v143
    %861 = vmatprep.subr.mxu0 %v148
    %862 = vmatpush1.msra.mxu0 %v147
    %863 = vmatprep.subr.mxu0 0.0
    %864 = vmatpush1.msra.mxu0 0.0
    %865 = vmatprep.subr.mxu0 0.0
    %866 = vmatpush1.msra.mxu0 0.0
    %867 = vmatprep.subr.mxu0 0.0
    %868 = vmatpush1.msra.mxu0 0.0
    %869 = vmatprep.subr.mxu0 0.0
    %870 = vmatpush1.msra.mxu0 0.0
    %871 = vmatprep.subr.mxu0 0.0
    %872 = vmatpush1.msra.mxu0 0.0
    %873 = vmatprep.subr.mxu0 0.0
    %874 = vmatpush1.msra.mxu0 0.0
    %875 = vmatprep.subr.mxu0 0.0
    %876 = vmatpush1.msra.mxu0 0.0
    %877 = vmatprep.subr.mxu0 0.0
    %878 = vmatpush1.msra.mxu0 0.0
    %879 = vmatprep.subr.mxu0 0.0
    %880 = vmatpush1.msra.mxu0 0.0
    %881 = vmatprep.subr.mxu0 0.0
    %882 = vmatpush1.msra.mxu0 0.0
    %883 = vmatprep.subr.mxu0 0.0
    %884 = vmatpush1.msra.mxu0 0.0
    %885 = vmatprep.subr.mxu0 0.0
    %886 = vmatpush1.msra.mxu0 0.0
    %887 = vmatprep.subr.mxu0 0.0
    %888 = vmatpush1.msra.mxu0 0.0
    %889 = vmatprep.subr.mxu0 0.0
    %890 = vmatpush1.msra.mxu0 0.0
    %891 = vmatprep.subr.mxu0 0.0
    %892 = vmatpush1.msra.mxu0 0.0
    %893 = vmatprep.subr.mxu0 0.0
    %894 = vmatpush1.msra.mxu0 0.0
    %895 = vmatprep.subr.mxu0 0.0
    %896 = vmatpush1.msra.mxu0 0.0
    %897 = vmatprep.subr.mxu0 0.0
    %898 = vmatpush1.msra.mxu0 0.0
    %899 = vmatprep.subr.mxu0 0.0
    %900 = vmatpush1.msra.mxu0 0.0
    %901 = vmatprep.subr.mxu0 0.0
    %902 = vmatpush1.msra.mxu0 0.0
    %903 = vmatprep.subr.mxu0 0.0
    %904 = vmatpush1.msra.mxu0 0.0
    %905 = vmatprep.subr.mxu0 0.0
    %906 = vmatpush1.msra.mxu0 0.0
    %907 = vmatprep.subr.mxu0 0.0
    %908 = vmatpush1.msra.mxu0 0.0
    %909 = vmatprep.subr.mxu0 0.0
    %910 = vmatpush1.msra.mxu0 0.0
    %911 = vmatprep.subr.mxu0 0.0
    %912 = vmatpush1.msra.mxu0 0.0
    %913 = vmatprep.subr.mxu0 0.0
    %914 = vmatpush1.msra.mxu0 0.0
    %915 = vmatprep.subr.mxu0 0.0
    %916 = vmatpush1.msra.mxu0 0.0
    %917 = vmatprep.subr.mxu0 0.0
    %918 = vmatpush1.msra.mxu0 0.0
    %919 = vmatprep.mubr.f32.mxu0 0.0
    %920 = vmatmul.mubr.f32.gmra.mrb[0].mxu0 %v853
    %v921 = vpop.f32.mrb[0].mxu0
    %v922 = vadd.f32 %v96, %v921
    %v923 = vpop.f32.mrb[0].mxu0
    %v924 = vadd.f32 %v100, %v923
    %925 = vdwg.mxu0
    %926 = vmatprep.subr.mxu0 %v138
    %927 = vmatpush1.msra.mxu0 %v137
    %928 = vmatprep.subr.mxu0 %v142
    %929 = vmatpush1.msra.mxu0 %v141
    %930 = vmatprep.subr.mxu0 %v146
    %931 = vmatpush1.msra.mxu0 %v145
    %932 = vmatprep.subr.mxu0 %v150
    %933 = vmatpush1.msra.mxu0 %v149
    %934 = vmatprep.subr.mxu0 0.0
    %935 = vmatpush1.msra.mxu0 0.0
    %936 = vmatprep.subr.mxu0 0.0
    %937 = vmatpush1.msra.mxu0 0.0
    %938 = vmatprep.subr.mxu0 0.0
    %939 = vmatpush1.msra.mxu0 0.0
    %940 = vmatprep.subr.mxu0 0.0
    %941 = vmatpush1.msra.mxu0 0.0
    %942 = vmatprep.subr.mxu0 0.0
    %943 = vmatpush1.msra.mxu0 0.0
    %944 = vmatprep.subr.mxu0 0.0
    %945 = vmatpush1.msra.mxu0 0.0
    %946 = vmatprep.subr.mxu0 0.0
    %947 = vmatpush1.msra.mxu0 0.0
    %948 = vmatprep.subr.mxu0 0.0
    %949 = vmatpush1.msra.mxu0 0.0
    %950 = vmatprep.subr.mxu0 0.0
    %951 = vmatpush1.msra.mxu0 0.0
    %952 = vmatprep.subr.mxu0 0.0
    %953 = vmatpush1.msra.mxu0 0.0
    %954 = vmatprep.subr.mxu0 0.0
    %955 = vmatpush1.msra.mxu0 0.0
    %956 = vmatprep.subr.mxu0 0.0
    %957 = vmatpush1.msra.mxu0 0.0
    %958 = vmatprep.subr.mxu0 0.0
    %959 = vmatpush1.msra.mxu0 0.0
    %960 = vmatprep.subr.mxu0 0.0
    %961 = vmatpush1.msra.mxu0 0.0
    %962 = vmatprep.subr.mxu0 0.0
    %963 = vmatpush1.msra.mxu0 0.0
    %964 = vmatprep.subr.mxu0 0.0
    %965 = vmatpush1.msra.mxu0 0.0
    %966 = vmatprep.subr.mxu0 0.0
    %967 = vmatpush1.msra.mxu0 0.0
    %968 = vmatprep.subr.mxu0 0.0
    %969 = vmatpush1.msra.mxu0 0.0
    %970 = vmatprep.subr.mxu0 0.0
    %971 = vmatpush1.msra.mxu0 0.0
    %972 = vmatprep.subr.mxu0 0.0
    %973 = vmatpush1.msra.mxu0 0.0
    %974 = vmatprep.subr.mxu0 0.0
    %975 = vmatpush1.msra.mxu0 0.0
    %976 = vmatprep.subr.mxu0 0.0
    %977 = vmatpush1.msra.mxu0 0.0
    %978 = vmatprep.subr.mxu0 0.0
    %979 = vmatpush1.msra.mxu0 0.0
    %980 = vmatprep.subr.mxu0 0.0
    %981 = vmatpush1.msra.mxu0 0.0
    %982 = vmatprep.subr.mxu0 0.0
    %983 = vmatpush1.msra.mxu0 0.0
    %984 = vmatprep.subr.mxu0 0.0
    %985 = vmatpush1.msra.mxu0 0.0
    %986 = vmatprep.subr.mxu0 0.0
    %987 = vmatpush1.msra.mxu0 0.0
    %988 = vmatprep.subr.mxu0 0.0
    %989 = vmatpush1.msra.mxu0 0.0
    %990 = vmatprep.mubr.f32.mxu0 0.0
    %991 = vmatmul.mubr.f32.gmra.mrb[0].mxu0 %v853
    %v992 = vpop.f32.mrb[0].mxu0
    %v993 = vadd.f32 %v104, %v992
    %v994 = vpop.f32.mrb[0].mxu0
    %v995 = vadd.f32 %v108, %v994
    %996 = vdwg.mxu0
    %v1001 = vcombine.low %v922, %v924
    %v1002 = vcombine.low %v993, %v995
    %v1004 = vunpack.c.l.s4 1983009808
    %v1005 = vunpack.c.0.s8 %v1004
    %v1006 = vlaneseq
    %v1007 = vshrl.u32 %v1006, 7
    %v1008 = vsub.s32 %v1005, %v1007
    %v1009 = vrot.slane %v1001, %v1008
    %v1011 = vunpack.c.l.s4 1983009808
    %v1012 = vunpack.c.0.s8 %v1011
    %v1013 = vlaneseq
    %v1014 = vshrl.u32 %v1013, 7
    %v1015 = vsub.s32 %v1012, %v1014
    %v1016 = vrot.slane %v1002, %v1015
    %v1017 = vcombine.low %v1009, %v1016
    %s1019 = scalar_lea.vmem [#allocation2], 32
    %1020 = vst [vmem:[%s1019] sm:$0xff] %v1017
    %s1021 = scalar_lea.vmem %s0, 10
    %v1022 = vld [vmem:[%s1021] sm:$0x3]
    %v1024 = vsel %vm168, %v1022, 0
    %1026 = vmatprep.subr.mxu0 %v136
    %1027 = vmatpush1.msra.mxu0 %v135
    %1028 = vmatprep.subr.mxu0 %v140
    %1029 = vmatpush1.msra.mxu0 %v139
    %1030 = vmatprep.subr.mxu0 %v144
    %1031 = vmatpush1.msra.mxu0 %v143
    %1032 = vmatprep.subr.mxu0 %v148
    %1033 = vmatpush1.msra.mxu0 %v147
    %1034 = vmatprep.subr.mxu0 0.0
    %1035 = vmatpush1.msra.mxu0 0.0
    %1036 = vmatprep.subr.mxu0 0.0
    %1037 = vmatpush1.msra.mxu0 0.0
    %1038 = vmatprep.subr.mxu0 0.0
    %1039 = vmatpush1.msra.mxu0 0.0
    %1040 = vmatprep.subr.mxu0 0.0
    %1041 = vmatpush1.msra.mxu0 0.0
    %1042 = vmatprep.subr.mxu0 0.0
    %1043 = vmatpush1.msra.mxu0 0.0
    %1044 = vmatprep.subr.mxu0 0.0
    %1045 = vmatpush1.msra.mxu0 0.0
    %1046 = vmatprep.subr.mxu0 0.0
    %1047 = vmatpush1.msra.mxu0 0.0
    %1048 = vmatprep.subr.mxu0 0.0
    %1049 = vmatpush1.msra.mxu0 0.0
    %1050 = vmatprep.subr.mxu0 0.0
    %1051 = vmatpush1.msra.mxu0 0.0
    %1052 = vmatprep.subr.mxu0 0.0
    %1053 = vmatpush1.msra.mxu0 0.0
    %1054 = vmatprep.subr.mxu0 0.0
    %1055 = vmatpush1.msra.mxu0 0.0
    %1056 = vmatprep.subr.mxu0 0.0
    %1057 = vmatpush1.msra.mxu0 0.0
    %1058 = vmatprep.subr.mxu0 0.0
    %1059 = vmatpush1.msra.mxu0 0.0
    %1060 = vmatprep.subr.mxu0 0.0
    %1061 = vmatpush1.msra.mxu0 0.0
    %1062 = vmatprep.subr.mxu0 0.0
    %1063 = vmatpush1.msra.mxu0 0.0
    %1064 = vmatprep.subr.mxu0 0.0
    %1065 = vmatpush1.msra.mxu0 0.0
    %1066 = vmatprep.subr.mxu0 0.0
    %1067 = vmatpush1.msra.mxu0 0.0
    %1068 = vmatprep.subr.mxu0 0.0
    %1069 = vmatpush1.msra.mxu0 0.0
    %1070 = vmatprep.subr.mxu0 0.0
    %1071 = vmatpush1.msra.mxu0 0.0
    %1072 = vmatprep.subr.mxu0 0.0
    %1073 = vmatpush1.msra.mxu0 0.0
    %1074 = vmatprep.subr.mxu0 0.0
    %1075 = vmatpush1.msra.mxu0 0.0
    %1076 = vmatprep.subr.mxu0 0.0
    %1077 = vmatpush1.msra.mxu0 0.0
    %1078 = vmatprep.subr.mxu0 0.0
    %1079 = vmatpush1.msra.mxu0 0.0
    %1080 = vmatprep.subr.mxu0 0.0
    %1081 = vmatpush1.msra.mxu0 0.0
    %1082 = vmatprep.subr.mxu0 0.0
    %1083 = vmatpush1.msra.mxu0 0.0
    %1084 = vmatprep.subr.mxu0 0.0
    %1085 = vmatpush1.msra.mxu0 0.0
    %1086 = vmatprep.subr.mxu0 0.0
    %1087 = vmatpush1.msra.mxu0 0.0
    %1088 = vmatprep.subr.mxu0 0.0
    %1089 = vmatpush1.msra.mxu0 0.0
    %1090 = vmatprep.mubr.f32.mxu0 0.0
    %1091 = vmatmul.mubr.f32.gmra.mrb[0].mxu0 %v1024
    %v1092 = vpop.f32.mrb[0].mxu0
    %v1093 = vadd.f32 %v96, %v1092
    %v1094 = vpop.f32.mrb[0].mxu0
    %v1095 = vadd.f32 %v100, %v1094
    %1096 = vdwg.mxu0
    %1097 = vmatprep.subr.mxu0 %v138
    %1098 = vmatpush1.msra.mxu0 %v137
    %1099 = vmatprep.subr.mxu0 %v142
    %1100 = vmatpush1.msra.mxu0 %v141
    %1101 = vmatprep.subr.mxu0 %v146
    %1102 = vmatpush1.msra.mxu0 %v145
    %1103 = vmatprep.subr.mxu0 %v150
    %1104 = vmatpush1.msra.mxu0 %v149
    %1105 = vmatprep.subr.mxu0 0.0
    %1106 = vmatpush1.msra.mxu0 0.0
    %1107 = vmatprep.subr.mxu0 0.0
    %1108 = vmatpush1.msra.mxu0 0.0
    %1109 = vmatprep.subr.mxu0 0.0
    %1110 = vmatpush1.msra.mxu0 0.0
    %1111 = vmatprep.subr.mxu0 0.0
    %1112 = vmatpush1.msra.mxu0 0.0
    %1113 = vmatprep.subr.mxu0 0.0
    %1114 = vmatpush1.msra.mxu0 0.0
    %1115 = vmatprep.subr.mxu0 0.0
    %1116 = vmatpush1.msra.mxu0 0.0
    %1117 = vmatprep.subr.mxu0 0.0
    %1118 = vmatpush1.msra.mxu0 0.0
    %1119 = vmatprep.subr.mxu0 0.0
    %1120 = vmatpush1.msra.mxu0 0.0
    %1121 = vmatprep.subr.mxu0 0.0
    %1122 = vmatpush1.msra.mxu0 0.0
    %1123 = vmatprep.subr.mxu0 0.0
    %1124 = vmatpush1.msra.mxu0 0.0
    %1125 = vmatprep.subr.mxu0 0.0
    %1126 = vmatpush1.msra.mxu0 0.0
    %1127 = vmatprep.subr.mxu0 0.0
    %1128 = vmatpush1.msra.mxu0 0.0
    %1129 = vmatprep.subr.mxu0 0.0
    %1130 = vmatpush1.msra.mxu0 0.0
    %1131 = vmatprep.subr.mxu0 0.0
    %1132 = vmatpush1.msra.mxu0 0.0
    %1133 = vmatprep.subr.mxu0 0.0
    %1134 = vmatpush1.msra.mxu0 0.0
    %1135 = vmatprep.subr.mxu0 0.0
    %1136 = vmatpush1.msra.mxu0 0.0
    %1137 = vmatprep.subr.mxu0 0.0
    %1138 = vmatpush1.msra.mxu0 0.0
    %1139 = vmatprep.subr.mxu0 0.0
    %1140 = vmatpush1.msra.mxu0 0.0
    %1141 = vmatprep.subr.mxu0 0.0
    %1142 = vmatpush1.msra.mxu0 0.0
    %1143 = vmatprep.subr.mxu0 0.0
    %1144 = vmatpush1.msra.mxu0 0.0
    %1145 = vmatprep.subr.mxu0 0.0
    %1146 = vmatpush1.msra.mxu0 0.0
    %1147 = vmatprep.subr.mxu0 0.0
    %1148 = vmatpush1.msra.mxu0 0.0
    %1149 = vmatprep.subr.mxu0 0.0
    %1150 = vmatpush1.msra.mxu0 0.0
    %1151 = vmatprep.subr.mxu0 0.0
    %1152 = vmatpush1.msra.mxu0 0.0
    %1153 = vmatprep.subr.mxu0 0.0
    %1154 = vmatpush1.msra.mxu0 0.0
    %1155 = vmatprep.subr.mxu0 0.0
    %1156 = vmatpush1.msra.mxu0 0.0
    %1157 = vmatprep.subr.mxu0 0.0
    %1158 = vmatpush1.msra.mxu0 0.0
    %1159 = vmatprep.subr.mxu0 0.0
    %1160 = vmatpush1.msra.mxu0 0.0
    %1161 = vmatprep.mubr.f32.mxu0 0.0
    %1162 = vmatmul.mubr.f32.gmra.mrb[0].mxu0 %v1024
    %v1163 = vpop.f32.mrb[0].mxu0
    %v1164 = vadd.f32 %v104, %v1163
    %v1165 = vpop.f32.mrb[0].mxu0
    %v1166 = vadd.f32 %v108, %v1165
    %1167 = vdwg.mxu0
    %v1172 = vcombine.low %v1093, %v1095
    %v1173 = vcombine.low %v1164, %v1166
    %v1175 = vunpack.c.l.s4 1983009808
    %v1176 = vunpack.c.0.s8 %v1175
    %v1177 = vlaneseq
    %v1178 = vshrl.u32 %v1177, 7
    %v1179 = vsub.s32 %v1176, %v1178
    %v1180 = vrot.slane %v1172, %v1179
    %v1182 = vunpack.c.l.s4 1983009808
    %v1183 = vunpack.c.0.s8 %v1182
    %v1184 = vlaneseq
    %v1185 = vshrl.u32 %v1184, 7
    %v1186 = vsub.s32 %v1183, %v1185
    %v1187 = vrot.slane %v1173, %v1186
    %v1188 = vcombine.low %v1180, %v1187
    %s1190 = scalar_lea.vmem [#allocation2], 40
    %1191 = vst [vmem:[%s1190] sm:$0xff] %v1188
    %s1192 = scalar_lea.vmem %s0, 12
    %v1193 = vld [vmem:[%s1192] sm:$0x3]
    %v1195 = vsel %vm168, %v1193, 0
    %1197 = vmatprep.subr.mxu0 %v136
    %1198 = vmatpush1.msra.mxu0 %v135
    %1199 = vmatprep.subr.mxu0 %v140
    %1200 = vmatpush1.msra.mxu0 %v139
    %1201 = vmatprep.subr.mxu0 %v144
    %1202 = vmatpush1.msra.mxu0 %v143
    %1203 = vmatprep.subr.mxu0 %v148
    %1204 = vmatpush1.msra.mxu0 %v147
    %1205 = vmatprep.subr.mxu0 0.0
    %1206 = vmatpush1.msra.mxu0 0.0
    %1207 = vmatprep.subr.mxu0 0.0
    %1208 = vmatpush1.msra.mxu0 0.0
    %1209 = vmatprep.subr.mxu0 0.0
    %1210 = vmatpush1.msra.mxu0 0.0
    %1211 = vmatprep.subr.mxu0 0.0
    %1212 = vmatpush1.msra.mxu0 0.0
    %1213 = vmatprep.subr.mxu0 0.0
    %1214 = vmatpush1.msra.mxu0 0.0
    %1215 = vmatprep.subr.mxu0 0.0
    %1216 = vmatpush1.msra.mxu0 0.0
    %1217 = vmatprep.subr.mxu0 0.0
    %1218 = vmatpush1.msra.mxu0 0.0
    %1219 = vmatprep.subr.mxu0 0.0
    %1220 = vmatpush1.msra.mxu0 0.0
    %1221 = vmatprep.subr.mxu0 0.0
    %1222 = vmatpush1.msra.mxu0 0.0
    %1223 = vmatprep.subr.mxu0 0.0
    %1224 = vmatpush1.msra.mxu0 0.0
    %1225 = vmatprep.subr.mxu0 0.0
    %1226 = vmatpush1.msra.mxu0 0.0
    %1227 = vmatprep.subr.mxu0 0.0
    %1228 = vmatpush1.msra.mxu0 0.0
    %1229 = vmatprep.subr.mxu0 0.0
    %1230 = vmatpush1.msra.mxu0 0.0
    %1231 = vmatprep.subr.mxu0 0.0
    %1232 = vmatpush1.msra.mxu0 0.0
    %1233 = vmatprep.subr.mxu0 0.0
    %1234 = vmatpush1.msra.mxu0 0.0
    %1235 = vmatprep.subr.mxu0 0.0
    %1236 = vmatpush1.msra.mxu0 0.0
    %1237 = vmatprep.subr.mxu0 0.0
    %1238 = vmatpush1.msra.mxu0 0.0
    %1239 = vmatprep.subr.mxu0 0.0
    %1240 = vmatpush1.msra.mxu0 0.0
    %1241 = vmatprep.subr.mxu0 0.0
    %1242 = vmatpush1.msra.mxu0 0.0
    %1243 = vmatprep.subr.mxu0 0.0
    %1244 = vmatpush1.msra.mxu0 0.0
    %1245 = vmatprep.subr.mxu0 0.0
    %1246 = vmatpush1.msra.mxu0 0.0
    %1247 = vmatprep.subr.mxu0 0.0
    %1248 = vmatpush1.msra.mxu0 0.0
    %1249 = vmatprep.subr.mxu0 0.0
    %1250 = vmatpush1.msra.mxu0 0.0
    %1251 = vmatprep.subr.mxu0 0.0
    %1252 = vmatpush1.msra.mxu0 0.0
    %1253 = vmatprep.subr.mxu0 0.0
    %1254 = vmatpush1.msra.mxu0 0.0
    %1255 = vmatprep.subr.mxu0 0.0
    %1256 = vmatpush1.msra.mxu0 0.0
    %1257 = vmatprep.subr.mxu0 0.0
    %1258 = vmatpush1.msra.mxu0 0.0
    %1259 = vmatprep.subr.mxu0 0.0
    %1260 = vmatpush1.msra.mxu0 0.0
    %1261 = vmatprep.mubr.f32.mxu0 0.0
    %1262 = vmatmul.mubr.f32.gmra.mrb[0].mxu0 %v1195
    %v1263 = vpop.f32.mrb[0].mxu0
    %v1264 = vadd.f32 %v96, %v1263
    %v1265 = vpop.f32.mrb[0].mxu0
    %v1266 = vadd.f32 %v100, %v1265
    %1267 = vdwg.mxu0
    %1268 = vmatprep.subr.mxu0 %v138
    %1269 = vmatpush1.msra.mxu0 %v137
    %1270 = vmatprep.subr.mxu0 %v142
    %1271 = vmatpush1.msra.mxu0 %v141
    %1272 = vmatprep.subr.mxu0 %v146
    %1273 = vmatpush1.msra.mxu0 %v145
    %1274 = vmatprep.subr.mxu0 %v150
    %1275 = vmatpush1.msra.mxu0 %v149
    %1276 = vmatprep.subr.mxu0 0.0
    %1277 = vmatpush1.msra.mxu0 0.0
    %1278 = vmatprep.subr.mxu0 0.0
    %1279 = vmatpush1.msra.mxu0 0.0
    %1280 = vmatprep.subr.mxu0 0.0
    %1281 = vmatpush1.msra.mxu0 0.0
    %1282 = vmatprep.subr.mxu0 0.0
    %1283 = vmatpush1.msra.mxu0 0.0
    %1284 = vmatprep.subr.mxu0 0.0
    %1285 = vmatpush1.msra.mxu0 0.0
    %1286 = vmatprep.subr.mxu0 0.0
    %1287 = vmatpush1.msra.mxu0 0.0
    %1288 = vmatprep.subr.mxu0 0.0
    %1289 = vmatpush1.msra.mxu0 0.0
    %1290 = vmatprep.subr.mxu0 0.0
    %1291 = vmatpush1.msra.mxu0 0.0
    %1292 = vmatprep.subr.mxu0 0.0
    %1293 = vmatpush1.msra.mxu0 0.0
    %1294 = vmatprep.subr.mxu0 0.0
    %1295 = vmatpush1.msra.mxu0 0.0
    %1296 = vmatprep.subr.mxu0 0.0
    %1297 = vmatpush1.msra.mxu0 0.0
    %1298 = vmatprep.subr.mxu0 0.0
    %1299 = vmatpush1.msra.mxu0 0.0
    %1300 = vmatprep.subr.mxu0 0.0
    %1301 = vmatpush1.msra.mxu0 0.0
    %1302 = vmatprep.subr.mxu0 0.0
    %1303 = vmatpush1.msra.mxu0 0.0
    %1304 = vmatprep.subr.mxu0 0.0
    %1305 = vmatpush1.msra.mxu0 0.0
    %1306 = vmatprep.subr.mxu0 0.0
    %1307 = vmatpush1.msra.mxu0 0.0
    %1308 = vmatprep.subr.mxu0 0.0
    %1309 = vmatpush1.msra.mxu0 0.0
    %1310 = vmatprep.subr.mxu0 0.0
    %1311 = vmatpush1.msra.mxu0 0.0
    %1312 = vmatprep.subr.mxu0 0.0
    %1313 = vmatpush1.msra.mxu0 0.0
    %1314 = vmatprep.subr.mxu0 0.0
    %1315 = vmatpush1.msra.mxu0 0.0
    %1316 = vmatprep.subr.mxu0 0.0
    %1317 = vmatpush1.msra.mxu0 0.0
    %1318 = vmatprep.subr.mxu0 0.0
    %1319 = vmatpush1.msra.mxu0 0.0
    %1320 = vmatprep.subr.mxu0 0.0
    %1321 = vmatpush1.msra.mxu0 0.0
    %1322 = vmatprep.subr.mxu0 0.0
    %1323 = vmatpush1.msra.mxu0 0.0
    %1324 = vmatprep.subr.mxu0 0.0
    %1325 = vmatpush1.msra.mxu0 0.0
    %1326 = vmatprep.subr.mxu0 0.0
    %1327 = vmatpush1.msra.mxu0 0.0
    %1328 = vmatprep.subr.mxu0 0.0
    %1329 = vmatpush1.msra.mxu0 0.0
    %1330 = vmatprep.subr.mxu0 0.0
    %1331 = vmatpush1.msra.mxu0 0.0
    %1332 = vmatprep.mubr.f32.mxu0 0.0
    %1333 = vmatmul.mubr.f32.gmra.mrb[0].mxu0 %v1195
    %v1334 = vpop.f32.mrb[0].mxu0
    %v1335 = vadd.f32 %v104, %v1334
    %v1336 = vpop.f32.mrb[0].mxu0
    %v1337 = vadd.f32 %v108, %v1336
    %1338 = vdwg.mxu0
    %v1343 = vcombine.low %v1264, %v1266
    %v1344 = vcombine.low %v1335, %v1337
    %v1346 = vunpack.c.l.s4 1983009808
    %v1347 = vunpack.c.0.s8 %v1346
    %v1348 = vlaneseq
    %v1349 = vshrl.u32 %v1348, 7
    %v1350 = vsub.s32 %v1347, %v1349
    %v1351 = vrot.slane %v1343, %v1350
    %v1353 = vunpack.c.l.s4 1983009808
    %v1354 = vunpack.c.0.s8 %v1353
    %v1355 = vlaneseq
    %v1356 = vshrl.u32 %v1355, 7
    %v1357 = vsub.s32 %v1354, %v1356
    %v1358 = vrot.slane %v1344, %v1357
    %v1359 = vcombine.low %v1351, %v1358
    %s1361 = scalar_lea.vmem [#allocation2], 48
    %1362 = vst [vmem:[%s1361] sm:$0xff] %v1359
    %s1363 = scalar_lea.vmem %s0, 14
    %v1364 = vld [vmem:[%s1363] sm:$0x3]
    %v1366 = vsel %vm168, %v1364, 0
    %1368 = vmatprep.subr.mxu0 %v136
    %1369 = vmatpush1.msra.mxu0 %v135
    %1370 = vmatprep.subr.mxu0 %v140
    %1371 = vmatpush1.msra.mxu0 %v139
    %1372 = vmatprep.subr.mxu0 %v144
    %1373 = vmatpush1.msra.mxu0 %v143
    %1374 = vmatprep.subr.mxu0 %v148
    %1375 = vmatpush1.msra.mxu0 %v147
    %1376 = vmatprep.subr.mxu0 0.0
    %1377 = vmatpush1.msra.mxu0 0.0
    %1378 = vmatprep.subr.mxu0 0.0
    %1379 = vmatpush1.msra.mxu0 0.0
    %1380 = vmatprep.subr.mxu0 0.0
    %1381 = vmatpush1.msra.mxu0 0.0
    %1382 = vmatprep.subr.mxu0 0.0
    %1383 = vmatpush1.msra.mxu0 0.0
    %1384 = vmatprep.subr.mxu0 0.0
    %1385 = vmatpush1.msra.mxu0 0.0
    %1386 = vmatprep.subr.mxu0 0.0
    %1387 = vmatpush1.msra.mxu0 0.0
    %1388 = vmatprep.subr.mxu0 0.0
    %1389 = vmatpush1.msra.mxu0 0.0
    %1390 = vmatprep.subr.mxu0 0.0
    %1391 = vmatpush1.msra.mxu0 0.0
    %1392 = vmatprep.subr.mxu0 0.0
    %1393 = vmatpush1.msra.mxu0 0.0
    %1394 = vmatprep.subr.mxu0 0.0
    %1395 = vmatpush1.msra.mxu0 0.0
    %1396 = vmatprep.subr.mxu0 0.0
    %1397 = vmatpush1.msra.mxu0 0.0
    %1398 = vmatprep.subr.mxu0 0.0
    %1399 = vmatpush1.msra.mxu0 0.0
    %1400 = vmatprep.subr.mxu0 0.0
    %1401 = vmatpush1.msra.mxu0 0.0
    %1402 = vmatprep.subr.mxu0 0.0
    %1403 = vmatpush1.msra.mxu0 0.0
    %1404 = vmatprep.subr.mxu0 0.0
    %1405 = vmatpush1.msra.mxu0 0.0
    %1406 = vmatprep.subr.mxu0 0.0
    %1407 = vmatpush1.msra.mxu0 0.0
    %1408 = vmatprep.subr.mxu0 0.0
    %1409 = vmatpush1.msra.mxu0 0.0
    %1410 = vmatprep.subr.mxu0 0.0
    %1411 = vmatpush1.msra.mxu0 0.0
    %1412 = vmatprep.subr.mxu0 0.0
    %1413 = vmatpush1.msra.mxu0 0.0
    %1414 = vmatprep.subr.mxu0 0.0
    %1415 = vmatpush1.msra.mxu0 0.0
    %1416 = vmatprep.subr.mxu0 0.0
    %1417 = vmatpush1.msra.mxu0 0.0
    %1418 = vmatprep.subr.mxu0 0.0
    %1419 = vmatpush1.msra.mxu0 0.0
    %1420 = vmatprep.subr.mxu0 0.0
    %1421 = vmatpush1.msra.mxu0 0.0
    %1422 = vmatprep.subr.mxu0 0.0
    %1423 = vmatpush1.msra.mxu0 0.0
    %1424 = vmatprep.subr.mxu0 0.0
    %1425 = vmatpush1.msra.mxu0 0.0
    %1426 = vmatprep.subr.mxu0 0.0
    %1427 = vmatpush1.msra.mxu0 0.0
    %1428 = vmatprep.subr.mxu0 0.0
    %1429 = vmatpush1.msra.mxu0 0.0
    %1430 = vmatprep.subr.mxu0 0.0
    %1431 = vmatpush1.msra.mxu0 0.0
    %1432 = vmatprep.mubr.f32.mxu0 0.0
    %1433 = vmatmul.mubr.f32.gmra.mrb[0].mxu0 %v1366
    %v1434 = vpop.f32.mrb[0].mxu0
    %v1435 = vadd.f32 %v96, %v1434
    %v1436 = vpop.f32.mrb[0].mxu0
    %v1437 = vadd.f32 %v100, %v1436
    %1438 = vdwg.mxu0
    %1439 = vmatprep.subr.mxu0 %v138
    %1440 = vmatpush1.msra.mxu0 %v137
    %1441 = vmatprep.subr.mxu0 %v142
    %1442 = vmatpush1.msra.mxu0 %v141
    %1443 = vmatprep.subr.mxu0 %v146
    %1444 = vmatpush1.msra.mxu0 %v145
    %1445 = vmatprep.subr.mxu0 %v150
    %1446 = vmatpush1.msra.mxu0 %v149
    %1447 = vmatprep.subr.mxu0 0.0
    %1448 = vmatpush1.msra.mxu0 0.0
    %1449 = vmatprep.subr.mxu0 0.0
    %1450 = vmatpush1.msra.mxu0 0.0
    %1451 = vmatprep.subr.mxu0 0.0
    %1452 = vmatpush1.msra.mxu0 0.0
    %1453 = vmatprep.subr.mxu0 0.0
    %1454 = vmatpush1.msra.mxu0 0.0
    %1455 = vmatprep.subr.mxu0 0.0
    %1456 = vmatpush1.msra.mxu0 0.0
    %1457 = vmatprep.subr.mxu0 0.0
    %1458 = vmatpush1.msra.mxu0 0.0
    %1459 = vmatprep.subr.mxu0 0.0
    %1460 = vmatpush1.msra.mxu0 0.0
    %1461 = vmatprep.subr.mxu0 0.0
    %1462 = vmatpush1.msra.mxu0 0.0
    %1463 = vmatprep.subr.mxu0 0.0
    %1464 = vmatpush1.msra.mxu0 0.0
    %1465 = vmatprep.subr.mxu0 0.0
    %1466 = vmatpush1.msra.mxu0 0.0
    %1467 = vmatprep.subr.mxu0 0.0
    %1468 = vmatpush1.msra.mxu0 0.0
    %1469 = vmatprep.subr.mxu0 0.0
    %1470 = vmatpush1.msra.mxu0 0.0
    %1471 = vmatprep.subr.mxu0 0.0
    %1472 = vmatpush1.msra.mxu0 0.0
    %1473 = vmatprep.subr.mxu0 0.0
    %1474 = vmatpush1.msra.mxu0 0.0
    %1475 = vmatprep.subr.mxu0 0.0
    %1476 = vmatpush1.msra.mxu0 0.0
    %1477 = vmatprep.subr.mxu0 0.0
    %1478 = vmatpush1.msra.mxu0 0.0
    %1479 = vmatprep.subr.mxu0 0.0
    %1480 = vmatpush1.msra.mxu0 0.0
    %1481 = vmatprep.subr.mxu0 0.0
    %1482 = vmatpush1.msra.mxu0 0.0
    %1483 = vmatprep.subr.mxu0 0.0
    %1484 = vmatpush1.msra.mxu0 0.0
    %1485 = vmatprep.subr.mxu0 0.0
    %1486 = vmatpush1.msra.mxu0 0.0
    %1487 = vmatprep.subr.mxu0 0.0
    %1488 = vmatpush1.msra.mxu0 0.0
    %1489 = vmatprep.subr.mxu0 0.0
    %1490 = vmatpush1.msra.mxu0 0.0
    %1491 = vmatprep.subr.mxu0 0.0
    %1492 = vmatpush1.msra.mxu0 0.0
    %1493 = vmatprep.subr.mxu0 0.0
    %1494 = vmatpush1.msra.mxu0 0.0
    %1495 = vmatprep.subr.mxu0 0.0
    %1496 = vmatpush1.msra.mxu0 0.0
    %1497 = vmatprep.subr.mxu0 0.0
    %1498 = vmatpush1.msra.mxu0 0.0
    %1499 = vmatprep.subr.mxu0 0.0
    %1500 = vmatpush1.msra.mxu0 0.0
    %1501 = vmatprep.subr.mxu0 0.0
    %1502 = vmatpush1.msra.mxu0 0.0
    %1503 = vmatprep.mubr.f32.mxu0 0.0
    %1504 = vmatmul.mubr.f32.gmra.mrb[0].mxu0 %v1366
    %v1505 = vpop.f32.mrb[0].mxu0
    %v1506 = vadd.f32 %v104, %v1505
    %v1507 = vpop.f32.mrb[0].mxu0
    %v1508 = vadd.f32 %v108, %v1507
    %1509 = vdwg.mxu0
    %v1514 = vcombine.low %v1435, %v1437
    %v1515 = vcombine.low %v1506, %v1508
    %v1517 = vunpack.c.l.s4 1983009808
    %v1518 = vunpack.c.0.s8 %v1517
    %v1519 = vlaneseq
    %v1520 = vshrl.u32 %v1519, 7
    %v1521 = vsub.s32 %v1518, %v1520
    %v1522 = vrot.slane %v1514, %v1521
    %v1524 = vunpack.c.l.s4 1983009808
    %v1525 = vunpack.c.0.s8 %v1524
    %v1526 = vlaneseq
    %v1527 = vshrl.u32 %v1526, 7
    %v1528 = vsub.s32 %v1525, %v1527
    %v1529 = vrot.slane %v1515, %v1528
    %v1530 = vcombine.low %v1522, %v1529
    %s1532 = scalar_lea.vmem [#allocation2], 56
    %1533 = vst [vmem:[%s1532] sm:$0xff] %v1530
    %v1534 = vld [vmem:[%s1] sm:$0x3]
    %v1536 = vsel %vm168, %v1534, 0
    %1538 = vmatprep.subr.mxu0 %v152
    %1539 = vmatpush1.msra.mxu0 %v151
    %1540 = vmatprep.subr.mxu0 %v156
    %1541 = vmatpush1.msra.mxu0 %v155
    %1542 = vmatprep.subr.mxu0 %v160
    %1543 = vmatpush1.msra.mxu0 %v159
    %1544 = vmatprep.subr.mxu0 %v164
    %1545 = vmatpush1.msra.mxu0 %v163
    %1546 = vmatprep.subr.mxu0 0.0
    %1547 = vmatpush1.msra.mxu0 0.0
    %1548 = vmatprep.subr.mxu0 0.0
    %1549 = vmatpush1.msra.mxu0 0.0
    %1550 = vmatprep.subr.mxu0 0.0
    %1551 = vmatpush1.msra.mxu0 0.0
    %1552 = vmatprep.subr.mxu0 0.0
    %1553 = vmatpush1.msra.mxu0 0.0
    %1554 = vmatprep.subr.mxu0 0.0
    %1555 = vmatpush1.msra.mxu0 0.0
    %1556 = vmatprep.subr.mxu0 0.0
    %1557 = vmatpush1.msra.mxu0 0.0
    %1558 = vmatprep.subr.mxu0 0.0
    %1559 = vmatpush1.msra.mxu0 0.0
    %1560 = vmatprep.subr.mxu0 0.0
    %1561 = vmatpush1.msra.mxu0 0.0
    %1562 = vmatprep.subr.mxu0 0.0
    %1563 = vmatpush1.msra.mxu0 0.0
    %1564 = vmatprep.subr.mxu0 0.0
    %1565 = vmatpush1.msra.mxu0 0.0
    %1566 = vmatprep.subr.mxu0 0.0
    %1567 = vmatpush1.msra.mxu0 0.0
    %1568 = vmatprep.subr.mxu0 0.0
    %1569 = vmatpush1.msra.mxu0 0.0
    %1570 = vmatprep.subr.mxu0 0.0
    %1571 = vmatpush1.msra.mxu0 0.0
    %1572 = vmatprep.subr.mxu0 0.0
    %1573 = vmatpush1.msra.mxu0 0.0
    %1574 = vmatprep.subr.mxu0 0.0
    %1575 = vmatpush1.msra.mxu0 0.0
    %1576 = vmatprep.subr.mxu0 0.0
    %1577 = vmatpush1.msra.mxu0 0.0
    %1578 = vmatprep.subr.mxu0 0.0
    %1579 = vmatpush1.msra.mxu0 0.0
    %1580 = vmatprep.subr.mxu0 0.0
    %1581 = vmatpush1.msra.mxu0 0.0
    %1582 = vmatprep.subr.mxu0 0.0
    %1583 = vmatpush1.msra.mxu0 0.0
    %1584 = vmatprep.subr.mxu0 0.0
    %1585 = vmatpush1.msra.mxu0 0.0
    %1586 = vmatprep.subr.mxu0 0.0
    %1587 = vmatpush1.msra.mxu0 0.0
    %1588 = vmatprep.subr.mxu0 0.0
    %1589 = vmatpush1.msra.mxu0 0.0
    %1590 = vmatprep.subr.mxu0 0.0
    %1591 = vmatpush1.msra.mxu0 0.0
    %1592 = vmatprep.subr.mxu0 0.0
    %1593 = vmatpush1.msra.mxu0 0.0
    %1594 = vmatprep.subr.mxu0 0.0
    %1595 = vmatpush1.msra.mxu0 0.0
    %1596 = vmatprep.subr.mxu0 0.0
    %1597 = vmatpush1.msra.mxu0 0.0
    %1598 = vmatprep.subr.mxu0 0.0
    %1599 = vmatpush1.msra.mxu0 0.0
    %1600 = vmatprep.subr.mxu0 0.0
    %1601 = vmatpush1.msra.mxu0 0.0
    %1602 = vmatprep.mubr.f32.mxu0 0.0
    %1603 = vmatmul.mubr.f32.gmra.mrb[0].mxu0 %v1536
    %v1604 = vpop.f32.mrb[0].mxu0
    %v1605 = vadd.f32 %v118, %v1604
    %v1606 = vpop.f32.mrb[0].mxu0
    %v1607 = vadd.f32 %v122, %v1606
    %1608 = vdwg.mxu0
    %1609 = vmatprep.subr.mxu0 %v154
    %1610 = vmatpush1.msra.mxu0 %v153
    %1611 = vmatprep.subr.mxu0 %v158
    %1612 = vmatpush1.msra.mxu0 %v157
    %1613 = vmatprep.subr.mxu0 %v162
    %1614 = vmatpush1.msra.mxu0 %v161
    %1615 = vmatprep.subr.mxu0 %v166
    %1616 = vmatpush1.msra.mxu0 %v165
    %1617 = vmatprep.subr.mxu0 0.0
    %1618 = vmatpush1.msra.mxu0 0.0
    %1619 = vmatprep.subr.mxu0 0.0
    %1620 = vmatpush1.msra.mxu0 0.0
    %1621 = vmatprep.subr.mxu0 0.0
    %1622 = vmatpush1.msra.mxu0 0.0
    %1623 = vmatprep.subr.mxu0 0.0
    %1624 = vmatpush1.msra.mxu0 0.0
    %1625 = vmatprep.subr.mxu0 0.0
    %1626 = vmatpush1.msra.mxu0 0.0
    %1627 = vmatprep.subr.mxu0 0.0
    %1628 = vmatpush1.msra.mxu0 0.0
    %1629 = vmatprep.subr.mxu0 0.0
    %1630 = vmatpush1.msra.mxu0 0.0
    %1631 = vmatprep.subr.mxu0 0.0
    %1632 = vmatpush1.msra.mxu0 0.0
    %1633 = vmatprep.subr.mxu0 0.0
    %1634 = vmatpush1.msra.mxu0 0.0
    %1635 = vmatprep.subr.mxu0 0.0
    %1636 = vmatpush1.msra.mxu0 0.0
    %1637 = vmatprep.subr.mxu0 0.0
    %1638 = vmatpush1.msra.mxu0 0.0
    %1639 = vmatprep.subr.mxu0 0.0
    %1640 = vmatpush1.msra.mxu0 0.0
    %1641 = vmatprep.subr.mxu0 0.0
    %1642 = vmatpush1.msra.mxu0 0.0
    %1643 = vmatprep.subr.mxu0 0.0
    %1644 = vmatpush1.msra.mxu0 0.0
    %1645 = vmatprep.subr.mxu0 0.0
    %1646 = vmatpush1.msra.mxu0 0.0
    %1647 = vmatprep.subr.mxu0 0.0
    %1648 = vmatpush1.msra.mxu0 0.0
    %1649 = vmatprep.subr.mxu0 0.0
    %1650 = vmatpush1.msra.mxu0 0.0
    %1651 = vmatprep.subr.mxu0 0.0
    %1652 = vmatpush1.msra.mxu0 0.0
    %1653 = vmatprep.subr.mxu0 0.0
    %1654 = vmatpush1.msra.mxu0 0.0
    %1655 = vmatprep.subr.mxu0 0.0
    %1656 = vmatpush1.msra.mxu0 0.0
    %1657 = vmatprep.subr.mxu0 0.0
    %1658 = vmatpush1.msra.mxu0 0.0
    %1659 = vmatprep.subr.mxu0 0.0
    %1660 = vmatpush1.msra.mxu0 0.0
    %1661 = vmatprep.subr.mxu0 0.0
    %1662 = vmatpush1.msra.mxu0 0.0
    %1663 = vmatprep.subr.mxu0 0.0
    %1664 = vmatpush1.msra.mxu0 0.0
    %1665 = vmatprep.subr.mxu0 0.0
    %1666 = vmatpush1.msra.mxu0 0.0
    %1667 = vmatprep.subr.mxu0 0.0
    %1668 = vmatpush1.msra.mxu0 0.0
    %1669 = vmatprep.subr.mxu0 0.0
    %1670 = vmatpush1.msra.mxu0 0.0
    %1671 = vmatprep.subr.mxu0 0.0
    %1672 = vmatpush1.msra.mxu0 0.0
    %1673 = vmatprep.mubr.f32.mxu0 0.0
    %1674 = vmatmul.mubr.f32.gmra.mrb[0].mxu0 %v1536
    %v1675 = vpop.f32.mrb[0].mxu0
    %v1676 = vadd.f32 %v126, %v1675
    %v1677 = vpop.f32.mrb[0].mxu0
    %v1678 = vadd.f32 %v130, %v1677
    %1679 = vdwg.mxu0
    %v1684 = vcombine.low %v1605, %v1607
    %v1685 = vcombine.low %v1676, %v1678
    %v1687 = vunpack.c.l.s4 1983009808
    %v1688 = vunpack.c.0.s8 %v1687
    %v1689 = vlaneseq
    %v1690 = vshrl.u32 %v1689, 7
    %v1691 = vsub.s32 %v1688, %v1690
    %v1692 = vrot.slane %v1684, %v1691
    %v1694 = vunpack.c.l.s4 1983009808
    %v1695 = vunpack.c.0.s8 %v1694
    %v1696 = vlaneseq
    %v1697 = vshrl.u32 %v1696, 7
    %v1698 = vsub.s32 %v1695, %v1697
    %v1699 = vrot.slane %v1685, %v1698
    %v1700 = vcombine.low %v1692, %v1699
    %1702 = vst [vmem:[#allocation3] sm:$0xff] %v1700
    %s1703 = scalar_lea.vmem %s1, 2
    %v1704 = vld [vmem:[%s1703] sm:$0x3]
    %v1706 = vsel %vm168, %v1704, 0
    %1708 = vmatprep.subr.mxu0 %v152
    %1709 = vmatpush1.msra.mxu0 %v151
    %1710 = vmatprep.subr.mxu0 %v156
    %1711 = vmatpush1.msra.mxu0 %v155
    %1712 = vmatprep.subr.mxu0 %v160
    %1713 = vmatpush1.msra.mxu0 %v159
    %1714 = vmatprep.subr.mxu0 %v164
    %1715 = vmatpush1.msra.mxu0 %v163
    %1716 = vmatprep.subr.mxu0 0.0
    %1717 = vmatpush1.msra.mxu0 0.0
    %1718 = vmatprep.subr.mxu0 0.0
    %1719 = vmatpush1.msra.mxu0 0.0
    %1720 = vmatprep.subr.mxu0 0.0
    %1721 = vmatpush1.msra.mxu0 0.0
    %1722 = vmatprep.subr.mxu0 0.0
    %1723 = vmatpush1.msra.mxu0 0.0
    %1724 = vmatprep.subr.mxu0 0.0
    %1725 = vmatpush1.msra.mxu0 0.0
    %1726 = vmatprep.subr.mxu0 0.0
    %1727 = vmatpush1.msra.mxu0 0.0
    %1728 = vmatprep.subr.mxu0 0.0
    %1729 = vmatpush1.msra.mxu0 0.0
    %1730 = vmatprep.subr.mxu0 0.0
    %1731 = vmatpush1.msra.mxu0 0.0
    %1732 = vmatprep.subr.mxu0 0.0
    %1733 = vmatpush1.msra.mxu0 0.0
    %1734 = vmatprep.subr.mxu0 0.0
    %1735 = vmatpush1.msra.mxu0 0.0
    %1736 = vmatprep.subr.mxu0 0.0
    %1737 = vmatpush1.msra.mxu0 0.0
    %1738 = vmatprep.subr.mxu0 0.0
    %1739 = vmatpush1.msra.mxu0 0.0
    %1740 = vmatprep.subr.mxu0 0.0
    %1741 = vmatpush1.msra.mxu0 0.0
    %1742 = vmatprep.subr.mxu0 0.0
    %1743 = vmatpush1.msra.mxu0 0.0
    %1744 = vmatprep.subr.mxu0 0.0
    %1745 = vmatpush1.msra.mxu0 0.0
    %1746 = vmatprep.subr.mxu0 0.0
    %1747 = vmatpush1.msra.mxu0 0.0
    %1748 = vmatprep.subr.mxu0 0.0
    %1749 = vmatpush1.msra.mxu0 0.0
    %1750 = vmatprep.subr.mxu0 0.0
    %1751 = vmatpush1.msra.mxu0 0.0
    %1752 = vmatprep.subr.mxu0 0.0
    %1753 = vmatpush1.msra.mxu0 0.0
    %1754 = vmatprep.subr.mxu0 0.0
    %1755 = vmatpush1.msra.mxu0 0.0
    %1756 = vmatprep.subr.mxu0 0.0
    %1757 = vmatpush1.msra.mxu0 0.0
    %1758 = vmatprep.subr.mxu0 0.0
    %1759 = vmatpush1.msra.mxu0 0.0
    %1760 = vmatprep.subr.mxu0 0.0
    %1761 = vmatpush1.msra.mxu0 0.0
    %1762 = vmatprep.subr.mxu0 0.0
    %1763 = vmatpush1.msra.mxu0 0.0
    %1764 = vmatprep.subr.mxu0 0.0
    %1765 = vmatpush1.msra.mxu0 0.0
    %1766 = vmatprep.subr.mxu0 0.0
    %1767 = vmatpush1.msra.mxu0 0.0
    %1768 = vmatprep.subr.mxu0 0.0
    %1769 = vmatpush1.msra.mxu0 0.0
    %1770 = vmatprep.subr.mxu0 0.0
    %1771 = vmatpush1.msra.mxu0 0.0
    %1772 = vmatprep.mubr.f32.mxu0 0.0
    %1773 = vmatmul.mubr.f32.gmra.mrb[0].mxu0 %v1706
    %v1774 = vpop.f32.mrb[0].mxu0
    %v1775 = vadd.f32 %v118, %v1774
    %v1776 = vpop.f32.mrb[0].mxu0
    %v1777 = vadd.f32 %v122, %v1776
    %1778 = vdwg.mxu0
    %1779 = vmatprep.subr.mxu0 %v154
    %1780 = vmatpush1.msra.mxu0 %v153
    %1781 = vmatprep.subr.mxu0 %v158
    %1782 = vmatpush1.msra.mxu0 %v157
    %1783 = vmatprep.subr.mxu0 %v162
    %1784 = vmatpush1.msra.mxu0 %v161
    %1785 = vmatprep.subr.mxu0 %v166
    %1786 = vmatpush1.msra.mxu0 %v165
    %1787 = vmatprep.subr.mxu0 0.0
    %1788 = vmatpush1.msra.mxu0 0.0
    %1789 = vmatprep.subr.mxu0 0.0
    %1790 = vmatpush1.msra.mxu0 0.0
    %1791 = vmatprep.subr.mxu0 0.0
    %1792 = vmatpush1.msra.mxu0 0.0
    %1793 = vmatprep.subr.mxu0 0.0
    %1794 = vmatpush1.msra.mxu0 0.0
    %1795 = vmatprep.subr.mxu0 0.0
    %1796 = vmatpush1.msra.mxu0 0.0
    %1797 = vmatprep.subr.mxu0 0.0
    %1798 = vmatpush1.msra.mxu0 0.0
    %1799 = vmatprep.subr.mxu0 0.0
    %1800 = vmatpush1.msra.mxu0 0.0
    %1801 = vmatprep.subr.mxu0 0.0
    %1802 = vmatpush1.msra.mxu0 0.0
    %1803 = vmatprep.subr.mxu0 0.0
    %1804 = vmatpush1.msra.mxu0 0.0
    %1805 = vmatprep.subr.mxu0 0.0
    %1806 = vmatpush1.msra.mxu0 0.0
    %1807 = vmatprep.subr.mxu0 0.0
    %1808 = vmatpush1.msra.mxu0 0.0
    %1809 = vmatprep.subr.mxu0 0.0
    %1810 = vmatpush1.msra.mxu0 0.0
    %1811 = vmatprep.subr.mxu0 0.0
    %1812 = vmatpush1.msra.mxu0 0.0
    %1813 = vmatprep.subr.mxu0 0.0
    %1814 = vmatpush1.msra.mxu0 0.0
    %1815 = vmatprep.subr.mxu0 0.0
    %1816 = vmatpush1.msra.mxu0 0.0
    %1817 = vmatprep.subr.mxu0 0.0
    %1818 = vmatpush1.msra.mxu0 0.0
    %1819 = vmatprep.subr.mxu0 0.0
    %1820 = vmatpush1.msra.mxu0 0.0
    %1821 = vmatprep.subr.mxu0 0.0
    %1822 = vmatpush1.msra.mxu0 0.0
    %1823 = vmatprep.subr.mxu0 0.0
    %1824 = vmatpush1.msra.mxu0 0.0
    %1825 = vmatprep.subr.mxu0 0.0
    %1826 = vmatpush1.msra.mxu0 0.0
    %1827 = vmatprep.subr.mxu0 0.0
    %1828 = vmatpush1.msra.mxu0 0.0
    %1829 = vmatprep.subr.mxu0 0.0
    %1830 = vmatpush1.msra.mxu0 0.0
    %1831 = vmatprep.subr.mxu0 0.0
    %1832 = vmatpush1.msra.mxu0 0.0
    %1833 = vmatprep.subr.mxu0 0.0
    %1834 = vmatpush1.msra.mxu0 0.0
    %1835 = vmatprep.subr.mxu0 0.0
    %1836 = vmatpush1.msra.mxu0 0.0
    %1837 = vmatprep.subr.mxu0 0.0
    %1838 = vmatpush1.msra.mxu0 0.0
    %1839 = vmatprep.subr.mxu0 0.0
    %1840 = vmatpush1.msra.mxu0 0.0
    %1841 = vmatprep.subr.mxu0 0.0
    %1842 = vmatpush1.msra.mxu0 0.0
    %1843 = vmatprep.mubr.f32.mxu0 0.0
    %1844 = vmatmul.mubr.f32.gmra.mrb[0].mxu0 %v1706
    %v1845 = vpop.f32.mrb[0].mxu0
    %v1846 = vadd.f32 %v126, %v1845
    %v1847 = vpop.f32.mrb[0].mxu0
    %v1848 = vadd.f32 %v130, %v1847
    %1849 = vdwg.mxu0
    %v1854 = vcombine.low %v1775, %v1777
    %v1855 = vcombine.low %v1846, %v1848
    %v1857 = vunpack.c.l.s4 1983009808
    %v1858 = vunpack.c.0.s8 %v1857
    %v1859 = vlaneseq
    %v1860 = vshrl.u32 %v1859, 7
    %v1861 = vsub.s32 %v1858, %v1860
    %v1862 = vrot.slane %v1854, %v1861
    %v1864 = vunpack.c.l.s4 1983009808
    %v1865 = vunpack.c.0.s8 %v1864
    %v1866 = vlaneseq
    %v1867 = vshrl.u32 %v1866, 7
    %v1868 = vsub.s32 %v1865, %v1867
    %v1869 = vrot.slane %v1855, %v1868
    %v1870 = vcombine.low %v1862, %v1869
    %s1872 = scalar_lea.vmem [#allocation3], 8
    %1873 = vst [vmem:[%s1872] sm:$0xff] %v1870
    %s1874 = scalar_lea.vmem %s1, 4
    %v1875 = vld [vmem:[%s1874] sm:$0x3]
    %v1877 = vsel %vm168, %v1875, 0
    %1879 = vmatprep.subr.mxu0 %v152
    %1880 = vmatpush1.msra.mxu0 %v151
    %1881 = vmatprep.subr.mxu0 %v156
    %1882 = vmatpush1.msra.mxu0 %v155
    %1883 = vmatprep.subr.mxu0 %v160
    %1884 = vmatpush1.msra.mxu0 %v159
    %1885 = vmatprep.subr.mxu0 %v164
    %1886 = vmatpush1.msra.mxu0 %v163
    %1887 = vmatprep.subr.mxu0 0.0
    %1888 = vmatpush1.msra.mxu0 0.0
    %1889 = vmatprep.subr.mxu0 0.0
    %1890 = vmatpush1.msra.mxu0 0.0
    %1891 = vmatprep.subr.mxu0 0.0
    %1892 = vmatpush1.msra.mxu0 0.0
    %1893 = vmatprep.subr.mxu0 0.0
    %1894 = vmatpush1.msra.mxu0 0.0
    %1895 = vmatprep.subr.mxu0 0.0
    %1896 = vmatpush1.msra.mxu0 0.0
    %1897 = vmatprep.subr.mxu0 0.0
    %1898 = vmatpush1.msra.mxu0 0.0
    %1899 = vmatprep.subr.mxu0 0.0
    %1900 = vmatpush1.msra.mxu0 0.0
    %1901 = vmatprep.subr.mxu0 0.0
    %1902 = vmatpush1.msra.mxu0 0.0
    %1903 = vmatprep.subr.mxu0 0.0
    %1904 = vmatpush1.msra.mxu0 0.0
    %1905 = vmatprep.subr.mxu0 0.0
    %1906 = vmatpush1.msra.mxu0 0.0
    %1907 = vmatprep.subr.mxu0 0.0
    %1908 = vmatpush1.msra.mxu0 0.0
    %1909 = vmatprep.subr.mxu0 0.0
    %1910 = vmatpush1.msra.mxu0 0.0
    %1911 = vmatprep.subr.mxu0 0.0
    %1912 = vmatpush1.msra.mxu0 0.0
    %1913 = vmatprep.subr.mxu0 0.0
    %1914 = vmatpush1.msra.mxu0 0.0
    %1915 = vmatprep.subr.mxu0 0.0
    %1916 = vmatpush1.msra.mxu0 0.0
    %1917 = vmatprep.subr.mxu0 0.0
    %1918 = vmatpush1.msra.mxu0 0.0
    %1919 = vmatprep.subr.mxu0 0.0
    %1920 = vmatpush1.msra.mxu0 0.0
    %1921 = vmatprep.subr.mxu0 0.0
    %1922 = vmatpush1.msra.mxu0 0.0
    %1923 = vmatprep.subr.mxu0 0.0
    %1924 = vmatpush1.msra.mxu0 0.0
    %1925 = vmatprep.subr.mxu0 0.0
    %1926 = vmatpush1.msra.mxu0 0.0
    %1927 = vmatprep.subr.mxu0 0.0
    %1928 = vmatpush1.msra.mxu0 0.0
    %1929 = vmatprep.subr.mxu0 0.0
    %1930 = vmatpush1.msra.mxu0 0.0
    %1931 = vmatprep.subr.mxu0 0.0
    %1932 = vmatpush1.msra.mxu0 0.0
    %1933 = vmatprep.subr.mxu0 0.0
    %1934 = vmatpush1.msra.mxu0 0.0
    %1935 = vmatprep.subr.mxu0 0.0
    %1936 = vmatpush1.msra.mxu0 0.0
    %1937 = vmatprep.subr.mxu0 0.0
    %1938 = vmatpush1.msra.mxu0 0.0
    %1939 = vmatprep.subr.mxu0 0.0
    %1940 = vmatpush1.msra.mxu0 0.0
    %1941 = vmatprep.subr.mxu0 0.0
    %1942 = vmatpush1.msra.mxu0 0.0
    %1943 = vmatprep.mubr.f32.mxu0 0.0
    %1944 = vmatmul.mubr.f32.gmra.mrb[0].mxu0 %v1877
    %v1945 = vpop.f32.mrb[0].mxu0
    %v1946 = vadd.f32 %v118, %v1945
    %v1947 = vpop.f32.mrb[0].mxu0
    %v1948 = vadd.f32 %v122, %v1947
    %1949 = vdwg.mxu0
    %1950 = vmatprep.subr.mxu0 %v154
    %1951 = vmatpush1.msra.mxu0 %v153
    %1952 = vmatprep.subr.mxu0 %v158
    %1953 = vmatpush1.msra.mxu0 %v157
    %1954 = vmatprep.subr.mxu0 %v162
    %1955 = vmatpush1.msra.mxu0 %v161
    %1956 = vmatprep.subr.mxu0 %v166
    %1957 = vmatpush1.msra.mxu0 %v165
    %1958 = vmatprep.subr.mxu0 0.0
    %1959 = vmatpush1.msra.mxu0 0.0
    %1960 = vmatprep.subr.mxu0 0.0
    %1961 = vmatpush1.msra.mxu0 0.0
    %1962 = vmatprep.subr.mxu0 0.0
    %1963 = vmatpush1.msra.mxu0 0.0
    %1964 = vmatprep.subr.mxu0 0.0
    %1965 = vmatpush1.msra.mxu0 0.0
    %1966 = vmatprep.subr.mxu0 0.0
    %1967 = vmatpush1.msra.mxu0 0.0
    %1968 = vmatprep.subr.mxu0 0.0
    %1969 = vmatpush1.msra.mxu0 0.0
    %1970 = vmatprep.subr.mxu0 0.0
    %1971 = vmatpush1.msra.mxu0 0.0
    %1972 = vmatprep.subr.mxu0 0.0
    %1973 = vmatpush1.msra.mxu0 0.0
    %1974 = vmatprep.subr.mxu0 0.0
    %1975 = vmatpush1.msra.mxu0 0.0
    %1976 = vmatprep.subr.mxu0 0.0
    %1977 = vmatpush1.msra.mxu0 0.0
    %1978 = vmatprep.subr.mxu0 0.0
    %1979 = vmatpush1.msra.mxu0 0.0
    %1980 = vmatprep.subr.mxu0 0.0
    %1981 = vmatpush1.msra.mxu0 0.0
    %1982 = vmatprep.subr.mxu0 0.0
    %1983 = vmatpush1.msra.mxu0 0.0
    %1984 = vmatprep.subr.mxu0 0.0
    %1985 = vmatpush1.msra.mxu0 0.0
    %1986 = vmatprep.subr.mxu0 0.0
    %1987 = vmatpush1.msra.mxu0 0.0
    %1988 = vmatprep.subr.mxu0 0.0
    %1989 = vmatpush1.msra.mxu0 0.0
    %1990 = vmatprep.subr.mxu0 0.0
    %1991 = vmatpush1.msra.mxu0 0.0
    %1992 = vmatprep.subr.mxu0 0.0
    %1993 = vmatpush1.msra.mxu0 0.0
    %1994 = vmatprep.subr.mxu0 0.0
    %1995 = vmatpush1.msra.mxu0 0.0
    %1996 = vmatprep.subr.mxu0 0.0
    %1997 = vmatpush1.msra.mxu0 0.0
    %1998 = vmatprep.subr.mxu0 0.0
    %1999 = vmatpush1.msra.mxu0 0.0
    %2000 = vmatprep.subr.mxu0 0.0
    %2001 = vmatpush1.msra.mxu0 0.0
    %2002 = vmatprep.subr.mxu0 0.0
    %2003 = vmatpush1.msra.mxu0 0.0
    %2004 = vmatprep.subr.mxu0 0.0
    %2005 = vmatpush1.msra.mxu0 0.0
    %2006 = vmatprep.subr.mxu0 0.0
    %2007 = vmatpush1.msra.mxu0 0.0
    %2008 = vmatprep.subr.mxu0 0.0
    %2009 = vmatpush1.msra.mxu0 0.0
    %2010 = vmatprep.subr.mxu0 0.0
    %2011 = vmatpush1.msra.mxu0 0.0
    %2012 = vmatprep.subr.mxu0 0.0
    %2013 = vmatpush1.msra.mxu0 0.0
    %2014 = vmatprep.mubr.f32.mxu0 0.0
    %2015 = vmatmul.mubr.f32.gmra.mrb[0].mxu0 %v1877
    %v2016 = vpop.f32.mrb[0].mxu0
    %v2017 = vadd.f32 %v126, %v2016
    %v2018 = vpop.f32.mrb[0].mxu0
    %v2019 = vadd.f32 %v130, %v2018
    %2020 = vdwg.mxu0
    %v2025 = vcombine.low %v1946, %v1948
    %v2026 = vcombine.low %v2017, %v2019
    %v2028 = vunpack.c.l.s4 1983009808
    %v2029 = vunpack.c.0.s8 %v2028
    %v2030 = vlaneseq
    %v2031 = vshrl.u32 %v2030, 7
    %v2032 = vsub.s32 %v2029, %v2031
    %v2033 = vrot.slane %v2025, %v2032
    %v2035 = vunpack.c.l.s4 1983009808
    %v2036 = vunpack.c.0.s8 %v2035
    %v2037 = vlaneseq
    %v2038 = vshrl.u32 %v2037, 7
    %v2039 = vsub.s32 %v2036, %v2038
    %v2040 = vrot.slane %v2026, %v2039
    %v2041 = vcombine.low %v2033, %v2040
    %s2043 = scalar_lea.vmem [#allocation3], 16
    %2044 = vst [vmem:[%s2043] sm:$0xff] %v2041
    %s2045 = scalar_lea.vmem %s1, 6
    %v2046 = vld [vmem:[%s2045] sm:$0x3]
    %v2048 = vsel %vm168, %v2046, 0
    %2050 = vmatprep.subr.mxu0 %v152
    %2051 = vmatpush1.msra.mxu0 %v151
    %2052 = vmatprep.subr.mxu0 %v156
    %2053 = vmatpush1.msra.mxu0 %v155
    %2054 = vmatprep.subr.mxu0 %v160
    %2055 = vmatpush1.msra.mxu0 %v159
    %2056 = vmatprep.subr.mxu0 %v164
    %2057 = vmatpush1.msra.mxu0 %v163
    %2058 = vmatprep.subr.mxu0 0.0
    %2059 = vmatpush1.msra.mxu0 0.0
    %2060 = vmatprep.subr.mxu0 0.0
    %2061 = vmatpush1.msra.mxu0 0.0
    %2062 = vmatprep.subr.mxu0 0.0
    %2063 = vmatpush1.msra.mxu0 0.0
    %2064 = vmatprep.subr.mxu0 0.0
    %2065 = vmatpush1.msra.mxu0 0.0
    %2066 = vmatprep.subr.mxu0 0.0
    %2067 = vmatpush1.msra.mxu0 0.0
    %2068 = vmatprep.subr.mxu0 0.0
    %2069 = vmatpush1.msra.mxu0 0.0
    %2070 = vmatprep.subr.mxu0 0.0
    %2071 = vmatpush1.msra.mxu0 0.0
    %2072 = vmatprep.subr.mxu0 0.0
    %2073 = vmatpush1.msra.mxu0 0.0
    %2074 = vmatprep.subr.mxu0 0.0
    %2075 = vmatpush1.msra.mxu0 0.0
    %2076 = vmatprep.subr.mxu0 0.0
    %2077 = vmatpush1.msra.mxu0 0.0
    %2078 = vmatprep.subr.mxu0 0.0
    %2079 = vmatpush1.msra.mxu0 0.0
    %2080 = vmatprep.subr.mxu0 0.0
    %2081 = vmatpush1.msra.mxu0 0.0
    %2082 = vmatprep.subr.mxu0 0.0
    %2083 = vmatpush1.msra.mxu0 0.0
    %2084 = vmatprep.subr.mxu0 0.0
    %2085 = vmatpush1.msra.mxu0 0.0
    %2086 = vmatprep.subr.mxu0 0.0
    %2087 = vmatpush1.msra.mxu0 0.0
    %2088 = vmatprep.subr.mxu0 0.0
    %2089 = vmatpush1.msra.mxu0 0.0
    %2090 = vmatprep.subr.mxu0 0.0
    %2091 = vmatpush1.msra.mxu0 0.0
    %2092 = vmatprep.subr.mxu0 0.0
    %2093 = vmatpush1.msra.mxu0 0.0
    %2094 = vmatprep.subr.mxu0 0.0
    %2095 = vmatpush1.msra.mxu0 0.0
    %2096 = vmatprep.subr.mxu0 0.0
    %2097 = vmatpush1.msra.mxu0 0.0
    %2098 = vmatprep.subr.mxu0 0.0
    %2099 = vmatpush1.msra.mxu0 0.0
    %2100 = vmatprep.subr.mxu0 0.0
    %2101 = vmatpush1.msra.mxu0 0.0
    %2102 = vmatprep.subr.mxu0 0.0
    %2103 = vmatpush1.msra.mxu0 0.0
    %2104 = vmatprep.subr.mxu0 0.0
    %2105 = vmatpush1.msra.mxu0 0.0
    %2106 = vmatprep.subr.mxu0 0.0
    %2107 = vmatpush1.msra.mxu0 0.0
    %2108 = vmatprep.subr.mxu0 0.0
    %2109 = vmatpush1.msra.mxu0 0.0
    %2110 = vmatprep.subr.mxu0 0.0
    %2111 = vmatpush1.msra.mxu0 0.0
    %2112 = vmatprep.subr.mxu0 0.0
    %2113 = vmatpush1.msra.mxu0 0.0
    %2114 = vmatprep.mubr.f32.mxu0 0.0
    %2115 = vmatmul.mubr.f32.gmra.mrb[0].mxu0 %v2048
    %v2116 = vpop.f32.mrb[0].mxu0
    %v2117 = vadd.f32 %v118, %v2116
    %v2118 = vpop.f32.mrb[0].mxu0
    %v2119 = vadd.f32 %v122, %v2118
    %2120 = vdwg.mxu0
    %2121 = vmatprep.subr.mxu0 %v154
    %2122 = vmatpush1.msra.mxu0 %v153
    %2123 = vmatprep.subr.mxu0 %v158
    %2124 = vmatpush1.msra.mxu0 %v157
    %2125 = vmatprep.subr.mxu0 %v162
    %2126 = vmatpush1.msra.mxu0 %v161
    %2127 = vmatprep.subr.mxu0 %v166
    %2128 = vmatpush1.msra.mxu0 %v165
    %2129 = vmatprep.subr.mxu0 0.0
    %2130 = vmatpush1.msra.mxu0 0.0
    %2131 = vmatprep.subr.mxu0 0.0
    %2132 = vmatpush1.msra.mxu0 0.0
    %2133 = vmatprep.subr.mxu0 0.0
    %2134 = vmatpush1.msra.mxu0 0.0
    %2135 = vmatprep.subr.mxu0 0.0
    %2136 = vmatpush1.msra.mxu0 0.0
    %2137 = vmatprep.subr.mxu0 0.0
    %2138 = vmatpush1.msra.mxu0 0.0
    %2139 = vmatprep.subr.mxu0 0.0
    %2140 = vmatpush1.msra.mxu0 0.0
    %2141 = vmatprep.subr.mxu0 0.0
    %2142 = vmatpush1.msra.mxu0 0.0
    %2143 = vmatprep.subr.mxu0 0.0
    %2144 = vmatpush1.msra.mxu0 0.0
    %2145 = vmatprep.subr.mxu0 0.0
    %2146 = vmatpush1.msra.mxu0 0.0
    %2147 = vmatprep.subr.mxu0 0.0
    %2148 = vmatpush1.msra.mxu0 0.0
    %2149 = vmatprep.subr.mxu0 0.0
    %2150 = vmatpush1.msra.mxu0 0.0
    %2151 = vmatprep.subr.mxu0 0.0
    %2152 = vmatpush1.msra.mxu0 0.0
    %2153 = vmatprep.subr.mxu0 0.0
    %2154 = vmatpush1.msra.mxu0 0.0
    %2155 = vmatprep.subr.mxu0 0.0
    %2156 = vmatpush1.msra.mxu0 0.0
    %2157 = vmatprep.subr.mxu0 0.0
    %2158 = vmatpush1.msra.mxu0 0.0
    %2159 = vmatprep.subr.mxu0 0.0
    %2160 = vmatpush1.msra.mxu0 0.0
    %2161 = vmatprep.subr.mxu0 0.0
    %2162 = vmatpush1.msra.mxu0 0.0
    %2163 = vmatprep.subr.mxu0 0.0
    %2164 = vmatpush1.msra.mxu0 0.0
    %2165 = vmatprep.subr.mxu0 0.0
    %2166 = vmatpush1.msra.mxu0 0.0
    %2167 = vmatprep.subr.mxu0 0.0
    %2168 = vmatpush1.msra.mxu0 0.0
    %2169 = vmatprep.subr.mxu0 0.0
    %2170 = vmatpush1.msra.mxu0 0.0
    %2171 = vmatprep.subr.mxu0 0.0
    %2172 = vmatpush1.msra.mxu0 0.0
    %2173 = vmatprep.subr.mxu0 0.0
    %2174 = vmatpush1.msra.mxu0 0.0
    %2175 = vmatprep.subr.mxu0 0.0
    %2176 = vmatpush1.msra.mxu0 0.0
    %2177 = vmatprep.subr.mxu0 0.0
    %2178 = vmatpush1.msra.mxu0 0.0
    %2179 = vmatprep.subr.mxu0 0.0
    %2180 = vmatpush1.msra.mxu0 0.0
    %2181 = vmatprep.subr.mxu0 0.0
    %2182 = vmatpush1.msra.mxu0 0.0
    %2183 = vmatprep.subr.mxu0 0.0
    %2184 = vmatpush1.msra.mxu0 0.0
    %2185 = vmatprep.mubr.f32.mxu0 0.0
    %2186 = vmatmul.mubr.f32.gmra.mrb[0].mxu0 %v2048
    %v2187 = vpop.f32.mrb[0].mxu0
    %v2188 = vadd.f32 %v126, %v2187
    %v2189 = vpop.f32.mrb[0].mxu0
    %v2190 = vadd.f32 %v130, %v2189
    %2191 = vdwg.mxu0
    %v2196 = vcombine.low %v2117, %v2119
    %v2197 = vcombine.low %v2188, %v2190
    %v2199 = vunpack.c.l.s4 1983009808
    %v2200 = vunpack.c.0.s8 %v2199
    %v2201 = vlaneseq
    %v2202 = vshrl.u32 %v2201, 7
    %v2203 = vsub.s32 %v2200, %v2202
    %v2204 = vrot.slane %v2196, %v2203
    %v2206 = vunpack.c.l.s4 1983009808
    %v2207 = vunpack.c.0.s8 %v2206
    %v2208 = vlaneseq
    %v2209 = vshrl.u32 %v2208, 7
    %v2210 = vsub.s32 %v2207, %v2209
    %v2211 = vrot.slane %v2197, %v2210
    %v2212 = vcombine.low %v2204, %v2211
    %s2214 = scalar_lea.vmem [#allocation3], 24
    %2215 = vst [vmem:[%s2214] sm:$0xff] %v2212
    %s2216 = scalar_lea.vmem %s1, 8
    %v2217 = vld [vmem:[%s2216] sm:$0x3]
    %v2219 = vsel %vm168, %v2217, 0
    %2221 = vmatprep.subr.mxu0 %v152
    %2222 = vmatpush1.msra.mxu0 %v151
    %2223 = vmatprep.subr.mxu0 %v156
    %2224 = vmatpush1.msra.mxu0 %v155
    %2225 = vmatprep.subr.mxu0 %v160
    %2226 = vmatpush1.msra.mxu0 %v159
    %2227 = vmatprep.subr.mxu0 %v164
    %2228 = vmatpush1.msra.mxu0 %v163
    %2229 = vmatprep.subr.mxu0 0.0
    %2230 = vmatpush1.msra.mxu0 0.0
    %2231 = vmatprep.subr.mxu0 0.0
    %2232 = vmatpush1.msra.mxu0 0.0
    %2233 = vmatprep.subr.mxu0 0.0
    %2234 = vmatpush1.msra.mxu0 0.0
    %2235 = vmatprep.subr.mxu0 0.0
    %2236 = vmatpush1.msra.mxu0 0.0
    %2237 = vmatprep.subr.mxu0 0.0
    %2238 = vmatpush1.msra.mxu0 0.0
    %2239 = vmatprep.subr.mxu0 0.0
    %2240 = vmatpush1.msra.mxu0 0.0
    %2241 = vmatprep.subr.mxu0 0.0
    %2242 = vmatpush1.msra.mxu0 0.0
    %2243 = vmatprep.subr.mxu0 0.0
    %2244 = vmatpush1.msra.mxu0 0.0
    %2245 = vmatprep.subr.mxu0 0.0
    %2246 = vmatpush1.msra.mxu0 0.0
    %2247 = vmatprep.subr.mxu0 0.0
    %2248 = vmatpush1.msra.mxu0 0.0
    %2249 = vmatprep.subr.mxu0 0.0
    %2250 = vmatpush1.msra.mxu0 0.0
    %2251 = vmatprep.subr.mxu0 0.0
    %2252 = vmatpush1.msra.mxu0 0.0
    %2253 = vmatprep.subr.mxu0 0.0
    %2254 = vmatpush1.msra.mxu0 0.0
    %2255 = vmatprep.subr.mxu0 0.0
    %2256 = vmatpush1.msra.mxu0 0.0
    %2257 = vmatprep.subr.mxu0 0.0
    %2258 = vmatpush1.msra.mxu0 0.0
    %2259 = vmatprep.subr.mxu0 0.0
    %2260 = vmatpush1.msra.mxu0 0.0
    %2261 = vmatprep.subr.mxu0 0.0
    %2262 = vmatpush1.msra.mxu0 0.0
    %2263 = vmatprep.subr.mxu0 0.0
    %2264 = vmatpush1.msra.mxu0 0.0
    %2265 = vmatprep.subr.mxu0 0.0
    %2266 = vmatpush1.msra.mxu0 0.0
    %2267 = vmatprep.subr.mxu0 0.0
    %2268 = vmatpush1.msra.mxu0 0.0
    %2269 = vmatprep.subr.mxu0 0.0
    %2270 = vmatpush1.msra.mxu0 0.0
    %2271 = vmatprep.subr.mxu0 0.0
    %2272 = vmatpush1.msra.mxu0 0.0
    %2273 = vmatprep.subr.mxu0 0.0
    %2274 = vmatpush1.msra.mxu0 0.0
    %2275 = vmatprep.subr.mxu0 0.0
    %2276 = vmatpush1.msra.mxu0 0.0
    %2277 = vmatprep.subr.mxu0 0.0
    %2278 = vmatpush1.msra.mxu0 0.0
    %2279 = vmatprep.subr.mxu0 0.0
    %2280 = vmatpush1.msra.mxu0 0.0
    %2281 = vmatprep.subr.mxu0 0.0
    %2282 = vmatpush1.msra.mxu0 0.0
    %2283 = vmatprep.subr.mxu0 0.0
    %2284 = vmatpush1.msra.mxu0 0.0
    %2285 = vmatprep.mubr.f32.mxu0 0.0
    %2286 = vmatmul.mubr.f32.gmra.mrb[0].mxu0 %v2219
    %v2287 = vpop.f32.mrb[0].mxu0
    %v2288 = vadd.f32 %v118, %v2287
    %v2289 = vpop.f32.mrb[0].mxu0
    %v2290 = vadd.f32 %v122, %v2289
    %2291 = vdwg.mxu0
    %2292 = vmatprep.subr.mxu0 %v154
    %2293 = vmatpush1.msra.mxu0 %v153
    %2294 = vmatprep.subr.mxu0 %v158
    %2295 = vmatpush1.msra.mxu0 %v157
    %2296 = vmatprep.subr.mxu0 %v162
    %2297 = vmatpush1.msra.mxu0 %v161
    %2298 = vmatprep.subr.mxu0 %v166
    %2299 = vmatpush1.msra.mxu0 %v165
    %2300 = vmatprep.subr.mxu0 0.0
    %2301 = vmatpush1.msra.mxu0 0.0
    %2302 = vmatprep.subr.mxu0 0.0
    %2303 = vmatpush1.msra.mxu0 0.0
    %2304 = vmatprep.subr.mxu0 0.0
    %2305 = vmatpush1.msra.mxu0 0.0
    %2306 = vmatprep.subr.mxu0 0.0
    %2307 = vmatpush1.msra.mxu0 0.0
    %2308 = vmatprep.subr.mxu0 0.0
    %2309 = vmatpush1.msra.mxu0 0.0
    %2310 = vmatprep.subr.mxu0 0.0
    %2311 = vmatpush1.msra.mxu0 0.0
    %2312 = vmatprep.subr.mxu0 0.0
    %2313 = vmatpush1.msra.mxu0 0.0
    %2314 = vmatprep.subr.mxu0 0.0
    %2315 = vmatpush1.msra.mxu0 0.0
    %2316 = vmatprep.subr.mxu0 0.0
    %2317 = vmatpush1.msra.mxu0 0.0
    %2318 = vmatprep.subr.mxu0 0.0
    %2319 = vmatpush1.msra.mxu0 0.0
    %2320 = vmatprep.subr.mxu0 0.0
    %2321 = vmatpush1.msra.mxu0 0.0
    %2322 = vmatprep.subr.mxu0 0.0
    %2323 = vmatpush1.msra.mxu0 0.0
    %2324 = vmatprep.subr.mxu0 0.0
    %2325 = vmatpush1.msra.mxu0 0.0
    %2326 = vmatprep.subr.mxu0 0.0
    %2327 = vmatpush1.msra.mxu0 0.0
    %2328 = vmatprep.subr.mxu0 0.0
    %2329 = vmatpush1.msra.mxu0 0.0
    %2330 = vmatprep.subr.mxu0 0.0
    %2331 = vmatpush1.msra.mxu0 0.0
    %2332 = vmatprep.subr.mxu0 0.0
    %2333 = vmatpush1.msra.mxu0 0.0
    %2334 = vmatprep.subr.mxu0 0.0
    %2335 = vmatpush1.msra.mxu0 0.0
    %2336 = vmatprep.subr.mxu0 0.0
    %2337 = vmatpush1.msra.mxu0 0.0
    %2338 = vmatprep.subr.mxu0 0.0
    %2339 = vmatpush1.msra.mxu0 0.0
    %2340 = vmatprep.subr.mxu0 0.0
    %2341 = vmatpush1.msra.mxu0 0.0
    %2342 = vmatprep.subr.mxu0 0.0
    %2343 = vmatpush1.msra.mxu0 0.0
    %2344 = vmatprep.subr.mxu0 0.0
    %2345 = vmatpush1.msra.mxu0 0.0
    %2346 = vmatprep.subr.mxu0 0.0
    %2347 = vmatpush1.msra.mxu0 0.0
    %2348 = vmatprep.subr.mxu0 0.0
    %2349 = vmatpush1.msra.mxu0 0.0
    %2350 = vmatprep.subr.mxu0 0.0
    %2351 = vmatpush1.msra.mxu0 0.0
    %2352 = vmatprep.subr.mxu0 0.0
    %2353 = vmatpush1.msra.mxu0 0.0
    %2354 = vmatprep.subr.mxu0 0.0
    %2355 = vmatpush1.msra.mxu0 0.0
    %2356 = vmatprep.mubr.f32.mxu0 0.0
    %2357 = vmatmul.mubr.f32.gmra.mrb[0].mxu0 %v2219
    %v2358 = vpop.f32.mrb[0].mxu0
    %v2359 = vadd.f32 %v126, %v2358
    %v2360 = vpop.f32.mrb[0].mxu0
    %v2361 = vadd.f32 %v130, %v2360
    %2362 = vdwg.mxu0
    %v2367 = vcombine.low %v2288, %v2290
    %v2368 = vcombine.low %v2359, %v2361
    %v2370 = vunpack.c.l.s4 1983009808
    %v2371 = vunpack.c.0.s8 %v2370
    %v2372 = vlaneseq
    %v2373 = vshrl.u32 %v2372, 7
    %v2374 = vsub.s32 %v2371, %v2373
    %v2375 = vrot.slane %v2367, %v2374
    %v2377 = vunpack.c.l.s4 1983009808
    %v2378 = vunpack.c.0.s8 %v2377
    %v2379 = vlaneseq
    %v2380 = vshrl.u32 %v2379, 7
    %v2381 = vsub.s32 %v2378, %v2380
    %v2382 = vrot.slane %v2368, %v2381
    %v2383 = vcombine.low %v2375, %v2382
    %s2385 = scalar_lea.vmem [#allocation3], 32
    %2386 = vst [vmem:[%s2385] sm:$0xff] %v2383
    %s2387 = scalar_lea.vmem %s1, 10
    %v2388 = vld [vmem:[%s2387] sm:$0x3]
    %v2390 = vsel %vm168, %v2388, 0
    %2392 = vmatprep.subr.mxu0 %v152
    %2393 = vmatpush1.msra.mxu0 %v151
    %2394 = vmatprep.subr.mxu0 %v156
    %2395 = vmatpush1.msra.mxu0 %v155
    %2396 = vmatprep.subr.mxu0 %v160
    %2397 = vmatpush1.msra.mxu0 %v159
    %2398 = vmatprep.subr.mxu0 %v164
    %2399 = vmatpush1.msra.mxu0 %v163
    %2400 = vmatprep.subr.mxu0 0.0
    %2401 = vmatpush1.msra.mxu0 0.0
    %2402 = vmatprep.subr.mxu0 0.0
    %2403 = vmatpush1.msra.mxu0 0.0
    %2404 = vmatprep.subr.mxu0 0.0
    %2405 = vmatpush1.msra.mxu0 0.0
    %2406 = vmatprep.subr.mxu0 0.0
    %2407 = vmatpush1.msra.mxu0 0.0
    %2408 = vmatprep.subr.mxu0 0.0
    %2409 = vmatpush1.msra.mxu0 0.0
    %2410 = vmatprep.subr.mxu0 0.0
    %2411 = vmatpush1.msra.mxu0 0.0
    %2412 = vmatprep.subr.mxu0 0.0
    %2413 = vmatpush1.msra.mxu0 0.0
    %2414 = vmatprep.subr.mxu0 0.0
    %2415 = vmatpush1.msra.mxu0 0.0
    %2416 = vmatprep.subr.mxu0 0.0
    %2417 = vmatpush1.msra.mxu0 0.0
    %2418 = vmatprep.subr.mxu0 0.0
    %2419 = vmatpush1.msra.mxu0 0.0
    %2420 = vmatprep.subr.mxu0 0.0
    %2421 = vmatpush1.msra.mxu0 0.0
    %2422 = vmatprep.subr.mxu0 0.0
    %2423 = vmatpush1.msra.mxu0 0.0
    %2424 = vmatprep.subr.mxu0 0.0
    %2425 = vmatpush1.msra.mxu0 0.0
    %2426 = vmatprep.subr.mxu0 0.0
    %2427 = vmatpush1.msra.mxu0 0.0
    %2428 = vmatprep.subr.mxu0 0.0
    %2429 = vmatpush1.msra.mxu0 0.0
    %2430 = vmatprep.subr.mxu0 0.0
    %2431 = vmatpush1.msra.mxu0 0.0
    %2432 = vmatprep.subr.mxu0 0.0
    %2433 = vmatpush1.msra.mxu0 0.0
    %2434 = vmatprep.subr.mxu0 0.0
    %2435 = vmatpush1.msra.mxu0 0.0
    %2436 = vmatprep.subr.mxu0 0.0
    %2437 = vmatpush1.msra.mxu0 0.0
    %2438 = vmatprep.subr.mxu0 0.0
    %2439 = vmatpush1.msra.mxu0 0.0
    %2440 = vmatprep.subr.mxu0 0.0
    %2441 = vmatpush1.msra.mxu0 0.0
    %2442 = vmatprep.subr.mxu0 0.0
    %2443 = vmatpush1.msra.mxu0 0.0
    %2444 = vmatprep.subr.mxu0 0.0
    %2445 = vmatpush1.msra.mxu0 0.0
    %2446 = vmatprep.subr.mxu0 0.0
    %2447 = vmatpush1.msra.mxu0 0.0
    %2448 = vmatprep.subr.mxu0 0.0
    %2449 = vmatpush1.msra.mxu0 0.0
    %2450 = vmatprep.subr.mxu0 0.0
    %2451 = vmatpush1.msra.mxu0 0.0
    %2452 = vmatprep.subr.mxu0 0.0
    %2453 = vmatpush1.msra.mxu0 0.0
    %2454 = vmatprep.subr.mxu0 0.0
    %2455 = vmatpush1.msra.mxu0 0.0
    %2456 = vmatprep.mubr.f32.mxu0 0.0
    %2457 = vmatmul.mubr.f32.gmra.mrb[0].mxu0 %v2390
    %v2458 = vpop.f32.mrb[0].mxu0
    %v2459 = vadd.f32 %v118, %v2458
    %v2460 = vpop.f32.mrb[0].mxu0
    %v2461 = vadd.f32 %v122, %v2460
    %2462 = vdwg.mxu0
    %2463 = vmatprep.subr.mxu0 %v154
    %2464 = vmatpush1.msra.mxu0 %v153
    %2465 = vmatprep.subr.mxu0 %v158
    %2466 = vmatpush1.msra.mxu0 %v157
    %2467 = vmatprep.subr.mxu0 %v162
    %2468 = vmatpush1.msra.mxu0 %v161
    %2469 = vmatprep.subr.mxu0 %v166
    %2470 = vmatpush1.msra.mxu0 %v165
    %2471 = vmatprep.subr.mxu0 0.0
    %2472 = vmatpush1.msra.mxu0 0.0
    %2473 = vmatprep.subr.mxu0 0.0
    %2474 = vmatpush1.msra.mxu0 0.0
    %2475 = vmatprep.subr.mxu0 0.0
    %2476 = vmatpush1.msra.mxu0 0.0
    %2477 = vmatprep.subr.mxu0 0.0
    %2478 = vmatpush1.msra.mxu0 0.0
    %2479 = vmatprep.subr.mxu0 0.0
    %2480 = vmatpush1.msra.mxu0 0.0
    %2481 = vmatprep.subr.mxu0 0.0
    %2482 = vmatpush1.msra.mxu0 0.0
    %2483 = vmatprep.subr.mxu0 0.0
    %2484 = vmatpush1.msra.mxu0 0.0
    %2485 = vmatprep.subr.mxu0 0.0
    %2486 = vmatpush1.msra.mxu0 0.0
    %2487 = vmatprep.subr.mxu0 0.0
    %2488 = vmatpush1.msra.mxu0 0.0
    %2489 = vmatprep.subr.mxu0 0.0
    %2490 = vmatpush1.msra.mxu0 0.0
    %2491 = vmatprep.subr.mxu0 0.0
    %2492 = vmatpush1.msra.mxu0 0.0
    %2493 = vmatprep.subr.mxu0 0.0
    %2494 = vmatpush1.msra.mxu0 0.0
    %2495 = vmatprep.subr.mxu0 0.0
    %2496 = vmatpush1.msra.mxu0 0.0
    %2497 = vmatprep.subr.mxu0 0.0
    %2498 = vmatpush1.msra.mxu0 0.0
    %2499 = vmatprep.subr.mxu0 0.0
    %2500 = vmatpush1.msra.mxu0 0.0
    %2501 = vmatprep.subr.mxu0 0.0
    %2502 = vmatpush1.msra.mxu0 0.0
    %2503 = vmatprep.subr.mxu0 0.0
    %2504 = vmatpush1.msra.mxu0 0.0
    %2505 = vmatprep.subr.mxu0 0.0
    %2506 = vmatpush1.msra.mxu0 0.0
    %2507 = vmatprep.subr.mxu0 0.0
    %2508 = vmatpush1.msra.mxu0 0.0
    %2509 = vmatprep.subr.mxu0 0.0
    %2510 = vmatpush1.msra.mxu0 0.0
    %2511 = vmatprep.subr.mxu0 0.0
    %2512 = vmatpush1.msra.mxu0 0.0
    %2513 = vmatprep.subr.mxu0 0.0
    %2514 = vmatpush1.msra.mxu0 0.0
    %2515 = vmatprep.subr.mxu0 0.0
    %2516 = vmatpush1.msra.mxu0 0.0
    %2517 = vmatprep.subr.mxu0 0.0
    %2518 = vmatpush1.msra.mxu0 0.0
    %2519 = vmatprep.subr.mxu0 0.0
    %2520 = vmatpush1.msra.mxu0 0.0
    %2521 = vmatprep.subr.mxu0 0.0
    %2522 = vmatpush1.msra.mxu0 0.0
    %2523 = vmatprep.subr.mxu0 0.0
    %2524 = vmatpush1.msra.mxu0 0.0
    %2525 = vmatprep.subr.mxu0 0.0
    %2526 = vmatpush1.msra.mxu0 0.0
    %2527 = vmatprep.mubr.f32.mxu0 0.0
    %2528 = vmatmul.mubr.f32.gmra.mrb[0].mxu0 %v2390
    %v2529 = vpop.f32.mrb[0].mxu0
    %v2530 = vadd.f32 %v126, %v2529
    %v2531 = vpop.f32.mrb[0].mxu0
    %v2532 = vadd.f32 %v130, %v2531
    %2533 = vdwg.mxu0
    %v2538 = vcombine.low %v2459, %v2461
    %v2539 = vcombine.low %v2530, %v2532
    %v2541 = vunpack.c.l.s4 1983009808
    %v2542 = vunpack.c.0.s8 %v2541
    %v2543 = vlaneseq
    %v2544 = vshrl.u32 %v2543, 7
    %v2545 = vsub.s32 %v2542, %v2544
    %v2546 = vrot.slane %v2538, %v2545
    %v2548 = vunpack.c.l.s4 1983009808
    %v2549 = vunpack.c.0.s8 %v2548
    %v2550 = vlaneseq
    %v2551 = vshrl.u32 %v2550, 7
    %v2552 = vsub.s32 %v2549, %v2551
    %v2553 = vrot.slane %v2539, %v2552
    %v2554 = vcombine.low %v2546, %v2553
    %s2556 = scalar_lea.vmem [#allocation3], 40
    %2557 = vst [vmem:[%s2556] sm:$0xff] %v2554
    %s2558 = scalar_lea.vmem %s1, 12
    %v2559 = vld [vmem:[%s2558] sm:$0x3]
    %v2561 = vsel %vm168, %v2559, 0
    %2563 = vmatprep.subr.mxu0 %v152
    %2564 = vmatpush1.msra.mxu0 %v151
    %2565 = vmatprep.subr.mxu0 %v156
    %2566 = vmatpush1.msra.mxu0 %v155
    %2567 = vmatprep.subr.mxu0 %v160
    %2568 = vmatpush1.msra.mxu0 %v159
    %2569 = vmatprep.subr.mxu0 %v164
    %2570 = vmatpush1.msra.mxu0 %v163
    %2571 = vmatprep.subr.mxu0 0.0
    %2572 = vmatpush1.msra.mxu0 0.0
    %2573 = vmatprep.subr.mxu0 0.0
    %2574 = vmatpush1.msra.mxu0 0.0
    %2575 = vmatprep.subr.mxu0 0.0
    %2576 = vmatpush1.msra.mxu0 0.0
    %2577 = vmatprep.subr.mxu0 0.0
    %2578 = vmatpush1.msra.mxu0 0.0
    %2579 = vmatprep.subr.mxu0 0.0
    %2580 = vmatpush1.msra.mxu0 0.0
    %2581 = vmatprep.subr.mxu0 0.0
    %2582 = vmatpush1.msra.mxu0 0.0
    %2583 = vmatprep.subr.mxu0 0.0
    %2584 = vmatpush1.msra.mxu0 0.0
    %2585 = vmatprep.subr.mxu0 0.0
    %2586 = vmatpush1.msra.mxu0 0.0
    %2587 = vmatprep.subr.mxu0 0.0
    %2588 = vmatpush1.msra.mxu0 0.0
    %2589 = vmatprep.subr.mxu0 0.0
    %2590 = vmatpush1.msra.mxu0 0.0
    %2591 = vmatprep.subr.mxu0 0.0
    %2592 = vmatpush1.msra.mxu0 0.0
    %2593 = vmatprep.subr.mxu0 0.0
    %2594 = vmatpush1.msra.mxu0 0.0
    %2595 = vmatprep.subr.mxu0 0.0
    %2596 = vmatpush1.msra.mxu0 0.0
    %2597 = vmatprep.subr.mxu0 0.0
    %2598 = vmatpush1.msra.mxu0 0.0
    %2599 = vmatprep.subr.mxu0 0.0
    %2600 = vmatpush1.msra.mxu0 0.0
    %2601 = vmatprep.subr.mxu0 0.0
    %2602 = vmatpush1.msra.mxu0 0.0
    %2603 = vmatprep.subr.mxu0 0.0
    %2604 = vmatpush1.msra.mxu0 0.0
    %2605 = vmatprep.subr.mxu0 0.0
    %2606 = vmatpush1.msra.mxu0 0.0
    %2607 = vmatprep.subr.mxu0 0.0
    %2608 = vmatpush1.msra.mxu0 0.0
    %2609 = vmatprep.subr.mxu0 0.0
    %2610 = vmatpush1.msra.mxu0 0.0
    %2611 = vmatprep.subr.mxu0 0.0
    %2612 = vmatpush1.msra.mxu0 0.0
    %2613 = vmatprep.subr.mxu0 0.0
    %2614 = vmatpush1.msra.mxu0 0.0
    %2615 = vmatprep.subr.mxu0 0.0
    %2616 = vmatpush1.msra.mxu0 0.0
    %2617 = vmatprep.subr.mxu0 0.0
    %2618 = vmatpush1.msra.mxu0 0.0
    %2619 = vmatprep.subr.mxu0 0.0
    %2620 = vmatpush1.msra.mxu0 0.0
    %2621 = vmatprep.subr.mxu0 0.0
    %2622 = vmatpush1.msra.mxu0 0.0
    %2623 = vmatprep.subr.mxu0 0.0
    %2624 = vmatpush1.msra.mxu0 0.0
    %2625 = vmatprep.subr.mxu0 0.0
    %2626 = vmatpush1.msra.mxu0 0.0
    %2627 = vmatprep.mubr.f32.mxu0 0.0
    %2628 = vmatmul.mubr.f32.gmra.mrb[0].mxu0 %v2561
    %v2629 = vpop.f32.mrb[0].mxu0
    %v2630 = vadd.f32 %v118, %v2629
    %v2631 = vpop.f32.mrb[0].mxu0
    %v2632 = vadd.f32 %v122, %v2631
    %2633 = vdwg.mxu0
    %2634 = vmatprep.subr.mxu0 %v154
    %2635 = vmatpush1.msra.mxu0 %v153
    %2636 = vmatprep.subr.mxu0 %v158
    %2637 = vmatpush1.msra.mxu0 %v157
    %2638 = vmatprep.subr.mxu0 %v162
    %2639 = vmatpush1.msra.mxu0 %v161
    %2640 = vmatprep.subr.mxu0 %v166
    %2641 = vmatpush1.msra.mxu0 %v165
    %2642 = vmatprep.subr.mxu0 0.0
    %2643 = vmatpush1.msra.mxu0 0.0
    %2644 = vmatprep.subr.mxu0 0.0
    %2645 = vmatpush1.msra.mxu0 0.0
    %2646 = vmatprep.subr.mxu0 0.0
    %2647 = vmatpush1.msra.mxu0 0.0
    %2648 = vmatprep.subr.mxu0 0.0
    %2649 = vmatpush1.msra.mxu0 0.0
    %2650 = vmatprep.subr.mxu0 0.0
    %2651 = vmatpush1.msra.mxu0 0.0
    %2652 = vmatprep.subr.mxu0 0.0
    %2653 = vmatpush1.msra.mxu0 0.0
    %2654 = vmatprep.subr.mxu0 0.0
    %2655 = vmatpush1.msra.mxu0 0.0
    %2656 = vmatprep.subr.mxu0 0.0
    %2657 = vmatpush1.msra.mxu0 0.0
    %2658 = vmatprep.subr.mxu0 0.0
    %2659 = vmatpush1.msra.mxu0 0.0
    %2660 = vmatprep.subr.mxu0 0.0
    %2661 = vmatpush1.msra.mxu0 0.0
    %2662 = vmatprep.subr.mxu0 0.0
    %2663 = vmatpush1.msra.mxu0 0.0
    %2664 = vmatprep.subr.mxu0 0.0
    %2665 = vmatpush1.msra.mxu0 0.0
    %2666 = vmatprep.subr.mxu0 0.0
    %2667 = vmatpush1.msra.mxu0 0.0
    %2668 = vmatprep.subr.mxu0 0.0
    %2669 = vmatpush1.msra.mxu0 0.0
    %2670 = vmatprep.subr.mxu0 0.0
    %2671 = vmatpush1.msra.mxu0 0.0
    %2672 = vmatprep.subr.mxu0 0.0
    %2673 = vmatpush1.msra.mxu0 0.0
    %2674 = vmatprep.subr.mxu0 0.0
    %2675 = vmatpush1.msra.mxu0 0.0
    %2676 = vmatprep.subr.mxu0 0.0
    %2677 = vmatpush1.msra.mxu0 0.0
    %2678 = vmatprep.subr.mxu0 0.0
    %2679 = vmatpush1.msra.mxu0 0.0
    %2680 = vmatprep.subr.mxu0 0.0
    %2681 = vmatpush1.msra.mxu0 0.0
    %2682 = vmatprep.subr.mxu0 0.0
    %2683 = vmatpush1.msra.mxu0 0.0
    %2684 = vmatprep.subr.mxu0 0.0
    %2685 = vmatpush1.msra.mxu0 0.0
    %2686 = vmatprep.subr.mxu0 0.0
    %2687 = vmatpush1.msra.mxu0 0.0
    %2688 = vmatprep.subr.mxu0 0.0
    %2689 = vmatpush1.msra.mxu0 0.0
    %2690 = vmatprep.subr.mxu0 0.0
    %2691 = vmatpush1.msra.mxu0 0.0
    %2692 = vmatprep.subr.mxu0 0.0
    %2693 = vmatpush1.msra.mxu0 0.0
    %2694 = vmatprep.subr.mxu0 0.0
    %2695 = vmatpush1.msra.mxu0 0.0
    %2696 = vmatprep.subr.mxu0 0.0
    %2697 = vmatpush1.msra.mxu0 0.0
    %2698 = vmatprep.mubr.f32.mxu0 0.0
    %2699 = vmatmul.mubr.f32.gmra.mrb[0].mxu0 %v2561
    %v2700 = vpop.f32.mrb[0].mxu0
    %v2701 = vadd.f32 %v126, %v2700
    %v2702 = vpop.f32.mrb[0].mxu0
    %v2703 = vadd.f32 %v130, %v2702
    %2704 = vdwg.mxu0
    %v2709 = vcombine.low %v2630, %v2632
    %v2710 = vcombine.low %v2701, %v2703
    %v2712 = vunpack.c.l.s4 1983009808
    %v2713 = vunpack.c.0.s8 %v2712
    %v2714 = vlaneseq
    %v2715 = vshrl.u32 %v2714, 7
    %v2716 = vsub.s32 %v2713, %v2715
    %v2717 = vrot.slane %v2709, %v2716
    %v2719 = vunpack.c.l.s4 1983009808
    %v2720 = vunpack.c.0.s8 %v2719
    %v2721 = vlaneseq
    %v2722 = vshrl.u32 %v2721, 7
    %v2723 = vsub.s32 %v2720, %v2722
    %v2724 = vrot.slane %v2710, %v2723
    %v2725 = vcombine.low %v2717, %v2724
    %s2727 = scalar_lea.vmem [#allocation3], 48
    %2728 = vst [vmem:[%s2727] sm:$0xff] %v2725
    %s2729 = scalar_lea.vmem %s1, 14
    %v2730 = vld [vmem:[%s2729] sm:$0x3]
    %v2732 = vsel %vm168, %v2730, 0
    %2734 = vmatprep.subr.mxu0 %v152
    %2735 = vmatpush1.msra.mxu0 %v151
    %2736 = vmatprep.subr.mxu0 %v156
    %2737 = vmatpush1.msra.mxu0 %v155
    %2738 = vmatprep.subr.mxu0 %v160
    %2739 = vmatpush1.msra.mxu0 %v159
    %2740 = vmatprep.subr.mxu0 %v164
    %2741 = vmatpush1.msra.mxu0 %v163
    %2742 = vmatprep.subr.mxu0 0.0
    %2743 = vmatpush1.msra.mxu0 0.0
    %2744 = vmatprep.subr.mxu0 0.0
    %2745 = vmatpush1.msra.mxu0 0.0
    %2746 = vmatprep.subr.mxu0 0.0
    %2747 = vmatpush1.msra.mxu0 0.0
    %2748 = vmatprep.subr.mxu0 0.0
    %2749 = vmatpush1.msra.mxu0 0.0
    %2750 = vmatprep.subr.mxu0 0.0
    %2751 = vmatpush1.msra.mxu0 0.0
    %2752 = vmatprep.subr.mxu0 0.0
    %2753 = vmatpush1.msra.mxu0 0.0
    %2754 = vmatprep.subr.mxu0 0.0
    %2755 = vmatpush1.msra.mxu0 0.0
    %2756 = vmatprep.subr.mxu0 0.0
    %2757 = vmatpush1.msra.mxu0 0.0
    %2758 = vmatprep.subr.mxu0 0.0
    %2759 = vmatpush1.msra.mxu0 0.0
    %2760 = vmatprep.subr.mxu0 0.0
    %2761 = vmatpush1.msra.mxu0 0.0
    %2762 = vmatprep.subr.mxu0 0.0
    %2763 = vmatpush1.msra.mxu0 0.0
    %2764 = vmatprep.subr.mxu0 0.0
    %2765 = vmatpush1.msra.mxu0 0.0
    %2766 = vmatprep.subr.mxu0 0.0
    %2767 = vmatpush1.msra.mxu0 0.0
    %2768 = vmatprep.subr.mxu0 0.0
    %2769 = vmatpush1.msra.mxu0 0.0
    %2770 = vmatprep.subr.mxu0 0.0
    %2771 = vmatpush1.msra.mxu0 0.0
    %2772 = vmatprep.subr.mxu0 0.0
    %2773 = vmatpush1.msra.mxu0 0.0
    %2774 = vmatprep.subr.mxu0 0.0
    %2775 = vmatpush1.msra.mxu0 0.0
    %2776 = vmatprep.subr.mxu0 0.0
    %2777 = vmatpush1.msra.mxu0 0.0
    %2778 = vmatprep.subr.mxu0 0.0
    %2779 = vmatpush1.msra.mxu0 0.0
    %2780 = vmatprep.subr.mxu0 0.0
    %2781 = vmatpush1.msra.mxu0 0.0
    %2782 = vmatprep.subr.mxu0 0.0
    %2783 = vmatpush1.msra.mxu0 0.0
    %2784 = vmatprep.subr.mxu0 0.0
    %2785 = vmatpush1.msra.mxu0 0.0
    %2786 = vmatprep.subr.mxu0 0.0
    %2787 = vmatpush1.msra.mxu0 0.0
    %2788 = vmatprep.subr.mxu0 0.0
    %2789 = vmatpush1.msra.mxu0 0.0
    %2790 = vmatprep.subr.mxu0 0.0
    %2791 = vmatpush1.msra.mxu0 0.0
    %2792 = vmatprep.subr.mxu0 0.0
    %2793 = vmatpush1.msra.mxu0 0.0
    %2794 = vmatprep.subr.mxu0 0.0
    %2795 = vmatpush1.msra.mxu0 0.0
    %2796 = vmatprep.subr.mxu0 0.0
    %2797 = vmatpush1.msra.mxu0 0.0
    %2798 = vmatprep.mubr.f32.mxu0 0.0
    %2799 = vmatmul.mubr.f32.gmra.mrb[0].mxu0 %v2732
    %v2800 = vpop.f32.mrb[0].mxu0
    %v2801 = vadd.f32 %v118, %v2800
    %v2802 = vpop.f32.mrb[0].mxu0
    %v2803 = vadd.f32 %v122, %v2802
    %2804 = vdwg.mxu0
    %2805 = vmatprep.subr.mxu0 %v154
    %2806 = vmatpush1.msra.mxu0 %v153
    %2807 = vmatprep.subr.mxu0 %v158
    %2808 = vmatpush1.msra.mxu0 %v157
    %2809 = vmatprep.subr.mxu0 %v162
    %2810 = vmatpush1.msra.mxu0 %v161
    %2811 = vmatprep.subr.mxu0 %v166
    %2812 = vmatpush1.msra.mxu0 %v165
    %2813 = vmatprep.subr.mxu0 0.0
    %2814 = vmatpush1.msra.mxu0 0.0
    %2815 = vmatprep.subr.mxu0 0.0
    %2816 = vmatpush1.msra.mxu0 0.0
    %2817 = vmatprep.subr.mxu0 0.0
    %2818 = vmatpush1.msra.mxu0 0.0
    %2819 = vmatprep.subr.mxu0 0.0
    %2820 = vmatpush1.msra.mxu0 0.0
    %2821 = vmatprep.subr.mxu0 0.0
    %2822 = vmatpush1.msra.mxu0 0.0
    %2823 = vmatprep.subr.mxu0 0.0
    %2824 = vmatpush1.msra.mxu0 0.0
    %2825 = vmatprep.subr.mxu0 0.0
    %2826 = vmatpush1.msra.mxu0 0.0
    %2827 = vmatprep.subr.mxu0 0.0
    %2828 = vmatpush1.msra.mxu0 0.0
    %2829 = vmatprep.subr.mxu0 0.0
    %2830 = vmatpush1.msra.mxu0 0.0
    %2831 = vmatprep.subr.mxu0 0.0
    %2832 = vmatpush1.msra.mxu0 0.0
    %2833 = vmatprep.subr.mxu0 0.0
    %2834 = vmatpush1.msra.mxu0 0.0
    %2835 = vmatprep.subr.mxu0 0.0
    %2836 = vmatpush1.msra.mxu0 0.0
    %2837 = vmatprep.subr.mxu0 0.0
    %2838 = vmatpush1.msra.mxu0 0.0
    %2839 = vmatprep.subr.mxu0 0.0
    %2840 = vmatpush1.msra.mxu0 0.0
    %2841 = vmatprep.subr.mxu0 0.0
    %2842 = vmatpush1.msra.mxu0 0.0
    %2843 = vmatprep.subr.mxu0 0.0
    %2844 = vmatpush1.msra.mxu0 0.0
    %2845 = vmatprep.subr.mxu0 0.0
    %2846 = vmatpush1.msra.mxu0 0.0
    %2847 = vmatprep.subr.mxu0 0.0
    %2848 = vmatpush1.msra.mxu0 0.0
    %2849 = vmatprep.subr.mxu0 0.0
    %2850 = vmatpush1.msra.mxu0 0.0
    %2851 = vmatprep.subr.mxu0 0.0
    %2852 = vmatpush1.msra.mxu0 0.0
    %2853 = vmatprep.subr.mxu0 0.0
    %2854 = vmatpush1.msra.mxu0 0.0
    %2855 = vmatprep.subr.mxu0 0.0
    %2856 = vmatpush1.msra.mxu0 0.0
    %2857 = vmatprep.subr.mxu0 0.0
    %2858 = vmatpush1.msra.mxu0 0.0
    %2859 = vmatprep.subr.mxu0 0.0
    %2860 = vmatpush1.msra.mxu0 0.0
    %2861 = vmatprep.subr.mxu0 0.0
    %2862 = vmatpush1.msra.mxu0 0.0
    %2863 = vmatprep.subr.mxu0 0.0
    %2864 = vmatpush1.msra.mxu0 0.0
    %2865 = vmatprep.subr.mxu0 0.0
    %2866 = vmatpush1.msra.mxu0 0.0
    %2867 = vmatprep.subr.mxu0 0.0
    %2868 = vmatpush1.msra.mxu0 0.0
    %2869 = vmatprep.mubr.f32.mxu0 0.0
    %2870 = vmatmul.mubr.f32.gmra.mrb[0].mxu0 %v2732
    %v2871 = vpop.f32.mrb[0].mxu0
    %v2872 = vadd.f32 %v126, %v2871
    %v2873 = vpop.f32.mrb[0].mxu0
    %v2874 = vadd.f32 %v130, %v2873
    %2875 = vdwg.mxu0
    %v2880 = vcombine.low %v2801, %v2803
    %v2881 = vcombine.low %v2872, %v2874
    %v2883 = vunpack.c.l.s4 1983009808
    %v2884 = vunpack.c.0.s8 %v2883
    %v2885 = vlaneseq
    %v2886 = vshrl.u32 %v2885, 7
    %v2887 = vsub.s32 %v2884, %v2886
    %v2888 = vrot.slane %v2880, %v2887
    %v2890 = vunpack.c.l.s4 1983009808
    %v2891 = vunpack.c.0.s8 %v2890
    %v2892 = vlaneseq
    %v2893 = vshrl.u32 %v2892, 7
    %v2894 = vsub.s32 %v2891, %v2893
    %v2895 = vrot.slane %v2881, %v2894
    %v2896 = vcombine.low %v2888, %v2895
    %s2898 = scalar_lea.vmem [#allocation3], 56
    %2899 = vst [vmem:[%s2898] sm:$0xff] %v2896
    %v2900 = vld [vmem:[%s3] sm:$0xff]
    %v2901 = vld [vmem:[%s3 + $0x8] sm:$0xff]
    %v2902 = vld [vmem:[%s3 + $0x10] sm:$0xff]
    %v2903 = vld [vmem:[%s3 + $0x18] sm:$0xff]
    %v2904 = vld [vmem:[%s3 + $0x20] sm:$0xff]
    %v2905 = vld [vmem:[%s3 + $0x28] sm:$0xff]
    %v2906 = vld [vmem:[%s3 + $0x30] sm:$0xff]
    %v2907 = vld [vmem:[%s3 + $0x38] sm:$0xff]
    %v2908 = vld [vmem:[%s3 + $0x40] sm:$0xff]
    %v2909 = vld [vmem:[%s3 + $0x48] sm:$0xff]
    %v2910 = vld [vmem:[%s3 + $0x50] sm:$0xff]
    %v2911 = vld [vmem:[%s3 + $0x58] sm:$0xff]
    %v2912 = vld [vmem:[%s3 + $0x60] sm:$0xff]
    %v2913 = vld [vmem:[%s3 + $0x68] sm:$0xff]
    %v2914 = vld [vmem:[%s3 + $0x70] sm:$0xff]
    %v2915 = vld [vmem:[%s3 + $0x78] sm:$0xff]
    %v2916 = vld [vmem:[%s3 + $0x80] sm:$0xff]
    %v2917 = vld [vmem:[%s3 + $0x88] sm:$0xff]
    %v2918 = vld [vmem:[%s3 + $0x90] sm:$0xff]
    %v2919 = vld [vmem:[%s3 + $0x98] sm:$0xff]
    %v2920 = vld [vmem:[%s3 + $0xa0] sm:$0xff]
    %v2921 = vld [vmem:[%s3 + $0xa8] sm:$0xff]
    %v2922 = vld [vmem:[%s3 + $0xb0] sm:$0xff]
    %v2923 = vld [vmem:[%s3 + $0xb8] sm:$0xff]
    %v2924 = vld [vmem:[%s3 + $0xc0] sm:$0xff]
    %v2925 = vld [vmem:[%s3 + $0xc8] sm:$0xff]
    %v2926 = vld [vmem:[%s3 + $0xd0] sm:$0xff]
    %v2927 = vld [vmem:[%s3 + $0xd8] sm:$0xff]
    %v2928 = vld [vmem:[%s3 + $0xe0] sm:$0xff]
    %v2929 = vld [vmem:[%s3 + $0xe8] sm:$0xff]
    %v2930 = vld [vmem:[%s3 + $0xf0] sm:$0xff]
    %v2931 = vld [vmem:[%s3 + $0xf8] sm:$0xff]
    %v2932 = vld [vmem:[%s3 + $0x100] sm:$0xff]
    %v2933 = vld [vmem:[%s3 + $0x108] sm:$0xff]
    %v2934 = vld [vmem:[%s3 + $0x110] sm:$0xff]
    %v2935 = vld [vmem:[%s3 + $0x118] sm:$0xff]
    %v2936 = vld [vmem:[%s3 + $0x120] sm:$0xff]
    %v2937 = vld [vmem:[%s3 + $0x128] sm:$0xff]
    %v2938 = vld [vmem:[%s3 + $0x130] sm:$0xff]
    %v2939 = vld [vmem:[%s3 + $0x138] sm:$0xff]
    %v2940 = vld [vmem:[%s3 + $0x140] sm:$0xff]
    %v2941 = vld [vmem:[%s3 + $0x148] sm:$0xff]
    %v2942 = vld [vmem:[%s3 + $0x150] sm:$0xff]
    %v2943 = vld [vmem:[%s3 + $0x158] sm:$0xff]
    %v2944 = vld [vmem:[%s3 + $0x160] sm:$0xff]
    %v2945 = vld [vmem:[%s3 + $0x168] sm:$0xff]
    %v2946 = vld [vmem:[%s3 + $0x170] sm:$0xff]
    %v2947 = vld [vmem:[%s3 + $0x178] sm:$0xff]
    %v2948 = vld [vmem:[%s3 + $0x180] sm:$0xff]
    %v2949 = vld [vmem:[%s3 + $0x188] sm:$0xff]
    %v2950 = vld [vmem:[%s3 + $0x190] sm:$0xff]
    %v2951 = vld [vmem:[%s3 + $0x198] sm:$0xff]
    %v2952 = vld [vmem:[%s3 + $0x1a0] sm:$0xff]
    %v2953 = vld [vmem:[%s3 + $0x1a8] sm:$0xff]
    %v2954 = vld [vmem:[%s3 + $0x1b0] sm:$0xff]
    %v2955 = vld [vmem:[%s3 + $0x1b8] sm:$0xff]
    %v2956 = vld [vmem:[%s3 + $0x1c0] sm:$0xff]
    %v2957 = vld [vmem:[%s3 + $0x1c8] sm:$0xff]
    %v2958 = vld [vmem:[%s3 + $0x1d0] sm:$0xff]
    %v2959 = vld [vmem:[%s3 + $0x1d8] sm:$0xff]
    %v2960 = vld [vmem:[%s3 + $0x1e0] sm:$0xff]
    %v2961 = vld [vmem:[%s3 + $0x1e8] sm:$0xff]
    %v2962 = vld [vmem:[%s3 + $0x1f0] sm:$0xff]
    %v2963 = vld [vmem:[%s3 + $0x1f8] sm:$0xff]
    %v2964 = vld [vmem:[#allocation2] sm:$0xff]
    %2965 = vmatprep.subr.mxu0 %v2901
    %2966 = vmatpush1.msra.mxu0 %v2900
    %2967 = vmatprep.subr.mxu0 %v2905
    %2968 = vmatpush1.msra.mxu0 %v2904
    %2969 = vmatprep.subr.mxu0 %v2909
    %2970 = vmatpush1.msra.mxu0 %v2908
    %2971 = vmatprep.subr.mxu0 %v2913
    %2972 = vmatpush1.msra.mxu0 %v2912
    %2973 = vmatprep.subr.mxu0 %v2917
    %2974 = vmatpush1.msra.mxu0 %v2916
    %2975 = vmatprep.subr.mxu0 %v2921
    %2976 = vmatpush1.msra.mxu0 %v2920
    %2977 = vmatprep.subr.mxu0 %v2925
    %2978 = vmatpush1.msra.mxu0 %v2924
    %2979 = vmatprep.subr.mxu0 %v2929
    %2980 = vmatpush1.msra.mxu0 %v2928
    %2981 = vmatprep.subr.mxu0 %v2933
    %2982 = vmatpush1.msra.mxu0 %v2932
    %2983 = vmatprep.subr.mxu0 %v2937
    %2984 = vmatpush1.msra.mxu0 %v2936
    %2985 = vmatprep.subr.mxu0 %v2941
    %2986 = vmatpush1.msra.mxu0 %v2940
    %2987 = vmatprep.subr.mxu0 %v2945
    %2988 = vmatpush1.msra.mxu0 %v2944
    %2989 = vmatprep.subr.mxu0 %v2949
    %2990 = vmatpush1.msra.mxu0 %v2948
    %2991 = vmatprep.subr.mxu0 %v2953
    %2992 = vmatpush1.msra.mxu0 %v2952
    %2993 = vmatprep.subr.mxu0 %v2957
    %2994 = vmatpush1.msra.mxu0 %v2956
    %2995 = vmatprep.subr.mxu0 %v2961
    %2996 = vmatpush1.msra.mxu0 %v2960
    %2997 = vmatprep.subr.mxu0 0.0
    %2998 = vmatpush1.msra.mxu0 0.0
    %2999 = vmatprep.subr.mxu0 0.0
    %3000 = vmatpush1.msra.mxu0 0.0
    %3001 = vmatprep.subr.mxu0 0.0
    %3002 = vmatpush1.msra.mxu0 0.0
    %3003 = vmatprep.subr.mxu0 0.0
    %3004 = vmatpush1.msra.mxu0 0.0
    %3005 = vmatprep.subr.mxu0 0.0
    %3006 = vmatpush1.msra.mxu0 0.0
    %3007 = vmatprep.subr.mxu0 0.0
    %3008 = vmatpush1.msra.mxu0 0.0
    %3009 = vmatprep.subr.mxu0 0.0
    %3010 = vmatpush1.msra.mxu0 0.0
    %3011 = vmatprep.subr.mxu0 0.0
    %3012 = vmatpush1.msra.mxu0 0.0
    %3013 = vmatprep.subr.mxu0 0.0
    %3014 = vmatpush1.msra.mxu0 0.0
    %3015 = vmatprep.subr.mxu0 0.0
    %3016 = vmatpush1.msra.mxu0 0.0
    %3017 = vmatprep.subr.mxu0 0.0
    %3018 = vmatpush1.msra.mxu0 0.0
    %3019 = vmatprep.subr.mxu0 0.0
    %3020 = vmatpush1.msra.mxu0 0.0
    %3021 = vmatprep.subr.mxu0 0.0
    %3022 = vmatpush1.msra.mxu0 0.0
    %3023 = vmatprep.subr.mxu0 0.0
    %3024 = vmatpush1.msra.mxu0 0.0
    %3025 = vmatprep.subr.mxu0 0.0
    %3026 = vmatpush1.msra.mxu0 0.0
    %3027 = vmatprep.subr.mxu0 0.0
    %3028 = vmatpush1.msra.mxu0 0.0
    %3029 = vmatprep.mubr.f32.mxu0 0.0
    %3030 = vmatmul.mubr.f32.gmra.mrb[0].mxu0 0.0
    %v3031 = vpop.f32.mrb[0].mxu0
    %v3032 = vadd.f32 0.0, %v3031
    %v3033 = vpop.f32.mrb[0].mxu0
    %v3034 = vadd.f32 0.0, %v3033
    %3035 = vdwg.mxu0
    %3036 = vmatprep.subr.mxu0 %v2903
    %3037 = vmatpush1.msra.mxu0 %v2902
    %3038 = vmatprep.subr.mxu0 %v2907
    %3039 = vmatpush1.msra.mxu0 %v2906
    %3040 = vmatprep.subr.mxu0 %v2911
    %3041 = vmatpush1.msra.mxu0 %v2910
    %3042 = vmatprep.subr.mxu0 %v2915
    %3043 = vmatpush1.msra.mxu0 %v2914
    %3044 = vmatprep.subr.mxu0 %v2919
    %3045 = vmatpush1.msra.mxu0 %v2918
    %3046 = vmatprep.subr.mxu0 %v2923
    %3047 = vmatpush1.msra.mxu0 %v2922
    %3048 = vmatprep.subr.mxu0 %v2927
    %3049 = vmatpush1.msra.mxu0 %v2926
    %3050 = vmatprep.subr.mxu0 %v2931
    %3051 = vmatpush1.msra.mxu0 %v2930
    %3052 = vmatprep.subr.mxu0 %v2935
    %3053 = vmatpush1.msra.mxu0 %v2934
    %3054 = vmatprep.subr.mxu0 %v2939
    %3055 = vmatpush1.msra.mxu0 %v2938
    %3056 = vmatprep.subr.mxu0 %v2943
    %3057 = vmatpush1.msra.mxu0 %v2942
    %3058 = vmatprep.subr.mxu0 %v2947
    %3059 = vmatpush1.msra.mxu0 %v2946
    %3060 = vmatprep.subr.mxu0 %v2951
    %3061 = vmatpush1.msra.mxu0 %v2950
    %3062 = vmatprep.subr.mxu0 %v2955
    %3063 = vmatpush1.msra.mxu0 %v2954
    %3064 = vmatprep.subr.mxu0 %v2959
    %3065 = vmatpush1.msra.mxu0 %v2958
    %3066 = vmatprep.subr.mxu0 %v2963
    %3067 = vmatpush1.msra.mxu0 %v2962
    %3068 = vmatprep.subr.mxu0 0.0
    %3069 = vmatpush1.msra.mxu0 0.0
    %3070 = vmatprep.subr.mxu0 0.0
    %3071 = vmatpush1.msra.mxu0 0.0
    %3072 = vmatprep.subr.mxu0 0.0
    %3073 = vmatpush1.msra.mxu0 0.0
    %3074 = vmatprep.subr.mxu0 0.0
    %3075 = vmatpush1.msra.mxu0 0.0
    %3076 = vmatprep.subr.mxu0 0.0
    %3077 = vmatpush1.msra.mxu0 0.0
    %3078 = vmatprep.subr.mxu0 0.0
    %3079 = vmatpush1.msra.mxu0 0.0
    %3080 = vmatprep.subr.mxu0 0.0
    %3081 = vmatpush1.msra.mxu0 0.0
    %3082 = vmatprep.subr.mxu0 0.0
    %3083 = vmatpush1.msra.mxu0 0.0
    %3084 = vmatprep.subr.mxu0 0.0
    %3085 = vmatpush1.msra.mxu0 0.0
    %3086 = vmatprep.subr.mxu0 0.0
    %3087 = vmatpush1.msra.mxu0 0.0
    %3088 = vmatprep.subr.mxu0 0.0
    %3089 = vmatpush1.msra.mxu0 0.0
    %3090 = vmatprep.subr.mxu0 0.0
    %3091 = vmatpush1.msra.mxu0 0.0
    %3092 = vmatprep.subr.mxu0 0.0
    %3093 = vmatpush1.msra.mxu0 0.0
    %3094 = vmatprep.subr.mxu0 0.0
    %3095 = vmatpush1.msra.mxu0 0.0
    %3096 = vmatprep.subr.mxu0 0.0
    %3097 = vmatpush1.msra.mxu0 0.0
    %3098 = vmatprep.subr.mxu0 0.0
    %3099 = vmatpush1.msra.mxu0 0.0
    %3100 = vmatprep.mubr.f32.mxu0 0.0
    %3101 = vmatmul.mubr.f32.gmra.mrb[0].mxu0 0.0
    %v3102 = vpop.f32.mrb[0].mxu0
    %v3103 = vadd.f32 0.0, %v3102
    %v3104 = vpop.f32.mrb[0].mxu0
    %v3105 = vadd.f32 0.0, %v3104
    %3106 = vdwg.mxu0
    %v3111 = vcombine.low %v3032, %v3034
    %v3112 = vcombine.low %v3103, %v3105
    %v3114 = vunpack.c.l.s4 1983009808
    %v3115 = vunpack.c.0.s8 %v3114
    %v3116 = vlaneseq
    %v3117 = vshrl.u32 %v3116, 7
    %v3118 = vsub.s32 %v3115, %v3117
    %v3119 = vrot.slane %v3111, %v3118
    %v3121 = vunpack.c.l.s4 1983009808
    %v3122 = vunpack.c.0.s8 %v3121
    %v3123 = vlaneseq
    %v3124 = vshrl.u32 %v3123, 7
    %v3125 = vsub.s32 %v3122, %v3124
    %v3126 = vrot.slane %v3112, %v3125
    %v3127 = vcombine.low %v3119, %v3126
    %v3129 = vadd.f32 %v2964, %v3127
    %v3130 = vxor.u32 %v3129, 2147483648
    %v3131 = vmul.f32 %v3130, 1.442695
    %v3132 = vpow.pop %v3131
    %v3133 = vadd.f32 %v3132, 1.0
    %v3134 = vrcp.pop %v3133
    %v3135 = vmul.f32 1.0, %v3134
    %v3137 = vrot.slane %v3129, 2
    %v3139 = vxor.u32 %v3137, 2147483648
    %v3140 = vmul.f32 %v3139, 1.442695
    %v3141 = vpow.pop %v3140
    %v3142 = vadd.f32 %v3141, 1.0
    %v3143 = vrcp.pop %v3142
    %v3144 = vmul.f32 1.0, %v3143
    %v3145 = vrot.slane %v3129, 4
    %v3147 = vtanh.pop %v3145
    %v3148 = vrot.slane %v3129, 6
    %v3150 = vxor.u32 %v3148, 2147483648
    %v3151 = vmul.f32 %v3150, 1.442695
    %v3152 = vpow.pop %v3151
    %v3153 = vadd.f32 %v3152, 1.0
    %v3154 = vrcp.pop %v3153
    %v3155 = vmul.f32 1.0, %v3154
    %v3156 = vmul.f32 %v3144, 0.0
    %v3157 = vmul.f32 %v3135, %v3147
    %v3158 = vadd.f32 %v3156, %v3157
    %v3159 = vtanh.pop %v3158
    %v3160 = vmul.f32 %v3155, %v3159
    %v3161 = vld [vmem:[%s506] sm:$0xff]
    %3162 = vmatprep.subr.mxu0 %v2901
    %3163 = vmatpush1.msra.mxu0 %v2900
    %3164 = vmatprep.subr.mxu0 %v2905
    %3165 = vmatpush1.msra.mxu0 %v2904
    %3166 = vmatprep.subr.mxu0 %v2909
    %3167 = vmatpush1.msra.mxu0 %v2908
    %3168 = vmatprep.subr.mxu0 %v2913
    %3169 = vmatpush1.msra.mxu0 %v2912
    %3170 = vmatprep.subr.mxu0 %v2917
    %3171 = vmatpush1.msra.mxu0 %v2916
    %3172 = vmatprep.subr.mxu0 %v2921
    %3173 = vmatpush1.msra.mxu0 %v2920
    %3174 = vmatprep.subr.mxu0 %v2925
    %3175 = vmatpush1.msra.mxu0 %v2924
    %3176 = vmatprep.subr.mxu0 %v2929
    %3177 = vmatpush1.msra.mxu0 %v2928
    %3178 = vmatprep.subr.mxu0 %v2933
    %3179 = vmatpush1.msra.mxu0 %v2932
    %3180 = vmatprep.subr.mxu0 %v2937
    %3181 = vmatpush1.msra.mxu0 %v2936
    %3182 = vmatprep.subr.mxu0 %v2941
    %3183 = vmatpush1.msra.mxu0 %v2940
    %3184 = vmatprep.subr.mxu0 %v2945
    %3185 = vmatpush1.msra.mxu0 %v2944
    %3186 = vmatprep.subr.mxu0 %v2949
    %3187 = vmatpush1.msra.mxu0 %v2948
    %3188 = vmatprep.subr.mxu0 %v2953
    %3189 = vmatpush1.msra.mxu0 %v2952
    %3190 = vmatprep.subr.mxu0 %v2957
    %3191 = vmatpush1.msra.mxu0 %v2956
    %3192 = vmatprep.subr.mxu0 %v2961
    %3193 = vmatpush1.msra.mxu0 %v2960
    %3194 = vmatprep.subr.mxu0 0.0
    %3195 = vmatpush1.msra.mxu0 0.0
    %3196 = vmatprep.subr.mxu0 0.0
    %3197 = vmatpush1.msra.mxu0 0.0
    %3198 = vmatprep.subr.mxu0 0.0
    %3199 = vmatpush1.msra.mxu0 0.0
    %3200 = vmatprep.subr.mxu0 0.0
    %3201 = vmatpush1.msra.mxu0 0.0
    %3202 = vmatprep.subr.mxu0 0.0
    %3203 = vmatpush1.msra.mxu0 0.0
    %3204 = vmatprep.subr.mxu0 0.0
    %3205 = vmatpush1.msra.mxu0 0.0
    %3206 = vmatprep.subr.mxu0 0.0
    %3207 = vmatpush1.msra.mxu0 0.0
    %3208 = vmatprep.subr.mxu0 0.0
    %3209 = vmatpush1.msra.mxu0 0.0
    %3210 = vmatprep.subr.mxu0 0.0
    %3211 = vmatpush1.msra.mxu0 0.0
    %3212 = vmatprep.subr.mxu0 0.0
    %3213 = vmatpush1.msra.mxu0 0.0
    %3214 = vmatprep.subr.mxu0 0.0
    %3215 = vmatpush1.msra.mxu0 0.0
    %3216 = vmatprep.subr.mxu0 0.0
    %3217 = vmatpush1.msra.mxu0 0.0
    %3218 = vmatprep.subr.mxu0 0.0
    %3219 = vmatpush1.msra.mxu0 0.0
    %3220 = vmatprep.subr.mxu0 0.0
    %3221 = vmatpush1.msra.mxu0 0.0
    %3222 = vmatprep.subr.mxu0 0.0
    %3223 = vmatpush1.msra.mxu0 0.0
    %3224 = vmatprep.subr.mxu0 0.0
    %3225 = vmatpush1.msra.mxu0 0.0
    %3226 = vmatprep.mubr.f32.mxu0 0.0
    %3227 = vmatmul.mubr.f32.gmra.mrb[0].mxu0 %v3160
    %v3228 = vpop.f32.mrb[0].mxu0
    %v3229 = vadd.f32 0.0, %v3228
    %v3230 = vpop.f32.mrb[0].mxu0
    %v3231 = vadd.f32 0.0, %v3230
    %3232 = vdwg.mxu0
    %3233 = vmatprep.subr.mxu0 %v2903
    %3234 = vmatpush1.msra.mxu0 %v2902
    %3235 = vmatprep.subr.mxu0 %v2907
    %3236 = vmatpush1.msra.mxu0 %v2906
    %3237 = vmatprep.subr.mxu0 %v2911
    %3238 = vmatpush1.msra.mxu0 %v2910
    %3239 = vmatprep.subr.mxu0 %v2915
    %3240 = vmatpush1.msra.mxu0 %v2914
    %3241 = vmatprep.subr.mxu0 %v2919
    %3242 = vmatpush1.msra.mxu0 %v2918
    %3243 = vmatprep.subr.mxu0 %v2923
    %3244 = vmatpush1.msra.mxu0 %v2922
    %3245 = vmatprep.subr.mxu0 %v2927
    %3246 = vmatpush1.msra.mxu0 %v2926
    %3247 = vmatprep.subr.mxu0 %v2931
    %3248 = vmatpush1.msra.mxu0 %v2930
    %3249 = vmatprep.subr.mxu0 %v2935
    %3250 = vmatpush1.msra.mxu0 %v2934
    %3251 = vmatprep.subr.mxu0 %v2939
    %3252 = vmatpush1.msra.mxu0 %v2938
    %3253 = vmatprep.subr.mxu0 %v2943
    %3254 = vmatpush1.msra.mxu0 %v2942
    %3255 = vmatprep.subr.mxu0 %v2947
    %3256 = vmatpush1.msra.mxu0 %v2946
    %3257 = vmatprep.subr.mxu0 %v2951
    %3258 = vmatpush1.msra.mxu0 %v2950
    %3259 = vmatprep.subr.mxu0 %v2955
    %3260 = vmatpush1.msra.mxu0 %v2954
    %3261 = vmatprep.subr.mxu0 %v2959
    %3262 = vmatpush1.msra.mxu0 %v2958
    %3263 = vmatprep.subr.mxu0 %v2963
    %3264 = vmatpush1.msra.mxu0 %v2962
    %3265 = vmatprep.subr.mxu0 0.0
    %3266 = vmatpush1.msra.mxu0 0.0
    %3267 = vmatprep.subr.mxu0 0.0
    %3268 = vmatpush1.msra.mxu0 0.0
    %3269 = vmatprep.subr.mxu0 0.0
    %3270 = vmatpush1.msra.mxu0 0.0
    %3271 = vmatprep.subr.mxu0 0.0
    %3272 = vmatpush1.msra.mxu0 0.0
    %3273 = vmatprep.subr.mxu0 0.0
    %3274 = vmatpush1.msra.mxu0 0.0
    %3275 = vmatprep.subr.mxu0 0.0
    %3276 = vmatpush1.msra.mxu0 0.0
    %3277 = vmatprep.subr.mxu0 0.0
    %3278 = vmatpush1.msra.mxu0 0.0
    %3279 = vmatprep.subr.mxu0 0.0
    %3280 = vmatpush1.msra.mxu0 0.0
    %3281 = vmatprep.subr.mxu0 0.0
    %3282 = vmatpush1.msra.mxu0 0.0
    %3283 = vmatprep.subr.mxu0 0.0
    %3284 = vmatpush1.msra.mxu0 0.0
    %3285 = vmatprep.subr.mxu0 0.0
    %3286 = vmatpush1.msra.mxu0 0.0
    %3287 = vmatprep.subr.mxu0 0.0
    %3288 = vmatpush1.msra.mxu0 0.0
    %3289 = vmatprep.subr.mxu0 0.0
    %3290 = vmatpush1.msra.mxu0 0.0
    %3291 = vmatprep.subr.mxu0 0.0
    %3292 = vmatpush1.msra.mxu0 0.0
    %3293 = vmatprep.subr.mxu0 0.0
    %3294 = vmatpush1.msra.mxu0 0.0
    %3295 = vmatprep.subr.mxu0 0.0
    %3296 = vmatpush1.msra.mxu0 0.0
    %3297 = vmatprep.mubr.f32.mxu0 0.0
    %3298 = vmatmul.mubr.f32.gmra.mrb[0].mxu0 %v3160
    %v3299 = vpop.f32.mrb[0].mxu0
    %v3300 = vadd.f32 0.0, %v3299
    %v3301 = vpop.f32.mrb[0].mxu0
    %v3302 = vadd.f32 0.0, %v3301
    %3303 = vdwg.mxu0
    %v3308 = vcombine.low %v3229, %v3231
    %v3309 = vcombine.low %v3300, %v3302
    %v3311 = vunpack.c.l.s4 1983009808
    %v3312 = vunpack.c.0.s8 %v3311
    %v3313 = vlaneseq
    %v3314 = vshrl.u32 %v3313, 7
    %v3315 = vsub.s32 %v3312, %v3314
    %v3316 = vrot.slane %v3308, %v3315
    %v3318 = vunpack.c.l.s4 1983009808
    %v3319 = vunpack.c.0.s8 %v3318
    %v3320 = vlaneseq
    %v3321 = vshrl.u32 %v3320, 7
    %v3322 = vsub.s32 %v3319, %v3321
    %v3323 = vrot.slane %v3309, %v3322
    %v3324 = vcombine.low %v3316, %v3323
    %v3326 = vadd.f32 %v3161, %v3324
    %v3327 = vxor.u32 %v3326, 2147483648
    %v3328 = vmul.f32 %v3327, 1.442695
    %v3329 = vpow.pop %v3328
    %v3330 = vadd.f32 %v3329, 1.0
    %v3331 = vrcp.pop %v3330
    %v3332 = vmul.f32 1.0, %v3331
    %v3334 = vrot.slane %v3326, 2
    %v3336 = vxor.u32 %v3334, 2147483648
    %v3337 = vmul.f32 %v3336, 1.442695
    %v3338 = vpow.pop %v3337
    %v3339 = vadd.f32 %v3338, 1.0
    %v3340 = vrcp.pop %v3339
    %v3341 = vmul.f32 1.0, %v3340
    %v3342 = vrot.slane %v3326, 4
    %v3344 = vtanh.pop %v3342
    %v3345 = vrot.slane %v3326, 6
    %v3347 = vxor.u32 %v3345, 2147483648
    %v3348 = vmul.f32 %v3347, 1.442695
    %v3349 = vpow.pop %v3348
    %v3350 = vadd.f32 %v3349, 1.0
    %v3351 = vrcp.pop %v3350
    %v3352 = vmul.f32 1.0, %v3351
    %v3353 = vmul.f32 %v3341, %v3158
    %v3354 = vmul.f32 %v3332, %v3344
    %v3355 = vadd.f32 %v3353, %v3354
    %v3356 = vtanh.pop %v3355
    %v3357 = vmul.f32 %v3352, %v3356
    %v3358 = vld [vmem:[%s677] sm:$0xff]
    %3359 = vmatprep.subr.mxu0 %v2901
    %3360 = vmatpush1.msra.mxu0 %v2900
    %3361 = vmatprep.subr.mxu0 %v2905
    %3362 = vmatpush1.msra.mxu0 %v2904
    %3363 = vmatprep.subr.mxu0 %v2909
    %3364 = vmatpush1.msra.mxu0 %v2908
    %3365 = vmatprep.subr.mxu0 %v2913
    %3366 = vmatpush1.msra.mxu0 %v2912
    %3367 = vmatprep.subr.mxu0 %v2917
    %3368 = vmatpush1.msra.mxu0 %v2916
    %3369 = vmatprep.subr.mxu0 %v2921
    %3370 = vmatpush1.msra.mxu0 %v2920
    %3371 = vmatprep.subr.mxu0 %v2925
    %3372 = vmatpush1.msra.mxu0 %v2924
    %3373 = vmatprep.subr.mxu0 %v2929
    %3374 = vmatpush1.msra.mxu0 %v2928
    %3375 = vmatprep.subr.mxu0 %v2933
    %3376 = vmatpush1.msra.mxu0 %v2932
    %3377 = vmatprep.subr.mxu0 %v2937
    %3378 = vmatpush1.msra.mxu0 %v2936
    %3379 = vmatprep.subr.mxu0 %v2941
    %3380 = vmatpush1.msra.mxu0 %v2940
    %3381 = vmatprep.subr.mxu0 %v2945
    %3382 = vmatpush1.msra.mxu0 %v2944
    %3383 = vmatprep.subr.mxu0 %v2949
    %3384 = vmatpush1.msra.mxu0 %v2948
    %3385 = vmatprep.subr.mxu0 %v2953
    %3386 = vmatpush1.msra.mxu0 %v2952
    %3387 = vmatprep.subr.mxu0 %v2957
    %3388 = vmatpush1.msra.mxu0 %v2956
    %3389 = vmatprep.subr.mxu0 %v2961
    %3390 = vmatpush1.msra.mxu0 %v2960
    %3391 = vmatprep.subr.mxu0 0.0
    %3392 = vmatpush1.msra.mxu0 0.0
    %3393 = vmatprep.subr.mxu0 0.0
    %3394 = vmatpush1.msra.mxu0 0.0
    %3395 = vmatprep.subr.mxu0 0.0
    %3396 = vmatpush1.msra.mxu0 0.0
    %3397 = vmatprep.subr.mxu0 0.0
    %3398 = vmatpush1.msra.mxu0 0.0
    %3399 = vmatprep.subr.mxu0 0.0
    %3400 = vmatpush1.msra.mxu0 0.0
    %3401 = vmatprep.subr.mxu0 0.0
    %3402 = vmatpush1.msra.mxu0 0.0
    %3403 = vmatprep.subr.mxu0 0.0
    %3404 = vmatpush1.msra.mxu0 0.0
    %3405 = vmatprep.subr.mxu0 0.0
    %3406 = vmatpush1.msra.mxu0 0.0
    %3407 = vmatprep.subr.mxu0 0.0
    %3408 = vmatpush1.msra.mxu0 0.0
    %3409 = vmatprep.subr.mxu0 0.0
    %3410 = vmatpush1.msra.mxu0 0.0
    %3411 = vmatprep.subr.mxu0 0.0
    %3412 = vmatpush1.msra.mxu0 0.0
    %3413 = vmatprep.subr.mxu0 0.0
    %3414 = vmatpush1.msra.mxu0 0.0
    %3415 = vmatprep.subr.mxu0 0.0
    %3416 = vmatpush1.msra.mxu0 0.0
    %3417 = vmatprep.subr.mxu0 0.0
    %3418 = vmatpush1.msra.mxu0 0.0
    %3419 = vmatprep.subr.mxu0 0.0
    %3420 = vmatpush1.msra.mxu0 0.0
    %3421 = vmatprep.subr.mxu0 0.0
    %3422 = vmatpush1.msra.mxu0 0.0
    %3423 = vmatprep.mubr.f32.mxu0 0.0
    %3424 = vmatmul.mubr.f32.gmra.mrb[0].mxu0 %v3357
    %v3425 = vpop.f32.mrb[0].mxu0
    %v3426 = vadd.f32 0.0, %v3425
    %v3427 = vpop.f32.mrb[0].mxu0
    %v3428 = vadd.f32 0.0, %v3427
    %3429 = vdwg.mxu0
    %3430 = vmatprep.subr.mxu0 %v2903
    %3431 = vmatpush1.msra.mxu0 %v2902
    %3432 = vmatprep.subr.mxu0 %v2907
    %3433 = vmatpush1.msra.mxu0 %v2906
    %3434 = vmatprep.subr.mxu0 %v2911
    %3435 = vmatpush1.msra.mxu0 %v2910
    %3436 = vmatprep.subr.mxu0 %v2915
    %3437 = vmatpush1.msra.mxu0 %v2914
    %3438 = vmatprep.subr.mxu0 %v2919
    %3439 = vmatpush1.msra.mxu0 %v2918
    %3440 = vmatprep.subr.mxu0 %v2923
    %3441 = vmatpush1.msra.mxu0 %v2922
    %3442 = vmatprep.subr.mxu0 %v2927
    %3443 = vmatpush1.msra.mxu0 %v2926
    %3444 = vmatprep.subr.mxu0 %v2931
    %3445 = vmatpush1.msra.mxu0 %v2930
    %3446 = vmatprep.subr.mxu0 %v2935
    %3447 = vmatpush1.msra.mxu0 %v2934
    %3448 = vmatprep.subr.mxu0 %v2939
    %3449 = vmatpush1.msra.mxu0 %v2938
    %3450 = vmatprep.subr.mxu0 %v2943
    %3451 = vmatpush1.msra.mxu0 %v2942
    %3452 = vmatprep.subr.mxu0 %v2947
    %3453 = vmatpush1.msra.mxu0 %v2946
    %3454 = vmatprep.subr.mxu0 %v2951
    %3455 = vmatpush1.msra.mxu0 %v2950
    %3456 = vmatprep.subr.mxu0 %v2955
    %3457 = vmatpush1.msra.mxu0 %v2954
    %3458 = vmatprep.subr.mxu0 %v2959
    %3459 = vmatpush1.msra.mxu0 %v2958
    %3460 = vmatprep.subr.mxu0 %v2963
    %3461 = vmatpush1.msra.mxu0 %v2962
    %3462 = vmatprep.subr.mxu0 0.0
    %3463 = vmatpush1.msra.mxu0 0.0
    %3464 = vmatprep.subr.mxu0 0.0
    %3465 = vmatpush1.msra.mxu0 0.0
    %3466 = vmatprep.subr.mxu0 0.0
    %3467 = vmatpush1.msra.mxu0 0.0
    %3468 = vmatprep.subr.mxu0 0.0
    %3469 = vmatpush1.msra.mxu0 0.0
    %3470 = vmatprep.subr.mxu0 0.0
    %3471 = vmatpush1.msra.mxu0 0.0
    %3472 = vmatprep.subr.mxu0 0.0
    %3473 = vmatpush1.msra.mxu0 0.0
    %3474 = vmatprep.subr.mxu0 0.0
    %3475 = vmatpush1.msra.mxu0 0.0
    %3476 = vmatprep.subr.mxu0 0.0
    %3477 = vmatpush1.msra.mxu0 0.0
    %3478 = vmatprep.subr.mxu0 0.0
    %3479 = vmatpush1.msra.mxu0 0.0
    %3480 = vmatprep.subr.mxu0 0.0
    %3481 = vmatpush1.msra.mxu0 0.0
    %3482 = vmatprep.subr.mxu0 0.0
    %3483 = vmatpush1.msra.mxu0 0.0
    %3484 = vmatprep.subr.mxu0 0.0
    %3485 = vmatpush1.msra.mxu0 0.0
    %3486 = vmatprep.subr.mxu0 0.0
    %3487 = vmatpush1.msra.mxu0 0.0
    %3488 = vmatprep.subr.mxu0 0.0
    %3489 = vmatpush1.msra.mxu0 0.0
    %3490 = vmatprep.subr.mxu0 0.0
    %3491 = vmatpush1.msra.mxu0 0.0
    %3492 = vmatprep.subr.mxu0 0.0
    %3493 = vmatpush1.msra.mxu0 0.0
    %3494 = vmatprep.mubr.f32.mxu0 0.0
    %3495 = vmatmul.mubr.f32.gmra.mrb[0].mxu0 %v3357
    %v3496 = vpop.f32.mrb[0].mxu0
    %v3497 = vadd.f32 0.0, %v3496
    %v3498 = vpop.f32.mrb[0].mxu0
    %v3499 = vadd.f32 0.0, %v3498
    %3500 = vdwg.mxu0
    %v3505 = vcombine.low %v3426, %v3428
    %v3506 = vcombine.low %v3497, %v3499
    %v3508 = vunpack.c.l.s4 1983009808
    %v3509 = vunpack.c.0.s8 %v3508
    %v3510 = vlaneseq
    %v3511 = vshrl.u32 %v3510, 7
    %v3512 = vsub.s32 %v3509, %v3511
    %v3513 = vrot.slane %v3505, %v3512
    %v3515 = vunpack.c.l.s4 1983009808
    %v3516 = vunpack.c.0.s8 %v3515
    %v3517 = vlaneseq
    %v3518 = vshrl.u32 %v3517, 7
    %v3519 = vsub.s32 %v3516, %v3518
    %v3520 = vrot.slane %v3506, %v3519
    %v3521 = vcombine.low %v3513, %v3520
    %v3523 = vadd.f32 %v3358, %v3521
    %v3524 = vxor.u32 %v3523, 2147483648
    %v3525 = vmul.f32 %v3524, 1.442695
    %v3526 = vpow.pop %v3525
    %v3527 = vadd.f32 %v3526, 1.0
    %v3528 = vrcp.pop %v3527
    %v3529 = vmul.f32 1.0, %v3528
    %v3531 = vrot.slane %v3523, 2
    %v3533 = vxor.u32 %v3531, 2147483648
    %v3534 = vmul.f32 %v3533, 1.442695
    %v3535 = vpow.pop %v3534
    %v3536 = vadd.f32 %v3535, 1.0
    %v3537 = vrcp.pop %v3536
    %v3538 = vmul.f32 1.0, %v3537
    %v3539 = vrot.slane %v3523, 4
    %v3541 = vtanh.pop %v3539
    %v3542 = vrot.slane %v3523, 6
    %v3544 = vxor.u32 %v3542, 2147483648
    %v3545 = vmul.f32 %v3544, 1.442695
    %v3546 = vpow.pop %v3545
    %v3547 = vadd.f32 %v3546, 1.0
    %v3548 = vrcp.pop %v3547
    %v3549 = vmul.f32 1.0, %v3548
    %v3550 = vmul.f32 %v3538, %v3355
    %v3551 = vmul.f32 %v3529, %v3541
    %v3552 = vadd.f32 %v3550, %v3551
    %v3553 = vtanh.pop %v3552
    %v3554 = vmul.f32 %v3549, %v3553
    %v3555 = vld [vmem:[%s848] sm:$0xff]
    %3556 = vmatprep.subr.mxu0 %v2901
    %3557 = vmatpush1.msra.mxu0 %v2900
    %3558 = vmatprep.subr.mxu0 %v2905
    %3559 = vmatpush1.msra.mxu0 %v2904
    %3560 = vmatprep.subr.mxu0 %v2909
    %3561 = vmatpush1.msra.mxu0 %v2908
    %3562 = vmatprep.subr.mxu0 %v2913
    %3563 = vmatpush1.msra.mxu0 %v2912
    %3564 = vmatprep.subr.mxu0 %v2917
    %3565 = vmatpush1.msra.mxu0 %v2916
    %3566 = vmatprep.subr.mxu0 %v2921
    %3567 = vmatpush1.msra.mxu0 %v2920
    %3568 = vmatprep.subr.mxu0 %v2925
    %3569 = vmatpush1.msra.mxu0 %v2924
    %3570 = vmatprep.subr.mxu0 %v2929
    %3571 = vmatpush1.msra.mxu0 %v2928
    %3572 = vmatprep.subr.mxu0 %v2933
    %3573 = vmatpush1.msra.mxu0 %v2932
    %3574 = vmatprep.subr.mxu0 %v2937
    %3575 = vmatpush1.msra.mxu0 %v2936
    %3576 = vmatprep.subr.mxu0 %v2941
    %3577 = vmatpush1.msra.mxu0 %v2940
    %3578 = vmatprep.subr.mxu0 %v2945
    %3579 = vmatpush1.msra.mxu0 %v2944
    %3580 = vmatprep.subr.mxu0 %v2949
    %3581 = vmatpush1.msra.mxu0 %v2948
    %3582 = vmatprep.subr.mxu0 %v2953
    %3583 = vmatpush1.msra.mxu0 %v2952
    %3584 = vmatprep.subr.mxu0 %v2957
    %3585 = vmatpush1.msra.mxu0 %v2956
    %3586 = vmatprep.subr.mxu0 %v2961
    %3587 = vmatpush1.msra.mxu0 %v2960
    %3588 = vmatprep.subr.mxu0 0.0
    %3589 = vmatpush1.msra.mxu0 0.0
    %3590 = vmatprep.subr.mxu0 0.0
    %3591 = vmatpush1.msra.mxu0 0.0
    %3592 = vmatprep.subr.mxu0 0.0
    %3593 = vmatpush1.msra.mxu0 0.0
    %3594 = vmatprep.subr.mxu0 0.0
    %3595 = vmatpush1.msra.mxu0 0.0
    %3596 = vmatprep.subr.mxu0 0.0
    %3597 = vmatpush1.msra.mxu0 0.0
    %3598 = vmatprep.subr.mxu0 0.0
    %3599 = vmatpush1.msra.mxu0 0.0
    %3600 = vmatprep.subr.mxu0 0.0
    %3601 = vmatpush1.msra.mxu0 0.0
    %3602 = vmatprep.subr.mxu0 0.0
    %3603 = vmatpush1.msra.mxu0 0.0
    %3604 = vmatprep.subr.mxu0 0.0
    %3605 = vmatpush1.msra.mxu0 0.0
    %3606 = vmatprep.subr.mxu0 0.0
    %3607 = vmatpush1.msra.mxu0 0.0
    %3608 = vmatprep.subr.mxu0 0.0
    %3609 = vmatpush1.msra.mxu0 0.0
    %3610 = vmatprep.subr.mxu0 0.0
    %3611 = vmatpush1.msra.mxu0 0.0
    %3612 = vmatprep.subr.mxu0 0.0
    %3613 = vmatpush1.msra.mxu0 0.0
    %3614 = vmatprep.subr.mxu0 0.0
    %3615 = vmatpush1.msra.mxu0 0.0
    %3616 = vmatprep.subr.mxu0 0.0
    %3617 = vmatpush1.msra.mxu0 0.0
    %3618 = vmatprep.subr.mxu0 0.0
    %3619 = vmatpush1.msra.mxu0 0.0
    %3620 = vmatprep.mubr.f32.mxu0 0.0
    %3621 = vmatmul.mubr.f32.gmra.mrb[0].mxu0 %v3554
    %v3622 = vpop.f32.mrb[0].mxu0
    %v3623 = vadd.f32 0.0, %v3622
    %v3624 = vpop.f32.mrb[0].mxu0
    %v3625 = vadd.f32 0.0, %v3624
    %3626 = vdwg.mxu0
    %3627 = vmatprep.subr.mxu0 %v2903
    %3628 = vmatpush1.msra.mxu0 %v2902
    %3629 = vmatprep.subr.mxu0 %v2907
    %3630 = vmatpush1.msra.mxu0 %v2906
    %3631 = vmatprep.subr.mxu0 %v2911
    %3632 = vmatpush1.msra.mxu0 %v2910
    %3633 = vmatprep.subr.mxu0 %v2915
    %3634 = vmatpush1.msra.mxu0 %v2914
    %3635 = vmatprep.subr.mxu0 %v2919
    %3636 = vmatpush1.msra.mxu0 %v2918
    %3637 = vmatprep.subr.mxu0 %v2923
    %3638 = vmatpush1.msra.mxu0 %v2922
    %3639 = vmatprep.subr.mxu0 %v2927
    %3640 = vmatpush1.msra.mxu0 %v2926
    %3641 = vmatprep.subr.mxu0 %v2931
    %3642 = vmatpush1.msra.mxu0 %v2930
    %3643 = vmatprep.subr.mxu0 %v2935
    %3644 = vmatpush1.msra.mxu0 %v2934
    %3645 = vmatprep.subr.mxu0 %v2939
    %3646 = vmatpush1.msra.mxu0 %v2938
    %3647 = vmatprep.subr.mxu0 %v2943
    %3648 = vmatpush1.msra.mxu0 %v2942
    %3649 = vmatprep.subr.mxu0 %v2947
    %3650 = vmatpush1.msra.mxu0 %v2946
    %3651 = vmatprep.subr.mxu0 %v2951
    %3652 = vmatpush1.msra.mxu0 %v2950
    %3653 = vmatprep.subr.mxu0 %v2955
    %3654 = vmatpush1.msra.mxu0 %v2954
    %3655 = vmatprep.subr.mxu0 %v2959
    %3656 = vmatpush1.msra.mxu0 %v2958
    %3657 = vmatprep.subr.mxu0 %v2963
    %3658 = vmatpush1.msra.mxu0 %v2962
    %3659 = vmatprep.subr.mxu0 0.0
    %3660 = vmatpush1.msra.mxu0 0.0
    %3661 = vmatprep.subr.mxu0 0.0
    %3662 = vmatpush1.msra.mxu0 0.0
    %3663 = vmatprep.subr.mxu0 0.0
    %3664 = vmatpush1.msra.mxu0 0.0
    %3665 = vmatprep.subr.mxu0 0.0
    %3666 = vmatpush1.msra.mxu0 0.0
    %3667 = vmatprep.subr.mxu0 0.0
    %3668 = vmatpush1.msra.mxu0 0.0
    %3669 = vmatprep.subr.mxu0 0.0
    %3670 = vmatpush1.msra.mxu0 0.0
    %3671 = vmatprep.subr.mxu0 0.0
    %3672 = vmatpush1.msra.mxu0 0.0
    %3673 = vmatprep.subr.mxu0 0.0
    %3674 = vmatpush1.msra.mxu0 0.0
    %3675 = vmatprep.subr.mxu0 0.0
    %3676 = vmatpush1.msra.mxu0 0.0
    %3677 = vmatprep.subr.mxu0 0.0
    %3678 = vmatpush1.msra.mxu0 0.0
    %3679 = vmatprep.subr.mxu0 0.0
    %3680 = vmatpush1.msra.mxu0 0.0
    %3681 = vmatprep.subr.mxu0 0.0
    %3682 = vmatpush1.msra.mxu0 0.0
    %3683 = vmatprep.subr.mxu0 0.0
    %3684 = vmatpush1.msra.mxu0 0.0
    %3685 = vmatprep.subr.mxu0 0.0
    %3686 = vmatpush1.msra.mxu0 0.0
    %3687 = vmatprep.subr.mxu0 0.0
    %3688 = vmatpush1.msra.mxu0 0.0
    %3689 = vmatprep.subr.mxu0 0.0
    %3690 = vmatpush1.msra.mxu0 0.0
    %3691 = vmatprep.mubr.f32.mxu0 0.0
    %3692 = vmatmul.mubr.f32.gmra.mrb[0].mxu0 %v3554
    %v3693 = vpop.f32.mrb[0].mxu0
    %v3694 = vadd.f32 0.0, %v3693
    %v3695 = vpop.f32.mrb[0].mxu0
    %v3696 = vadd.f32 0.0, %v3695
    %3697 = vdwg.mxu0
    %v3702 = vcombine.low %v3623, %v3625
    %v3703 = vcombine.low %v3694, %v3696
    %v3705 = vunpack.c.l.s4 1983009808
    %v3706 = vunpack.c.0.s8 %v3705
    %v3707 = vlaneseq
    %v3708 = vshrl.u32 %v3707, 7
    %v3709 = vsub.s32 %v3706, %v3708
    %v3710 = vrot.slane %v3702, %v3709
    %v3712 = vunpack.c.l.s4 1983009808
    %v3713 = vunpack.c.0.s8 %v3712
    %v3714 = vlaneseq
    %v3715 = vshrl.u32 %v3714, 7
    %v3716 = vsub.s32 %v3713, %v3715
    %v3717 = vrot.slane %v3703, %v3716
    %v3718 = vcombine.low %v3710, %v3717
    %v3720 = vadd.f32 %v3555, %v3718
    %v3721 = vxor.u32 %v3720, 2147483648
    %v3722 = vmul.f32 %v3721, 1.442695
    %v3723 = vpow.pop %v3722
    %v3724 = vadd.f32 %v3723, 1.0
    %v3725 = vrcp.pop %v3724
    %v3726 = vmul.f32 1.0, %v3725
    %v3728 = vrot.slane %v3720, 2
    %v3730 = vxor.u32 %v3728, 2147483648
    %v3731 = vmul.f32 %v3730, 1.442695
    %v3732 = vpow.pop %v3731
    %v3733 = vadd.f32 %v3732, 1.0
    %v3734 = vrcp.pop %v3733
    %v3735 = vmul.f32 1.0, %v3734
    %v3736 = vrot.slane %v3720, 4
    %v3738 = vtanh.pop %v3736
    %v3739 = vrot.slane %v3720, 6
    %v3741 = vxor.u32 %v3739, 2147483648
    %v3742 = vmul.f32 %v3741, 1.442695
    %v3743 = vpow.pop %v3742
    %v3744 = vadd.f32 %v3743, 1.0
    %v3745 = vrcp.pop %v3744
    %v3746 = vmul.f32 1.0, %v3745
    %v3747 = vmul.f32 %v3735, %v3552
    %v3748 = vmul.f32 %v3726, %v3738
    %v3749 = vadd.f32 %v3747, %v3748
    %v3750 = vtanh.pop %v3749
    %v3751 = vmul.f32 %v3746, %v3750
    %v3752 = vld [vmem:[%s1019] sm:$0xff]
    %3753 = vmatprep.subr.mxu0 %v2901
    %3754 = vmatpush1.msra.mxu0 %v2900
    %3755 = vmatprep.subr.mxu0 %v2905
    %3756 = vmatpush1.msra.mxu0 %v2904
    %3757 = vmatprep.subr.mxu0 %v2909
    %3758 = vmatpush1.msra.mxu0 %v2908
    %3759 = vmatprep.subr.mxu0 %v2913
    %3760 = vmatpush1.msra.mxu0 %v2912
    %3761 = vmatprep.subr.mxu0 %v2917
    %3762 = vmatpush1.msra.mxu0 %v2916
    %3763 = vmatprep.subr.mxu0 %v2921
    %3764 = vmatpush1.msra.mxu0 %v2920
    %3765 = vmatprep.subr.mxu0 %v2925
    %3766 = vmatpush1.msra.mxu0 %v2924
    %3767 = vmatprep.subr.mxu0 %v2929
    %3768 = vmatpush1.msra.mxu0 %v2928
    %3769 = vmatprep.subr.mxu0 %v2933
    %3770 = vmatpush1.msra.mxu0 %v2932
    %3771 = vmatprep.subr.mxu0 %v2937
    %3772 = vmatpush1.msra.mxu0 %v2936
    %3773 = vmatprep.subr.mxu0 %v2941
    %3774 = vmatpush1.msra.mxu0 %v2940
    %3775 = vmatprep.subr.mxu0 %v2945
    %3776 = vmatpush1.msra.mxu0 %v2944
    %3777 = vmatprep.subr.mxu0 %v2949
    %3778 = vmatpush1.msra.mxu0 %v2948
    %3779 = vmatprep.subr.mxu0 %v2953
    %3780 = vmatpush1.msra.mxu0 %v2952
    %3781 = vmatprep.subr.mxu0 %v2957
    %3782 = vmatpush1.msra.mxu0 %v2956
    %3783 = vmatprep.subr.mxu0 %v2961
    %3784 = vmatpush1.msra.mxu0 %v2960
    %3785 = vmatprep.subr.mxu0 0.0
    %3786 = vmatpush1.msra.mxu0 0.0
    %3787 = vmatprep.subr.mxu0 0.0
    %3788 = vmatpush1.msra.mxu0 0.0
    %3789 = vmatprep.subr.mxu0 0.0
    %3790 = vmatpush1.msra.mxu0 0.0
    %3791 = vmatprep.subr.mxu0 0.0
    %3792 = vmatpush1.msra.mxu0 0.0
    %3793 = vmatprep.subr.mxu0 0.0
    %3794 = vmatpush1.msra.mxu0 0.0
    %3795 = vmatprep.subr.mxu0 0.0
    %3796 = vmatpush1.msra.mxu0 0.0
    %3797 = vmatprep.subr.mxu0 0.0
    %3798 = vmatpush1.msra.mxu0 0.0
    %3799 = vmatprep.subr.mxu0 0.0
    %3800 = vmatpush1.msra.mxu0 0.0
    %3801 = vmatprep.subr.mxu0 0.0
    %3802 = vmatpush1.msra.mxu0 0.0
    %3803 = vmatprep.subr.mxu0 0.0
    %3804 = vmatpush1.msra.mxu0 0.0
    %3805 = vmatprep.subr.mxu0 0.0
    %3806 = vmatpush1.msra.mxu0 0.0
    %3807 = vmatprep.subr.mxu0 0.0
    %3808 = vmatpush1.msra.mxu0 0.0
    %3809 = vmatprep.subr.mxu0 0.0
    %3810 = vmatpush1.msra.mxu0 0.0
    %3811 = vmatprep.subr.mxu0 0.0
    %3812 = vmatpush1.msra.mxu0 0.0
    %3813 = vmatprep.subr.mxu0 0.0
    %3814 = vmatpush1.msra.mxu0 0.0
    %3815 = vmatprep.subr.mxu0 0.0
    %3816 = vmatpush1.msra.mxu0 0.0
    %3817 = vmatprep.mubr.f32.mxu0 0.0
    %3818 = vmatmul.mubr.f32.gmra.mrb[0].mxu0 %v3751
    %v3819 = vpop.f32.mrb[0].mxu0
    %v3820 = vadd.f32 0.0, %v3819
    %v3821 = vpop.f32.mrb[0].mxu0
    %v3822 = vadd.f32 0.0, %v3821
    %3823 = vdwg.mxu0
    %3824 = vmatprep.subr.mxu0 %v2903
    %3825 = vmatpush1.msra.mxu0 %v2902
    %3826 = vmatprep.subr.mxu0 %v2907
    %3827 = vmatpush1.msra.mxu0 %v2906
    %3828 = vmatprep.subr.mxu0 %v2911
    %3829 = vmatpush1.msra.mxu0 %v2910
    %3830 = vmatprep.subr.mxu0 %v2915
    %3831 = vmatpush1.msra.mxu0 %v2914
    %3832 = vmatprep.subr.mxu0 %v2919
    %3833 = vmatpush1.msra.mxu0 %v2918
    %3834 = vmatprep.subr.mxu0 %v2923
    %3835 = vmatpush1.msra.mxu0 %v2922
    %3836 = vmatprep.subr.mxu0 %v2927
    %3837 = vmatpush1.msra.mxu0 %v2926
    %3838 = vmatprep.subr.mxu0 %v2931
    %3839 = vmatpush1.msra.mxu0 %v2930
    %3840 = vmatprep.subr.mxu0 %v2935
    %3841 = vmatpush1.msra.mxu0 %v2934
    %3842 = vmatprep.subr.mxu0 %v2939
    %3843 = vmatpush1.msra.mxu0 %v2938
    %3844 = vmatprep.subr.mxu0 %v2943
    %3845 = vmatpush1.msra.mxu0 %v2942
    %3846 = vmatprep.subr.mxu0 %v2947
    %3847 = vmatpush1.msra.mxu0 %v2946
    %3848 = vmatprep.subr.mxu0 %v2951
    %3849 = vmatpush1.msra.mxu0 %v2950
    %3850 = vmatprep.subr.mxu0 %v2955
    %3851 = vmatpush1.msra.mxu0 %v2954
    %3852 = vmatprep.subr.mxu0 %v2959
    %3853 = vmatpush1.msra.mxu0 %v2958
    %3854 = vmatprep.subr.mxu0 %v2963
    %3855 = vmatpush1.msra.mxu0 %v2962
    %3856 = vmatprep.subr.mxu0 0.0
    %3857 = vmatpush1.msra.mxu0 0.0
    %3858 = vmatprep.subr.mxu0 0.0
    %3859 = vmatpush1.msra.mxu0 0.0
    %3860 = vmatprep.subr.mxu0 0.0
    %3861 = vmatpush1.msra.mxu0 0.0
    %3862 = vmatprep.subr.mxu0 0.0
    %3863 = vmatpush1.msra.mxu0 0.0
    %3864 = vmatprep.subr.mxu0 0.0
    %3865 = vmatpush1.msra.mxu0 0.0
    %3866 = vmatprep.subr.mxu0 0.0
    %3867 = vmatpush1.msra.mxu0 0.0
    %3868 = vmatprep.subr.mxu0 0.0
    %3869 = vmatpush1.msra.mxu0 0.0
    %3870 = vmatprep.subr.mxu0 0.0
    %3871 = vmatpush1.msra.mxu0 0.0
    %3872 = vmatprep.subr.mxu0 0.0
    %3873 = vmatpush1.msra.mxu0 0.0
    %3874 = vmatprep.subr.mxu0 0.0
    %3875 = vmatpush1.msra.mxu0 0.0
    %3876 = vmatprep.subr.mxu0 0.0
    %3877 = vmatpush1.msra.mxu0 0.0
    %3878 = vmatprep.subr.mxu0 0.0
    %3879 = vmatpush1.msra.mxu0 0.0
    %3880 = vmatprep.subr.mxu0 0.0
    %3881 = vmatpush1.msra.mxu0 0.0
    %3882 = vmatprep.subr.mxu0 0.0
    %3883 = vmatpush1.msra.mxu0 0.0
    %3884 = vmatprep.subr.mxu0 0.0
    %3885 = vmatpush1.msra.mxu0 0.0
    %3886 = vmatprep.subr.mxu0 0.0
    %3887 = vmatpush1.msra.mxu0 0.0
    %3888 = vmatprep.mubr.f32.mxu0 0.0
    %3889 = vmatmul.mubr.f32.gmra.mrb[0].mxu0 %v3751
    %v3890 = vpop.f32.mrb[0].mxu0
    %v3891 = vadd.f32 0.0, %v3890
    %v3892 = vpop.f32.mrb[0].mxu0
    %v3893 = vadd.f32 0.0, %v3892
    %3894 = vdwg.mxu0
    %v3899 = vcombine.low %v3820, %v3822
    %v3900 = vcombine.low %v3891, %v3893
    %v3902 = vunpack.c.l.s4 1983009808
    %v3903 = vunpack.c.0.s8 %v3902
    %v3904 = vlaneseq
    %v3905 = vshrl.u32 %v3904, 7
    %v3906 = vsub.s32 %v3903, %v3905
    %v3907 = vrot.slane %v3899, %v3906
    %v3909 = vunpack.c.l.s4 1983009808
    %v3910 = vunpack.c.0.s8 %v3909
    %v3911 = vlaneseq
    %v3912 = vshrl.u32 %v3911, 7
    %v3913 = vsub.s32 %v3910, %v3912
    %v3914 = vrot.slane %v3900, %v3913
    %v3915 = vcombine.low %v3907, %v3914
    %v3917 = vadd.f32 %v3752, %v3915
    %v3918 = vxor.u32 %v3917, 2147483648
    %v3919 = vmul.f32 %v3918, 1.442695
    %v3920 = vpow.pop %v3919
    %v3921 = vadd.f32 %v3920, 1.0
    %v3922 = vrcp.pop %v3921
    %v3923 = vmul.f32 1.0, %v3922
    %v3925 = vrot.slane %v3917, 2
    %v3927 = vxor.u32 %v3925, 2147483648
    %v3928 = vmul.f32 %v3927, 1.442695
    %v3929 = vpow.pop %v3928
    %v3930 = vadd.f32 %v3929, 1.0
    %v3931 = vrcp.pop %v3930
    %v3932 = vmul.f32 1.0, %v3931
    %v3933 = vrot.slane %v3917, 4
    %v3935 = vtanh.pop %v3933
    %v3936 = vrot.slane %v3917, 6
    %v3938 = vxor.u32 %v3936, 2147483648
    %v3939 = vmul.f32 %v3938, 1.442695
    %v3940 = vpow.pop %v3939
    %v3941 = vadd.f32 %v3940, 1.0
    %v3942 = vrcp.pop %v3941
    %v3943 = vmul.f32 1.0, %v3942
    %v3944 = vmul.f32 %v3932, %v3749
    %v3945 = vmul.f32 %v3923, %v3935
    %v3946 = vadd.f32 %v3944, %v3945
    %v3947 = vtanh.pop %v3946
    %v3948 = vmul.f32 %v3943, %v3947
    %v3949 = vld [vmem:[%s1190] sm:$0xff]
    %3950 = vmatprep.subr.mxu0 %v2901
    %3951 = vmatpush1.msra.mxu0 %v2900
    %3952 = vmatprep.subr.mxu0 %v2905
    %3953 = vmatpush1.msra.mxu0 %v2904
    %3954 = vmatprep.subr.mxu0 %v2909
    %3955 = vmatpush1.msra.mxu0 %v2908
    %3956 = vmatprep.subr.mxu0 %v2913
    %3957 = vmatpush1.msra.mxu0 %v2912
    %3958 = vmatprep.subr.mxu0 %v2917
    %3959 = vmatpush1.msra.mxu0 %v2916
    %3960 = vmatprep.subr.mxu0 %v2921
    %3961 = vmatpush1.msra.mxu0 %v2920
    %3962 = vmatprep.subr.mxu0 %v2925
    %3963 = vmatpush1.msra.mxu0 %v2924
    %3964 = vmatprep.subr.mxu0 %v2929
    %3965 = vmatpush1.msra.mxu0 %v2928
    %3966 = vmatprep.subr.mxu0 %v2933
    %3967 = vmatpush1.msra.mxu0 %v2932
    %3968 = vmatprep.subr.mxu0 %v2937
    %3969 = vmatpush1.msra.mxu0 %v2936
    %3970 = vmatprep.subr.mxu0 %v2941
    %3971 = vmatpush1.msra.mxu0 %v2940
    %3972 = vmatprep.subr.mxu0 %v2945
    %3973 = vmatpush1.msra.mxu0 %v2944
    %3974 = vmatprep.subr.mxu0 %v2949
    %3975 = vmatpush1.msra.mxu0 %v2948
    %3976 = vmatprep.subr.mxu0 %v2953
    %3977 = vmatpush1.msra.mxu0 %v2952
    %3978 = vmatprep.subr.mxu0 %v2957
    %3979 = vmatpush1.msra.mxu0 %v2956
    %3980 = vmatprep.subr.mxu0 %v2961
    %3981 = vmatpush1.msra.mxu0 %v2960
    %3982 = vmatprep.subr.mxu0 0.0
    %3983 = vmatpush1.msra.mxu0 0.0
    %3984 = vmatprep.subr.mxu0 0.0
    %3985 = vmatpush1.msra.mxu0 0.0
    %3986 = vmatprep.subr.mxu0 0.0
    %3987 = vmatpush1.msra.mxu0 0.0
    %3988 = vmatprep.subr.mxu0 0.0
    %3989 = vmatpush1.msra.mxu0 0.0
    %3990 = vmatprep.subr.mxu0 0.0
    %3991 = vmatpush1.msra.mxu0 0.0
    %3992 = vmatprep.subr.mxu0 0.0
    %3993 = vmatpush1.msra.mxu0 0.0
    %3994 = vmatprep.subr.mxu0 0.0
    %3995 = vmatpush1.msra.mxu0 0.0
    %3996 = vmatprep.subr.mxu0 0.0
    %3997 = vmatpush1.msra.mxu0 0.0
    %3998 = vmatprep.subr.mxu0 0.0
    %3999 = vmatpush1.msra.mxu0 0.0
    %4000 = vmatprep.subr.mxu0 0.0
    %4001 = vmatpush1.msra.mxu0 0.0
    %4002 = vmatprep.subr.mxu0 0.0
    %4003 = vmatpush1.msra.mxu0 0.0
    %4004 = vmatprep.subr.mxu0 0.0
    %4005 = vmatpush1.msra.mxu0 0.0
    %4006 = vmatprep.subr.mxu0 0.0
    %4007 = vmatpush1.msra.mxu0 0.0
    %4008 = vmatprep.subr.mxu0 0.0
    %4009 = vmatpush1.msra.mxu0 0.0
    %4010 = vmatprep.subr.mxu0 0.0
    %4011 = vmatpush1.msra.mxu0 0.0
    %4012 = vmatprep.subr.mxu0 0.0
    %4013 = vmatpush1.msra.mxu0 0.0
    %4014 = vmatprep.mubr.f32.mxu0 0.0
    %4015 = vmatmul.mubr.f32.gmra.mrb[0].mxu0 %v3948
    %v4016 = vpop.f32.mrb[0].mxu0
    %v4017 = vadd.f32 0.0, %v4016
    %v4018 = vpop.f32.mrb[0].mxu0
    %v4019 = vadd.f32 0.0, %v4018
    %4020 = vdwg.mxu0
    %4021 = vmatprep.subr.mxu0 %v2903
    %4022 = vmatpush1.msra.mxu0 %v2902
    %4023 = vmatprep.subr.mxu0 %v2907
    %4024 = vmatpush1.msra.mxu0 %v2906
    %4025 = vmatprep.subr.mxu0 %v2911
    %4026 = vmatpush1.msra.mxu0 %v2910
    %4027 = vmatprep.subr.mxu0 %v2915
    %4028 = vmatpush1.msra.mxu0 %v2914
    %4029 = vmatprep.subr.mxu0 %v2919
    %4030 = vmatpush1.msra.mxu0 %v2918
    %4031 = vmatprep.subr.mxu0 %v2923
    %4032 = vmatpush1.msra.mxu0 %v2922
    %4033 = vmatprep.subr.mxu0 %v2927
    %4034 = vmatpush1.msra.mxu0 %v2926
    %4035 = vmatprep.subr.mxu0 %v2931
    %4036 = vmatpush1.msra.mxu0 %v2930
    %4037 = vmatprep.subr.mxu0 %v2935
    %4038 = vmatpush1.msra.mxu0 %v2934
    %4039 = vmatprep.subr.mxu0 %v2939
    %4040 = vmatpush1.msra.mxu0 %v2938
    %4041 = vmatprep.subr.mxu0 %v2943
    %4042 = vmatpush1.msra.mxu0 %v2942
    %4043 = vmatprep.subr.mxu0 %v2947
    %4044 = vmatpush1.msra.mxu0 %v2946
    %4045 = vmatprep.subr.mxu0 %v2951
    %4046 = vmatpush1.msra.mxu0 %v2950
    %4047 = vmatprep.subr.mxu0 %v2955
    %4048 = vmatpush1.msra.mxu0 %v2954
    %4049 = vmatprep.subr.mxu0 %v2959
    %4050 = vmatpush1.msra.mxu0 %v2958
    %4051 = vmatprep.subr.mxu0 %v2963
    %4052 = vmatpush1.msra.mxu0 %v2962
    %4053 = vmatprep.subr.mxu0 0.0
    %4054 = vmatpush1.msra.mxu0 0.0
    %4055 = vmatprep.subr.mxu0 0.0
    %4056 = vmatpush1.msra.mxu0 0.0
    %4057 = vmatprep.subr.mxu0 0.0
    %4058 = vmatpush1.msra.mxu0 0.0
    %4059 = vmatprep.subr.mxu0 0.0
    %4060 = vmatpush1.msra.mxu0 0.0
    %4061 = vmatprep.subr.mxu0 0.0
    %4062 = vmatpush1.msra.mxu0 0.0
    %4063 = vmatprep.subr.mxu0 0.0
    %4064 = vmatpush1.msra.mxu0 0.0
    %4065 = vmatprep.subr.mxu0 0.0
    %4066 = vmatpush1.msra.mxu0 0.0
    %4067 = vmatprep.subr.mxu0 0.0
    %4068 = vmatpush1.msra.mxu0 0.0
    %4069 = vmatprep.subr.mxu0 0.0
    %4070 = vmatpush1.msra.mxu0 0.0
    %4071 = vmatprep.subr.mxu0 0.0
    %4072 = vmatpush1.msra.mxu0 0.0
    %4073 = vmatprep.subr.mxu0 0.0
    %4074 = vmatpush1.msra.mxu0 0.0
    %4075 = vmatprep.subr.mxu0 0.0
    %4076 = vmatpush1.msra.mxu0 0.0
    %4077 = vmatprep.subr.mxu0 0.0
    %4078 = vmatpush1.msra.mxu0 0.0
    %4079 = vmatprep.subr.mxu0 0.0
    %4080 = vmatpush1.msra.mxu0 0.0
    %4081 = vmatprep.subr.mxu0 0.0
    %4082 = vmatpush1.msra.mxu0 0.0
    %4083 = vmatprep.subr.mxu0 0.0
    %4084 = vmatpush1.msra.mxu0 0.0
    %4085 = vmatprep.mubr.f32.mxu0 0.0
    %4086 = vmatmul.mubr.f32.gmra.mrb[0].mxu0 %v3948
    %v4087 = vpop.f32.mrb[0].mxu0
    %v4088 = vadd.f32 0.0, %v4087
    %v4089 = vpop.f32.mrb[0].mxu0
    %v4090 = vadd.f32 0.0, %v4089
    %4091 = vdwg.mxu0
    %v4096 = vcombine.low %v4017, %v4019
    %v4097 = vcombine.low %v4088, %v4090
    %v4099 = vunpack.c.l.s4 1983009808
    %v4100 = vunpack.c.0.s8 %v4099
    %v4101 = vlaneseq
    %v4102 = vshrl.u32 %v4101, 7
    %v4103 = vsub.s32 %v4100, %v4102
    %v4104 = vrot.slane %v4096, %v4103
    %v4106 = vunpack.c.l.s4 1983009808
    %v4107 = vunpack.c.0.s8 %v4106
    %v4108 = vlaneseq
    %v4109 = vshrl.u32 %v4108, 7
    %v4110 = vsub.s32 %v4107, %v4109
    %v4111 = vrot.slane %v4097, %v4110
    %v4112 = vcombine.low %v4104, %v4111
    %v4114 = vadd.f32 %v3949, %v4112
    %v4115 = vxor.u32 %v4114, 2147483648
    %v4116 = vmul.f32 %v4115, 1.442695
    %v4117 = vpow.pop %v4116
    %v4118 = vadd.f32 %v4117, 1.0
    %v4119 = vrcp.pop %v4118
    %v4120 = vmul.f32 1.0, %v4119
    %v4122 = vrot.slane %v4114, 2
    %v4124 = vxor.u32 %v4122, 2147483648
    %v4125 = vmul.f32 %v4124, 1.442695
    %v4126 = vpow.pop %v4125
    %v4127 = vadd.f32 %v4126, 1.0
    %v4128 = vrcp.pop %v4127
    %v4129 = vmul.f32 1.0, %v4128
    %v4130 = vrot.slane %v4114, 4
    %v4132 = vtanh.pop %v4130
    %v4133 = vrot.slane %v4114, 6
    %v4135 = vxor.u32 %v4133, 2147483648
    %v4136 = vmul.f32 %v4135, 1.442695
    %v4137 = vpow.pop %v4136
    %v4138 = vadd.f32 %v4137, 1.0
    %v4139 = vrcp.pop %v4138
    %v4140 = vmul.f32 1.0, %v4139
    %v4141 = vmul.f32 %v4129, %v3946
    %v4142 = vmul.f32 %v4120, %v4132
    %v4143 = vadd.f32 %v4141, %v4142
    %v4144 = vtanh.pop %v4143
    %v4145 = vmul.f32 %v4140, %v4144
    %v4146 = vld [vmem:[%s1361] sm:$0xff]
    %4147 = vmatprep.subr.mxu0 %v2901
    %4148 = vmatpush1.msra.mxu0 %v2900
    %4149 = vmatprep.subr.mxu0 %v2905
    %4150 = vmatpush1.msra.mxu0 %v2904
    %4151 = vmatprep.subr.mxu0 %v2909
    %4152 = vmatpush1.msra.mxu0 %v2908
    %4153 = vmatprep.subr.mxu0 %v2913
    %4154 = vmatpush1.msra.mxu0 %v2912
    %4155 = vmatprep.subr.mxu0 %v2917
    %4156 = vmatpush1.msra.mxu0 %v2916
    %4157 = vmatprep.subr.mxu0 %v2921
    %4158 = vmatpush1.msra.mxu0 %v2920
    %4159 = vmatprep.subr.mxu0 %v2925
    %4160 = vmatpush1.msra.mxu0 %v2924
    %4161 = vmatprep.subr.mxu0 %v2929
    %4162 = vmatpush1.msra.mxu0 %v2928
    %4163 = vmatprep.subr.mxu0 %v2933
    %4164 = vmatpush1.msra.mxu0 %v2932
    %4165 = vmatprep.subr.mxu0 %v2937
    %4166 = vmatpush1.msra.mxu0 %v2936
    %4167 = vmatprep.subr.mxu0 %v2941
    %4168 = vmatpush1.msra.mxu0 %v2940
    %4169 = vmatprep.subr.mxu0 %v2945
    %4170 = vmatpush1.msra.mxu0 %v2944
    %4171 = vmatprep.subr.mxu0 %v2949
    %4172 = vmatpush1.msra.mxu0 %v2948
    %4173 = vmatprep.subr.mxu0 %v2953
    %4174 = vmatpush1.msra.mxu0 %v2952
    %4175 = vmatprep.subr.mxu0 %v2957
    %4176 = vmatpush1.msra.mxu0 %v2956
    %4177 = vmatprep.subr.mxu0 %v2961
    %4178 = vmatpush1.msra.mxu0 %v2960
    %4179 = vmatprep.subr.mxu0 0.0
    %4180 = vmatpush1.msra.mxu0 0.0
    %4181 = vmatprep.subr.mxu0 0.0
    %4182 = vmatpush1.msra.mxu0 0.0
    %4183 = vmatprep.subr.mxu0 0.0
    %4184 = vmatpush1.msra.mxu0 0.0
    %4185 = vmatprep.subr.mxu0 0.0
    %4186 = vmatpush1.msra.mxu0 0.0
    %4187 = vmatprep.subr.mxu0 0.0
    %4188 = vmatpush1.msra.mxu0 0.0
    %4189 = vmatprep.subr.mxu0 0.0
    %4190 = vmatpush1.msra.mxu0 0.0
    %4191 = vmatprep.subr.mxu0 0.0
    %4192 = vmatpush1.msra.mxu0 0.0
    %4193 = vmatprep.subr.mxu0 0.0
    %4194 = vmatpush1.msra.mxu0 0.0
    %4195 = vmatprep.subr.mxu0 0.0
    %4196 = vmatpush1.msra.mxu0 0.0
    %4197 = vmatprep.subr.mxu0 0.0
    %4198 = vmatpush1.msra.mxu0 0.0
    %4199 = vmatprep.subr.mxu0 0.0
    %4200 = vmatpush1.msra.mxu0 0.0
    %4201 = vmatprep.subr.mxu0 0.0
    %4202 = vmatpush1.msra.mxu0 0.0
    %4203 = vmatprep.subr.mxu0 0.0
    %4204 = vmatpush1.msra.mxu0 0.0
    %4205 = vmatprep.subr.mxu0 0.0
    %4206 = vmatpush1.msra.mxu0 0.0
    %4207 = vmatprep.subr.mxu0 0.0
    %4208 = vmatpush1.msra.mxu0 0.0
    %4209 = vmatprep.subr.mxu0 0.0
    %4210 = vmatpush1.msra.mxu0 0.0
    %4211 = vmatprep.mubr.f32.mxu0 0.0
    %4212 = vmatmul.mubr.f32.gmra.mrb[0].mxu0 %v4145
    %v4213 = vpop.f32.mrb[0].mxu0
    %v4214 = vadd.f32 0.0, %v4213
    %v4215 = vpop.f32.mrb[0].mxu0
    %v4216 = vadd.f32 0.0, %v4215
    %4217 = vdwg.mxu0
    %4218 = vmatprep.subr.mxu0 %v2903
    %4219 = vmatpush1.msra.mxu0 %v2902
    %4220 = vmatprep.subr.mxu0 %v2907
    %4221 = vmatpush1.msra.mxu0 %v2906
    %4222 = vmatprep.subr.mxu0 %v2911
    %4223 = vmatpush1.msra.mxu0 %v2910
    %4224 = vmatprep.subr.mxu0 %v2915
    %4225 = vmatpush1.msra.mxu0 %v2914
    %4226 = vmatprep.subr.mxu0 %v2919
    %4227 = vmatpush1.msra.mxu0 %v2918
    %4228 = vmatprep.subr.mxu0 %v2923
    %4229 = vmatpush1.msra.mxu0 %v2922
    %4230 = vmatprep.subr.mxu0 %v2927
    %4231 = vmatpush1.msra.mxu0 %v2926
    %4232 = vmatprep.subr.mxu0 %v2931
    %4233 = vmatpush1.msra.mxu0 %v2930
    %4234 = vmatprep.subr.mxu0 %v2935
    %4235 = vmatpush1.msra.mxu0 %v2934
    %4236 = vmatprep.subr.mxu0 %v2939
    %4237 = vmatpush1.msra.mxu0 %v2938
    %4238 = vmatprep.subr.mxu0 %v2943
    %4239 = vmatpush1.msra.mxu0 %v2942
    %4240 = vmatprep.subr.mxu0 %v2947
    %4241 = vmatpush1.msra.mxu0 %v2946
    %4242 = vmatprep.subr.mxu0 %v2951
    %4243 = vmatpush1.msra.mxu0 %v2950
    %4244 = vmatprep.subr.mxu0 %v2955
    %4245 = vmatpush1.msra.mxu0 %v2954
    %4246 = vmatprep.subr.mxu0 %v2959
    %4247 = vmatpush1.msra.mxu0 %v2958
    %4248 = vmatprep.subr.mxu0 %v2963
    %4249 = vmatpush1.msra.mxu0 %v2962
    %4250 = vmatprep.subr.mxu0 0.0
    %4251 = vmatpush1.msra.mxu0 0.0
    %4252 = vmatprep.subr.mxu0 0.0
    %4253 = vmatpush1.msra.mxu0 0.0
    %4254 = vmatprep.subr.mxu0 0.0
    %4255 = vmatpush1.msra.mxu0 0.0
    %4256 = vmatprep.subr.mxu0 0.0
    %4257 = vmatpush1.msra.mxu0 0.0
    %4258 = vmatprep.subr.mxu0 0.0
    %4259 = vmatpush1.msra.mxu0 0.0
    %4260 = vmatprep.subr.mxu0 0.0
    %4261 = vmatpush1.msra.mxu0 0.0
    %4262 = vmatprep.subr.mxu0 0.0
    %4263 = vmatpush1.msra.mxu0 0.0
    %4264 = vmatprep.subr.mxu0 0.0
    %4265 = vmatpush1.msra.mxu0 0.0
    %4266 = vmatprep.subr.mxu0 0.0
    %4267 = vmatpush1.msra.mxu0 0.0
    %4268 = vmatprep.subr.mxu0 0.0
    %4269 = vmatpush1.msra.mxu0 0.0
    %4270 = vmatprep.subr.mxu0 0.0
    %4271 = vmatpush1.msra.mxu0 0.0
    %4272 = vmatprep.subr.mxu0 0.0
    %4273 = vmatpush1.msra.mxu0 0.0
    %4274 = vmatprep.subr.mxu0 0.0
    %4275 = vmatpush1.msra.mxu0 0.0
    %4276 = vmatprep.subr.mxu0 0.0
    %4277 = vmatpush1.msra.mxu0 0.0
    %4278 = vmatprep.subr.mxu0 0.0
    %4279 = vmatpush1.msra.mxu0 0.0
    %4280 = vmatprep.subr.mxu0 0.0
    %4281 = vmatpush1.msra.mxu0 0.0
    %4282 = vmatprep.mubr.f32.mxu0 0.0
    %4283 = vmatmul.mubr.f32.gmra.mrb[0].mxu0 %v4145
    %v4284 = vpop.f32.mrb[0].mxu0
    %v4285 = vadd.f32 0.0, %v4284
    %v4286 = vpop.f32.mrb[0].mxu0
    %v4287 = vadd.f32 0.0, %v4286
    %4288 = vdwg.mxu0
    %v4293 = vcombine.low %v4214, %v4216
    %v4294 = vcombine.low %v4285, %v4287
    %v4296 = vunpack.c.l.s4 1983009808
    %v4297 = vunpack.c.0.s8 %v4296
    %v4298 = vlaneseq
    %v4299 = vshrl.u32 %v4298, 7
    %v4300 = vsub.s32 %v4297, %v4299
    %v4301 = vrot.slane %v4293, %v4300
    %v4303 = vunpack.c.l.s4 1983009808
    %v4304 = vunpack.c.0.s8 %v4303
    %v4305 = vlaneseq
    %v4306 = vshrl.u32 %v4305, 7
    %v4307 = vsub.s32 %v4304, %v4306
    %v4308 = vrot.slane %v4294, %v4307
    %v4309 = vcombine.low %v4301, %v4308
    %v4311 = vadd.f32 %v4146, %v4309
    %v4312 = vxor.u32 %v4311, 2147483648
    %v4313 = vmul.f32 %v4312, 1.442695
    %v4314 = vpow.pop %v4313
    %v4315 = vadd.f32 %v4314, 1.0
    %v4316 = vrcp.pop %v4315
    %v4317 = vmul.f32 1.0, %v4316
    %v4319 = vrot.slane %v4311, 2
    %v4321 = vxor.u32 %v4319, 2147483648
    %v4322 = vmul.f32 %v4321, 1.442695
    %v4323 = vpow.pop %v4322
    %v4324 = vadd.f32 %v4323, 1.0
    %v4325 = vrcp.pop %v4324
    %v4326 = vmul.f32 1.0, %v4325
    %v4327 = vrot.slane %v4311, 4
    %v4329 = vtanh.pop %v4327
    %v4330 = vrot.slane %v4311, 6
    %v4332 = vxor.u32 %v4330, 2147483648
    %v4333 = vmul.f32 %v4332, 1.442695
    %v4334 = vpow.pop %v4333
    %v4335 = vadd.f32 %v4334, 1.0
    %v4336 = vrcp.pop %v4335
    %v4337 = vmul.f32 1.0, %v4336
    %v4338 = vmul.f32 %v4326, %v4143
    %v4339 = vmul.f32 %v4317, %v4329
    %v4340 = vadd.f32 %v4338, %v4339
    %v4341 = vtanh.pop %v4340
    %v4342 = vmul.f32 %v4337, %v4341
    %v4343 = vld [vmem:[%s1532] sm:$0xff]
    %4344 = vmatprep.subr.mxu0 %v2901
    %4345 = vmatpush1.msra.mxu0 %v2900
    %4346 = vmatprep.subr.mxu0 %v2905
    %4347 = vmatpush1.msra.mxu0 %v2904
    %4348 = vmatprep.subr.mxu0 %v2909
    %4349 = vmatpush1.msra.mxu0 %v2908
    %4350 = vmatprep.subr.mxu0 %v2913
    %4351 = vmatpush1.msra.mxu0 %v2912
    %4352 = vmatprep.subr.mxu0 %v2917
    %4353 = vmatpush1.msra.mxu0 %v2916
    %4354 = vmatprep.subr.mxu0 %v2921
    %4355 = vmatpush1.msra.mxu0 %v2920
    %4356 = vmatprep.subr.mxu0 %v2925
    %4357 = vmatpush1.msra.mxu0 %v2924
    %4358 = vmatprep.subr.mxu0 %v2929
    %4359 = vmatpush1.msra.mxu0 %v2928
    %4360 = vmatprep.subr.mxu0 %v2933
    %4361 = vmatpush1.msra.mxu0 %v2932
    %4362 = vmatprep.subr.mxu0 %v2937
    %4363 = vmatpush1.msra.mxu0 %v2936
    %4364 = vmatprep.subr.mxu0 %v2941
    %4365 = vmatpush1.msra.mxu0 %v2940
    %4366 = vmatprep.subr.mxu0 %v2945
    %4367 = vmatpush1.msra.mxu0 %v2944
    %4368 = vmatprep.subr.mxu0 %v2949
    %4369 = vmatpush1.msra.mxu0 %v2948
    %4370 = vmatprep.subr.mxu0 %v2953
    %4371 = vmatpush1.msra.mxu0 %v2952
    %4372 = vmatprep.subr.mxu0 %v2957
    %4373 = vmatpush1.msra.mxu0 %v2956
    %4374 = vmatprep.subr.mxu0 %v2961
    %4375 = vmatpush1.msra.mxu0 %v2960
    %4376 = vmatprep.subr.mxu0 0.0
    %4377 = vmatpush1.msra.mxu0 0.0
    %4378 = vmatprep.subr.mxu0 0.0
    %4379 = vmatpush1.msra.mxu0 0.0
    %4380 = vmatprep.subr.mxu0 0.0
    %4381 = vmatpush1.msra.mxu0 0.0
    %4382 = vmatprep.subr.mxu0 0.0
    %4383 = vmatpush1.msra.mxu0 0.0
    %4384 = vmatprep.subr.mxu0 0.0
    %4385 = vmatpush1.msra.mxu0 0.0
    %4386 = vmatprep.subr.mxu0 0.0
    %4387 = vmatpush1.msra.mxu0 0.0
    %4388 = vmatprep.subr.mxu0 0.0
    %4389 = vmatpush1.msra.mxu0 0.0
    %4390 = vmatprep.subr.mxu0 0.0
    %4391 = vmatpush1.msra.mxu0 0.0
    %4392 = vmatprep.subr.mxu0 0.0
    %4393 = vmatpush1.msra.mxu0 0.0
    %4394 = vmatprep.subr.mxu0 0.0
    %4395 = vmatpush1.msra.mxu0 0.0
    %4396 = vmatprep.subr.mxu0 0.0
    %4397 = vmatpush1.msra.mxu0 0.0
    %4398 = vmatprep.subr.mxu0 0.0
    %4399 = vmatpush1.msra.mxu0 0.0
    %4400 = vmatprep.subr.mxu0 0.0
    %4401 = vmatpush1.msra.mxu0 0.0
    %4402 = vmatprep.subr.mxu0 0.0
    %4403 = vmatpush1.msra.mxu0 0.0
    %4404 = vmatprep.subr.mxu0 0.0
    %4405 = vmatpush1.msra.mxu0 0.0
    %4406 = vmatprep.subr.mxu0 0.0
    %4407 = vmatpush1.msra.mxu0 0.0
    %4408 = vmatprep.mubr.f32.mxu0 0.0
    %4409 = vmatmul.mubr.f32.gmra.mrb[0].mxu0 %v4342
    %v4410 = vpop.f32.mrb[0].mxu0
    %v4411 = vadd.f32 0.0, %v4410
    %v4412 = vpop.f32.mrb[0].mxu0
    %v4413 = vadd.f32 0.0, %v4412
    %4414 = vdwg.mxu0
    %4415 = vmatprep.subr.mxu0 %v2903
    %4416 = vmatpush1.msra.mxu0 %v2902
    %4417 = vmatprep.subr.mxu0 %v2907
    %4418 = vmatpush1.msra.mxu0 %v2906
    %4419 = vmatprep.subr.mxu0 %v2911
    %4420 = vmatpush1.msra.mxu0 %v2910
    %4421 = vmatprep.subr.mxu0 %v2915
    %4422 = vmatpush1.msra.mxu0 %v2914
    %4423 = vmatprep.subr.mxu0 %v2919
    %4424 = vmatpush1.msra.mxu0 %v2918
    %4425 = vmatprep.subr.mxu0 %v2923
    %4426 = vmatpush1.msra.mxu0 %v2922
    %4427 = vmatprep.subr.mxu0 %v2927
    %4428 = vmatpush1.msra.mxu0 %v2926
    %4429 = vmatprep.subr.mxu0 %v2931
    %4430 = vmatpush1.msra.mxu0 %v2930
    %4431 = vmatprep.subr.mxu0 %v2935
    %4432 = vmatpush1.msra.mxu0 %v2934
    %4433 = vmatprep.subr.mxu0 %v2939
    %4434 = vmatpush1.msra.mxu0 %v2938
    %4435 = vmatprep.subr.mxu0 %v2943
    %4436 = vmatpush1.msra.mxu0 %v2942
    %4437 = vmatprep.subr.mxu0 %v2947
    %4438 = vmatpush1.msra.mxu0 %v2946
    %4439 = vmatprep.subr.mxu0 %v2951
    %4440 = vmatpush1.msra.mxu0 %v2950
    %4441 = vmatprep.subr.mxu0 %v2955
    %4442 = vmatpush1.msra.mxu0 %v2954
    %4443 = vmatprep.subr.mxu0 %v2959
    %4444 = vmatpush1.msra.mxu0 %v2958
    %4445 = vmatprep.subr.mxu0 %v2963
    %4446 = vmatpush1.msra.mxu0 %v2962
    %4447 = vmatprep.subr.mxu0 0.0
    %4448 = vmatpush1.msra.mxu0 0.0
    %4449 = vmatprep.subr.mxu0 0.0
    %4450 = vmatpush1.msra.mxu0 0.0
    %4451 = vmatprep.subr.mxu0 0.0
    %4452 = vmatpush1.msra.mxu0 0.0
    %4453 = vmatprep.subr.mxu0 0.0
    %4454 = vmatpush1.msra.mxu0 0.0
    %4455 = vmatprep.subr.mxu0 0.0
    %4456 = vmatpush1.msra.mxu0 0.0
    %4457 = vmatprep.subr.mxu0 0.0
    %4458 = vmatpush1.msra.mxu0 0.0
    %4459 = vmatprep.subr.mxu0 0.0
    %4460 = vmatpush1.msra.mxu0 0.0
    %4461 = vmatprep.subr.mxu0 0.0
    %4462 = vmatpush1.msra.mxu0 0.0
    %4463 = vmatprep.subr.mxu0 0.0
    %4464 = vmatpush1.msra.mxu0 0.0
    %4465 = vmatprep.subr.mxu0 0.0
    %4466 = vmatpush1.msra.mxu0 0.0
    %4467 = vmatprep.subr.mxu0 0.0
    %4468 = vmatpush1.msra.mxu0 0.0
    %4469 = vmatprep.subr.mxu0 0.0
    %4470 = vmatpush1.msra.mxu0 0.0
    %4471 = vmatprep.subr.mxu0 0.0
    %4472 = vmatpush1.msra.mxu0 0.0
    %4473 = vmatprep.subr.mxu0 0.0
    %4474 = vmatpush1.msra.mxu0 0.0
    %4475 = vmatprep.subr.mxu0 0.0
    %4476 = vmatpush1.msra.mxu0 0.0
    %4477 = vmatprep.subr.mxu0 0.0
    %4478 = vmatpush1.msra.mxu0 0.0
    %4479 = vmatprep.mubr.f32.mxu0 0.0
    %4480 = vmatmul.mubr.f32.gmra.mrb[0].mxu0 %v4342
    %v4481 = vpop.f32.mrb[0].mxu0
    %v4482 = vadd.f32 0.0, %v4481
    %v4483 = vpop.f32.mrb[0].mxu0
    %v4484 = vadd.f32 0.0, %v4483
    %4485 = vdwg.mxu0
    %v4490 = vcombine.low %v4411, %v4413
    %v4491 = vcombine.low %v4482, %v4484
    %v4493 = vunpack.c.l.s4 1983009808
    %v4494 = vunpack.c.0.s8 %v4493
    %v4495 = vlaneseq
    %v4496 = vshrl.u32 %v4495, 7
    %v4497 = vsub.s32 %v4494, %v4496
    %v4498 = vrot.slane %v4490, %v4497
    %v4500 = vunpack.c.l.s4 1983009808
    %v4501 = vunpack.c.0.s8 %v4500
    %v4502 = vlaneseq
    %v4503 = vshrl.u32 %v4502, 7
    %v4504 = vsub.s32 %v4501, %v4503
    %v4505 = vrot.slane %v4491, %v4504
    %v4506 = vcombine.low %v4498, %v4505
    %v4508 = vadd.f32 %v4343, %v4506
    %v4509 = vxor.u32 %v4508, 2147483648
    %v4510 = vmul.f32 %v4509, 1.442695
    %v4511 = vpow.pop %v4510
    %v4512 = vadd.f32 %v4511, 1.0
    %v4513 = vrcp.pop %v4512
    %v4514 = vmul.f32 1.0, %v4513
    %v4516 = vrot.slane %v4508, 2
    %v4518 = vxor.u32 %v4516, 2147483648
    %v4519 = vmul.f32 %v4518, 1.442695
    %v4520 = vpow.pop %v4519
    %v4521 = vadd.f32 %v4520, 1.0
    %v4522 = vrcp.pop %v4521
    %v4523 = vmul.f32 1.0, %v4522
    %v4524 = vrot.slane %v4508, 4
    %v4526 = vtanh.pop %v4524
    %v4527 = vrot.slane %v4508, 6
    %v4529 = vxor.u32 %v4527, 2147483648
    %v4530 = vmul.f32 %v4529, 1.442695
    %v4531 = vpow.pop %v4530
    %v4532 = vadd.f32 %v4531, 1.0
    %v4533 = vrcp.pop %v4532
    %v4534 = vmul.f32 1.0, %v4533
    %v4535 = vmul.f32 %v4523, %v4340
    %v4536 = vmul.f32 %v4514, %v4526
    %v4537 = vadd.f32 %v4535, %v4536
    %v4538 = vtanh.pop %v4537
    %v4539 = vmul.f32 %v4534, %v4538
    %v4540 = vld [vmem:[#allocation10] sm:$0xff]
    %v4541 = vld [vmem:[#allocation10 + $0x8] sm:$0xff]
    %v4542 = vld [vmem:[#allocation10 + $0x10] sm:$0xff]
    %v4543 = vld [vmem:[#allocation10 + $0x18] sm:$0xff]
    %v4544 = vld [vmem:[#allocation10 + $0x20] sm:$0xff]
    %v4545 = vld [vmem:[#allocation10 + $0x28] sm:$0xff]
    %v4546 = vld [vmem:[#allocation10 + $0x30] sm:$0xff]
    %v4547 = vld [vmem:[#allocation10 + $0x38] sm:$0xff]
    %v4548 = vld [vmem:[#allocation10 + $0x40] sm:$0xff]
    %v4549 = vld [vmem:[#allocation10 + $0x48] sm:$0xff]
    %v4550 = vld [vmem:[#allocation10 + $0x50] sm:$0xff]
    %v4551 = vld [vmem:[#allocation10 + $0x58] sm:$0xff]
    %v4552 = vld [vmem:[#allocation10 + $0x60] sm:$0xff]
    %v4553 = vld [vmem:[#allocation10 + $0x68] sm:$0xff]
    %v4554 = vld [vmem:[#allocation10 + $0x70] sm:$0xff]
    %v4555 = vld [vmem:[#allocation10 + $0x78] sm:$0xff]
    %v4556 = vld [vmem:[#allocation10 + $0x80] sm:$0xff]
    %v4557 = vld [vmem:[#allocation10 + $0x88] sm:$0xff]
    %v4558 = vld [vmem:[#allocation10 + $0x90] sm:$0xff]
    %v4559 = vld [vmem:[#allocation10 + $0x98] sm:$0xff]
    %v4560 = vld [vmem:[#allocation10 + $0xa0] sm:$0xff]
    %v4561 = vld [vmem:[#allocation10 + $0xa8] sm:$0xff]
    %v4562 = vld [vmem:[#allocation10 + $0xb0] sm:$0xff]
    %v4563 = vld [vmem:[#allocation10 + $0xb8] sm:$0xff]
    %v4564 = vld [vmem:[#allocation10 + $0xc0] sm:$0xff]
    %v4565 = vld [vmem:[#allocation10 + $0xc8] sm:$0xff]
    %v4566 = vld [vmem:[#allocation10 + $0xd0] sm:$0xff]
    %v4567 = vld [vmem:[#allocation10 + $0xd8] sm:$0xff]
    %v4568 = vld [vmem:[#allocation10 + $0xe0] sm:$0xff]
    %v4569 = vld [vmem:[#allocation10 + $0xe8] sm:$0xff]
    %v4570 = vld [vmem:[#allocation10 + $0xf0] sm:$0xff]
    %v4571 = vld [vmem:[#allocation10 + $0xf8] sm:$0xff]
    %v4572 = vld [vmem:[#allocation10 + $0x100] sm:$0xff]
    %v4573 = vld [vmem:[#allocation10 + $0x108] sm:$0xff]
    %v4574 = vld [vmem:[#allocation10 + $0x110] sm:$0xff]
    %v4575 = vld [vmem:[#allocation10 + $0x118] sm:$0xff]
    %v4576 = vld [vmem:[#allocation10 + $0x120] sm:$0xff]
    %v4577 = vld [vmem:[#allocation10 + $0x128] sm:$0xff]
    %v4578 = vld [vmem:[#allocation10 + $0x130] sm:$0xff]
    %v4579 = vld [vmem:[#allocation10 + $0x138] sm:$0xff]
    %v4580 = vld [vmem:[#allocation10 + $0x140] sm:$0xff]
    %v4581 = vld [vmem:[#allocation10 + $0x148] sm:$0xff]
    %v4582 = vld [vmem:[#allocation10 + $0x150] sm:$0xff]
    %v4583 = vld [vmem:[#allocation10 + $0x158] sm:$0xff]
    %v4584 = vld [vmem:[#allocation10 + $0x160] sm:$0xff]
    %v4585 = vld [vmem:[#allocation10 + $0x168] sm:$0xff]
    %v4586 = vld [vmem:[#allocation10 + $0x170] sm:$0xff]
    %v4587 = vld [vmem:[#allocation10 + $0x178] sm:$0xff]
    %v4588 = vld [vmem:[#allocation10 + $0x180] sm:$0xff]
    %v4589 = vld [vmem:[#allocation10 + $0x188] sm:$0xff]
    %v4590 = vld [vmem:[#allocation10 + $0x190] sm:$0xff]
    %v4591 = vld [vmem:[#allocation10 + $0x198] sm:$0xff]
    %v4592 = vld [vmem:[#allocation10 + $0x1a0] sm:$0xff]
    %v4593 = vld [vmem:[#allocation10 + $0x1a8] sm:$0xff]
    %v4594 = vld [vmem:[#allocation10 + $0x1b0] sm:$0xff]
    %v4595 = vld [vmem:[#allocation10 + $0x1b8] sm:$0xff]
    %v4596 = vld [vmem:[#allocation10 + $0x1c0] sm:$0xff]
    %v4597 = vld [vmem:[#allocation10 + $0x1c8] sm:$0xff]
    %v4598 = vld [vmem:[#allocation10 + $0x1d0] sm:$0xff]
    %v4599 = vld [vmem:[#allocation10 + $0x1d8] sm:$0xff]
    %v4600 = vld [vmem:[#allocation10 + $0x1e0] sm:$0xff]
    %v4601 = vld [vmem:[#allocation10 + $0x1e8] sm:$0xff]
    %v4602 = vld [vmem:[#allocation10 + $0x1f0] sm:$0xff]
    %v4603 = vld [vmem:[#allocation10 + $0x1f8] sm:$0xff]
    %v4604 = vld [vmem:[#allocation3] sm:$0xff]
    %4605 = vmatprep.subr.mxu0 %v4541
    %4606 = vmatpush1.msra.mxu0 %v4540
    %4607 = vmatprep.subr.mxu0 %v4545
    %4608 = vmatpush1.msra.mxu0 %v4544
    %4609 = vmatprep.subr.mxu0 %v4549
    %4610 = vmatpush1.msra.mxu0 %v4548
    %4611 = vmatprep.subr.mxu0 %v4553
    %4612 = vmatpush1.msra.mxu0 %v4552
    %4613 = vmatprep.subr.mxu0 %v4557
    %4614 = vmatpush1.msra.mxu0 %v4556
    %4615 = vmatprep.subr.mxu0 %v4561
    %4616 = vmatpush1.msra.mxu0 %v4560
    %4617 = vmatprep.subr.mxu0 %v4565
    %4618 = vmatpush1.msra.mxu0 %v4564
    %4619 = vmatprep.subr.mxu0 %v4569
    %4620 = vmatpush1.msra.mxu0 %v4568
    %4621 = vmatprep.subr.mxu0 %v4573
    %4622 = vmatpush1.msra.mxu0 %v4572
    %4623 = vmatprep.subr.mxu0 %v4577
    %4624 = vmatpush1.msra.mxu0 %v4576
    %4625 = vmatprep.subr.mxu0 %v4581
    %4626 = vmatpush1.msra.mxu0 %v4580
    %4627 = vmatprep.subr.mxu0 %v4585
    %4628 = vmatpush1.msra.mxu0 %v4584
    %4629 = vmatprep.subr.mxu0 %v4589
    %4630 = vmatpush1.msra.mxu0 %v4588
    %4631 = vmatprep.subr.mxu0 %v4593
    %4632 = vmatpush1.msra.mxu0 %v4592
    %4633 = vmatprep.subr.mxu0 %v4597
    %4634 = vmatpush1.msra.mxu0 %v4596
    %4635 = vmatprep.subr.mxu0 %v4601
    %4636 = vmatpush1.msra.mxu0 %v4600
    %4637 = vmatprep.subr.mxu0 0.0
    %4638 = vmatpush1.msra.mxu0 0.0
    %4639 = vmatprep.subr.mxu0 0.0
    %4640 = vmatpush1.msra.mxu0 0.0
    %4641 = vmatprep.subr.mxu0 0.0
    %4642 = vmatpush1.msra.mxu0 0.0
    %4643 = vmatprep.subr.mxu0 0.0
    %4644 = vmatpush1.msra.mxu0 0.0
    %4645 = vmatprep.subr.mxu0 0.0
    %4646 = vmatpush1.msra.mxu0 0.0
    %4647 = vmatprep.subr.mxu0 0.0
    %4648 = vmatpush1.msra.mxu0 0.0
    %4649 = vmatprep.subr.mxu0 0.0
    %4650 = vmatpush1.msra.mxu0 0.0
    %4651 = vmatprep.subr.mxu0 0.0
    %4652 = vmatpush1.msra.mxu0 0.0
    %4653 = vmatprep.subr.mxu0 0.0
    %4654 = vmatpush1.msra.mxu0 0.0
    %4655 = vmatprep.subr.mxu0 0.0
    %4656 = vmatpush1.msra.mxu0 0.0
    %4657 = vmatprep.subr.mxu0 0.0
    %4658 = vmatpush1.msra.mxu0 0.0
    %4659 = vmatprep.subr.mxu0 0.0
    %4660 = vmatpush1.msra.mxu0 0.0
    %4661 = vmatprep.subr.mxu0 0.0
    %4662 = vmatpush1.msra.mxu0 0.0
    %4663 = vmatprep.subr.mxu0 0.0
    %4664 = vmatpush1.msra.mxu0 0.0
    %4665 = vmatprep.subr.mxu0 0.0
    %4666 = vmatpush1.msra.mxu0 0.0
    %4667 = vmatprep.subr.mxu0 0.0
    %4668 = vmatpush1.msra.mxu0 0.0
    %4669 = vmatprep.mubr.f32.mxu0 0.0
    %4670 = vmatmul.mubr.f32.gmra.mrb[0].mxu0 %v4539
    %v4671 = vpop.f32.mrb[0].mxu0
    %v4672 = vadd.f32 0.0, %v4671
    %v4673 = vpop.f32.mrb[0].mxu0
    %v4674 = vadd.f32 0.0, %v4673
    %4675 = vdwg.mxu0
    %4676 = vmatprep.subr.mxu0 %v4543
    %4677 = vmatpush1.msra.mxu0 %v4542
    %4678 = vmatprep.subr.mxu0 %v4547
    %4679 = vmatpush1.msra.mxu0 %v4546
    %4680 = vmatprep.subr.mxu0 %v4551
    %4681 = vmatpush1.msra.mxu0 %v4550
    %4682 = vmatprep.subr.mxu0 %v4555
    %4683 = vmatpush1.msra.mxu0 %v4554
    %4684 = vmatprep.subr.mxu0 %v4559
    %4685 = vmatpush1.msra.mxu0 %v4558
    %4686 = vmatprep.subr.mxu0 %v4563
    %4687 = vmatpush1.msra.mxu0 %v4562
    %4688 = vmatprep.subr.mxu0 %v4567
    %4689 = vmatpush1.msra.mxu0 %v4566
    %4690 = vmatprep.subr.mxu0 %v4571
    %4691 = vmatpush1.msra.mxu0 %v4570
    %4692 = vmatprep.subr.mxu0 %v4575
    %4693 = vmatpush1.msra.mxu0 %v4574
    %4694 = vmatprep.subr.mxu0 %v4579
    %4695 = vmatpush1.msra.mxu0 %v4578
    %4696 = vmatprep.subr.mxu0 %v4583
    %4697 = vmatpush1.msra.mxu0 %v4582
    %4698 = vmatprep.subr.mxu0 %v4587
    %4699 = vmatpush1.msra.mxu0 %v4586
    %4700 = vmatprep.subr.mxu0 %v4591
    %4701 = vmatpush1.msra.mxu0 %v4590
    %4702 = vmatprep.subr.mxu0 %v4595
    %4703 = vmatpush1.msra.mxu0 %v4594
    %4704 = vmatprep.subr.mxu0 %v4599
    %4705 = vmatpush1.msra.mxu0 %v4598
    %4706 = vmatprep.subr.mxu0 %v4603
    %4707 = vmatpush1.msra.mxu0 %v4602
    %4708 = vmatprep.subr.mxu0 0.0
    %4709 = vmatpush1.msra.mxu0 0.0
    %4710 = vmatprep.subr.mxu0 0.0
    %4711 = vmatpush1.msra.mxu0 0.0
    %4712 = vmatprep.subr.mxu0 0.0
    %4713 = vmatpush1.msra.mxu0 0.0
    %4714 = vmatprep.subr.mxu0 0.0
    %4715 = vmatpush1.msra.mxu0 0.0
    %4716 = vmatprep.subr.mxu0 0.0
    %4717 = vmatpush1.msra.mxu0 0.0
    %4718 = vmatprep.subr.mxu0 0.0
    %4719 = vmatpush1.msra.mxu0 0.0
    %4720 = vmatprep.subr.mxu0 0.0
    %4721 = vmatpush1.msra.mxu0 0.0
    %4722 = vmatprep.subr.mxu0 0.0
    %4723 = vmatpush1.msra.mxu0 0.0
    %4724 = vmatprep.subr.mxu0 0.0
    %4725 = vmatpush1.msra.mxu0 0.0
    %4726 = vmatprep.subr.mxu0 0.0
    %4727 = vmatpush1.msra.mxu0 0.0
    %4728 = vmatprep.subr.mxu0 0.0
    %4729 = vmatpush1.msra.mxu0 0.0
    %4730 = vmatprep.subr.mxu0 0.0
    %4731 = vmatpush1.msra.mxu0 0.0
    %4732 = vmatprep.subr.mxu0 0.0
    %4733 = vmatpush1.msra.mxu0 0.0
    %4734 = vmatprep.subr.mxu0 0.0
    %4735 = vmatpush1.msra.mxu0 0.0
    %4736 = vmatprep.subr.mxu0 0.0
    %4737 = vmatpush1.msra.mxu0 0.0
    %4738 = vmatprep.subr.mxu0 0.0
    %4739 = vmatpush1.msra.mxu0 0.0
    %4740 = vmatprep.mubr.f32.mxu0 0.0
    %4741 = vmatmul.mubr.f32.gmra.mrb[0].mxu0 %v4539
    %v4742 = vpop.f32.mrb[0].mxu0
    %v4743 = vadd.f32 0.0, %v4742
    %v4744 = vpop.f32.mrb[0].mxu0
    %v4745 = vadd.f32 0.0, %v4744
    %4746 = vdwg.mxu0
    %v4751 = vcombine.low %v4672, %v4674
    %v4752 = vcombine.low %v4743, %v4745
    %v4754 = vunpack.c.l.s4 1983009808
    %v4755 = vunpack.c.0.s8 %v4754
    %v4756 = vlaneseq
    %v4757 = vshrl.u32 %v4756, 7
    %v4758 = vsub.s32 %v4755, %v4757
    %v4759 = vrot.slane %v4751, %v4758
    %v4761 = vunpack.c.l.s4 1983009808
    %v4762 = vunpack.c.0.s8 %v4761
    %v4763 = vlaneseq
    %v4764 = vshrl.u32 %v4763, 7
    %v4765 = vsub.s32 %v4762, %v4764
    %v4766 = vrot.slane %v4752, %v4765
    %v4767 = vcombine.low %v4759, %v4766
    %v4769 = vadd.f32 %v4604, %v4767
    %v4770 = vxor.u32 %v4769, 2147483648
    %v4771 = vmul.f32 %v4770, 1.442695
    %v4772 = vpow.pop %v4771
    %v4773 = vadd.f32 %v4772, 1.0
    %v4774 = vrcp.pop %v4773
    %v4775 = vmul.f32 1.0, %v4774
    %v4777 = vrot.slane %v4769, 2
    %v4779 = vxor.u32 %v4777, 2147483648
    %v4780 = vmul.f32 %v4779, 1.442695
    %v4781 = vpow.pop %v4780
    %v4782 = vadd.f32 %v4781, 1.0
    %v4783 = vrcp.pop %v4782
    %v4784 = vmul.f32 1.0, %v4783
    %v4785 = vrot.slane %v4769, 4
    %v4787 = vtanh.pop %v4785
    %v4788 = vrot.slane %v4769, 6
    %v4790 = vxor.u32 %v4788, 2147483648
    %v4791 = vmul.f32 %v4790, 1.442695
    %v4792 = vpow.pop %v4791
    %v4793 = vadd.f32 %v4792, 1.0
    %v4794 = vrcp.pop %v4793
    %v4795 = vmul.f32 1.0, %v4794
    %v4796 = vmul.f32 %v4784, %v4537
    %v4797 = vmul.f32 %v4775, %v4787
    %v4798 = vadd.f32 %v4796, %v4797
    %v4799 = vtanh.pop %v4798
    %v4800 = vmul.f32 %v4795, %v4799
    %4801 = vst [vmem:[#allocation4] sm:$0x3] %v4800
    %v4802 = vld [vmem:[%s1872] sm:$0xff]
    %4803 = vmatprep.subr.mxu0 %v4541
    %4804 = vmatpush1.msra.mxu0 %v4540
    %4805 = vmatprep.subr.mxu0 %v4545
    %4806 = vmatpush1.msra.mxu0 %v4544
    %4807 = vmatprep.subr.mxu0 %v4549
    %4808 = vmatpush1.msra.mxu0 %v4548
    %4809 = vmatprep.subr.mxu0 %v4553
    %4810 = vmatpush1.msra.mxu0 %v4552
    %4811 = vmatprep.subr.mxu0 %v4557
    %4812 = vmatpush1.msra.mxu0 %v4556
    %4813 = vmatprep.subr.mxu0 %v4561
    %4814 = vmatpush1.msra.mxu0 %v4560
    %4815 = vmatprep.subr.mxu0 %v4565
    %4816 = vmatpush1.msra.mxu0 %v4564
    %4817 = vmatprep.subr.mxu0 %v4569
    %4818 = vmatpush1.msra.mxu0 %v4568
    %4819 = vmatprep.subr.mxu0 %v4573
    %4820 = vmatpush1.msra.mxu0 %v4572
    %4821 = vmatprep.subr.mxu0 %v4577
    %4822 = vmatpush1.msra.mxu0 %v4576
    %4823 = vmatprep.subr.mxu0 %v4581
    %4824 = vmatpush1.msra.mxu0 %v4580
    %4825 = vmatprep.subr.mxu0 %v4585
    %4826 = vmatpush1.msra.mxu0 %v4584
    %4827 = vmatprep.subr.mxu0 %v4589
    %4828 = vmatpush1.msra.mxu0 %v4588
    %4829 = vmatprep.subr.mxu0 %v4593
    %4830 = vmatpush1.msra.mxu0 %v4592
    %4831 = vmatprep.subr.mxu0 %v4597
    %4832 = vmatpush1.msra.mxu0 %v4596
    %4833 = vmatprep.subr.mxu0 %v4601
    %4834 = vmatpush1.msra.mxu0 %v4600
    %4835 = vmatprep.subr.mxu0 0.0
    %4836 = vmatpush1.msra.mxu0 0.0
    %4837 = vmatprep.subr.mxu0 0.0
    %4838 = vmatpush1.msra.mxu0 0.0
    %4839 = vmatprep.subr.mxu0 0.0
    %4840 = vmatpush1.msra.mxu0 0.0
    %4841 = vmatprep.subr.mxu0 0.0
    %4842 = vmatpush1.msra.mxu0 0.0
    %4843 = vmatprep.subr.mxu0 0.0
    %4844 = vmatpush1.msra.mxu0 0.0
    %4845 = vmatprep.subr.mxu0 0.0
    %4846 = vmatpush1.msra.mxu0 0.0
    %4847 = vmatprep.subr.mxu0 0.0
    %4848 = vmatpush1.msra.mxu0 0.0
    %4849 = vmatprep.subr.mxu0 0.0
    %4850 = vmatpush1.msra.mxu0 0.0
    %4851 = vmatprep.subr.mxu0 0.0
    %4852 = vmatpush1.msra.mxu0 0.0
    %4853 = vmatprep.subr.mxu0 0.0
    %4854 = vmatpush1.msra.mxu0 0.0
    %4855 = vmatprep.subr.mxu0 0.0
    %4856 = vmatpush1.msra.mxu0 0.0
    %4857 = vmatprep.subr.mxu0 0.0
    %4858 = vmatpush1.msra.mxu0 0.0
    %4859 = vmatprep.subr.mxu0 0.0
    %4860 = vmatpush1.msra.mxu0 0.0
    %4861 = vmatprep.subr.mxu0 0.0
    %4862 = vmatpush1.msra.mxu0 0.0
    %4863 = vmatprep.subr.mxu0 0.0
    %4864 = vmatpush1.msra.mxu0 0.0
    %4865 = vmatprep.subr.mxu0 0.0
    %4866 = vmatpush1.msra.mxu0 0.0
    %4867 = vmatprep.mubr.f32.mxu0 0.0
    %4868 = vmatmul.mubr.f32.gmra.mrb[0].mxu0 %v4800
    %v4869 = vpop.f32.mrb[0].mxu0
    %v4870 = vadd.f32 0.0, %v4869
    %v4871 = vpop.f32.mrb[0].mxu0
    %v4872 = vadd.f32 0.0, %v4871
    %4873 = vdwg.mxu0
    %4874 = vmatprep.subr.mxu0 %v4543
    %4875 = vmatpush1.msra.mxu0 %v4542
    %4876 = vmatprep.subr.mxu0 %v4547
    %4877 = vmatpush1.msra.mxu0 %v4546
    %4878 = vmatprep.subr.mxu0 %v4551
    %4879 = vmatpush1.msra.mxu0 %v4550
    %4880 = vmatprep.subr.mxu0 %v4555
    %4881 = vmatpush1.msra.mxu0 %v4554
    %4882 = vmatprep.subr.mxu0 %v4559
    %4883 = vmatpush1.msra.mxu0 %v4558
    %4884 = vmatprep.subr.mxu0 %v4563
    %4885 = vmatpush1.msra.mxu0 %v4562
    %4886 = vmatprep.subr.mxu0 %v4567
    %4887 = vmatpush1.msra.mxu0 %v4566
    %4888 = vmatprep.subr.mxu0 %v4571
    %4889 = vmatpush1.msra.mxu0 %v4570
    %4890 = vmatprep.subr.mxu0 %v4575
    %4891 = vmatpush1.msra.mxu0 %v4574
    %4892 = vmatprep.subr.mxu0 %v4579
    %4893 = vmatpush1.msra.mxu0 %v4578
    %4894 = vmatprep.subr.mxu0 %v4583
    %4895 = vmatpush1.msra.mxu0 %v4582
    %4896 = vmatprep.subr.mxu0 %v4587
    %4897 = vmatpush1.msra.mxu0 %v4586
    %4898 = vmatprep.subr.mxu0 %v4591
    %4899 = vmatpush1.msra.mxu0 %v4590
    %4900 = vmatprep.subr.mxu0 %v4595
    %4901 = vmatpush1.msra.mxu0 %v4594
    %4902 = vmatprep.subr.mxu0 %v4599
    %4903 = vmatpush1.msra.mxu0 %v4598
    %4904 = vmatprep.subr.mxu0 %v4603
    %4905 = vmatpush1.msra.mxu0 %v4602
    %4906 = vmatprep.subr.mxu0 0.0
    %4907 = vmatpush1.msra.mxu0 0.0
    %4908 = vmatprep.subr.mxu0 0.0
    %4909 = vmatpush1.msra.mxu0 0.0
    %4910 = vmatprep.subr.mxu0 0.0
    %4911 = vmatpush1.msra.mxu0 0.0
    %4912 = vmatprep.subr.mxu0 0.0
    %4913 = vmatpush1.msra.mxu0 0.0
    %4914 = vmatprep.subr.mxu0 0.0
    %4915 = vmatpush1.msra.mxu0 0.0
    %4916 = vmatprep.subr.mxu0 0.0
    %4917 = vmatpush1.msra.mxu0 0.0
    %4918 = vmatprep.subr.mxu0 0.0
    %4919 = vmatpush1.msra.mxu0 0.0
    %4920 = vmatprep.subr.mxu0 0.0
    %4921 = vmatpush1.msra.mxu0 0.0
    %4922 = vmatprep.subr.mxu0 0.0
    %4923 = vmatpush1.msra.mxu0 0.0
    %4924 = vmatprep.subr.mxu0 0.0
    %4925 = vmatpush1.msra.mxu0 0.0
    %4926 = vmatprep.subr.mxu0 0.0
    %4927 = vmatpush1.msra.mxu0 0.0
    %4928 = vmatprep.subr.mxu0 0.0
    %4929 = vmatpush1.msra.mxu0 0.0
    %4930 = vmatprep.subr.mxu0 0.0
    %4931 = vmatpush1.msra.mxu0 0.0
    %4932 = vmatprep.subr.mxu0 0.0
    %4933 = vmatpush1.msra.mxu0 0.0
    %4934 = vmatprep.subr.mxu0 0.0
    %4935 = vmatpush1.msra.mxu0 0.0
    %4936 = vmatprep.subr.mxu0 0.0
    %4937 = vmatpush1.msra.mxu0 0.0
    %4938 = vmatprep.mubr.f32.mxu0 0.0
    %4939 = vmatmul.mubr.f32.gmra.mrb[0].mxu0 %v4800
    %v4940 = vpop.f32.mrb[0].mxu0
    %v4941 = vadd.f32 0.0, %v4940
    %v4942 = vpop.f32.mrb[0].mxu0
    %v4943 = vadd.f32 0.0, %v4942
    %4944 = vdwg.mxu0
    %v4949 = vcombine.low %v4870, %v4872
    %v4950 = vcombine.low %v4941, %v4943
    %v4952 = vunpack.c.l.s4 1983009808
    %v4953 = vunpack.c.0.s8 %v4952
    %v4954 = vlaneseq
    %v4955 = vshrl.u32 %v4954, 7
    %v4956 = vsub.s32 %v4953, %v4955
    %v4957 = vrot.slane %v4949, %v4956
    %v4959 = vunpack.c.l.s4 1983009808
    %v4960 = vunpack.c.0.s8 %v4959
    %v4961 = vlaneseq
    %v4962 = vshrl.u32 %v4961, 7
    %v4963 = vsub.s32 %v4960, %v4962
    %v4964 = vrot.slane %v4950, %v4963
    %v4965 = vcombine.low %v4957, %v4964
    %v4967 = vadd.f32 %v4802, %v4965
    %v4968 = vxor.u32 %v4967, 2147483648
    %v4969 = vmul.f32 %v4968, 1.442695
    %v4970 = vpow.pop %v4969
    %v4971 = vadd.f32 %v4970, 1.0
    %v4972 = vrcp.pop %v4971
    %v4973 = vmul.f32 1.0, %v4972
    %v4975 = vrot.slane %v4967, 2
    %v4977 = vxor.u32 %v4975, 2147483648
    %v4978 = vmul.f32 %v4977, 1.442695
    %v4979 = vpow.pop %v4978
    %v4980 = vadd.f32 %v4979, 1.0
    %v4981 = vrcp.pop %v4980
    %v4982 = vmul.f32 1.0, %v4981
    %v4983 = vrot.slane %v4967, 4
    %v4985 = vtanh.pop %v4983
    %v4986 = vrot.slane %v4967, 6
    %v4988 = vxor.u32 %v4986, 2147483648
    %v4989 = vmul.f32 %v4988, 1.442695
    %v4990 = vpow.pop %v4989
    %v4991 = vadd.f32 %v4990, 1.0
    %v4992 = vrcp.pop %v4991
    %v4993 = vmul.f32 1.0, %v4992
    %v4994 = vmul.f32 %v4982, %v4798
    %v4995 = vmul.f32 %v4973, %v4985
    %v4996 = vadd.f32 %v4994, %v4995
    %v4997 = vtanh.pop %v4996
    %v4998 = vmul.f32 %v4993, %v4997
    %s4999 = scalar_lea.vmem [#allocation4], 2
    %5000 = vst [vmem:[%s4999] sm:$0x3] %v4998
    %v5001 = vld [vmem:[%s2043] sm:$0xff]
    %5002 = vmatprep.subr.mxu0 %v4541
    %5003 = vmatpush1.msra.mxu0 %v4540
    %5004 = vmatprep.subr.mxu0 %v4545
    %5005 = vmatpush1.msra.mxu0 %v4544
    %5006 = vmatprep.subr.mxu0 %v4549
    %5007 = vmatpush1.msra.mxu0 %v4548
    %5008 = vmatprep.subr.mxu0 %v4553
    %5009 = vmatpush1.msra.mxu0 %v4552
    %5010 = vmatprep.subr.mxu0 %v4557
    %5011 = vmatpush1.msra.mxu0 %v4556
    %5012 = vmatprep.subr.mxu0 %v4561
    %5013 = vmatpush1.msra.mxu0 %v4560
    %5014 = vmatprep.subr.mxu0 %v4565
    %5015 = vmatpush1.msra.mxu0 %v4564
    %5016 = vmatprep.subr.mxu0 %v4569
    %5017 = vmatpush1.msra.mxu0 %v4568
    %5018 = vmatprep.subr.mxu0 %v4573
    %5019 = vmatpush1.msra.mxu0 %v4572
    %5020 = vmatprep.subr.mxu0 %v4577
    %5021 = vmatpush1.msra.mxu0 %v4576
    %5022 = vmatprep.subr.mxu0 %v4581
    %5023 = vmatpush1.msra.mxu0 %v4580
    %5024 = vmatprep.subr.mxu0 %v4585
    %5025 = vmatpush1.msra.mxu0 %v4584
    %5026 = vmatprep.subr.mxu0 %v4589
    %5027 = vmatpush1.msra.mxu0 %v4588
    %5028 = vmatprep.subr.mxu0 %v4593
    %5029 = vmatpush1.msra.mxu0 %v4592
    %5030 = vmatprep.subr.mxu0 %v4597
    %5031 = vmatpush1.msra.mxu0 %v4596
    %5032 = vmatprep.subr.mxu0 %v4601
    %5033 = vmatpush1.msra.mxu0 %v4600
    %5034 = vmatprep.subr.mxu0 0.0
    %5035 = vmatpush1.msra.mxu0 0.0
    %5036 = vmatprep.subr.mxu0 0.0
    %5037 = vmatpush1.msra.mxu0 0.0
    %5038 = vmatprep.subr.mxu0 0.0
    %5039 = vmatpush1.msra.mxu0 0.0
    %5040 = vmatprep.subr.mxu0 0.0
    %5041 = vmatpush1.msra.mxu0 0.0
    %5042 = vmatprep.subr.mxu0 0.0
    %5043 = vmatpush1.msra.mxu0 0.0
    %5044 = vmatprep.subr.mxu0 0.0
    %5045 = vmatpush1.msra.mxu0 0.0
    %5046 = vmatprep.subr.mxu0 0.0
    %5047 = vmatpush1.msra.mxu0 0.0
    %5048 = vmatprep.subr.mxu0 0.0
    %5049 = vmatpush1.msra.mxu0 0.0
    %5050 = vmatprep.subr.mxu0 0.0
    %5051 = vmatpush1.msra.mxu0 0.0
    %5052 = vmatprep.subr.mxu0 0.0
    %5053 = vmatpush1.msra.mxu0 0.0
    %5054 = vmatprep.subr.mxu0 0.0
    %5055 = vmatpush1.msra.mxu0 0.0
    %5056 = vmatprep.subr.mxu0 0.0
    %5057 = vmatpush1.msra.mxu0 0.0
    %5058 = vmatprep.subr.mxu0 0.0
    %5059 = vmatpush1.msra.mxu0 0.0
    %5060 = vmatprep.subr.mxu0 0.0
    %5061 = vmatpush1.msra.mxu0 0.0
    %5062 = vmatprep.subr.mxu0 0.0
    %5063 = vmatpush1.msra.mxu0 0.0
    %5064 = vmatprep.subr.mxu0 0.0
    %5065 = vmatpush1.msra.mxu0 0.0
    %5066 = vmatprep.mubr.f32.mxu0 0.0
    %5067 = vmatmul.mubr.f32.gmra.mrb[0].mxu0 %v4998
    %v5068 = vpop.f32.mrb[0].mxu0
    %v5069 = vadd.f32 0.0, %v5068
    %v5070 = vpop.f32.mrb[0].mxu0
    %v5071 = vadd.f32 0.0, %v5070
    %5072 = vdwg.mxu0
    %5073 = vmatprep.subr.mxu0 %v4543
    %5074 = vmatpush1.msra.mxu0 %v4542
    %5075 = vmatprep.subr.mxu0 %v4547
    %5076 = vmatpush1.msra.mxu0 %v4546
    %5077 = vmatprep.subr.mxu0 %v4551
    %5078 = vmatpush1.msra.mxu0 %v4550
    %5079 = vmatprep.subr.mxu0 %v4555
    %5080 = vmatpush1.msra.mxu0 %v4554
    %5081 = vmatprep.subr.mxu0 %v4559
    %5082 = vmatpush1.msra.mxu0 %v4558
    %5083 = vmatprep.subr.mxu0 %v4563
    %5084 = vmatpush1.msra.mxu0 %v4562
    %5085 = vmatprep.subr.mxu0 %v4567
    %5086 = vmatpush1.msra.mxu0 %v4566
    %5087 = vmatprep.subr.mxu0 %v4571
    %5088 = vmatpush1.msra.mxu0 %v4570
    %5089 = vmatprep.subr.mxu0 %v4575
    %5090 = vmatpush1.msra.mxu0 %v4574
    %5091 = vmatprep.subr.mxu0 %v4579
    %5092 = vmatpush1.msra.mxu0 %v4578
    %5093 = vmatprep.subr.mxu0 %v4583
    %5094 = vmatpush1.msra.mxu0 %v4582
    %5095 = vmatprep.subr.mxu0 %v4587
    %5096 = vmatpush1.msra.mxu0 %v4586
    %5097 = vmatprep.subr.mxu0 %v4591
    %5098 = vmatpush1.msra.mxu0 %v4590
    %5099 = vmatprep.subr.mxu0 %v4595
    %5100 = vmatpush1.msra.mxu0 %v4594
    %5101 = vmatprep.subr.mxu0 %v4599
    %5102 = vmatpush1.msra.mxu0 %v4598
    %5103 = vmatprep.subr.mxu0 %v4603
    %5104 = vmatpush1.msra.mxu0 %v4602
    %5105 = vmatprep.subr.mxu0 0.0
    %5106 = vmatpush1.msra.mxu0 0.0
    %5107 = vmatprep.subr.mxu0 0.0
    %5108 = vmatpush1.msra.mxu0 0.0
    %5109 = vmatprep.subr.mxu0 0.0
    %5110 = vmatpush1.msra.mxu0 0.0
    %5111 = vmatprep.subr.mxu0 0.0
    %5112 = vmatpush1.msra.mxu0 0.0
    %5113 = vmatprep.subr.mxu0 0.0
    %5114 = vmatpush1.msra.mxu0 0.0
    %5115 = vmatprep.subr.mxu0 0.0
    %5116 = vmatpush1.msra.mxu0 0.0
    %5117 = vmatprep.subr.mxu0 0.0
    %5118 = vmatpush1.msra.mxu0 0.0
    %5119 = vmatprep.subr.mxu0 0.0
    %5120 = vmatpush1.msra.mxu0 0.0
    %5121 = vmatprep.subr.mxu0 0.0
    %5122 = vmatpush1.msra.mxu0 0.0
    %5123 = vmatprep.subr.mxu0 0.0
    %5124 = vmatpush1.msra.mxu0 0.0
    %5125 = vmatprep.subr.mxu0 0.0
    %5126 = vmatpush1.msra.mxu0 0.0
    %5127 = vmatprep.subr.mxu0 0.0
    %5128 = vmatpush1.msra.mxu0 0.0
    %5129 = vmatprep.subr.mxu0 0.0
    %5130 = vmatpush1.msra.mxu0 0.0
    %5131 = vmatprep.subr.mxu0 0.0
    %5132 = vmatpush1.msra.mxu0 0.0
    %5133 = vmatprep.subr.mxu0 0.0
    %5134 = vmatpush1.msra.mxu0 0.0
    %5135 = vmatprep.subr.mxu0 0.0
    %5136 = vmatpush1.msra.mxu0 0.0
    %5137 = vmatprep.mubr.f32.mxu0 0.0
    %5138 = vmatmul.mubr.f32.gmra.mrb[0].mxu0 %v4998
    %v5139 = vpop.f32.mrb[0].mxu0
    %v5140 = vadd.f32 0.0, %v5139
    %v5141 = vpop.f32.mrb[0].mxu0
    %v5142 = vadd.f32 0.0, %v5141
    %5143 = vdwg.mxu0
    %v5148 = vcombine.low %v5069, %v5071
    %v5149 = vcombine.low %v5140, %v5142
    %v5151 = vunpack.c.l.s4 1983009808
    %v5152 = vunpack.c.0.s8 %v5151
    %v5153 = vlaneseq
    %v5154 = vshrl.u32 %v5153, 7
    %v5155 = vsub.s32 %v5152, %v5154
    %v5156 = vrot.slane %v5148, %v5155
    %v5158 = vunpack.c.l.s4 1983009808
    %v5159 = vunpack.c.0.s8 %v5158
    %v5160 = vlaneseq
    %v5161 = vshrl.u32 %v5160, 7
    %v5162 = vsub.s32 %v5159, %v5161
    %v5163 = vrot.slane %v5149, %v5162
    %v5164 = vcombine.low %v5156, %v5163
    %v5166 = vadd.f32 %v5001, %v5164
    %v5167 = vxor.u32 %v5166, 2147483648
    %v5168 = vmul.f32 %v5167, 1.442695
    %v5169 = vpow.pop %v5168
    %v5170 = vadd.f32 %v5169, 1.0
    %v5171 = vrcp.pop %v5170
    %v5172 = vmul.f32 1.0, %v5171
    %v5174 = vrot.slane %v5166, 2
    %v5176 = vxor.u32 %v5174, 2147483648
    %v5177 = vmul.f32 %v5176, 1.442695
    %v5178 = vpow.pop %v5177
    %v5179 = vadd.f32 %v5178, 1.0
    %v5180 = vrcp.pop %v5179
    %v5181 = vmul.f32 1.0, %v5180
    %v5182 = vrot.slane %v5166, 4
    %v5184 = vtanh.pop %v5182
    %v5185 = vrot.slane %v5166, 6
    %v5187 = vxor.u32 %v5185, 2147483648
    %v5188 = vmul.f32 %v5187, 1.442695
    %v5189 = vpow.pop %v5188
    %v5190 = vadd.f32 %v5189, 1.0
    %v5191 = vrcp.pop %v5190
    %v5192 = vmul.f32 1.0, %v5191
    %v5193 = vmul.f32 %v5181, %v4996
    %v5194 = vmul.f32 %v5172, %v5184
    %v5195 = vadd.f32 %v5193, %v5194
    %v5196 = vtanh.pop %v5195
    %v5197 = vmul.f32 %v5192, %v5196
    %s5198 = scalar_lea.vmem [#allocation4], 4
    %5199 = vst [vmem:[%s5198] sm:$0x3] %v5197
    %v5200 = vld [vmem:[%s2214] sm:$0xff]
    %5201 = vmatprep.subr.mxu0 %v4541
    %5202 = vmatpush1.msra.mxu0 %v4540
    %5203 = vmatprep.subr.mxu0 %v4545
    %5204 = vmatpush1.msra.mxu0 %v4544
    %5205 = vmatprep.subr.mxu0 %v4549
    %5206 = vmatpush1.msra.mxu0 %v4548
    %5207 = vmatprep.subr.mxu0 %v4553
    %5208 = vmatpush1.msra.mxu0 %v4552
    %5209 = vmatprep.subr.mxu0 %v4557
    %5210 = vmatpush1.msra.mxu0 %v4556
    %5211 = vmatprep.subr.mxu0 %v4561
    %5212 = vmatpush1.msra.mxu0 %v4560
    %5213 = vmatprep.subr.mxu0 %v4565
    %5214 = vmatpush1.msra.mxu0 %v4564
    %5215 = vmatprep.subr.mxu0 %v4569
    %5216 = vmatpush1.msra.mxu0 %v4568
    %5217 = vmatprep.subr.mxu0 %v4573
    %5218 = vmatpush1.msra.mxu0 %v4572
    %5219 = vmatprep.subr.mxu0 %v4577
    %5220 = vmatpush1.msra.mxu0 %v4576
    %5221 = vmatprep.subr.mxu0 %v4581
    %5222 = vmatpush1.msra.mxu0 %v4580
    %5223 = vmatprep.subr.mxu0 %v4585
    %5224 = vmatpush1.msra.mxu0 %v4584
    %5225 = vmatprep.subr.mxu0 %v4589
    %5226 = vmatpush1.msra.mxu0 %v4588
    %5227 = vmatprep.subr.mxu0 %v4593
    %5228 = vmatpush1.msra.mxu0 %v4592
    %5229 = vmatprep.subr.mxu0 %v4597
    %5230 = vmatpush1.msra.mxu0 %v4596
    %5231 = vmatprep.subr.mxu0 %v4601
    %5232 = vmatpush1.msra.mxu0 %v4600
    %5233 = vmatprep.subr.mxu0 0.0
    %5234 = vmatpush1.msra.mxu0 0.0
    %5235 = vmatprep.subr.mxu0 0.0
    %5236 = vmatpush1.msra.mxu0 0.0
    %5237 = vmatprep.subr.mxu0 0.0
    %5238 = vmatpush1.msra.mxu0 0.0
    %5239 = vmatprep.subr.mxu0 0.0
    %5240 = vmatpush1.msra.mxu0 0.0
    %5241 = vmatprep.subr.mxu0 0.0
    %5242 = vmatpush1.msra.mxu0 0.0
    %5243 = vmatprep.subr.mxu0 0.0
    %5244 = vmatpush1.msra.mxu0 0.0
    %5245 = vmatprep.subr.mxu0 0.0
    %5246 = vmatpush1.msra.mxu0 0.0
    %5247 = vmatprep.subr.mxu0 0.0
    %5248 = vmatpush1.msra.mxu0 0.0
    %5249 = vmatprep.subr.mxu0 0.0
    %5250 = vmatpush1.msra.mxu0 0.0
    %5251 = vmatprep.subr.mxu0 0.0
    %5252 = vmatpush1.msra.mxu0 0.0
    %5253 = vmatprep.subr.mxu0 0.0
    %5254 = vmatpush1.msra.mxu0 0.0
    %5255 = vmatprep.subr.mxu0 0.0
    %5256 = vmatpush1.msra.mxu0 0.0
    %5257 = vmatprep.subr.mxu0 0.0
    %5258 = vmatpush1.msra.mxu0 0.0
    %5259 = vmatprep.subr.mxu0 0.0
    %5260 = vmatpush1.msra.mxu0 0.0
    %5261 = vmatprep.subr.mxu0 0.0
    %5262 = vmatpush1.msra.mxu0 0.0
    %5263 = vmatprep.subr.mxu0 0.0
    %5264 = vmatpush1.msra.mxu0 0.0
    %5265 = vmatprep.mubr.f32.mxu0 0.0
    %5266 = vmatmul.mubr.f32.gmra.mrb[0].mxu0 %v5197
    %v5267 = vpop.f32.mrb[0].mxu0
    %v5268 = vadd.f32 0.0, %v5267
    %v5269 = vpop.f32.mrb[0].mxu0
    %v5270 = vadd.f32 0.0, %v5269
    %5271 = vdwg.mxu0
    %5272 = vmatprep.subr.mxu0 %v4543
    %5273 = vmatpush1.msra.mxu0 %v4542
    %5274 = vmatprep.subr.mxu0 %v4547
    %5275 = vmatpush1.msra.mxu0 %v4546
    %5276 = vmatprep.subr.mxu0 %v4551
    %5277 = vmatpush1.msra.mxu0 %v4550
    %5278 = vmatprep.subr.mxu0 %v4555
    %5279 = vmatpush1.msra.mxu0 %v4554
    %5280 = vmatprep.subr.mxu0 %v4559
    %5281 = vmatpush1.msra.mxu0 %v4558
    %5282 = vmatprep.subr.mxu0 %v4563
    %5283 = vmatpush1.msra.mxu0 %v4562
    %5284 = vmatprep.subr.mxu0 %v4567
    %5285 = vmatpush1.msra.mxu0 %v4566
    %5286 = vmatprep.subr.mxu0 %v4571
    %5287 = vmatpush1.msra.mxu0 %v4570
    %5288 = vmatprep.subr.mxu0 %v4575
    %5289 = vmatpush1.msra.mxu0 %v4574
    %5290 = vmatprep.subr.mxu0 %v4579
    %5291 = vmatpush1.msra.mxu0 %v4578
    %5292 = vmatprep.subr.mxu0 %v4583
    %5293 = vmatpush1.msra.mxu0 %v4582
    %5294 = vmatprep.subr.mxu0 %v4587
    %5295 = vmatpush1.msra.mxu0 %v4586
    %5296 = vmatprep.subr.mxu0 %v4591
    %5297 = vmatpush1.msra.mxu0 %v4590
    %5298 = vmatprep.subr.mxu0 %v4595
    %5299 = vmatpush1.msra.mxu0 %v4594
    %5300 = vmatprep.subr.mxu0 %v4599
    %5301 = vmatpush1.msra.mxu0 %v4598
    %5302 = vmatprep.subr.mxu0 %v4603
    %5303 = vmatpush1.msra.mxu0 %v4602
    %5304 = vmatprep.subr.mxu0 0.0
    %5305 = vmatpush1.msra.mxu0 0.0
    %5306 = vmatprep.subr.mxu0 0.0
    %5307 = vmatpush1.msra.mxu0 0.0
    %5308 = vmatprep.subr.mxu0 0.0
    %5309 = vmatpush1.msra.mxu0 0.0
    %5310 = vmatprep.subr.mxu0 0.0
    %5311 = vmatpush1.msra.mxu0 0.0
    %5312 = vmatprep.subr.mxu0 0.0
    %5313 = vmatpush1.msra.mxu0 0.0
    %5314 = vmatprep.subr.mxu0 0.0
    %5315 = vmatpush1.msra.mxu0 0.0
    %5316 = vmatprep.subr.mxu0 0.0
    %5317 = vmatpush1.msra.mxu0 0.0
    %5318 = vmatprep.subr.mxu0 0.0
    %5319 = vmatpush1.msra.mxu0 0.0
    %5320 = vmatprep.subr.mxu0 0.0
    %5321 = vmatpush1.msra.mxu0 0.0
    %5322 = vmatprep.subr.mxu0 0.0
    %5323 = vmatpush1.msra.mxu0 0.0
    %5324 = vmatprep.subr.mxu0 0.0
    %5325 = vmatpush1.msra.mxu0 0.0
    %5326 = vmatprep.subr.mxu0 0.0
    %5327 = vmatpush1.msra.mxu0 0.0
    %5328 = vmatprep.subr.mxu0 0.0
    %5329 = vmatpush1.msra.mxu0 0.0
    %5330 = vmatprep.subr.mxu0 0.0
    %5331 = vmatpush1.msra.mxu0 0.0
    %5332 = vmatprep.subr.mxu0 0.0
    %5333 = vmatpush1.msra.mxu0 0.0
    %5334 = vmatprep.subr.mxu0 0.0
    %5335 = vmatpush1.msra.mxu0 0.0
    %5336 = vmatprep.mubr.f32.mxu0 0.0
    %5337 = vmatmul.mubr.f32.gmra.mrb[0].mxu0 %v5197
    %v5338 = vpop.f32.mrb[0].mxu0
    %v5339 = vadd.f32 0.0, %v5338
    %v5340 = vpop.f32.mrb[0].mxu0
    %v5341 = vadd.f32 0.0, %v5340
    %5342 = vdwg.mxu0
    %v5347 = vcombine.low %v5268, %v5270
    %v5348 = vcombine.low %v5339, %v5341
    %v5350 = vunpack.c.l.s4 1983009808
    %v5351 = vunpack.c.0.s8 %v5350
    %v5352 = vlaneseq
    %v5353 = vshrl.u32 %v5352, 7
    %v5354 = vsub.s32 %v5351, %v5353
    %v5355 = vrot.slane %v5347, %v5354
    %v5357 = vunpack.c.l.s4 1983009808
    %v5358 = vunpack.c.0.s8 %v5357
    %v5359 = vlaneseq
    %v5360 = vshrl.u32 %v5359, 7
    %v5361 = vsub.s32 %v5358, %v5360
    %v5362 = vrot.slane %v5348, %v5361
    %v5363 = vcombine.low %v5355, %v5362
    %v5365 = vadd.f32 %v5200, %v5363
    %v5366 = vxor.u32 %v5365, 2147483648
    %v5367 = vmul.f32 %v5366, 1.442695
    %v5368 = vpow.pop %v5367
    %v5369 = vadd.f32 %v5368, 1.0
    %v5370 = vrcp.pop %v5369
    %v5371 = vmul.f32 1.0, %v5370
    %v5373 = vrot.slane %v5365, 2
    %v5375 = vxor.u32 %v5373, 2147483648
    %v5376 = vmul.f32 %v5375, 1.442695
    %v5377 = vpow.pop %v5376
    %v5378 = vadd.f32 %v5377, 1.0
    %v5379 = vrcp.pop %v5378
    %v5380 = vmul.f32 1.0, %v5379
    %v5381 = vrot.slane %v5365, 4
    %v5383 = vtanh.pop %v5381
    %v5384 = vrot.slane %v5365, 6
    %v5386 = vxor.u32 %v5384, 2147483648
    %v5387 = vmul.f32 %v5386, 1.442695
    %v5388 = vpow.pop %v5387
    %v5389 = vadd.f32 %v5388, 1.0
    %v5390 = vrcp.pop %v5389
    %v5391 = vmul.f32 1.0, %v5390
    %v5392 = vmul.f32 %v5380, %v5195
    %v5393 = vmul.f32 %v5371, %v5383
    %v5394 = vadd.f32 %v5392, %v5393
    %v5395 = vtanh.pop %v5394
    %v5396 = vmul.f32 %v5391, %v5395
    %s5397 = scalar_lea.vmem [#allocation4], 6
    %5398 = vst [vmem:[%s5397] sm:$0x3] %v5396
    %v5399 = vld [vmem:[%s2385] sm:$0xff]
    %5400 = vmatprep.subr.mxu0 %v4541
    %5401 = vmatpush1.msra.mxu0 %v4540
    %5402 = vmatprep.subr.mxu0 %v4545
    %5403 = vmatpush1.msra.mxu0 %v4544
    %5404 = vmatprep.subr.mxu0 %v4549
    %5405 = vmatpush1.msra.mxu0 %v4548
    %5406 = vmatprep.subr.mxu0 %v4553
    %5407 = vmatpush1.msra.mxu0 %v4552
    %5408 = vmatprep.subr.mxu0 %v4557
    %5409 = vmatpush1.msra.mxu0 %v4556
    %5410 = vmatprep.subr.mxu0 %v4561
    %5411 = vmatpush1.msra.mxu0 %v4560
    %5412 = vmatprep.subr.mxu0 %v4565
    %5413 = vmatpush1.msra.mxu0 %v4564
    %5414 = vmatprep.subr.mxu0 %v4569
    %5415 = vmatpush1.msra.mxu0 %v4568
    %5416 = vmatprep.subr.mxu0 %v4573
    %5417 = vmatpush1.msra.mxu0 %v4572
    %5418 = vmatprep.subr.mxu0 %v4577
    %5419 = vmatpush1.msra.mxu0 %v4576
    %5420 = vmatprep.subr.mxu0 %v4581
    %5421 = vmatpush1.msra.mxu0 %v4580
    %5422 = vmatprep.subr.mxu0 %v4585
    %5423 = vmatpush1.msra.mxu0 %v4584
    %5424 = vmatprep.subr.mxu0 %v4589
    %5425 = vmatpush1.msra.mxu0 %v4588
    %5426 = vmatprep.subr.mxu0 %v4593
    %5427 = vmatpush1.msra.mxu0 %v4592
    %5428 = vmatprep.subr.mxu0 %v4597
    %5429 = vmatpush1.msra.mxu0 %v4596
    %5430 = vmatprep.subr.mxu0 %v4601
    %5431 = vmatpush1.msra.mxu0 %v4600
    %5432 = vmatprep.subr.mxu0 0.0
    %5433 = vmatpush1.msra.mxu0 0.0
    %5434 = vmatprep.subr.mxu0 0.0
    %5435 = vmatpush1.msra.mxu0 0.0
    %5436 = vmatprep.subr.mxu0 0.0
    %5437 = vmatpush1.msra.mxu0 0.0
    %5438 = vmatprep.subr.mxu0 0.0
    %5439 = vmatpush1.msra.mxu0 0.0
    %5440 = vmatprep.subr.mxu0 0.0
    %5441 = vmatpush1.msra.mxu0 0.0
    %5442 = vmatprep.subr.mxu0 0.0
    %5443 = vmatpush1.msra.mxu0 0.0
    %5444 = vmatprep.subr.mxu0 0.0
    %5445 = vmatpush1.msra.mxu0 0.0
    %5446 = vmatprep.subr.mxu0 0.0
    %5447 = vmatpush1.msra.mxu0 0.0
    %5448 = vmatprep.subr.mxu0 0.0
    %5449 = vmatpush1.msra.mxu0 0.0
    %5450 = vmatprep.subr.mxu0 0.0
    %5451 = vmatpush1.msra.mxu0 0.0
    %5452 = vmatprep.subr.mxu0 0.0
    %5453 = vmatpush1.msra.mxu0 0.0
    %5454 = vmatprep.subr.mxu0 0.0
    %5455 = vmatpush1.msra.mxu0 0.0
    %5456 = vmatprep.subr.mxu0 0.0
    %5457 = vmatpush1.msra.mxu0 0.0
    %5458 = vmatprep.subr.mxu0 0.0
    %5459 = vmatpush1.msra.mxu0 0.0
    %5460 = vmatprep.subr.mxu0 0.0
    %5461 = vmatpush1.msra.mxu0 0.0
    %5462 = vmatprep.subr.mxu0 0.0
    %5463 = vmatpush1.msra.mxu0 0.0
    %5464 = vmatprep.mubr.f32.mxu0 0.0
    %5465 = vmatmul.mubr.f32.gmra.mrb[0].mxu0 %v5396
    %v5466 = vpop.f32.mrb[0].mxu0
    %v5467 = vadd.f32 0.0, %v5466
    %v5468 = vpop.f32.mrb[0].mxu0
    %v5469 = vadd.f32 0.0, %v5468
    %5470 = vdwg.mxu0
    %5471 = vmatprep.subr.mxu0 %v4543
    %5472 = vmatpush1.msra.mxu0 %v4542
    %5473 = vmatprep.subr.mxu0 %v4547
    %5474 = vmatpush1.msra.mxu0 %v4546
    %5475 = vmatprep.subr.mxu0 %v4551
    %5476 = vmatpush1.msra.mxu0 %v4550
    %5477 = vmatprep.subr.mxu0 %v4555
    %5478 = vmatpush1.msra.mxu0 %v4554
    %5479 = vmatprep.subr.mxu0 %v4559
    %5480 = vmatpush1.msra.mxu0 %v4558
    %5481 = vmatprep.subr.mxu0 %v4563
    %5482 = vmatpush1.msra.mxu0 %v4562
    %5483 = vmatprep.subr.mxu0 %v4567
    %5484 = vmatpush1.msra.mxu0 %v4566
    %5485 = vmatprep.subr.mxu0 %v4571
    %5486 = vmatpush1.msra.mxu0 %v4570
    %5487 = vmatprep.subr.mxu0 %v4575
    %5488 = vmatpush1.msra.mxu0 %v4574
    %5489 = vmatprep.subr.mxu0 %v4579
    %5490 = vmatpush1.msra.mxu0 %v4578
    %5491 = vmatprep.subr.mxu0 %v4583
    %5492 = vmatpush1.msra.mxu0 %v4582
    %5493 = vmatprep.subr.mxu0 %v4587
    %5494 = vmatpush1.msra.mxu0 %v4586
    %5495 = vmatprep.subr.mxu0 %v4591
    %5496 = vmatpush1.msra.mxu0 %v4590
    %5497 = vmatprep.subr.mxu0 %v4595
    %5498 = vmatpush1.msra.mxu0 %v4594
    %5499 = vmatprep.subr.mxu0 %v4599
    %5500 = vmatpush1.msra.mxu0 %v4598
    %5501 = vmatprep.subr.mxu0 %v4603
    %5502 = vmatpush1.msra.mxu0 %v4602
    %5503 = vmatprep.subr.mxu0 0.0
    %5504 = vmatpush1.msra.mxu0 0.0
    %5505 = vmatprep.subr.mxu0 0.0
    %5506 = vmatpush1.msra.mxu0 0.0
    %5507 = vmatprep.subr.mxu0 0.0
    %5508 = vmatpush1.msra.mxu0 0.0
    %5509 = vmatprep.subr.mxu0 0.0
    %5510 = vmatpush1.msra.mxu0 0.0
    %5511 = vmatprep.subr.mxu0 0.0
    %5512 = vmatpush1.msra.mxu0 0.0
    %5513 = vmatprep.subr.mxu0 0.0
    %5514 = vmatpush1.msra.mxu0 0.0
    %5515 = vmatprep.subr.mxu0 0.0
    %5516 = vmatpush1.msra.mxu0 0.0
    %5517 = vmatprep.subr.mxu0 0.0
    %5518 = vmatpush1.msra.mxu0 0.0
    %5519 = vmatprep.subr.mxu0 0.0
    %5520 = vmatpush1.msra.mxu0 0.0
    %5521 = vmatprep.subr.mxu0 0.0
    %5522 = vmatpush1.msra.mxu0 0.0
    %5523 = vmatprep.subr.mxu0 0.0
    %5524 = vmatpush1.msra.mxu0 0.0
    %5525 = vmatprep.subr.mxu0 0.0
    %5526 = vmatpush1.msra.mxu0 0.0
    %5527 = vmatprep.subr.mxu0 0.0
    %5528 = vmatpush1.msra.mxu0 0.0
    %5529 = vmatprep.subr.mxu0 0.0
    %5530 = vmatpush1.msra.mxu0 0.0
    %5531 = vmatprep.subr.mxu0 0.0
    %5532 = vmatpush1.msra.mxu0 0.0
    %5533 = vmatprep.subr.mxu0 0.0
    %5534 = vmatpush1.msra.mxu0 0.0
    %5535 = vmatprep.mubr.f32.mxu0 0.0
    %5536 = vmatmul.mubr.f32.gmra.mrb[0].mxu0 %v5396
    %v5537 = vpop.f32.mrb[0].mxu0
    %v5538 = vadd.f32 0.0, %v5537
    %v5539 = vpop.f32.mrb[0].mxu0
    %v5540 = vadd.f32 0.0, %v5539
    %5541 = vdwg.mxu0
    %v5546 = vcombine.low %v5467, %v5469
    %v5547 = vcombine.low %v5538, %v5540
    %v5549 = vunpack.c.l.s4 1983009808
    %v5550 = vunpack.c.0.s8 %v5549
    %v5551 = vlaneseq
    %v5552 = vshrl.u32 %v5551, 7
    %v5553 = vsub.s32 %v5550, %v5552
    %v5554 = vrot.slane %v5546, %v5553
    %v5556 = vunpack.c.l.s4 1983009808
    %v5557 = vunpack.c.0.s8 %v5556
    %v5558 = vlaneseq
    %v5559 = vshrl.u32 %v5558, 7
    %v5560 = vsub.s32 %v5557, %v5559
    %v5561 = vrot.slane %v5547, %v5560
    %v5562 = vcombine.low %v5554, %v5561
    %v5564 = vadd.f32 %v5399, %v5562
    %v5565 = vxor.u32 %v5564, 2147483648
    %v5566 = vmul.f32 %v5565, 1.442695
    %v5567 = vpow.pop %v5566
    %v5568 = vadd.f32 %v5567, 1.0
    %v5569 = vrcp.pop %v5568
    %v5570 = vmul.f32 1.0, %v5569
    %v5572 = vrot.slane %v5564, 2
    %v5574 = vxor.u32 %v5572, 2147483648
    %v5575 = vmul.f32 %v5574, 1.442695
    %v5576 = vpow.pop %v5575
    %v5577 = vadd.f32 %v5576, 1.0
    %v5578 = vrcp.pop %v5577
    %v5579 = vmul.f32 1.0, %v5578
    %v5580 = vrot.slane %v5564, 4
    %v5582 = vtanh.pop %v5580
    %v5583 = vrot.slane %v5564, 6
    %v5585 = vxor.u32 %v5583, 2147483648
    %v5586 = vmul.f32 %v5585, 1.442695
    %v5587 = vpow.pop %v5586
    %v5588 = vadd.f32 %v5587, 1.0
    %v5589 = vrcp.pop %v5588
    %v5590 = vmul.f32 1.0, %v5589
    %v5591 = vmul.f32 %v5579, %v5394
    %v5592 = vmul.f32 %v5570, %v5582
    %v5593 = vadd.f32 %v5591, %v5592
    %v5594 = vtanh.pop %v5593
    %v5595 = vmul.f32 %v5590, %v5594
    %s5596 = scalar_lea.vmem [#allocation4], 8
    %5597 = vst [vmem:[%s5596] sm:$0x3] %v5595
    %v5598 = vld [vmem:[%s2556] sm:$0xff]
    %5599 = vmatprep.subr.mxu0 %v4541
    %5600 = vmatpush1.msra.mxu0 %v4540
    %5601 = vmatprep.subr.mxu0 %v4545
    %5602 = vmatpush1.msra.mxu0 %v4544
    %5603 = vmatprep.subr.mxu0 %v4549
    %5604 = vmatpush1.msra.mxu0 %v4548
    %5605 = vmatprep.subr.mxu0 %v4553
    %5606 = vmatpush1.msra.mxu0 %v4552
    %5607 = vmatprep.subr.mxu0 %v4557
    %5608 = vmatpush1.msra.mxu0 %v4556
    %5609 = vmatprep.subr.mxu0 %v4561
    %5610 = vmatpush1.msra.mxu0 %v4560
    %5611 = vmatprep.subr.mxu0 %v4565
    %5612 = vmatpush1.msra.mxu0 %v4564
    %5613 = vmatprep.subr.mxu0 %v4569
    %5614 = vmatpush1.msra.mxu0 %v4568
    %5615 = vmatprep.subr.mxu0 %v4573
    %5616 = vmatpush1.msra.mxu0 %v4572
    %5617 = vmatprep.subr.mxu0 %v4577
    %5618 = vmatpush1.msra.mxu0 %v4576
    %5619 = vmatprep.subr.mxu0 %v4581
    %5620 = vmatpush1.msra.mxu0 %v4580
    %5621 = vmatprep.subr.mxu0 %v4585
    %5622 = vmatpush1.msra.mxu0 %v4584
    %5623 = vmatprep.subr.mxu0 %v4589
    %5624 = vmatpush1.msra.mxu0 %v4588
    %5625 = vmatprep.subr.mxu0 %v4593
    %5626 = vmatpush1.msra.mxu0 %v4592
    %5627 = vmatprep.subr.mxu0 %v4597
    %5628 = vmatpush1.msra.mxu0 %v4596
    %5629 = vmatprep.subr.mxu0 %v4601
    %5630 = vmatpush1.msra.mxu0 %v4600
    %5631 = vmatprep.subr.mxu0 0.0
    %5632 = vmatpush1.msra.mxu0 0.0
    %5633 = vmatprep.subr.mxu0 0.0
    %5634 = vmatpush1.msra.mxu0 0.0
    %5635 = vmatprep.subr.mxu0 0.0
    %5636 = vmatpush1.msra.mxu0 0.0
    %5637 = vmatprep.subr.mxu0 0.0
    %5638 = vmatpush1.msra.mxu0 0.0
    %5639 = vmatprep.subr.mxu0 0.0
    %5640 = vmatpush1.msra.mxu0 0.0
    %5641 = vmatprep.subr.mxu0 0.0
    %5642 = vmatpush1.msra.mxu0 0.0
    %5643 = vmatprep.subr.mxu0 0.0
    %5644 = vmatpush1.msra.mxu0 0.0
    %5645 = vmatprep.subr.mxu0 0.0
    %5646 = vmatpush1.msra.mxu0 0.0
    %5647 = vmatprep.subr.mxu0 0.0
    %5648 = vmatpush1.msra.mxu0 0.0
    %5649 = vmatprep.subr.mxu0 0.0
    %5650 = vmatpush1.msra.mxu0 0.0
    %5651 = vmatprep.subr.mxu0 0.0
    %5652 = vmatpush1.msra.mxu0 0.0
    %5653 = vmatprep.subr.mxu0 0.0
    %5654 = vmatpush1.msra.mxu0 0.0
    %5655 = vmatprep.subr.mxu0 0.0
    %5656 = vmatpush1.msra.mxu0 0.0
    %5657 = vmatprep.subr.mxu0 0.0
    %5658 = vmatpush1.msra.mxu0 0.0
    %5659 = vmatprep.subr.mxu0 0.0
    %5660 = vmatpush1.msra.mxu0 0.0
    %5661 = vmatprep.subr.mxu0 0.0
    %5662 = vmatpush1.msra.mxu0 0.0
    %5663 = vmatprep.mubr.f32.mxu0 0.0
    %5664 = vmatmul.mubr.f32.gmra.mrb[0].mxu0 %v5595
    %v5665 = vpop.f32.mrb[0].mxu0
    %v5666 = vadd.f32 0.0, %v5665
    %v5667 = vpop.f32.mrb[0].mxu0
    %v5668 = vadd.f32 0.0, %v5667
    %5669 = vdwg.mxu0
    %5670 = vmatprep.subr.mxu0 %v4543
    %5671 = vmatpush1.msra.mxu0 %v4542
    %5672 = vmatprep.subr.mxu0 %v4547
    %5673 = vmatpush1.msra.mxu0 %v4546
    %5674 = vmatprep.subr.mxu0 %v4551
    %5675 = vmatpush1.msra.mxu0 %v4550
    %5676 = vmatprep.subr.mxu0 %v4555
    %5677 = vmatpush1.msra.mxu0 %v4554
    %5678 = vmatprep.subr.mxu0 %v4559
    %5679 = vmatpush1.msra.mxu0 %v4558
    %5680 = vmatprep.subr.mxu0 %v4563
    %5681 = vmatpush1.msra.mxu0 %v4562
    %5682 = vmatprep.subr.mxu0 %v4567
    %5683 = vmatpush1.msra.mxu0 %v4566
    %5684 = vmatprep.subr.mxu0 %v4571
    %5685 = vmatpush1.msra.mxu0 %v4570
    %5686 = vmatprep.subr.mxu0 %v4575
    %5687 = vmatpush1.msra.mxu0 %v4574
    %5688 = vmatprep.subr.mxu0 %v4579
    %5689 = vmatpush1.msra.mxu0 %v4578
    %5690 = vmatprep.subr.mxu0 %v4583
    %5691 = vmatpush1.msra.mxu0 %v4582
    %5692 = vmatprep.subr.mxu0 %v4587
    %5693 = vmatpush1.msra.mxu0 %v4586
    %5694 = vmatprep.subr.mxu0 %v4591
    %5695 = vmatpush1.msra.mxu0 %v4590
    %5696 = vmatprep.subr.mxu0 %v4595
    %5697 = vmatpush1.msra.mxu0 %v4594
    %5698 = vmatprep.subr.mxu0 %v4599
    %5699 = vmatpush1.msra.mxu0 %v4598
    %5700 = vmatprep.subr.mxu0 %v4603
    %5701 = vmatpush1.msra.mxu0 %v4602
    %5702 = vmatprep.subr.mxu0 0.0
    %5703 = vmatpush1.msra.mxu0 0.0
    %5704 = vmatprep.subr.mxu0 0.0
    %5705 = vmatpush1.msra.mxu0 0.0
    %5706 = vmatprep.subr.mxu0 0.0
    %5707 = vmatpush1.msra.mxu0 0.0
    %5708 = vmatprep.subr.mxu0 0.0
    %5709 = vmatpush1.msra.mxu0 0.0
    %5710 = vmatprep.subr.mxu0 0.0
    %5711 = vmatpush1.msra.mxu0 0.0
    %5712 = vmatprep.subr.mxu0 0.0
    %5713 = vmatpush1.msra.mxu0 0.0
    %5714 = vmatprep.subr.mxu0 0.0
    %5715 = vmatpush1.msra.mxu0 0.0
    %5716 = vmatprep.subr.mxu0 0.0
    %5717 = vmatpush1.msra.mxu0 0.0
    %5718 = vmatprep.subr.mxu0 0.0
    %5719 = vmatpush1.msra.mxu0 0.0
    %5720 = vmatprep.subr.mxu0 0.0
    %5721 = vmatpush1.msra.mxu0 0.0
    %5722 = vmatprep.subr.mxu0 0.0
    %5723 = vmatpush1.msra.mxu0 0.0
    %5724 = vmatprep.subr.mxu0 0.0
    %5725 = vmatpush1.msra.mxu0 0.0
    %5726 = vmatprep.subr.mxu0 0.0
    %5727 = vmatpush1.msra.mxu0 0.0
    %5728 = vmatprep.subr.mxu0 0.0
    %5729 = vmatpush1.msra.mxu0 0.0
    %5730 = vmatprep.subr.mxu0 0.0
    %5731 = vmatpush1.msra.mxu0 0.0
    %5732 = vmatprep.subr.mxu0 0.0
    %5733 = vmatpush1.msra.mxu0 0.0
    %5734 = vmatprep.mubr.f32.mxu0 0.0
    %5735 = vmatmul.mubr.f32.gmra.mrb[0].mxu0 %v5595
    %v5736 = vpop.f32.mrb[0].mxu0
    %v5737 = vadd.f32 0.0, %v5736
    %v5738 = vpop.f32.mrb[0].mxu0
    %v5739 = vadd.f32 0.0, %v5738
    %5740 = vdwg.mxu0
    %v5745 = vcombine.low %v5666, %v5668
    %v5746 = vcombine.low %v5737, %v5739
    %v5748 = vunpack.c.l.s4 1983009808
    %v5749 = vunpack.c.0.s8 %v5748
    %v5750 = vlaneseq
    %v5751 = vshrl.u32 %v5750, 7
    %v5752 = vsub.s32 %v5749, %v5751
    %v5753 = vrot.slane %v5745, %v5752
    %v5755 = vunpack.c.l.s4 1983009808
    %v5756 = vunpack.c.0.s8 %v5755
    %v5757 = vlaneseq
    %v5758 = vshrl.u32 %v5757, 7
    %v5759 = vsub.s32 %v5756, %v5758
    %v5760 = vrot.slane %v5746, %v5759
    %v5761 = vcombine.low %v5753, %v5760
    %v5763 = vadd.f32 %v5598, %v5761
    %v5764 = vxor.u32 %v5763, 2147483648
    %v5765 = vmul.f32 %v5764, 1.442695
    %v5766 = vpow.pop %v5765
    %v5767 = vadd.f32 %v5766, 1.0
    %v5768 = vrcp.pop %v5767
    %v5769 = vmul.f32 1.0, %v5768
    %v5771 = vrot.slane %v5763, 2
    %v5773 = vxor.u32 %v5771, 2147483648
    %v5774 = vmul.f32 %v5773, 1.442695
    %v5775 = vpow.pop %v5774
    %v5776 = vadd.f32 %v5775, 1.0
    %v5777 = vrcp.pop %v5776
    %v5778 = vmul.f32 1.0, %v5777
    %v5779 = vrot.slane %v5763, 4
    %v5781 = vtanh.pop %v5779
    %v5782 = vrot.slane %v5763, 6
    %v5784 = vxor.u32 %v5782, 2147483648
    %v5785 = vmul.f32 %v5784, 1.442695
    %v5786 = vpow.pop %v5785
    %v5787 = vadd.f32 %v5786, 1.0
    %v5788 = vrcp.pop %v5787
    %v5789 = vmul.f32 1.0, %v5788
    %v5790 = vmul.f32 %v5778, %v5593
    %v5791 = vmul.f32 %v5769, %v5781
    %v5792 = vadd.f32 %v5790, %v5791
    %v5793 = vtanh.pop %v5792
    %v5794 = vmul.f32 %v5789, %v5793
    %s5795 = scalar_lea.vmem [#allocation4], 10
    %5796 = vst [vmem:[%s5795] sm:$0x3] %v5794
    %v5797 = vld [vmem:[%s2727] sm:$0xff]
    %5798 = vmatprep.subr.mxu0 %v4541
    %5799 = vmatpush1.msra.mxu0 %v4540
    %5800 = vmatprep.subr.mxu0 %v4545
    %5801 = vmatpush1.msra.mxu0 %v4544
    %5802 = vmatprep.subr.mxu0 %v4549
    %5803 = vmatpush1.msra.mxu0 %v4548
    %5804 = vmatprep.subr.mxu0 %v4553
    %5805 = vmatpush1.msra.mxu0 %v4552
    %5806 = vmatprep.subr.mxu0 %v4557
    %5807 = vmatpush1.msra.mxu0 %v4556
    %5808 = vmatprep.subr.mxu0 %v4561
    %5809 = vmatpush1.msra.mxu0 %v4560
    %5810 = vmatprep.subr.mxu0 %v4565
    %5811 = vmatpush1.msra.mxu0 %v4564
    %5812 = vmatprep.subr.mxu0 %v4569
    %5813 = vmatpush1.msra.mxu0 %v4568
    %5814 = vmatprep.subr.mxu0 %v4573
    %5815 = vmatpush1.msra.mxu0 %v4572
    %5816 = vmatprep.subr.mxu0 %v4577
    %5817 = vmatpush1.msra.mxu0 %v4576
    %5818 = vmatprep.subr.mxu0 %v4581
    %5819 = vmatpush1.msra.mxu0 %v4580
    %5820 = vmatprep.subr.mxu0 %v4585
    %5821 = vmatpush1.msra.mxu0 %v4584
    %5822 = vmatprep.subr.mxu0 %v4589
    %5823 = vmatpush1.msra.mxu0 %v4588
    %5824 = vmatprep.subr.mxu0 %v4593
    %5825 = vmatpush1.msra.mxu0 %v4592
    %5826 = vmatprep.subr.mxu0 %v4597
    %5827 = vmatpush1.msra.mxu0 %v4596
    %5828 = vmatprep.subr.mxu0 %v4601
    %5829 = vmatpush1.msra.mxu0 %v4600
    %5830 = vmatprep.subr.mxu0 0.0
    %5831 = vmatpush1.msra.mxu0 0.0
    %5832 = vmatprep.subr.mxu0 0.0
    %5833 = vmatpush1.msra.mxu0 0.0
    %5834 = vmatprep.subr.mxu0 0.0
    %5835 = vmatpush1.msra.mxu0 0.0
    %5836 = vmatprep.subr.mxu0 0.0
    %5837 = vmatpush1.msra.mxu0 0.0
    %5838 = vmatprep.subr.mxu0 0.0
    %5839 = vmatpush1.msra.mxu0 0.0
    %5840 = vmatprep.subr.mxu0 0.0
    %5841 = vmatpush1.msra.mxu0 0.0
    %5842 = vmatprep.subr.mxu0 0.0
    %5843 = vmatpush1.msra.mxu0 0.0
    %5844 = vmatprep.subr.mxu0 0.0
    %5845 = vmatpush1.msra.mxu0 0.0
    %5846 = vmatprep.subr.mxu0 0.0
    %5847 = vmatpush1.msra.mxu0 0.0
    %5848 = vmatprep.subr.mxu0 0.0
    %5849 = vmatpush1.msra.mxu0 0.0
    %5850 = vmatprep.subr.mxu0 0.0
    %5851 = vmatpush1.msra.mxu0 0.0
    %5852 = vmatprep.subr.mxu0 0.0
    %5853 = vmatpush1.msra.mxu0 0.0
    %5854 = vmatprep.subr.mxu0 0.0
    %5855 = vmatpush1.msra.mxu0 0.0
    %5856 = vmatprep.subr.mxu0 0.0
    %5857 = vmatpush1.msra.mxu0 0.0
    %5858 = vmatprep.subr.mxu0 0.0
    %5859 = vmatpush1.msra.mxu0 0.0
    %5860 = vmatprep.subr.mxu0 0.0
    %5861 = vmatpush1.msra.mxu0 0.0
    %5862 = vmatprep.mubr.f32.mxu0 0.0
    %5863 = vmatmul.mubr.f32.gmra.mrb[0].mxu0 %v5794
    %v5864 = vpop.f32.mrb[0].mxu0
    %v5865 = vadd.f32 0.0, %v5864
    %v5866 = vpop.f32.mrb[0].mxu0
    %v5867 = vadd.f32 0.0, %v5866
    %5868 = vdwg.mxu0
    %5869 = vmatprep.subr.mxu0 %v4543
    %5870 = vmatpush1.msra.mxu0 %v4542
    %5871 = vmatprep.subr.mxu0 %v4547
    %5872 = vmatpush1.msra.mxu0 %v4546
    %5873 = vmatprep.subr.mxu0 %v4551
    %5874 = vmatpush1.msra.mxu0 %v4550
    %5875 = vmatprep.subr.mxu0 %v4555
    %5876 = vmatpush1.msra.mxu0 %v4554
    %5877 = vmatprep.subr.mxu0 %v4559
    %5878 = vmatpush1.msra.mxu0 %v4558
    %5879 = vmatprep.subr.mxu0 %v4563
    %5880 = vmatpush1.msra.mxu0 %v4562
    %5881 = vmatprep.subr.mxu0 %v4567
    %5882 = vmatpush1.msra.mxu0 %v4566
    %5883 = vmatprep.subr.mxu0 %v4571
    %5884 = vmatpush1.msra.mxu0 %v4570
    %5885 = vmatprep.subr.mxu0 %v4575
    %5886 = vmatpush1.msra.mxu0 %v4574
    %5887 = vmatprep.subr.mxu0 %v4579
    %5888 = vmatpush1.msra.mxu0 %v4578
    %5889 = vmatprep.subr.mxu0 %v4583
    %5890 = vmatpush1.msra.mxu0 %v4582
    %5891 = vmatprep.subr.mxu0 %v4587
    %5892 = vmatpush1.msra.mxu0 %v4586
    %5893 = vmatprep.subr.mxu0 %v4591
    %5894 = vmatpush1.msra.mxu0 %v4590
    %5895 = vmatprep.subr.mxu0 %v4595
    %5896 = vmatpush1.msra.mxu0 %v4594
    %5897 = vmatprep.subr.mxu0 %v4599
    %5898 = vmatpush1.msra.mxu0 %v4598
    %5899 = vmatprep.subr.mxu0 %v4603
    %5900 = vmatpush1.msra.mxu0 %v4602
    %5901 = vmatprep.subr.mxu0 0.0
    %5902 = vmatpush1.msra.mxu0 0.0
    %5903 = vmatprep.subr.mxu0 0.0
    %5904 = vmatpush1.msra.mxu0 0.0
    %5905 = vmatprep.subr.mxu0 0.0
    %5906 = vmatpush1.msra.mxu0 0.0
    %5907 = vmatprep.subr.mxu0 0.0
    %5908 = vmatpush1.msra.mxu0 0.0
    %5909 = vmatprep.subr.mxu0 0.0
    %5910 = vmatpush1.msra.mxu0 0.0
    %5911 = vmatprep.subr.mxu0 0.0
    %5912 = vmatpush1.msra.mxu0 0.0
    %5913 = vmatprep.subr.mxu0 0.0
    %5914 = vmatpush1.msra.mxu0 0.0
    %5915 = vmatprep.subr.mxu0 0.0
    %5916 = vmatpush1.msra.mxu0 0.0
    %5917 = vmatprep.subr.mxu0 0.0
    %5918 = vmatpush1.msra.mxu0 0.0
    %5919 = vmatprep.subr.mxu0 0.0
    %5920 = vmatpush1.msra.mxu0 0.0
    %5921 = vmatprep.subr.mxu0 0.0
    %5922 = vmatpush1.msra.mxu0 0.0
    %5923 = vmatprep.subr.mxu0 0.0
    %5924 = vmatpush1.msra.mxu0 0.0
    %5925 = vmatprep.subr.mxu0 0.0
    %5926 = vmatpush1.msra.mxu0 0.0
    %5927 = vmatprep.subr.mxu0 0.0
    %5928 = vmatpush1.msra.mxu0 0.0
    %5929 = vmatprep.subr.mxu0 0.0
    %5930 = vmatpush1.msra.mxu0 0.0
    %5931 = vmatprep.subr.mxu0 0.0
    %5932 = vmatpush1.msra.mxu0 0.0
    %5933 = vmatprep.mubr.f32.mxu0 0.0
    %5934 = vmatmul.mubr.f32.gmra.mrb[0].mxu0 %v5794
    %v5935 = vpop.f32.mrb[0].mxu0
    %v5936 = vadd.f32 0.0, %v5935
    %v5937 = vpop.f32.mrb[0].mxu0
    %v5938 = vadd.f32 0.0, %v5937
    %5939 = vdwg.mxu0
    %v5944 = vcombine.low %v5865, %v5867
    %v5945 = vcombine.low %v5936, %v5938
    %v5947 = vunpack.c.l.s4 1983009808
    %v5948 = vunpack.c.0.s8 %v5947
    %v5949 = vlaneseq
    %v5950 = vshrl.u32 %v5949, 7
    %v5951 = vsub.s32 %v5948, %v5950
    %v5952 = vrot.slane %v5944, %v5951
    %v5954 = vunpack.c.l.s4 1983009808
    %v5955 = vunpack.c.0.s8 %v5954
    %v5956 = vlaneseq
    %v5957 = vshrl.u32 %v5956, 7
    %v5958 = vsub.s32 %v5955, %v5957
    %v5959 = vrot.slane %v5945, %v5958
    %v5960 = vcombine.low %v5952, %v5959
    %v5962 = vadd.f32 %v5797, %v5960
    %v5963 = vxor.u32 %v5962, 2147483648
    %v5964 = vmul.f32 %v5963, 1.442695
    %v5965 = vpow.pop %v5964
    %v5966 = vadd.f32 %v5965, 1.0
    %v5967 = vrcp.pop %v5966
    %v5968 = vmul.f32 1.0, %v5967
    %v5970 = vrot.slane %v5962, 2
    %v5972 = vxor.u32 %v5970, 2147483648
    %v5973 = vmul.f32 %v5972, 1.442695
    %v5974 = vpow.pop %v5973
    %v5975 = vadd.f32 %v5974, 1.0
    %v5976 = vrcp.pop %v5975
    %v5977 = vmul.f32 1.0, %v5976
    %v5978 = vrot.slane %v5962, 4
    %v5980 = vtanh.pop %v5978
    %v5981 = vrot.slane %v5962, 6
    %v5983 = vxor.u32 %v5981, 2147483648
    %v5984 = vmul.f32 %v5983, 1.442695
    %v5985 = vpow.pop %v5984
    %v5986 = vadd.f32 %v5985, 1.0
    %v5987 = vrcp.pop %v5986
    %v5988 = vmul.f32 1.0, %v5987
    %v5989 = vmul.f32 %v5977, %v5792
    %v5990 = vmul.f32 %v5968, %v5980
    %v5991 = vadd.f32 %v5989, %v5990
    %v5992 = vtanh.pop %v5991
    %v5993 = vmul.f32 %v5988, %v5992
    %s5994 = scalar_lea.vmem [#allocation4], 12
    %5995 = vst [vmem:[%s5994] sm:$0x3] %v5993
    %v5996 = vld [vmem:[%s2898] sm:$0xff]
    %5997 = vmatprep.subr.mxu0 %v4541
    %5998 = vmatpush1.msra.mxu0 %v4540
    %5999 = vmatprep.subr.mxu0 %v4545
    %6000 = vmatpush1.msra.mxu0 %v4544
    %6001 = vmatprep.subr.mxu0 %v4549
    %6002 = vmatpush1.msra.mxu0 %v4548
    %6003 = vmatprep.subr.mxu0 %v4553
    %6004 = vmatpush1.msra.mxu0 %v4552
    %6005 = vmatprep.subr.mxu0 %v4557
    %6006 = vmatpush1.msra.mxu0 %v4556
    %6007 = vmatprep.subr.mxu0 %v4561
    %6008 = vmatpush1.msra.mxu0 %v4560
    %6009 = vmatprep.subr.mxu0 %v4565
    %6010 = vmatpush1.msra.mxu0 %v4564
    %6011 = vmatprep.subr.mxu0 %v4569
    %6012 = vmatpush1.msra.mxu0 %v4568
    %6013 = vmatprep.subr.mxu0 %v4573
    %6014 = vmatpush1.msra.mxu0 %v4572
    %6015 = vmatprep.subr.mxu0 %v4577
    %6016 = vmatpush1.msra.mxu0 %v4576
    %6017 = vmatprep.subr.mxu0 %v4581
    %6018 = vmatpush1.msra.mxu0 %v4580
    %6019 = vmatprep.subr.mxu0 %v4585
    %6020 = vmatpush1.msra.mxu0 %v4584
    %6021 = vmatprep.subr.mxu0 %v4589
    %6022 = vmatpush1.msra.mxu0 %v4588
    %6023 = vmatprep.subr.mxu0 %v4593
    %6024 = vmatpush1.msra.mxu0 %v4592
    %6025 = vmatprep.subr.mxu0 %v4597
    %6026 = vmatpush1.msra.mxu0 %v4596
    %6027 = vmatprep.subr.mxu0 %v4601
    %6028 = vmatpush1.msra.mxu0 %v4600
    %6029 = vmatprep.subr.mxu0 0.0
    %6030 = vmatpush1.msra.mxu0 0.0
    %6031 = vmatprep.subr.mxu0 0.0
    %6032 = vmatpush1.msra.mxu0 0.0
    %6033 = vmatprep.subr.mxu0 0.0
    %6034 = vmatpush1.msra.mxu0 0.0
    %6035 = vmatprep.subr.mxu0 0.0
    %6036 = vmatpush1.msra.mxu0 0.0
    %6037 = vmatprep.subr.mxu0 0.0
    %6038 = vmatpush1.msra.mxu0 0.0
    %6039 = vmatprep.subr.mxu0 0.0
    %6040 = vmatpush1.msra.mxu0 0.0
    %6041 = vmatprep.subr.mxu0 0.0
    %6042 = vmatpush1.msra.mxu0 0.0
    %6043 = vmatprep.subr.mxu0 0.0
    %6044 = vmatpush1.msra.mxu0 0.0
    %6045 = vmatprep.subr.mxu0 0.0
    %6046 = vmatpush1.msra.mxu0 0.0
    %6047 = vmatprep.subr.mxu0 0.0
    %6048 = vmatpush1.msra.mxu0 0.0
    %6049 = vmatprep.subr.mxu0 0.0
    %6050 = vmatpush1.msra.mxu0 0.0
    %6051 = vmatprep.subr.mxu0 0.0
    %6052 = vmatpush1.msra.mxu0 0.0
    %6053 = vmatprep.subr.mxu0 0.0
    %6054 = vmatpush1.msra.mxu0 0.0
    %6055 = vmatprep.subr.mxu0 0.0
    %6056 = vmatpush1.msra.mxu0 0.0
    %6057 = vmatprep.subr.mxu0 0.0
    %6058 = vmatpush1.msra.mxu0 0.0
    %6059 = vmatprep.subr.mxu0 0.0
    %6060 = vmatpush1.msra.mxu0 0.0
    %6061 = vmatprep.mubr.f32.mxu0 0.0
    %6062 = vmatmul.mubr.f32.gmra.mrb[0].mxu0 %v5993
    %v6063 = vpop.f32.mrb[0].mxu0
    %v6064 = vadd.f32 0.0, %v6063
    %v6065 = vpop.f32.mrb[0].mxu0
    %v6066 = vadd.f32 0.0, %v6065
    %6067 = vdwg.mxu0
    %6068 = vmatprep.subr.mxu0 %v4543
    %6069 = vmatpush1.msra.mxu0 %v4542
    %6070 = vmatprep.subr.mxu0 %v4547
    %6071 = vmatpush1.msra.mxu0 %v4546
    %6072 = vmatprep.subr.mxu0 %v4551
    %6073 = vmatpush1.msra.mxu0 %v4550
    %6074 = vmatprep.subr.mxu0 %v4555
    %6075 = vmatpush1.msra.mxu0 %v4554
    %6076 = vmatprep.subr.mxu0 %v4559
    %6077 = vmatpush1.msra.mxu0 %v4558
    %6078 = vmatprep.subr.mxu0 %v4563
    %6079 = vmatpush1.msra.mxu0 %v4562
    %6080 = vmatprep.subr.mxu0 %v4567
    %6081 = vmatpush1.msra.mxu0 %v4566
    %6082 = vmatprep.subr.mxu0 %v4571
    %6083 = vmatpush1.msra.mxu0 %v4570
    %6084 = vmatprep.subr.mxu0 %v4575
    %6085 = vmatpush1.msra.mxu0 %v4574
    %6086 = vmatprep.subr.mxu0 %v4579
    %6087 = vmatpush1.msra.mxu0 %v4578
    %6088 = vmatprep.subr.mxu0 %v4583
    %6089 = vmatpush1.msra.mxu0 %v4582
    %6090 = vmatprep.subr.mxu0 %v4587
    %6091 = vmatpush1.msra.mxu0 %v4586
    %6092 = vmatprep.subr.mxu0 %v4591
    %6093 = vmatpush1.msra.mxu0 %v4590
    %6094 = vmatprep.subr.mxu0 %v4595
    %6095 = vmatpush1.msra.mxu0 %v4594
    %6096 = vmatprep.subr.mxu0 %v4599
    %6097 = vmatpush1.msra.mxu0 %v4598
    %6098 = vmatprep.subr.mxu0 %v4603
    %6099 = vmatpush1.msra.mxu0 %v4602
    %6100 = vmatprep.subr.mxu0 0.0
    %6101 = vmatpush1.msra.mxu0 0.0
    %6102 = vmatprep.subr.mxu0 0.0
    %6103 = vmatpush1.msra.mxu0 0.0
    %6104 = vmatprep.subr.mxu0 0.0
    %6105 = vmatpush1.msra.mxu0 0.0
    %6106 = vmatprep.subr.mxu0 0.0
    %6107 = vmatpush1.msra.mxu0 0.0
    %6108 = vmatprep.subr.mxu0 0.0
    %6109 = vmatpush1.msra.mxu0 0.0
    %6110 = vmatprep.subr.mxu0 0.0
    %6111 = vmatpush1.msra.mxu0 0.0
    %6112 = vmatprep.subr.mxu0 0.0
    %6113 = vmatpush1.msra.mxu0 0.0
    %6114 = vmatprep.subr.mxu0 0.0
    %6115 = vmatpush1.msra.mxu0 0.0
    %6116 = vmatprep.subr.mxu0 0.0
    %6117 = vmatpush1.msra.mxu0 0.0
    %6118 = vmatprep.subr.mxu0 0.0
    %6119 = vmatpush1.msra.mxu0 0.0
    %6120 = vmatprep.subr.mxu0 0.0
    %6121 = vmatpush1.msra.mxu0 0.0
    %6122 = vmatprep.subr.mxu0 0.0
    %6123 = vmatpush1.msra.mxu0 0.0
    %6124 = vmatprep.subr.mxu0 0.0
    %6125 = vmatpush1.msra.mxu0 0.0
    %6126 = vmatprep.subr.mxu0 0.0
    %6127 = vmatpush1.msra.mxu0 0.0
    %6128 = vmatprep.subr.mxu0 0.0
    %6129 = vmatpush1.msra.mxu0 0.0
    %6130 = vmatprep.subr.mxu0 0.0
    %6131 = vmatpush1.msra.mxu0 0.0
    %6132 = vmatprep.mubr.f32.mxu0 0.0
    %6133 = vmatmul.mubr.f32.gmra.mrb[0].mxu0 %v5993
    %v6134 = vpop.f32.mrb[0].mxu0
    %v6135 = vadd.f32 0.0, %v6134
    %v6136 = vpop.f32.mrb[0].mxu0
    %v6137 = vadd.f32 0.0, %v6136
    %6138 = vdwg.mxu0
    %v6143 = vcombine.low %v6064, %v6066
    %v6144 = vcombine.low %v6135, %v6137
    %v6146 = vunpack.c.l.s4 1983009808
    %v6147 = vunpack.c.0.s8 %v6146
    %v6148 = vlaneseq
    %v6149 = vshrl.u32 %v6148, 7
    %v6150 = vsub.s32 %v6147, %v6149
    %v6151 = vrot.slane %v6143, %v6150
    %v6153 = vunpack.c.l.s4 1983009808
    %v6154 = vunpack.c.0.s8 %v6153
    %v6155 = vlaneseq
    %v6156 = vshrl.u32 %v6155, 7
    %v6157 = vsub.s32 %v6154, %v6156
    %v6158 = vrot.slane %v6144, %v6157
    %v6159 = vcombine.low %v6151, %v6158
    %v6161 = vadd.f32 %v5996, %v6159
    %v6162 = vxor.u32 %v6161, 2147483648
    %v6163 = vmul.f32 %v6162, 1.442695
    %v6164 = vpow.pop %v6163
    %v6165 = vadd.f32 %v6164, 1.0
    %v6166 = vrcp.pop %v6165
    %v6167 = vmul.f32 1.0, %v6166
    %v6169 = vrot.slane %v6161, 2
    %v6171 = vxor.u32 %v6169, 2147483648
    %v6172 = vmul.f32 %v6171, 1.442695
    %v6173 = vpow.pop %v6172
    %v6174 = vadd.f32 %v6173, 1.0
    %v6175 = vrcp.pop %v6174
    %v6176 = vmul.f32 1.0, %v6175
    %v6177 = vrot.slane %v6161, 4
    %v6179 = vtanh.pop %v6177
    %v6180 = vrot.slane %v6161, 6
    %v6182 = vxor.u32 %v6180, 2147483648
    %v6183 = vmul.f32 %v6182, 1.442695
    %v6184 = vpow.pop %v6183
    %v6185 = vadd.f32 %v6184, 1.0
    %v6186 = vrcp.pop %v6185
    %v6187 = vmul.f32 1.0, %v6186
    %v6188 = vmul.f32 %v6176, %v5991
    %v6189 = vmul.f32 %v6167, %v6179
    %v6190 = vadd.f32 %v6188, %v6189
    %v6191 = vtanh.pop %v6190
    %v6192 = vmul.f32 %v6187, %v6191
    %s6193 = scalar_lea.vmem [#allocation4], 14
    %6194 = vst [vmem:[%s6193] sm:$0x3] %v6192
    %v6195 = vld [vmem:[%s9] sm:$0x1]
    %v6197 = vlaneseq
    %v6198 = vshrl.u32 %v6197, 7
    %v6199 = vsub.s32 0, %v6198
    %v6200 = vrot.slane %v6195, %v6199
    %v6202 = vld [vmem:[#allocation11] sm:$0xff]
    %v6203 = vld [vmem:[#allocation11 + $0x8] sm:$0xff]
    %v6204 = vld [vmem:[#allocation11 + $0x10] sm:$0xff]
    %v6205 = vld [vmem:[#allocation11 + $0x18] sm:$0xff]
    %v6206 = vld [vmem:[#allocation11 + $0x20] sm:$0xff]
    %v6207 = vld [vmem:[#allocation11 + $0x28] sm:$0xff]
    %v6208 = vld [vmem:[#allocation11 + $0x30] sm:$0xff]
    %v6209 = vld [vmem:[#allocation11 + $0x38] sm:$0xff]
    %v6210 = vld [vmem:[#allocation11 + $0x40] sm:$0xff]
    %v6211 = vld [vmem:[#allocation11 + $0x48] sm:$0xff]
    %v6212 = vld [vmem:[#allocation11 + $0x50] sm:$0xff]
    %v6213 = vld [vmem:[#allocation11 + $0x58] sm:$0xff]
    %v6214 = vld [vmem:[#allocation11 + $0x60] sm:$0xff]
    %v6215 = vld [vmem:[#allocation11 + $0x68] sm:$0xff]
    %v6216 = vld [vmem:[#allocation11 + $0x70] sm:$0xff]
    %v6217 = vld [vmem:[#allocation11 + $0x78] sm:$0xff]
    %v6218 = vld [vmem:[#allocation4] sm:$0x3]
    %6219 = vmatprep.subr.mxu0 0.0
    %6220 = vmatpush1.msra.mxu0 %v6202
    %6221 = vmatprep.subr.mxu0 0.0
    %6222 = vmatpush1.msra.mxu0 %v6203
    %6223 = vmatprep.subr.mxu0 0.0
    %6224 = vmatpush1.msra.mxu0 %v6204
    %6225 = vmatprep.subr.mxu0 0.0
    %6226 = vmatpush1.msra.mxu0 %v6205
    %6227 = vmatprep.subr.mxu0 0.0
    %6228 = vmatpush1.msra.mxu0 %v6206
    %6229 = vmatprep.subr.mxu0 0.0
    %6230 = vmatpush1.msra.mxu0 %v6207
    %6231 = vmatprep.subr.mxu0 0.0
    %6232 = vmatpush1.msra.mxu0 %v6208
    %6233 = vmatprep.subr.mxu0 0.0
    %6234 = vmatpush1.msra.mxu0 %v6209
    %6235 = vmatprep.subr.mxu0 0.0
    %6236 = vmatpush1.msra.mxu0 %v6210
    %6237 = vmatprep.subr.mxu0 0.0
    %6238 = vmatpush1.msra.mxu0 %v6211
    %6239 = vmatprep.subr.mxu0 0.0
    %6240 = vmatpush1.msra.mxu0 %v6212
    %6241 = vmatprep.subr.mxu0 0.0
    %6242 = vmatpush1.msra.mxu0 %v6213
    %6243 = vmatprep.subr.mxu0 0.0
    %6244 = vmatpush1.msra.mxu0 %v6214
    %6245 = vmatprep.subr.mxu0 0.0
    %6246 = vmatpush1.msra.mxu0 %v6215
    %6247 = vmatprep.subr.mxu0 0.0
    %6248 = vmatpush1.msra.mxu0 %v6216
    %6249 = vmatprep.subr.mxu0 0.0
    %6250 = vmatpush1.msra.mxu0 %v6217
    %6251 = vmatprep.subr.mxu0 0.0
    %6252 = vmatpush1.msra.mxu0 0.0
    %6253 = vmatprep.subr.mxu0 0.0
    %6254 = vmatpush1.msra.mxu0 0.0
    %6255 = vmatprep.subr.mxu0 0.0
    %6256 = vmatpush1.msra.mxu0 0.0
    %6257 = vmatprep.subr.mxu0 0.0
    %6258 = vmatpush1.msra.mxu0 0.0
    %6259 = vmatprep.subr.mxu0 0.0
    %6260 = vmatpush1.msra.mxu0 0.0
    %6261 = vmatprep.subr.mxu0 0.0
    %6262 = vmatpush1.msra.mxu0 0.0
    %6263 = vmatprep.subr.mxu0 0.0
    %6264 = vmatpush1.msra.mxu0 0.0
    %6265 = vmatprep.subr.mxu0 0.0
    %6266 = vmatpush1.msra.mxu0 0.0
    %6267 = vmatprep.subr.mxu0 0.0
    %6268 = vmatpush1.msra.mxu0 0.0
    %6269 = vmatprep.subr.mxu0 0.0
    %6270 = vmatpush1.msra.mxu0 0.0
    %6271 = vmatprep.subr.mxu0 0.0
    %6272 = vmatpush1.msra.mxu0 0.0
    %6273 = vmatprep.subr.mxu0 0.0
    %6274 = vmatpush1.msra.mxu0 0.0
    %6275 = vmatprep.subr.mxu0 0.0
    %6276 = vmatpush1.msra.mxu0 0.0
    %6277 = vmatprep.subr.mxu0 0.0
    %6278 = vmatpush1.msra.mxu0 0.0
    %6279 = vmatprep.subr.mxu0 0.0
    %6280 = vmatpush1.msra.mxu0 0.0
    %6281 = vmatprep.subr.mxu0 0.0
    %6282 = vmatpush1.msra.mxu0 0.0
    %6283 = vmatprep.mubr.f32.mxu0 0.0
    %6284 = vmatmul.mubr.f32.gmra.mrb[0].mxu0 %v6218
    %v6285 = vpop.f32.mrb[0].mxu0
    %v6286 = vadd.f32 %v6200, %v6285
    %v6287 = vpop.f32.mrb[0].mxu0
    %6288 = vdwg.mxu0
    %6289 = vst [vmem:[#allocation13] sm:$0x3] %v6286
    %v6290 = vld [vmem:[%s4999] sm:$0x3]
    %6291 = vmatprep.subr.mxu0 0.0
    %6292 = vmatpush1.msra.mxu0 %v6202
    %6293 = vmatprep.subr.mxu0 0.0
    %6294 = vmatpush1.msra.mxu0 %v6203
    %6295 = vmatprep.subr.mxu0 0.0
    %6296 = vmatpush1.msra.mxu0 %v6204
    %6297 = vmatprep.subr.mxu0 0.0
    %6298 = vmatpush1.msra.mxu0 %v6205
    %6299 = vmatprep.subr.mxu0 0.0
    %6300 = vmatpush1.msra.mxu0 %v6206
    %6301 = vmatprep.subr.mxu0 0.0
    %6302 = vmatpush1.msra.mxu0 %v6207
    %6303 = vmatprep.subr.mxu0 0.0
    %6304 = vmatpush1.msra.mxu0 %v6208
    %6305 = vmatprep.subr.mxu0 0.0
    %6306 = vmatpush1.msra.mxu0 %v6209
    %6307 = vmatprep.subr.mxu0 0.0
    %6308 = vmatpush1.msra.mxu0 %v6210
    %6309 = vmatprep.subr.mxu0 0.0
    %6310 = vmatpush1.msra.mxu0 %v6211
    %6311 = vmatprep.subr.mxu0 0.0
    %6312 = vmatpush1.msra.mxu0 %v6212
    %6313 = vmatprep.subr.mxu0 0.0
    %6314 = vmatpush1.msra.mxu0 %v6213
    %6315 = vmatprep.subr.mxu0 0.0
    %6316 = vmatpush1.msra.mxu0 %v6214
    %6317 = vmatprep.subr.mxu0 0.0
    %6318 = vmatpush1.msra.mxu0 %v6215
    %6319 = vmatprep.subr.mxu0 0.0
    %6320 = vmatpush1.msra.mxu0 %v6216
    %6321 = vmatprep.subr.mxu0 0.0
    %6322 = vmatpush1.msra.mxu0 %v6217
    %6323 = vmatprep.subr.mxu0 0.0
    %6324 = vmatpush1.msra.mxu0 0.0
    %6325 = vmatprep.subr.mxu0 0.0
    %6326 = vmatpush1.msra.mxu0 0.0
    %6327 = vmatprep.subr.mxu0 0.0
    %6328 = vmatpush1.msra.mxu0 0.0
    %6329 = vmatprep.subr.mxu0 0.0
    %6330 = vmatpush1.msra.mxu0 0.0
    %6331 = vmatprep.subr.mxu0 0.0
    %6332 = vmatpush1.msra.mxu0 0.0
    %6333 = vmatprep.subr.mxu0 0.0
    %6334 = vmatpush1.msra.mxu0 0.0
    %6335 = vmatprep.subr.mxu0 0.0
    %6336 = vmatpush1.msra.mxu0 0.0
    %6337 = vmatprep.subr.mxu0 0.0
    %6338 = vmatpush1.msra.mxu0 0.0
    %6339 = vmatprep.subr.mxu0 0.0
    %6340 = vmatpush1.msra.mxu0 0.0
    %6341 = vmatprep.subr.mxu0 0.0
    %6342 = vmatpush1.msra.mxu0 0.0
    %6343 = vmatprep.subr.mxu0 0.0
    %6344 = vmatpush1.msra.mxu0 0.0
    %6345 = vmatprep.subr.mxu0 0.0
    %6346 = vmatpush1.msra.mxu0 0.0
    %6347 = vmatprep.subr.mxu0 0.0
    %6348 = vmatpush1.msra.mxu0 0.0
    %6349 = vmatprep.subr.mxu0 0.0
    %6350 = vmatpush1.msra.mxu0 0.0
    %6351 = vmatprep.subr.mxu0 0.0
    %6352 = vmatpush1.msra.mxu0 0.0
    %6353 = vmatprep.subr.mxu0 0.0
    %6354 = vmatpush1.msra.mxu0 0.0
    %6355 = vmatprep.mubr.f32.mxu0 0.0
    %6356 = vmatmul.mubr.f32.gmra.mrb[0].mxu0 %v6290
    %v6357 = vpop.f32.mrb[0].mxu0
    %v6358 = vadd.f32 %v6200, %v6357
    %v6359 = vpop.f32.mrb[0].mxu0
    %6360 = vdwg.mxu0
    %s6361 = scalar_lea.vmem [#allocation13], 2
    %6362 = vst [vmem:[%s6361] sm:$0x3] %v6358
    %v6363 = vld [vmem:[%s5198] sm:$0x3]
    %6364 = vmatprep.subr.mxu0 0.0
    %6365 = vmatpush1.msra.mxu0 %v6202
    %6366 = vmatprep.subr.mxu0 0.0
    %6367 = vmatpush1.msra.mxu0 %v6203
    %6368 = vmatprep.subr.mxu0 0.0
    %6369 = vmatpush1.msra.mxu0 %v6204
    %6370 = vmatprep.subr.mxu0 0.0
    %6371 = vmatpush1.msra.mxu0 %v6205
    %6372 = vmatprep.subr.mxu0 0.0
    %6373 = vmatpush1.msra.mxu0 %v6206
    %6374 = vmatprep.subr.mxu0 0.0
    %6375 = vmatpush1.msra.mxu0 %v6207
    %6376 = vmatprep.subr.mxu0 0.0
    %6377 = vmatpush1.msra.mxu0 %v6208
    %6378 = vmatprep.subr.mxu0 0.0
    %6379 = vmatpush1.msra.mxu0 %v6209
    %6380 = vmatprep.subr.mxu0 0.0
    %6381 = vmatpush1.msra.mxu0 %v6210
    %6382 = vmatprep.subr.mxu0 0.0
    %6383 = vmatpush1.msra.mxu0 %v6211
    %6384 = vmatprep.subr.mxu0 0.0
    %6385 = vmatpush1.msra.mxu0 %v6212
    %6386 = vmatprep.subr.mxu0 0.0
    %6387 = vmatpush1.msra.mxu0 %v6213
    %6388 = vmatprep.subr.mxu0 0.0
    %6389 = vmatpush1.msra.mxu0 %v6214
    %6390 = vmatprep.subr.mxu0 0.0
    %6391 = vmatpush1.msra.mxu0 %v6215
    %6392 = vmatprep.subr.mxu0 0.0
    %6393 = vmatpush1.msra.mxu0 %v6216
    %6394 = vmatprep.subr.mxu0 0.0
    %6395 = vmatpush1.msra.mxu0 %v6217
    %6396 = vmatprep.subr.mxu0 0.0
    %6397 = vmatpush1.msra.mxu0 0.0
    %6398 = vmatprep.subr.mxu0 0.0
    %6399 = vmatpush1.msra.mxu0 0.0
    %6400 = vmatprep.subr.mxu0 0.0
    %6401 = vmatpush1.msra.mxu0 0.0
    %6402 = vmatprep.subr.mxu0 0.0
    %6403 = vmatpush1.msra.mxu0 0.0
    %6404 = vmatprep.subr.mxu0 0.0
    %6405 = vmatpush1.msra.mxu0 0.0
    %6406 = vmatprep.subr.mxu0 0.0
    %6407 = vmatpush1.msra.mxu0 0.0
    %6408 = vmatprep.subr.mxu0 0.0
    %6409 = vmatpush1.msra.mxu0 0.0
    %6410 = vmatprep.subr.mxu0 0.0
    %6411 = vmatpush1.msra.mxu0 0.0
    %6412 = vmatprep.subr.mxu0 0.0
    %6413 = vmatpush1.msra.mxu0 0.0
    %6414 = vmatprep.subr.mxu0 0.0
    %6415 = vmatpush1.msra.mxu0 0.0
    %6416 = vmatprep.subr.mxu0 0.0
    %6417 = vmatpush1.msra.mxu0 0.0
    %6418 = vmatprep.subr.mxu0 0.0
    %6419 = vmatpush1.msra.mxu0 0.0
    %6420 = vmatprep.subr.mxu0 0.0
    %6421 = vmatpush1.msra.mxu0 0.0
    %6422 = vmatprep.subr.mxu0 0.0
    %6423 = vmatpush1.msra.mxu0 0.0
    %6424 = vmatprep.subr.mxu0 0.0
    %6425 = vmatpush1.msra.mxu0 0.0
    %6426 = vmatprep.subr.mxu0 0.0
    %6427 = vmatpush1.msra.mxu0 0.0
    %6428 = vmatprep.mubr.f32.mxu0 0.0
    %6429 = vmatmul.mubr.f32.gmra.mrb[0].mxu0 %v6363
    %v6430 = vpop.f32.mrb[0].mxu0
    %v6431 = vadd.f32 %v6200, %v6430
    %v6432 = vpop.f32.mrb[0].mxu0
    %6433 = vdwg.mxu0
    %s6434 = scalar_lea.vmem [#allocation13], 4
    %6435 = vst [vmem:[%s6434] sm:$0x3] %v6431
    %v6436 = vld [vmem:[%s5397] sm:$0x3]
    %6437 = vmatprep.subr.mxu0 0.0
    %6438 = vmatpush1.msra.mxu0 %v6202
    %6439 = vmatprep.subr.mxu0 0.0
    %6440 = vmatpush1.msra.mxu0 %v6203
    %6441 = vmatprep.subr.mxu0 0.0
    %6442 = vmatpush1.msra.mxu0 %v6204
    %6443 = vmatprep.subr.mxu0 0.0
    %6444 = vmatpush1.msra.mxu0 %v6205
    %6445 = vmatprep.subr.mxu0 0.0
    %6446 = vmatpush1.msra.mxu0 %v6206
    %6447 = vmatprep.subr.mxu0 0.0
    %6448 = vmatpush1.msra.mxu0 %v6207
    %6449 = vmatprep.subr.mxu0 0.0
    %6450 = vmatpush1.msra.mxu0 %v6208
    %6451 = vmatprep.subr.mxu0 0.0
    %6452 = vmatpush1.msra.mxu0 %v6209
    %6453 = vmatprep.subr.mxu0 0.0
    %6454 = vmatpush1.msra.mxu0 %v6210
    %6455 = vmatprep.subr.mxu0 0.0
    %6456 = vmatpush1.msra.mxu0 %v6211
    %6457 = vmatprep.subr.mxu0 0.0
    %6458 = vmatpush1.msra.mxu0 %v6212
    %6459 = vmatprep.subr.mxu0 0.0
    %6460 = vmatpush1.msra.mxu0 %v6213
    %6461 = vmatprep.subr.mxu0 0.0
    %6462 = vmatpush1.msra.mxu0 %v6214
    %6463 = vmatprep.subr.mxu0 0.0
    %6464 = vmatpush1.msra.mxu0 %v6215
    %6465 = vmatprep.subr.mxu0 0.0
    %6466 = vmatpush1.msra.mxu0 %v6216
    %6467 = vmatprep.subr.mxu0 0.0
    %6468 = vmatpush1.msra.mxu0 %v6217
    %6469 = vmatprep.subr.mxu0 0.0
    %6470 = vmatpush1.msra.mxu0 0.0
    %6471 = vmatprep.subr.mxu0 0.0
    %6472 = vmatpush1.msra.mxu0 0.0
    %6473 = vmatprep.subr.mxu0 0.0
    %6474 = vmatpush1.msra.mxu0 0.0
    %6475 = vmatprep.subr.mxu0 0.0
    %6476 = vmatpush1.msra.mxu0 0.0
    %6477 = vmatprep.subr.mxu0 0.0
    %6478 = vmatpush1.msra.mxu0 0.0
    %6479 = vmatprep.subr.mxu0 0.0
    %6480 = vmatpush1.msra.mxu0 0.0
    %6481 = vmatprep.subr.mxu0 0.0
    %6482 = vmatpush1.msra.mxu0 0.0
    %6483 = vmatprep.subr.mxu0 0.0
    %6484 = vmatpush1.msra.mxu0 0.0
    %6485 = vmatprep.subr.mxu0 0.0
    %6486 = vmatpush1.msra.mxu0 0.0
    %6487 = vmatprep.subr.mxu0 0.0
    %6488 = vmatpush1.msra.mxu0 0.0
    %6489 = vmatprep.subr.mxu0 0.0
    %6490 = vmatpush1.msra.mxu0 0.0
    %6491 = vmatprep.subr.mxu0 0.0
    %6492 = vmatpush1.msra.mxu0 0.0
    %6493 = vmatprep.subr.mxu0 0.0
    %6494 = vmatpush1.msra.mxu0 0.0
    %6495 = vmatprep.subr.mxu0 0.0
    %6496 = vmatpush1.msra.mxu0 0.0
    %6497 = vmatprep.subr.mxu0 0.0
    %6498 = vmatpush1.msra.mxu0 0.0
    %6499 = vmatprep.subr.mxu0 0.0
    %6500 = vmatpush1.msra.mxu0 0.0
    %6501 = vmatprep.mubr.f32.mxu0 0.0
    %6502 = vmatmul.mubr.f32.gmra.mrb[0].mxu0 %v6436
    %v6503 = vpop.f32.mrb[0].mxu0
    %v6504 = vadd.f32 %v6200, %v6503
    %v6505 = vpop.f32.mrb[0].mxu0
    %6506 = vdwg.mxu0
    %s6507 = scalar_lea.vmem [#allocation13], 6
    %6508 = vst [vmem:[%s6507] sm:$0x3] %v6504
    %v6509 = vld [vmem:[%s5596] sm:$0x3]
    %6510 = vmatprep.subr.mxu0 0.0
    %6511 = vmatpush1.msra.mxu0 %v6202
    %6512 = vmatprep.subr.mxu0 0.0
    %6513 = vmatpush1.msra.mxu0 %v6203
    %6514 = vmatprep.subr.mxu0 0.0
    %6515 = vmatpush1.msra.mxu0 %v6204
    %6516 = vmatprep.subr.mxu0 0.0
    %6517 = vmatpush1.msra.mxu0 %v6205
    %6518 = vmatprep.subr.mxu0 0.0
    %6519 = vmatpush1.msra.mxu0 %v6206
    %6520 = vmatprep.subr.mxu0 0.0
    %6521 = vmatpush1.msra.mxu0 %v6207
    %6522 = vmatprep.subr.mxu0 0.0
    %6523 = vmatpush1.msra.mxu0 %v6208
    %6524 = vmatprep.subr.mxu0 0.0
    %6525 = vmatpush1.msra.mxu0 %v6209
    %6526 = vmatprep.subr.mxu0 0.0
    %6527 = vmatpush1.msra.mxu0 %v6210
    %6528 = vmatprep.subr.mxu0 0.0
    %6529 = vmatpush1.msra.mxu0 %v6211
    %6530 = vmatprep.subr.mxu0 0.0
    %6531 = vmatpush1.msra.mxu0 %v6212
    %6532 = vmatprep.subr.mxu0 0.0
    %6533 = vmatpush1.msra.mxu0 %v6213
    %6534 = vmatprep.subr.mxu0 0.0
    %6535 = vmatpush1.msra.mxu0 %v6214
    %6536 = vmatprep.subr.mxu0 0.0
    %6537 = vmatpush1.msra.mxu0 %v6215
    %6538 = vmatprep.subr.mxu0 0.0
    %6539 = vmatpush1.msra.mxu0 %v6216
    %6540 = vmatprep.subr.mxu0 0.0
    %6541 = vmatpush1.msra.mxu0 %v6217
    %6542 = vmatprep.subr.mxu0 0.0
    %6543 = vmatpush1.msra.mxu0 0.0
    %6544 = vmatprep.subr.mxu0 0.0
    %6545 = vmatpush1.msra.mxu0 0.0
    %6546 = vmatprep.subr.mxu0 0.0
    %6547 = vmatpush1.msra.mxu0 0.0
    %6548 = vmatprep.subr.mxu0 0.0
    %6549 = vmatpush1.msra.mxu0 0.0
    %6550 = vmatprep.subr.mxu0 0.0
    %6551 = vmatpush1.msra.mxu0 0.0
    %6552 = vmatprep.subr.mxu0 0.0
    %6553 = vmatpush1.msra.mxu0 0.0
    %6554 = vmatprep.subr.mxu0 0.0
    %6555 = vmatpush1.msra.mxu0 0.0
    %6556 = vmatprep.subr.mxu0 0.0
    %6557 = vmatpush1.msra.mxu0 0.0
    %6558 = vmatprep.subr.mxu0 0.0
    %6559 = vmatpush1.msra.mxu0 0.0
    %6560 = vmatprep.subr.mxu0 0.0
    %6561 = vmatpush1.msra.mxu0 0.0
    %6562 = vmatprep.subr.mxu0 0.0
    %6563 = vmatpush1.msra.mxu0 0.0
    %6564 = vmatprep.subr.mxu0 0.0
    %6565 = vmatpush1.msra.mxu0 0.0
    %6566 = vmatprep.subr.mxu0 0.0
    %6567 = vmatpush1.msra.mxu0 0.0
    %6568 = vmatprep.subr.mxu0 0.0
    %6569 = vmatpush1.msra.mxu0 0.0
    %6570 = vmatprep.subr.mxu0 0.0
    %6571 = vmatpush1.msra.mxu0 0.0
    %6572 = vmatprep.subr.mxu0 0.0
    %6573 = vmatpush1.msra.mxu0 0.0
    %6574 = vmatprep.mubr.f32.mxu0 0.0
    %6575 = vmatmul.mubr.f32.gmra.mrb[0].mxu0 %v6509
    %v6576 = vpop.f32.mrb[0].mxu0
    %v6577 = vadd.f32 %v6200, %v6576
    %v6578 = vpop.f32.mrb[0].mxu0
    %6579 = vdwg.mxu0
    %s6580 = scalar_lea.vmem [#allocation13], 8
    %6581 = vst [vmem:[%s6580] sm:$0x3] %v6577
    %v6582 = vld [vmem:[%s5795] sm:$0x3]
    %6583 = vmatprep.subr.mxu0 0.0
    %6584 = vmatpush1.msra.mxu0 %v6202
    %6585 = vmatprep.subr.mxu0 0.0
    %6586 = vmatpush1.msra.mxu0 %v6203
    %6587 = vmatprep.subr.mxu0 0.0
    %6588 = vmatpush1.msra.mxu0 %v6204
    %6589 = vmatprep.subr.mxu0 0.0
    %6590 = vmatpush1.msra.mxu0 %v6205
    %6591 = vmatprep.subr.mxu0 0.0
    %6592 = vmatpush1.msra.mxu0 %v6206
    %6593 = vmatprep.subr.mxu0 0.0
    %6594 = vmatpush1.msra.mxu0 %v6207
    %6595 = vmatprep.subr.mxu0 0.0
    %6596 = vmatpush1.msra.mxu0 %v6208
    %6597 = vmatprep.subr.mxu0 0.0
    %6598 = vmatpush1.msra.mxu0 %v6209
    %6599 = vmatprep.subr.mxu0 0.0
    %6600 = vmatpush1.msra.mxu0 %v6210
    %6601 = vmatprep.subr.mxu0 0.0
    %6602 = vmatpush1.msra.mxu0 %v6211
    %6603 = vmatprep.subr.mxu0 0.0
    %6604 = vmatpush1.msra.mxu0 %v6212
    %6605 = vmatprep.subr.mxu0 0.0
    %6606 = vmatpush1.msra.mxu0 %v6213
    %6607 = vmatprep.subr.mxu0 0.0
    %6608 = vmatpush1.msra.mxu0 %v6214
    %6609 = vmatprep.subr.mxu0 0.0
    %6610 = vmatpush1.msra.mxu0 %v6215
    %6611 = vmatprep.subr.mxu0 0.0
    %6612 = vmatpush1.msra.mxu0 %v6216
    %6613 = vmatprep.subr.mxu0 0.0
    %6614 = vmatpush1.msra.mxu0 %v6217
    %6615 = vmatprep.subr.mxu0 0.0
    %6616 = vmatpush1.msra.mxu0 0.0
    %6617 = vmatprep.subr.mxu0 0.0
    %6618 = vmatpush1.msra.mxu0 0.0
    %6619 = vmatprep.subr.mxu0 0.0
    %6620 = vmatpush1.msra.mxu0 0.0
    %6621 = vmatprep.subr.mxu0 0.0
    %6622 = vmatpush1.msra.mxu0 0.0
    %6623 = vmatprep.subr.mxu0 0.0
    %6624 = vmatpush1.msra.mxu0 0.0
    %6625 = vmatprep.subr.mxu0 0.0
    %6626 = vmatpush1.msra.mxu0 0.0
    %6627 = vmatprep.subr.mxu0 0.0
    %6628 = vmatpush1.msra.mxu0 0.0
    %6629 = vmatprep.subr.mxu0 0.0
    %6630 = vmatpush1.msra.mxu0 0.0
    %6631 = vmatprep.subr.mxu0 0.0
    %6632 = vmatpush1.msra.mxu0 0.0
    %6633 = vmatprep.subr.mxu0 0.0
    %6634 = vmatpush1.msra.mxu0 0.0
    %6635 = vmatprep.subr.mxu0 0.0
    %6636 = vmatpush1.msra.mxu0 0.0
    %6637 = vmatprep.subr.mxu0 0.0
    %6638 = vmatpush1.msra.mxu0 0.0
    %6639 = vmatprep.subr.mxu0 0.0
    %6640 = vmatpush1.msra.mxu0 0.0
    %6641 = vmatprep.subr.mxu0 0.0
    %6642 = vmatpush1.msra.mxu0 0.0
    %6643 = vmatprep.subr.mxu0 0.0
    %6644 = vmatpush1.msra.mxu0 0.0
    %6645 = vmatprep.subr.mxu0 0.0
    %6646 = vmatpush1.msra.mxu0 0.0
    %6647 = vmatprep.mubr.f32.mxu0 0.0
    %6648 = vmatmul.mubr.f32.gmra.mrb[0].mxu0 %v6582
    %v6649 = vpop.f32.mrb[0].mxu0
    %v6650 = vadd.f32 %v6200, %v6649
    %v6651 = vpop.f32.mrb[0].mxu0
    %6652 = vdwg.mxu0
    %s6653 = scalar_lea.vmem [#allocation13], 10
    %6654 = vst [vmem:[%s6653] sm:$0x3] %v6650
    %v6655 = vld [vmem:[%s5994] sm:$0x3]
    %6656 = vmatprep.subr.mxu0 0.0
    %6657 = vmatpush1.msra.mxu0 %v6202
    %6658 = vmatprep.subr.mxu0 0.0
    %6659 = vmatpush1.msra.mxu0 %v6203
    %6660 = vmatprep.subr.mxu0 0.0
    %6661 = vmatpush1.msra.mxu0 %v6204
    %6662 = vmatprep.subr.mxu0 0.0
    %6663 = vmatpush1.msra.mxu0 %v6205
    %6664 = vmatprep.subr.mxu0 0.0
    %6665 = vmatpush1.msra.mxu0 %v6206
    %6666 = vmatprep.subr.mxu0 0.0
    %6667 = vmatpush1.msra.mxu0 %v6207
    %6668 = vmatprep.subr.mxu0 0.0
    %6669 = vmatpush1.msra.mxu0 %v6208
    %6670 = vmatprep.subr.mxu0 0.0
    %6671 = vmatpush1.msra.mxu0 %v6209
    %6672 = vmatprep.subr.mxu0 0.0
    %6673 = vmatpush1.msra.mxu0 %v6210
    %6674 = vmatprep.subr.mxu0 0.0
    %6675 = vmatpush1.msra.mxu0 %v6211
    %6676 = vmatprep.subr.mxu0 0.0
    %6677 = vmatpush1.msra.mxu0 %v6212
    %6678 = vmatprep.subr.mxu0 0.0
    %6679 = vmatpush1.msra.mxu0 %v6213
    %6680 = vmatprep.subr.mxu0 0.0
    %6681 = vmatpush1.msra.mxu0 %v6214
    %6682 = vmatprep.subr.mxu0 0.0
    %6683 = vmatpush1.msra.mxu0 %v6215
    %6684 = vmatprep.subr.mxu0 0.0
    %6685 = vmatpush1.msra.mxu0 %v6216
    %6686 = vmatprep.subr.mxu0 0.0
    %6687 = vmatpush1.msra.mxu0 %v6217
    %6688 = vmatprep.subr.mxu0 0.0
    %6689 = vmatpush1.msra.mxu0 0.0
    %6690 = vmatprep.subr.mxu0 0.0
    %6691 = vmatpush1.msra.mxu0 0.0
    %6692 = vmatprep.subr.mxu0 0.0
    %6693 = vmatpush1.msra.mxu0 0.0
    %6694 = vmatprep.subr.mxu0 0.0
    %6695 = vmatpush1.msra.mxu0 0.0
    %6696 = vmatprep.subr.mxu0 0.0
    %6697 = vmatpush1.msra.mxu0 0.0
    %6698 = vmatprep.subr.mxu0 0.0
    %6699 = vmatpush1.msra.mxu0 0.0
    %6700 = vmatprep.subr.mxu0 0.0
    %6701 = vmatpush1.msra.mxu0 0.0
    %6702 = vmatprep.subr.mxu0 0.0
    %6703 = vmatpush1.msra.mxu0 0.0
    %6704 = vmatprep.subr.mxu0 0.0
    %6705 = vmatpush1.msra.mxu0 0.0
    %6706 = vmatprep.subr.mxu0 0.0
    %6707 = vmatpush1.msra.mxu0 0.0
    %6708 = vmatprep.subr.mxu0 0.0
    %6709 = vmatpush1.msra.mxu0 0.0
    %6710 = vmatprep.subr.mxu0 0.0
    %6711 = vmatpush1.msra.mxu0 0.0
    %6712 = vmatprep.subr.mxu0 0.0
    %6713 = vmatpush1.msra.mxu0 0.0
    %6714 = vmatprep.subr.mxu0 0.0
    %6715 = vmatpush1.msra.mxu0 0.0
    %6716 = vmatprep.subr.mxu0 0.0
    %6717 = vmatpush1.msra.mxu0 0.0
    %6718 = vmatprep.subr.mxu0 0.0
    %6719 = vmatpush1.msra.mxu0 0.0
    %6720 = vmatprep.mubr.f32.mxu0 0.0
    %6721 = vmatmul.mubr.f32.gmra.mrb[0].mxu0 %v6655
    %v6722 = vpop.f32.mrb[0].mxu0
    %v6723 = vadd.f32 %v6200, %v6722
    %v6724 = vpop.f32.mrb[0].mxu0
    %6725 = vdwg.mxu0
    %s6726 = scalar_lea.vmem [#allocation13], 12
    %6727 = vst [vmem:[%s6726] sm:$0x3] %v6723
    %v6728 = vld [vmem:[%s6193] sm:$0x3]
    %6729 = vmatprep.subr.mxu0 0.0
    %6730 = vmatpush1.msra.mxu0 %v6202
    %6731 = vmatprep.subr.mxu0 0.0
    %6732 = vmatpush1.msra.mxu0 %v6203
    %6733 = vmatprep.subr.mxu0 0.0
    %6734 = vmatpush1.msra.mxu0 %v6204
    %6735 = vmatprep.subr.mxu0 0.0
    %6736 = vmatpush1.msra.mxu0 %v6205
    %6737 = vmatprep.subr.mxu0 0.0
    %6738 = vmatpush1.msra.mxu0 %v6206
    %6739 = vmatprep.subr.mxu0 0.0
    %6740 = vmatpush1.msra.mxu0 %v6207
    %6741 = vmatprep.subr.mxu0 0.0
    %6742 = vmatpush1.msra.mxu0 %v6208
    %6743 = vmatprep.subr.mxu0 0.0
    %6744 = vmatpush1.msra.mxu0 %v6209
    %6745 = vmatprep.subr.mxu0 0.0
    %6746 = vmatpush1.msra.mxu0 %v6210
    %6747 = vmatprep.subr.mxu0 0.0
    %6748 = vmatpush1.msra.mxu0 %v6211
    %6749 = vmatprep.subr.mxu0 0.0
    %6750 = vmatpush1.msra.mxu0 %v6212
    %6751 = vmatprep.subr.mxu0 0.0
    %6752 = vmatpush1.msra.mxu0 %v6213
    %6753 = vmatprep.subr.mxu0 0.0
    %6754 = vmatpush1.msra.mxu0 %v6214
    %6755 = vmatprep.subr.mxu0 0.0
    %6756 = vmatpush1.msra.mxu0 %v6215
    %6757 = vmatprep.subr.mxu0 0.0
    %6758 = vmatpush1.msra.mxu0 %v6216
    %6759 = vmatprep.subr.mxu0 0.0
    %6760 = vmatpush1.msra.mxu0 %v6217
    %6761 = vmatprep.subr.mxu0 0.0
    %6762 = vmatpush1.msra.mxu0 0.0
    %6763 = vmatprep.subr.mxu0 0.0
    %6764 = vmatpush1.msra.mxu0 0.0
    %6765 = vmatprep.subr.mxu0 0.0
    %6766 = vmatpush1.msra.mxu0 0.0
    %6767 = vmatprep.subr.mxu0 0.0
    %6768 = vmatpush1.msra.mxu0 0.0
    %6769 = vmatprep.subr.mxu0 0.0
    %6770 = vmatpush1.msra.mxu0 0.0
    %6771 = vmatprep.subr.mxu0 0.0
    %6772 = vmatpush1.msra.mxu0 0.0
    %6773 = vmatprep.subr.mxu0 0.0
    %6774 = vmatpush1.msra.mxu0 0.0
    %6775 = vmatprep.subr.mxu0 0.0
    %6776 = vmatpush1.msra.mxu0 0.0
    %6777 = vmatprep.subr.mxu0 0.0
    %6778 = vmatpush1.msra.mxu0 0.0
    %6779 = vmatprep.subr.mxu0 0.0
    %6780 = vmatpush1.msra.mxu0 0.0
    %6781 = vmatprep.subr.mxu0 0.0
    %6782 = vmatpush1.msra.mxu0 0.0
    %6783 = vmatprep.subr.mxu0 0.0
    %6784 = vmatpush1.msra.mxu0 0.0
    %6785 = vmatprep.subr.mxu0 0.0
    %6786 = vmatpush1.msra.mxu0 0.0
    %6787 = vmatprep.subr.mxu0 0.0
    %6788 = vmatpush1.msra.mxu0 0.0
    %6789 = vmatprep.subr.mxu0 0.0
    %6790 = vmatpush1.msra.mxu0 0.0
    %6791 = vmatprep.subr.mxu0 0.0
    %6792 = vmatpush1.msra.mxu0 0.0
    %6793 = vmatprep.mubr.f32.mxu0 0.0
    %6794 = vmatmul.mubr.f32.gmra.mrb[0].mxu0 %v6728
    %v6795 = vpop.f32.mrb[0].mxu0
    %v6796 = vadd.f32 %v6200, %v6795
    %v6797 = vpop.f32.mrb[0].mxu0
    %6798 = vdwg.mxu0
    %s6799 = scalar_lea.vmem [#allocation13], 14
    %6800 = vst [vmem:[%s6799] sm:$0x3] %v6796
    // Predicated region
    $region58: #{s2s_forward.1} parent=1 // pred_check
      _
    $region59: #{s2s_forward.1} parent=1 // pred_check_branch
      %6802 = sbr.rel (0) target = $region61
    $region60: #{s2s_forward.1} parent=1 // pred_region
      %s6804 = ssub.s32 256, 256
      %6805 = vsyncadd [#allocation7], %s6804
      %s6806 = sshll.u32 [#allocation13], 4
      %s6807 = int_to_ptr.vmem [resolvable:$true] %s6806
      %6812 = dma.vmem_to_hbm [thread:$0]  %s6807, 256, %s10, [#allocation7], 32, 32, 2
    $region61: #{s2s_forward.1} parent=1 // pred_fallthru
      _
    // Predicated region
    $region62: #{s2s_forward.1} parent=1 // pred_check
      _
    $region63: #{s2s_forward.1} parent=1 // pred_check_branch
      %6814 = sbr.rel (0) target = $region65
    $region64: #{s2s_forward.1} parent=1 // pred_region
      %6815 = dma.done [#allocation7], 256
    $region65: #{s2s_forward.1} parent=1 // pred_fallthru
      _
    %6816 = vsyncpa [#allocation6], 1
    %6817 = vsyncpa [#allocation9], 1
    %6818 = vsyncpa [#allocation12], 1
    %6819 = vsyncpa [#allocation7], 1

</llo_original>
